<compile_context>
chip_gen: v7x
topology: tpu7x:2x2x1
jax: 0.10.0
libtpu: 0.0.40
codegen_flags: <defaults>
</compile_context>

<pallas_src>
import functools

import numpy as np

import jax
import jax.numpy as jnp
from jax.experimental import pallas as pl
from jax.experimental.pallas import tpu as pltpu


def _round_up(x, m):
    return (x + m - 1) // m * m


def _largest_divisor_leq(n, cap):
    for d in range(min(n, cap), 0, -1):
        if n % d == 0:
            return d
    return 1


# ----------------------------------------------------------------------------
# Pallas kernel A: complex per-mode channel mixing (the SpectralConv einsum)
#   out[m, b, o] = sum_i x[m, b, i] * w[m, i, o]        (complex arithmetic)
# 3-multiply complex product; gridded ("parallel") over blocks of modes.
# ----------------------------------------------------------------------------
def _spectral_mix_kernel(xr_ref, xi_ref, wr_ref, wi_ref, or_ref, oi_ref):
    xr = xr_ref[...]
    xi = xi_ref[...]
    wr = wr_ref[...]
    wi = wi_ref[...]
    k1 = jnp.einsum('mbi,mio->mbo', xr, wr, preferred_element_type=jnp.float32)
    k2 = jnp.einsum('mbi,mio->mbo', xi, wi, preferred_element_type=jnp.float32)
    k3 = jnp.einsum('mbi,mio->mbo', xr + xi, wr + wi,
                    preferred_element_type=jnp.float32)
    or_ref[...] = k1 - k2            # real part
    oi_ref[...] = k3 - k1 - k2       # imag part


def spectral_mode_mix(xr, xi, wr, wi, *, mode_block=32):
    M, B, Cin = xr.shape
    Cout = wr.shape[-1]
    mblk = _largest_divisor_leq(M, mode_block)   # stream 16-64 modes per step
    grid = (M // mblk,)
    x_spec = pl.BlockSpec((mblk, B, Cin), lambda m: (m, 0, 0))
    w_spec = pl.BlockSpec((mblk, Cin, Cout), lambda m: (m, 0, 0))
    o_spec = pl.BlockSpec((mblk, B, Cout), lambda m: (m, 0, 0))
    return pl.pallas_call(
        _spectral_mix_kernel,
        out_shape=(jax.ShapeDtypeStruct((M, B, Cout), jnp.float32),
                   jax.ShapeDtypeStruct((M, B, Cout), jnp.float32)),
        grid=grid,
        in_specs=[x_spec, x_spec, w_spec, w_spec],
        out_specs=(o_spec, o_spec),
        compiler_params=pltpu.CompilerParams(
            dimension_semantics=("parallel",),
            vmem_limit_bytes=32 * 1024 * 1024),
    )(xr, xi, wr, wi)


# ----------------------------------------------------------------------------
# Pallas kernel B: fused inverse-DFT (from the corner) + 1x1 conv + bias + ReLU
#   out[b, :, s] = relu( Or[b] @ Br[:, s] - Oi[b] @ Bi[:, s]      (spectral x1)
#                      + Wconv @ x[b, :, s] + bias )              (local conv)
# NCHW-native: channels on sublanes, flattened spatial tile (>=128) on lanes.
# ----------------------------------------------------------------------------
def _fused_out_kernel(x_ref, or_ref, oi_ref, br_ref, bi_ref, w_ref, b_ref,
                      o_ref):
    x = x_ref[0]                                             # (C, S_TILE)
    x1 = (jnp.dot(or_ref[0], br_ref[...], preferred_element_type=jnp.float32)
          - jnp.dot(oi_ref[0], bi_ref[...], preferred_element_type=jnp.float32))
    x2 = jnp.dot(w_ref[...], x, preferred_element_type=jnp.float32)
    o_ref[0] = jnp.maximum(x1 + x2 + b_ref[...], 0.0).astype(o_ref.dtype)


def fused_idft_conv_relu(x3, or3, oi3, basis_r, basis_i, w_conv, bias, *,
                         s_tile):
    B, C, S_pad = x3.shape
    M = basis_r.shape[0]
    grid = (B, S_pad // s_tile)
    return pl.pallas_call(
        _fused_out_kernel,
        out_shape=jax.ShapeDtypeStruct((B, C, S_pad), jnp.float32),
        grid=grid,
        in_specs=[
            pl.BlockSpec((1, C, s_tile), lambda b, s: (b, 0, s)),   # x
            pl.BlockSpec((1, C, M), lambda b, s: (b, 0, 0)),        # corner (re)
            pl.BlockSpec((1, C, M), lambda b, s: (b, 0, 0)),        # corner (im)
            pl.BlockSpec((M, s_tile), lambda b, s: (0, s)),         # IDFT basis (re)
            pl.BlockSpec((M, s_tile), lambda b, s: (0, s)),         # IDFT basis (im)
            pl.BlockSpec((C, C), lambda b, s: (0, 0)),              # conv weight
            pl.BlockSpec((C, 1), lambda b, s: (0, 0)),              # conv bias
        ],
        out_specs=pl.BlockSpec((1, C, s_tile), lambda b, s: (b, 0, s)),
        compiler_params=pltpu.CompilerParams(
            dimension_semantics=("parallel", "parallel"),
            vmem_limit_bytes=32 * 1024 * 1024),
    )(x3, or3, oi3, basis_r, basis_i, w_conv, bias)


# ----------------------------------------------------------------------------
# Inverse-DFT basis for the zero-padded-corner irfftn, as two real matrices.
#   x1[h,w] = Re( sum_{k1<m1,k2<m2} O[k1,k2] * basis[(k1,k2),(h,w)] )
# with basis[(k1,k2),(h,w)] = c[k2] * exp(2i*pi*(h*k1/H + w*k2/W)) / (H*W),
# c[0]=1, c[W//2]=1 (even W, if kept), else 2 (Hermitian doubling of +/-k2).
# ----------------------------------------------------------------------------
def _idft_basis(H, W, m1, m2):
    k1 = np.arange(m1)
    k2 = np.arange(m2)
    h = np.arange(H)
    w = np.arange(W)
    eh = np.exp(2j * np.pi * np.outer(h, k1) / H)            # (H, m1)
    ew = np.exp(2j * np.pi * np.outer(w, k2) / W)            # (W, m2)
    c = np.full((m2,), 2.0)
    c[0] = 1.0
    if W % 2 == 0 and (W // 2) < m2:
        c[W // 2] = 1.0
    ew = ew * c[None, :]
    basis = eh[:, :, None, None] * ew.T[None, None, :, :].transpose(0, 1, 3, 2)
    # basis[h, k1, w, k2] -> (k1, k2, h, w) -> (M, H*W)
    basis = basis.transpose(1, 3, 0, 2).reshape(m1 * m2, H * W) / (H * W)
    return (basis.real.astype(np.float32), basis.imag.astype(np.float32))


# ----------------------------------------------------------------------------
# Full FNOBlock forward (dims=2).  `modes` must be static (closure / partial).
# ----------------------------------------------------------------------------
def fno_block_forward(x, params, *, modes):
    B, C, H, W = x.shape
    m1, m2 = modes
    M = m1 * m2
    S = H * W

    xf = x.astype(jnp.float32)

    # ---- forward rFFT (plain JAX) and low-frequency corner ----
    # TODO(synk): the forward rFFT has no Pallas TPU primitive; it stays in
    # jnp.fft.  Only the [:m1, :m2] corner is consumed downstream.
    x_ft = jnp.fft.rfftn(xf, axes=(-2, -1))                  # (B, C, H, W//2+1)
    corner = x_ft[:, :, :m1, :m2]                            # (B, C, m1, m2)
    xr = jnp.real(corner).reshape(B, C, M).transpose(2, 0, 1)   # (M, B, C) tiny
    xi = jnp.imag(corner).reshape(B, C, M).transpose(2, 0, 1)

    # ---- Pallas kernel A: per-mode complex channel mixing ----
    or_m, oi_m = spectral_mode_mix(xr, xi, params['spec_wr_m'],
                                   params['spec_wi_m'])
    or3 = or_m.transpose(1, 2, 0)                            # (B, C, M) tiny
    oi3 = oi_m.transpose(1, 2, 0)

    # ---- Pallas kernel B: fused inverse-DFT + 1x1 conv + bias + ReLU ----
    br_np, bi_np = _idft_basis(H, W, m1, m2)                 # numpy constants
    s_tile = min(512, _round_up(S, 128))
    S_pad = _round_up(S, s_tile)
    basis_r = jnp.asarray(np.pad(br_np, ((0, 0), (0, S_pad - S))))
    basis_i = jnp.asarray(np.pad(bi_np, ((0, 0), (0, S_pad - S))))

    x3 = xf.reshape(B, C, S)                                 # free reshape (NCHW)
    if S_pad != S:
        x3 = jnp.pad(x3, ((0, 0), (0, 0), (0, S_pad - S)))

    y = fused_idft_conv_relu(x3, or3, oi3, basis_r, basis_i,
                             params['conv_w'],
                             params['conv_b'].reshape(C, 1),
                             s_tile=s_tile)
    return y[:, :, :S].reshape(B, C, H, W)                   # still NCHW


# ----------------------------------------------------------------------------
# Deterministic parameter init (shapes as FNOBlock.__init__ implies)
# ----------------------------------------------------------------------------
def init_params(key, width, modes):
    m1, m2 = modes
    M = m1 * m2
    k1, k2, k3, k4 = jax.random.split(key, 4)
    scale = 1.0 / (width * width)
    spec_wr = scale * jax.random.uniform(k1, (width, width, m1, m2), jnp.float32)
    spec_wi = scale * jax.random.uniform(k2, (width, width, m1, m2), jnp.float32)
    bound = 1.0 / float(np.sqrt(width))
    conv_w = jax.random.uniform(k3, (width, width), jnp.float32, -bound, bound)
    conv_b = jax.random.uniform(k4, (width,), jnp.float32, -bound, bound)
    # Pre-transpose spectral weights to the modes-major (M, Cin, Cout) layout
    # the Pallas mode-mix kernel consumes (static -> done once, not per forward).
    spec_wr_m = spec_wr.transpose(2, 3, 0, 1).reshape(M, width, width)
    spec_wi_m = spec_wi.transpose(2, 3, 0, 1).reshape(M, width, width)
    return {
        'spec_wr': spec_wr,            # (Cin, Cout, m1, m2) - reference layout
        'spec_wi': spec_wi,
        'spec_wr_m': spec_wr_m,        # (M, Cin, Cout)      - kernel layout
        'spec_wi_m': spec_wi_m,
        'conv_w': conv_w,              # (Cout, Cin)
        'conv_b': conv_b,              # (Cout,)
    }


# ----------------------------------------------------------------------------
# Pure-JAX reference (mirrors the PyTorch semantics) for correctness check
# ----------------------------------------------------------------------------
def reference(x, params, modes):
    B, C, H, W = x.shape
    m1, m2 = modes
    hi = jax.lax.Precision.HIGHEST
    x_ft = jnp.fft.rfftn(x.astype(jnp.float32), axes=(-2, -1))
    w_c = (params['spec_wr'] + 1j * params['spec_wi']).astype(jnp.complex64)
    corner = jnp.einsum('bixy,ioxy->boxy', x_ft[:, :, :m1, :m2], w_c,
                        precision=hi)
    out_ft = jnp.zeros_like(x_ft).at[:, :, :m1, :m2].set(corner)
    x1 = jnp.fft.irfftn(out_ft, s=(H, W), axes=(-2, -1))
    x2 = (jnp.einsum('oi,bihw->bohw', params['conv_w'], x, precision=hi)
          + params['conv_b'].reshape(1, C, 1, 1))
    return jnp.maximum(x1 + x2, 0.0)


if __name__ == "__main__":
    key = jax.random.PRNGKey(0)
    B, C, H, W = 2, 32, 16, 16          # batch, width (channels), spatial
    modes = (8, 8)
    kx, kp = jax.random.split(key)
    x = jax.random.normal(kx, (B, C, H, W), jnp.float32)
    params = init_params(kp, C, modes)

    fwd = jax.jit(functools.partial(fno_block_forward, modes=modes))
    out = jax.block_until_ready(fwd(x, params))

    ref = reference(x, params, modes)
    assert out.shape == (B, C, H, W)
    max_err = float(jnp.max(jnp.abs(out - ref)))
    assert jnp.allclose(out, ref, atol=1e-3, rtol=1e-3), \
        f"max abs err = {max_err}"
    print("KERNEL_OK")
</pallas_src>

<mosaic_0001>
module attributes {stable_mosaic.version = 11 : i64} {
  func.func @_spectral_mix_kernel(%arg0: i32, %arg1: memref<32x2x32xf32, #tpu.memory_space<vmem>>, %arg2: memref<32x2x32xf32, #tpu.memory_space<vmem>>, %arg3: memref<32x32x32xf32, #tpu.memory_space<vmem>>, %arg4: memref<32x32x32xf32, #tpu.memory_space<vmem>>, %arg5: memref<32x2x32xf32, #tpu.memory_space<vmem>>, %arg6: memref<32x2x32xf32, #tpu.memory_space<vmem>>) attributes {dimension_semantics = [#tpu.dimension_semantics<parallel>], iteration_bounds = array<i64: 2>, scalar_prefetch = 0 : i64, scratch_operands = 0 : i64, tpu.core_type = #tpu.core_type<tc>, window_params = [{transform_indices = @transform_0, window_bounds = array<i64: 32, 2, 32>}, {transform_indices = @transform_1, window_bounds = array<i64: 32, 2, 32>}, {transform_indices = @transform_2, window_bounds = array<i64: 32, 32, 32>}, {transform_indices = @transform_3, window_bounds = array<i64: 32, 32, 32>}, {transform_indices = @transform_4, window_bounds = array<i64: 32, 2, 32>}, {transform_indices = @transform_5, window_bounds = array<i64: 32, 2, 32>}]} {
    %c0 = arith.constant 0 : index
    %c0_0 = arith.constant 0 : index
    %c0_1 = arith.constant 0 : index
    %0 = vector.load %arg1[%c0, %c0_0, %c0_1] : memref<32x2x32xf32, #tpu.memory_space<vmem>>, vector<32x2x32xf32>
    %c0_2 = arith.constant 0 : index
    %c0_3 = arith.constant 0 : index
    %c0_4 = arith.constant 0 : index
    %1 = vector.load %arg2[%c0_2, %c0_3, %c0_4] : memref<32x2x32xf32, #tpu.memory_space<vmem>>, vector<32x2x32xf32>
    %c0_5 = arith.constant 0 : index
    %c0_6 = arith.constant 0 : index
    %c0_7 = arith.constant 0 : index
    %2 = vector.load %arg3[%c0_5, %c0_6, %c0_7] : memref<32x32x32xf32, #tpu.memory_space<vmem>>, vector<32x32x32xf32>
    %c0_8 = arith.constant 0 : index
    %c0_9 = arith.constant 0 : index
    %c0_10 = arith.constant 0 : index
    %3 = vector.load %arg4[%c0_8, %c0_9, %c0_10] : memref<32x32x32xf32, #tpu.memory_space<vmem>>, vector<32x32x32xf32>
    "tpu.trace_start"() <{level = 10 : i32, message = "mbi,mio->mbo"}> : () -> ()
    %cst = arith.constant dense<0.000000e+00> : vector<32x2x32xf32>
    %4 = tpu.matmul %0, %2, %cst {dimension_numbers = #tpu.dot_dimension_numbers<[2], [1], [1], [2], [0, 0, 0, 1, 1, 2], [0], [0]>} : vector<32x2x32xf32>, vector<32x32x32xf32>, vector<32x2x32xf32> -> vector<32x2x32xf32>
    %cst_11 = arith.constant dense<0.000000e+00> : vector<32x2x32xf32>
    %5 = tpu.matmul %1, %3, %cst_11 {dimension_numbers = #tpu.dot_dimension_numbers<[2], [1], [1], [2], [0, 0, 0, 1, 1, 2], [0], [0]>} : vector<32x2x32xf32>, vector<32x32x32xf32>, vector<32x2x32xf32> -> vector<32x2x32xf32>
    "tpu.trace_stop"() : () -> ()
    %6 = arith.addf %0, %1 : vector<32x2x32xf32>
    %7 = arith.addf %2, %3 : vector<32x32x32xf32>
    "tpu.trace_start"() <{level = 10 : i32, message = "mbi,mio->mbo"}> : () -> ()
    %cst_12 = arith.constant dense<0.000000e+00> : vector<32x2x32xf32>
    %8 = tpu.matmul %6, %7, %cst_12 {dimension_numbers = #tpu.dot_dimension_numbers<[2], [1], [1], [2], [0, 0, 0, 1, 1, 2], [0], [0]>} : vector<32x2x32xf32>, vector<32x32x32xf32>, vector<32x2x32xf32> -> vector<32x2x32xf32>
    "tpu.trace_stop"() : () -> ()
    %9 = arith.subf %4, %5 : vector<32x2x32xf32>
    %c0_13 = arith.constant 0 : index
    %c0_14 = arith.constant 0 : index
    %c0_15 = arith.constant 0 : index
    %10 = vector.load %arg5[%c0_13, %c0_14, %c0_15] : memref<32x2x32xf32, #tpu.memory_space<vmem>>, vector<32x2x32xf32>
    tpu.vector_store %arg5[%c0_13, %c0_14, %c0_15], %9 {strides = array<i32>} : memref<32x2x32xf32, #tpu.memory_space<vmem>>, vector<32x2x32xf32>,
    %11 = arith.subf %8, %4 : vector<32x2x32xf32>
    %12 = arith.subf %11, %5 : vector<32x2x32xf32>
    %c0_16 = arith.constant 0 : index
    %c0_17 = arith.constant 0 : index
    %c0_18 = arith.constant 0 : index
    %13 = vector.load %arg6[%c0_16, %c0_17, %c0_18] : memref<32x2x32xf32, #tpu.memory_space<vmem>>, vector<32x2x32xf32>
    tpu.vector_store %arg6[%c0_16, %c0_17, %c0_18], %12 {strides = array<i32>} : memref<32x2x32xf32, #tpu.memory_space<vmem>>, vector<32x2x32xf32>,
    return
  }
  func.func @transform_0(%arg0: i32) -> (i32, i32, i32) {
    %c0_i32 = arith.constant 0 : i32
    %c0_i32_0 = arith.constant 0 : i32
    %c0_i32_1 = arith.constant 0 : i32
    return %arg0, %c0_i32, %c0_i32_0 : i32, i32, i32
  }
  func.func @transform_1(%arg0: i32) -> (i32, i32, i32) {
    %c0_i32 = arith.constant 0 : i32
    %c0_i32_0 = arith.constant 0 : i32
    %c0_i32_1 = arith.constant 0 : i32
    return %arg0, %c0_i32, %c0_i32_0 : i32, i32, i32
  }
  func.func @transform_2(%arg0: i32) -> (i32, i32, i32) {
    %c0_i32 = arith.constant 0 : i32
    %c0_i32_0 = arith.constant 0 : i32
    %c0_i32_1 = arith.constant 0 : i32
    return %arg0, %c0_i32, %c0_i32_0 : i32, i32, i32
  }
  func.func @transform_3(%arg0: i32) -> (i32, i32, i32) {
    %c0_i32 = arith.constant 0 : i32
    %c0_i32_0 = arith.constant 0 : i32
    %c0_i32_1 = arith.constant 0 : i32
    return %arg0, %c0_i32, %c0_i32_0 : i32, i32, i32
  }
  func.func @transform_4(%arg0: i32) -> (i32, i32, i32) {
    %c0_i32 = arith.constant 0 : i32
    %c0_i32_0 = arith.constant 0 : i32
    %c0_i32_1 = arith.constant 0 : i32
    return %arg0, %c0_i32, %c0_i32_0 : i32, i32, i32
  }
  func.func @transform_5(%arg0: i32) -> (i32, i32, i32) {
    %c0_i32 = arith.constant 0 : i32
    %c0_i32_0 = arith.constant 0 : i32
    %c0_i32_1 = arith.constant 0 : i32
    return %arg0, %c0_i32, %c0_i32_0 : i32, i32, i32
  }
}

module attributes {stable_mosaic.version = 11 : i64} {
  func.func @_fused_out_kernel(%arg0: i32, %arg1: i32, %arg2: memref<1x32x256xf32, #tpu.memory_space<vmem>>, %arg3: memref<1x32x64xf32, #tpu.memory_space<vmem>>, %arg4: memref<1x32x64xf32, #tpu.memory_space<vmem>>, %arg5: memref<64x256xf32, #tpu.memory_space<vmem>>, %arg6: memref<64x256xf32, #tpu.memory_space<vmem>>, %arg7: memref<32x32xf32, #tpu.memory_space<vmem>>, %arg8: memref<32x1xf32, #tpu.memory_space<vmem>>, %arg9: memref<1x32x256xf32, #tpu.memory_space<vmem>>) attributes {dimension_semantics = [#tpu.dimension_semantics<parallel>, #tpu.dimension_semantics<parallel>], iteration_bounds = array<i64: 2, 1>, scalar_prefetch = 0 : i64, scratch_operands = 0 : i64, tpu.core_type = #tpu.core_type<tc>, window_params = [{transform_indices = @transform_0, window_bounds = array<i64: 1, 32, 256>}, {transform_indices = @transform_1, window_bounds = array<i64: 1, 32, 64>}, {transform_indices = @transform_2, window_bounds = array<i64: 1, 32, 64>}, {transform_indices = @transform_3, window_bounds = array<i64: 64, 256>}, {transform_indices = @transform_4, window_bounds = array<i64: 64, 256>}, {pipeline_mode = #tpu.pipeline_mode<synchronous>, transform_indices = @transform_5, window_bounds = array<i64: 32, 32>}, {pipeline_mode = #tpu.pipeline_mode<synchronous>, transform_indices = @transform_6, window_bounds = array<i64: 32, 1>}, {transform_indices = @transform_7, window_bounds = array<i64: 1, 32, 256>}]} {
    %c0 = arith.constant 0 : index
    %c0_0 = arith.constant 0 : index
    %c0_1 = arith.constant 0 : index
    %0 = vector.load %arg2[%c0, %c0_0, %c0_1] : memref<1x32x256xf32, #tpu.memory_space<vmem>>, vector<1x32x256xf32>
    %1 = vector.shape_cast %0 : vector<1x32x256xf32> to vector<32x256xf32>
    %c0_2 = arith.constant 0 : index
    %c0_3 = arith.constant 0 : index
    %c0_4 = arith.constant 0 : index
    %2 = vector.load %arg3[%c0_2, %c0_3, %c0_4] : memref<1x32x64xf32, #tpu.memory_space<vmem>>, vector<1x32x64xf32>
    %3 = vector.shape_cast %2 : vector<1x32x64xf32> to vector<32x64xf32>
    %c0_5 = arith.constant 0 : index
    %c0_6 = arith.constant 0 : index
    %4 = vector.load %arg5[%c0_5, %c0_6] : memref<64x256xf32, #tpu.memory_space<vmem>>, vector<64x256xf32>
    %cst = arith.constant dense<0.000000e+00> : vector<32x256xf32>
    %5 = tpu.matmul %3, %4, %cst {dimension_numbers = #tpu.dot_dimension_numbers<[1], [0], [0], [1], [0, 0, 1, 1], [], []>} : vector<32x64xf32>, vector<64x256xf32>, vector<32x256xf32> -> vector<32x256xf32>
    %c0_7 = arith.constant 0 : index
    %c0_8 = arith.constant 0 : index
    %c0_9 = arith.constant 0 : index
    %6 = vector.load %arg4[%c0_7, %c0_8, %c0_9] : memref<1x32x64xf32, #tpu.memory_space<vmem>>, vector<1x32x64xf32>
    %7 = vector.shape_cast %6 : vector<1x32x64xf32> to vector<32x64xf32>
    %c0_10 = arith.constant 0 : index
    %c0_11 = arith.constant 0 : index
    %8 = vector.load %arg6[%c0_10, %c0_11] : memref<64x256xf32, #tpu.memory_space<vmem>>, vector<64x256xf32>
    %cst_12 = arith.constant dense<0.000000e+00> : vector<32x256xf32>
    %9 = tpu.matmul %7, %8, %cst_12 {dimension_numbers = #tpu.dot_dimension_numbers<[1], [0], [0], [1], [0, 0, 1, 1], [], []>} : vector<32x64xf32>, vector<64x256xf32>, vector<32x256xf32> -> vector<32x256xf32>
    %10 = arith.subf %5, %9 : vector<32x256xf32>
    %c0_13 = arith.constant 0 : index
    %c0_14 = arith.constant 0 : index
    %11 = vector.load %arg7[%c0_13, %c0_14] : memref<32x32xf32, #tpu.memory_space<vmem>>, vector<32x32xf32>
    %cst_15 = arith.constant dense<0.000000e+00> : vector<32x256xf32>
    %12 = tpu.matmul %11, %1, %cst_15 {dimension_numbers = #tpu.dot_dimension_numbers<[1], [0], [0], [1], [0, 0, 1, 1], [], []>} : vector<32x32xf32>, vector<32x256xf32>, vector<32x256xf32> -> vector<32x256xf32>
    %13 = arith.addf %10, %12 : vector<32x256xf32>
    %c0_16 = arith.constant 0 : index
    %c0_17 = arith.constant 0 : index
    %14 = vector.load %arg8[%c0_16, %c0_17] : memref<32x1xf32, #tpu.memory_space<vmem>>, vector<32x1xf32>
    %15 = vector.broadcast %14 : vector<32x1xf32> to vector<32x256xf32>
    %16 = arith.addf %13, %15 : vector<32x256xf32>
    %cst_18 = arith.constant 0.000000e+00 : f32
    %17 = vector.broadcast %cst_18 : f32 to vector<32x256xf32>
    %18 = arith.maximumf %16, %17 : vector<32x256xf32>
    %c0_19 = arith.constant 0 : index
    %c0_20 = arith.constant 0 : index
    %c0_21 = arith.constant 0 : index
    %19 = vector.load %arg9[%c0_19, %c0_20, %c0_21] : memref<1x32x256xf32, #tpu.memory_space<vmem>>, vector<1x32x256xf32>
    %20 = vector.shape_cast %19 : vector<1x32x256xf32> to vector<32x256xf32>
    %21 = vector.shape_cast %18 : vector<32x256xf32> to vector<1x32x256xf32>
    tpu.vector_store %arg9[%c0_19, %c0_20, %c0_21], %21 {strides = array<i32>} : memref<1x32x256xf32, #tpu.memory_space<vmem>>, vector<1x32x256xf32>,
    return
  }
  func.func @transform_0(%arg0: i32, %arg1: i32) -> (i32, i32, i32) {
    %c0_i32 = arith.constant 0 : i32
    %c0_i32_0 = arith.constant 0 : i32
    return %arg0, %c0_i32, %arg1 : i32, i32, i32
  }
  func.func @transform_1(%arg0: i32, %arg1: i32) -> (i32, i32, i32) {
    %c0_i32 = arith.constant 0 : i32
    %c0_i32_0 = arith.constant 0 : i32
    %c0_i32_1 = arith.constant 0 : i32
    return %arg0, %c0_i32, %c0_i32_0 : i32, i32, i32
  }
  func.func @transform_2(%arg0: i32, %arg1: i32) -> (i32, i32, i32) {
    %c0_i32 = arith.constant 0 : i32
    %c0_i32_0 = arith.constant 0 : i32
    %c0_i32_1 = arith.constant 0 : i32
    return %arg0, %c0_i32, %c0_i32_0 : i32, i32, i32
  }
  func.func @transform_3(%arg0: i32, %arg1: i32) -> (i32, i32) {
    %c0_i32 = arith.constant 0 : i32
    %c0_i32_0 = arith.constant 0 : i32
    return %c0_i32, %arg1 : i32, i32
  }
  func.func @transform_4(%arg0: i32, %arg1: i32) -> (i32, i32) {
    %c0_i32 = arith.constant 0 : i32
    %c0_i32_0 = arith.constant 0 : i32
    return %c0_i32, %arg1 : i32, i32
  }
  func.func @transform_5(%arg0: i32, %arg1: i32) -> (i32, i32) {
    %c0_i32 = arith.constant 0 : i32
    %c0_i32_0 = arith.constant 0 : i32
    %c0_i32_1 = arith.constant 0 : i32
    return %c0_i32, %c0_i32_0 : i32, i32
  }
  func.func @transform_6(%arg0: i32, %arg1: i32) -> (i32, i32) {
    %c0_i32 = arith.constant 0 : i32
    %c0_i32_0 = arith.constant 0 : i32
    %c0_i32_1 = arith.constant 0 : i32
    return %c0_i32, %c0_i32_0 : i32, i32
  }
  func.func @transform_7(%arg0: i32, %arg1: i32) -> (i32, i32, i32) {
    %c0_i32 = arith.constant 0 : i32
    %c0_i32_0 = arith.constant 0 : i32
    return %arg0, %c0_i32, %arg1 : i32, i32, i32
  }
}

</mosaic_0001>

<llo_original>
// kernel: fno_block_forward.3
$region0: #{fno_block_forward.3}
  #allocation0 [shape = 'u32[]', space=smem, size = 0x4, offset = 0x4, fixed_abs, tag = 'smem constant byte address 0x4 - core index']
  #allocation1 [shape = 'u32[144,128]{1,0:T(1,128)}', space=vmem, size = 0x12000, scoped, tag = 'internal scratch']
  %s0 = inlined_call_operand.vmem [shape: f32[2,32,256], index: 0, kind: input, shape index: {}]
  %s1 = inlined_call_operand.vmem [shape: f32[2,32,64], index: 1, kind: input, shape index: {}]
  %s2 = inlined_call_operand.vmem [shape: f32[2,32,64], index: 2, kind: input, shape index: {}]
  %s3 = inlined_call_operand.vmem [shape: f32[64,256], index: 3, kind: input, shape index: {}]
  %s4 = inlined_call_operand.vmem [shape: f32[64,256], index: 4, kind: input, shape index: {}]
  %s5 = inlined_call_operand.vmem [shape: f32[32,32], index: 5, kind: input, shape index: {}]
  %s6 = inlined_call_operand.vmem [shape: f32[32,1], index: 6, kind: input, shape index: {}]
  %s7 = inlined_call_operand.vmem [shape: f32[2,32,256], index: 7, kind: output, shape index: {}]
  %s8 = sld [smem:[#allocation0]]
  $region61: #{fno_block_forward.3} parent=0
    _
  %s10 = ssub.s32 1, %s8
  %s11 = scalar_select 0, %s10, %s8
  loop: start=0, step=1, limit=4
  $region2: #{fno_block_forward.3} parent=0 // loop_pre_header
    _
  $region3: #{fno_block_forward.3} parent=0 // loop_header
    %s13 = sphi 0, %s17
    %p14 = scmp.ge.s32.totalorder %s13, 4
    %s20 = sphi 0, %s32
    %s21 = sphi 0, %s28
    %s22 = sphi 0, %s20
    %s23 = sphi 0, %s21
    %s24 = sphi 0, %s22
    %s25 = sphi 0, %s23
    %s37 = sphi 0, %s39
    %s40 = sphi 0, %s37
    %s41 = sphi 0, %s40
    %s57 = sphi 0, %s41
    %s63 = sphi 0, %s65
    %s66 = sphi 0, %s63
    %s67 = sphi 0, %s66
    %s83 = sphi 0, %s67
    %s89 = sphi 0, %s91
    %s92 = sphi 0, %s89
    %s93 = sphi 0, %s92
    %s109 = sphi 0, %s93
    %s115 = sphi 0, %s117
    %s118 = sphi 0, %s115
    %s119 = sphi 0, %s118
    %s135 = sphi 0, %s119
    %s141 = sphi 0, %s143
    %s144 = sphi 0, %s141
    %s145 = sphi 0, %s144
    %s161 = sphi 0, %s145
    %s165 = sphi 0, %s165
    %s167 = sphi 0, %s165
    %s168 = sphi 0, %s167
    %s182 = sphi 0, %s168
    %s186 = sphi 0, %s186
    %s188 = sphi 0, %s186
    %s189 = sphi 0, %s188
    %s203 = sphi 0, %s189
    %s211 = sphi 0, %s213
    %s214 = sphi 0, %s211
    %s215 = sphi 0, %s214
    %s231 = sphi 0, %s215
  $region4: #{fno_block_forward.3} parent=0 // loop_header_branch
    %16 = sbr.rel (%p14) target = $region8
  $region5: #{fno_block_forward.3} parent=0 // loop_body
    %s18 = ssub.s32 %s13, 1
    %s19 = ssub.s32 %s13, 2
    %s26 = sadd.s32 1, %s21
    %p27 = scmp.ge.s32.totalorder %s26, 1
    %s28 = scalar_select %p27, 0, %s26
    %s29 = sadd.s32 1, %s20
    %s30 = scalar_select %p27, %s29, %s20
    %p31 = scmp.ge.s32.totalorder %s30, 2
    %s32 = scalar_select %p31, 0, %s30
    %s33 = ssub.s32 %s20, %s32
    %s34 = ssub.s32 %s21, %s28
    %s35 = sor.u32 %s33, %s34
    %p36 = scmp.eq.s32.totalorder %s35, 0
    %s38 = sadd.s32 %s37, 1
    %s39 = scalar_select %p36, %s37, %s38
    %p42 = pneg %p36
    %p43 = scmp.eq.s32.totalorder %s13, 1
    %p44 = por %p42, %p43
    %p45 = scmp.ne.s32.totalorder %s37, %s40
    %p46 = scmp.eq.s32.totalorder %s13, 0
    %p47 = por %p45, %p46
    %p48 = scmp.ne.s32.totalorder %s37, %s40
    %p49 = scmp.eq.s32.totalorder %s18, 1
    %p50 = por %p48, %p49
    %p51 = scmp.ne.s32.totalorder %s40, %s41
    %p52 = scmp.eq.s32.totalorder %s18, 0
    %p53 = por %p51, %p52
    %p54 = scmp.ne.s32.totalorder %s40, %s41
    %p55 = scmp.eq.s32.totalorder %s19, 1
    %p56 = por %p54, %p55
    %p58 = scmp.ne.s32.totalorder %s41, %s57
    %p59 = scmp.eq.s32.totalorder %s19, 0
    %p60 = por %p58, %p59
    %s61 = ssub.s32 %s20, %s32
    %p62 = scmp.eq.s32.totalorder %s61, 0
    %s64 = sadd.s32 %s63, 1
    %s65 = scalar_select %p62, %s63, %s64
    %p68 = pneg %p62
    %p69 = scmp.eq.s32.totalorder %s13, 1
    %p70 = por %p68, %p69
    %p71 = scmp.ne.s32.totalorder %s63, %s66
    %p72 = scmp.eq.s32.totalorder %s13, 0
    %p73 = por %p71, %p72
    %p74 = scmp.ne.s32.totalorder %s63, %s66
    %p75 = scmp.eq.s32.totalorder %s18, 1
    %p76 = por %p74, %p75
    %p77 = scmp.ne.s32.totalorder %s66, %s67
    %p78 = scmp.eq.s32.totalorder %s18, 0
    %p79 = por %p77, %p78
    %p80 = scmp.ne.s32.totalorder %s66, %s67
    %p81 = scmp.eq.s32.totalorder %s19, 1
    %p82 = por %p80, %p81
    %p84 = scmp.ne.s32.totalorder %s67, %s83
    %p85 = scmp.eq.s32.totalorder %s19, 0
    %p86 = por %p84, %p85
    %s87 = ssub.s32 %s20, %s32
    %p88 = scmp.eq.s32.totalorder %s87, 0
    %s90 = sadd.s32 %s89, 1
    %s91 = scalar_select %p88, %s89, %s90
    %p94 = pneg %p88
    %p95 = scmp.eq.s32.totalorder %s13, 1
    %p96 = por %p94, %p95
    %p97 = scmp.ne.s32.totalorder %s89, %s92
    %p98 = scmp.eq.s32.totalorder %s13, 0
    %p99 = por %p97, %p98
    %p100 = scmp.ne.s32.totalorder %s89, %s92
    %p101 = scmp.eq.s32.totalorder %s18, 1
    %p102 = por %p100, %p101
    %p103 = scmp.ne.s32.totalorder %s92, %s93
    %p104 = scmp.eq.s32.totalorder %s18, 0
    %p105 = por %p103, %p104
    %p106 = scmp.ne.s32.totalorder %s92, %s93
    %p107 = scmp.eq.s32.totalorder %s19, 1
    %p108 = por %p106, %p107
    %p110 = scmp.ne.s32.totalorder %s93, %s109
    %p111 = scmp.eq.s32.totalorder %s19, 0
    %p112 = por %p110, %p111
    %s113 = ssub.s32 %s21, %s28
    %p114 = scmp.eq.s32.totalorder %s113, 0
    %s116 = sadd.s32 %s115, 1
    %s117 = scalar_select %p114, %s115, %s116
    %p120 = pneg %p114
    %p121 = scmp.eq.s32.totalorder %s13, 1
    %p122 = por %p120, %p121
    %p123 = scmp.ne.s32.totalorder %s115, %s118
    %p124 = scmp.eq.s32.totalorder %s13, 0
    %p125 = por %p123, %p124
    %p126 = scmp.ne.s32.totalorder %s115, %s118
    %p127 = scmp.eq.s32.totalorder %s18, 1
    %p128 = por %p126, %p127
    %p129 = scmp.ne.s32.totalorder %s118, %s119
    %p130 = scmp.eq.s32.totalorder %s18, 0
    %p131 = por %p129, %p130
    %p132 = scmp.ne.s32.totalorder %s118, %s119
    %p133 = scmp.eq.s32.totalorder %s19, 1
    %p134 = por %p132, %p133
    %p136 = scmp.ne.s32.totalorder %s119, %s135
    %p137 = scmp.eq.s32.totalorder %s19, 0
    %p138 = por %p136, %p137
    %s139 = ssub.s32 %s21, %s28
    %p140 = scmp.eq.s32.totalorder %s139, 0
    %s142 = sadd.s32 %s141, 1
    %s143 = scalar_select %p140, %s141, %s142
    %p146 = pneg %p140
    %p147 = scmp.eq.s32.totalorder %s13, 1
    %p148 = por %p146, %p147
    %p149 = scmp.ne.s32.totalorder %s141, %s144
    %p150 = scmp.eq.s32.totalorder %s13, 0
    %p151 = por %p149, %p150
    %p152 = scmp.ne.s32.totalorder %s141, %s144
    %p153 = scmp.eq.s32.totalorder %s18, 1
    %p154 = por %p152, %p153
    %p155 = scmp.ne.s32.totalorder %s144, %s145
    %p156 = scmp.eq.s32.totalorder %s18, 0
    %p157 = por %p155, %p156
    %p158 = scmp.ne.s32.totalorder %s144, %s145
    %p159 = scmp.eq.s32.totalorder %s19, 1
    %p160 = por %p158, %p159
    %p162 = scmp.ne.s32.totalorder %s145, %s161
    %p163 = scmp.eq.s32.totalorder %s19, 0
    %p164 = por %p162, %p163
    %s166 = sadd.s32 %s165, 1
    %p169 = scmp.eq.s32.totalorder %s13, 1
    %p170 = scmp.ne.s32.totalorder %s165, %s167
    %p171 = scmp.eq.s32.totalorder %s13, 0
    %p172 = por %p170, %p171
    %p173 = scmp.ne.s32.totalorder %s165, %s167
    %p174 = scmp.eq.s32.totalorder %s18, 1
    %p175 = por %p173, %p174
    %p176 = scmp.ne.s32.totalorder %s167, %s168
    %p177 = scmp.eq.s32.totalorder %s18, 0
    %p178 = por %p176, %p177
    %p179 = scmp.ne.s32.totalorder %s167, %s168
    %p180 = scmp.eq.s32.totalorder %s19, 1
    %p181 = por %p179, %p180
    %p183 = scmp.ne.s32.totalorder %s168, %s182
    %p184 = scmp.eq.s32.totalorder %s19, 0
    %p185 = por %p183, %p184
    %s187 = sadd.s32 %s186, 1
    %p190 = scmp.eq.s32.totalorder %s13, 1
    %p191 = scmp.ne.s32.totalorder %s186, %s188
    %p192 = scmp.eq.s32.totalorder %s13, 0
    %p193 = por %p191, %p192
    %p194 = scmp.ne.s32.totalorder %s186, %s188
    %p195 = scmp.eq.s32.totalorder %s18, 1
    %p196 = por %p194, %p195
    %p197 = scmp.ne.s32.totalorder %s188, %s189
    %p198 = scmp.eq.s32.totalorder %s18, 0
    %p199 = por %p197, %p198
    %p200 = scmp.ne.s32.totalorder %s188, %s189
    %p201 = scmp.eq.s32.totalorder %s19, 1
    %p202 = por %p200, %p201
    %p204 = scmp.ne.s32.totalorder %s189, %s203
    %p205 = scmp.eq.s32.totalorder %s19, 0
    %p206 = por %p204, %p205
    %s207 = ssub.s32 %s20, %s32
    %s208 = ssub.s32 %s21, %s28
    %s209 = sor.u32 %s207, %s208
    %p210 = scmp.eq.s32.totalorder %s209, 0
    %s212 = sadd.s32 %s211, 1
    %s213 = scalar_select %p210, %s211, %s212
    %p216 = pneg %p210
    %p217 = scmp.eq.s32.totalorder %s13, 1
    %p218 = por %p216, %p217
    %p219 = scmp.ne.s32.totalorder %s211, %s214
    %p220 = scmp.eq.s32.totalorder %s13, 0
    %p221 = por %p219, %p220
    %p222 = scmp.ne.s32.totalorder %s211, %s214
    %p223 = scmp.eq.s32.totalorder %s18, 1
    %p224 = por %p222, %p223
    %p225 = scmp.ne.s32.totalorder %s214, %s215
    %p226 = scmp.eq.s32.totalorder %s18, 0
    %p227 = por %p225, %p226
    %p228 = scmp.ne.s32.totalorder %s214, %s215
    %p229 = scmp.eq.s32.totalorder %s19, 1
    %p230 = por %p228, %p229
    %p232 = scmp.ne.s32.totalorder %s215, %s231
    %p233 = scmp.eq.s32.totalorder %s19, 0
    %p234 = por %p232, %p233
    %p235 = scmp.le.s32.totalorder 1, %s13
    %p236 = scmp.lt.s32.totalorder %s13, 3
    %p237 = pnand %p235, %p236
    %p238 = pneg %p237
    // Predicated region
    $region9: #{fno_block_forward.3} parent=5 // pred_check
      _
    $region10: #{fno_block_forward.3} parent=5 // pred_check_branch
      %240 = sbr.rel (%p237) target = $region12
    $region11: #{fno_block_forward.3} parent=5 // pred_region
      %s241 = ssub.s32 %s13, 1
      // Predicated region
      $region13: #{fno_block_forward.3} parent=11 // pred_check
        %p242 = pneg %p131
      $region14: #{fno_block_forward.3} parent=11 // pred_check_branch
        %244 = sbr.rel (%p242) target = $region16
      $region15: #{fno_block_forward.3} parent=11 // pred_region
        %s245 = smul.u32 2, %s23
        %p246 = scmp.lt.s32.totalorder %s245, 1
        %s247 = scalar_select %p246, %s245, 1
        %s248 = smul.addr %s247, 8
        %s249 = scalar_lea.vmem %s3, %s248
        %s250 = smul.u32 2, %s23
      $region16: #{fno_block_forward.3} parent=11 // pred_fallthru
        _
      // Predicated region
      $region17: #{fno_block_forward.3} parent=11 // pred_check
        %p251 = pneg %p157
      $region18: #{fno_block_forward.3} parent=11 // pred_check_branch
        %253 = sbr.rel (%p251) target = $region20
      $region19: #{fno_block_forward.3} parent=11 // pred_region
        %s254 = smul.u32 2, %s23
        %p255 = scmp.lt.s32.totalorder %s254, 1
        %s256 = scalar_select %p255, %s254, 1
        %s257 = smul.addr %s256, 8
        %s258 = scalar_lea.vmem %s4, %s257
        %s259 = smul.u32 2, %s23
      $region20: #{fno_block_forward.3} parent=11 // pred_fallthru
        _
      // Predicated region
      $region21: #{fno_block_forward.3} parent=11 // pred_check
        %p260 = pneg %p178
      $region22: #{fno_block_forward.3} parent=11 // pred_check_branch
        %262 = sbr.rel (%p260) target = $region24
      $region23: #{fno_block_forward.3} parent=11 // pred_region
        _
      $region24: #{fno_block_forward.3} parent=11 // pred_fallthru
        _
      // Predicated region
      $region25: #{fno_block_forward.3} parent=11 // pred_check
        %p263 = pneg %p199
      $region26: #{fno_block_forward.3} parent=11 // pred_check_branch
        %265 = sbr.rel (%p263) target = $region28
      $region27: #{fno_block_forward.3} parent=11 // pred_region
        _
      $region28: #{fno_block_forward.3} parent=11 // pred_fallthru
        _
    $region12: #{fno_block_forward.3} parent=5 // pred_fallthru
      _
    %p266 = scmp.lt.s32.totalorder %s13, 2
    // Predicated region
    $region29: #{fno_block_forward.3} parent=5 // pred_check
      %p267 = pneg %p266
    $region30: #{fno_block_forward.3} parent=5 // pred_check_branch
      %269 = sbr.rel (%p267) target = $region32
    $region31: #{fno_block_forward.3} parent=5 // pred_region
      // Predicated region
      $region33: #{fno_block_forward.3} parent=31 // pred_check
        %p270 = pneg %p47
      $region34: #{fno_block_forward.3} parent=31 // pred_check_branch
        %272 = sbr.rel (%p270) target = $region36
      $region35: #{fno_block_forward.3} parent=31 // pred_region
        %s273 = smul.u32 2, %s21
        %p274 = scmp.lt.s32.totalorder %s20, 1
        %s275 = scalar_select %p274, %s20, 1
        %p276 = scmp.lt.s32.totalorder %s273, 1
        %s277 = scalar_select %p276, %s273, 1
        %s278 = smul.addr %s275, 8
        %s279 = sadd.s32 %s277, %s278
        %s280 = smul.addr %s279, 8
        %s281 = scalar_lea.vmem %s0, %s280
        %s282 = smul.u32 2, %s21
      $region36: #{fno_block_forward.3} parent=31 // pred_fallthru
        _
      // Predicated region
      $region37: #{fno_block_forward.3} parent=31 // pred_check
        %p283 = pneg %p73
      $region38: #{fno_block_forward.3} parent=31 // pred_check_branch
        %285 = sbr.rel (%p283) target = $region40
      $region39: #{fno_block_forward.3} parent=31 // pred_region
        %p286 = scmp.lt.s32.totalorder %s20, 1
        %s287 = scalar_select %p286, %s20, 1
        %s288 = smul.addr %s287, 4
        %s289 = smul.addr %s288, 8
        %s290 = scalar_lea.vmem %s1, %s289
      $region40: #{fno_block_forward.3} parent=31 // pred_fallthru
        _
      // Predicated region
      $region41: #{fno_block_forward.3} parent=31 // pred_check
        %p291 = pneg %p99
      $region42: #{fno_block_forward.3} parent=31 // pred_check_branch
        %293 = sbr.rel (%p291) target = $region44
      $region43: #{fno_block_forward.3} parent=31 // pred_region
        %p294 = scmp.lt.s32.totalorder %s20, 1
        %s295 = scalar_select %p294, %s20, 1
        %s296 = smul.addr %s295, 4
        %s297 = smul.addr %s296, 8
        %s298 = scalar_lea.vmem %s2, %s297
      $region44: #{fno_block_forward.3} parent=31 // pred_fallthru
        _
    $region32: #{fno_block_forward.3} parent=5 // pred_fallthru
      _
    %p299 = scmp.le.s32.totalorder 1, %s13
    %p300 = scmp.lt.s32.totalorder %s13, 3
    %p301 = pnand %p299, %p300
    %p302 = pneg %p301
    // Predicated region
    $region45: #{fno_block_forward.3} parent=5 // pred_check
      _
    $region46: #{fno_block_forward.3} parent=5 // pred_check_branch
      %304 = sbr.rel (%p301) target = $region48
    $region47: #{fno_block_forward.3} parent=5 // pred_region
      %s305 = ssub.s32 %s13, 1
      %s306 = smul.u32 2, %s23
      %p307 = scmp.lt.s32.totalorder %s22, 1
      %s308 = scalar_select %p307, %s22, 1
      %p309 = scmp.lt.s32.totalorder %s306, 1
      %s310 = scalar_select %p309, %s306, 1
      %s311 = smul.addr %s308, 8
      %s312 = sadd.s32 %s310, %s311
      %s313 = smul.addr %s312, 8
      %s314 = scalar_lea.vmem %s0, %s313
      %p315 = pneg %p53
      %p316 = pneg %p50
      %p317 = scmp.lt.s32.totalorder %s22, 1
      %s318 = scalar_select %p317, %s22, 1
      %s319 = smul.addr %s318, 4
      %s320 = smul.addr %s319, 8
      %s321 = scalar_lea.vmem %s1, %s320
      %p322 = pneg %p79
      %p323 = pneg %p76
      %p324 = scmp.lt.s32.totalorder %s22, 1
      %s325 = scalar_select %p324, %s22, 1
      %s326 = smul.addr %s325, 4
      %s327 = smul.addr %s326, 8
      %s328 = scalar_lea.vmem %s2, %s327
      %p329 = pneg %p105
      %p330 = pneg %p102
      %s331 = smul.u32 2, %s23
      %p332 = scmp.lt.s32.totalorder %s331, 1
      %s333 = scalar_select %p332, %s331, 1
      %s334 = smul.addr %s333, 8
      %s335 = scalar_lea.vmem %s3, %s334
      %p336 = pneg %p131
      %p337 = pneg %p128
      %s338 = smul.u32 2, %s23
      %p339 = scmp.lt.s32.totalorder %s338, 1
      %s340 = scalar_select %p339, %s338, 1
      %s341 = smul.addr %s340, 8
      %s342 = scalar_lea.vmem %s4, %s341
      %p343 = pneg %p157
      %p344 = pneg %p154
      %p345 = pneg %p178
      %p346 = pneg %p175
      %p347 = pneg %p199
      %p348 = pneg %p196
      %p349 = pneg %p227
      %p350 = pneg %p224
      %s351 = smul.u32 2, %s23
      %p352 = scmp.lt.s32.totalorder %s22, 1
      %s353 = scalar_select %p352, %s22, 1
      %p354 = scmp.lt.s32.totalorder %s351, 1
      %s355 = scalar_select %p354, %s351, 1
      %s356 = smul.addr %s353, 8
      %s357 = sadd.s32 %s355, %s356
      %s358 = smul.addr %s357, 8
      %s359 = scalar_lea.vmem %s7, %s358
      %s360 = smul.u32 2, %s23
      %p361 = scmp.lt.s32.totalorder %s22, 1
      %s362 = scalar_select %p361, %s22, 1
      %p363 = scmp.lt.s32.totalorder %s360, 1
      %s364 = scalar_select %p363, %s360, 1
      %s365 = smul.addr %s362, 8
      %s366 = sadd.s32 %s364, %s365
      %s367 = smul.addr %s366, 8
      %s368 = scalar_lea.vmem %s0, %s367
      %s369 = smul.u32 2, %s23
      %p370 = scmp.lt.s32.totalorder %s22, 1
      %s371 = scalar_select %p370, %s22, 1
      %s372 = smul.addr %s371, 4
      %s373 = smul.addr %s372, 8
      %s374 = scalar_lea.vmem %s1, %s373
      %p375 = scmp.lt.s32.totalorder %s22, 1
      %s376 = scalar_select %p375, %s22, 1
      %s377 = smul.addr %s376, 4
      %s378 = smul.addr %s377, 8
      %s379 = scalar_lea.vmem %s2, %s378
      %s380 = smul.u32 2, %s23
      %p381 = scmp.lt.s32.totalorder %s380, 1
      %s382 = scalar_select %p381, %s380, 1
      %s383 = smul.addr %s382, 8
      %s384 = scalar_lea.vmem %s3, %s383
      %s385 = smul.u32 2, %s23
      %s386 = smul.u32 2, %s23
      %p387 = scmp.lt.s32.totalorder %s386, 1
      %s388 = scalar_select %p387, %s386, 1
      %s389 = smul.addr %s388, 8
      %s390 = scalar_lea.vmem %s4, %s389
      %s391 = smul.u32 2, %s23
      %s392 = smul.u32 2, %s23
      %p393 = scmp.lt.s32.totalorder %s22, 1
      %s394 = scalar_select %p393, %s22, 1
      %p395 = scmp.lt.s32.totalorder %s392, 1
      %s396 = scalar_select %p395, %s392, 1
      %s397 = smul.addr %s394, 8
      %s398 = sadd.s32 %s396, %s397
      %s399 = smul.addr %s398, 8
      %s400 = scalar_lea.vmem %s7, %s399
      %s401 = smul.u32 2, %s23
      %v402 = vld [vmem:[%s368] sm:$0xff]
      %v403 = vld [vmem:[%s368 + $0x8] sm:$0xff]
      %v404 = vld [vmem:[%s368 + $0x10] sm:$0xff]
      %v405 = vld [vmem:[%s368 + $0x18] sm:$0xff]
      %v406 = vld [vmem:[%s368 + $0x20] sm:$0xff]
      %v407 = vld [vmem:[%s368 + $0x28] sm:$0xff]
      %v408 = vld [vmem:[%s368 + $0x30] sm:$0xff]
      %v409 = vld [vmem:[%s368 + $0x38] sm:$0xff]
      %v410 = vld [vmem:[%s374] sm:$0xff]
      %v411 = vld [vmem:[%s374 + $0x8] sm:$0xff]
      %v412 = vld [vmem:[%s374 + $0x10] sm:$0xff]
      %v413 = vld [vmem:[%s374 + $0x18] sm:$0xff]
      %v414 = vld [vmem:[%s384] sm:$0xff]
      %v415 = vld [vmem:[%s384 + $0x8] sm:$0xff]
      %v416 = vld [vmem:[%s384 + $0x10] sm:$0xff]
      %v417 = vld [vmem:[%s384 + $0x18] sm:$0xff]
      %v418 = vld [vmem:[%s384 + $0x20] sm:$0xff]
      %v419 = vld [vmem:[%s384 + $0x28] sm:$0xff]
      %v420 = vld [vmem:[%s384 + $0x30] sm:$0xff]
      %v421 = vld [vmem:[%s384 + $0x38] sm:$0xff]
      %v422 = vld [vmem:[%s384 + $0x40] sm:$0xff]
      %v423 = vld [vmem:[%s384 + $0x48] sm:$0xff]
      %v424 = vld [vmem:[%s384 + $0x50] sm:$0xff]
      %v425 = vld [vmem:[%s384 + $0x58] sm:$0xff]
      %v426 = vld [vmem:[%s384 + $0x60] sm:$0xff]
      %v427 = vld [vmem:[%s384 + $0x68] sm:$0xff]
      %v428 = vld [vmem:[%s384 + $0x70] sm:$0xff]
      %v429 = vld [vmem:[%s384 + $0x78] sm:$0xff]
      %vm430 = vcmask 523264
      %v432 = vsel %vm430, %v410, 0
      %v435 = vsel %vm430, %v411, 0
      %v438 = vsel %vm430, %v412, 0
      %v441 = vsel %vm430, %v413, 0
      %443 = vmatprep.subr.mxu0 %v415
      %444 = vmatpush1.msra.mxu0 %v414
      %445 = vmatprep.subr.mxu0 %v417
      %446 = vmatpush1.msra.mxu0 %v416
      %447 = vmatprep.subr.mxu0 %v419
      %448 = vmatpush1.msra.mxu0 %v418
      %449 = vmatprep.subr.mxu0 %v421
      %450 = vmatpush1.msra.mxu0 %v420
      %451 = vmatprep.subr.mxu0 %v423
      %452 = vmatpush1.msra.mxu0 %v422
      %453 = vmatprep.subr.mxu0 %v425
      %454 = vmatpush1.msra.mxu0 %v424
      %455 = vmatprep.subr.mxu0 %v427
      %456 = vmatpush1.msra.mxu0 %v426
      %457 = vmatprep.subr.mxu0 %v429
      %458 = vmatpush1.msra.mxu0 %v428
      %459 = vmatprep.subr.mxu0 0.0
      %460 = vmatpush1.msra.mxu0 0.0
      %461 = vmatprep.subr.mxu0 0.0
      %462 = vmatpush1.msra.mxu0 0.0
      %463 = vmatprep.subr.mxu0 0.0
      %464 = vmatpush1.msra.mxu0 0.0
      %465 = vmatprep.subr.mxu0 0.0
      %466 = vmatpush1.msra.mxu0 0.0
      %467 = vmatprep.subr.mxu0 0.0
      %468 = vmatpush1.msra.mxu0 0.0
      %469 = vmatprep.subr.mxu0 0.0
      %470 = vmatpush1.msra.mxu0 0.0
      %471 = vmatprep.subr.mxu0 0.0
      %472 = vmatpush1.msra.mxu0 0.0
      %473 = vmatprep.subr.mxu0 0.0
      %474 = vmatpush1.msra.mxu0 0.0
      %475 = vmatprep.subr.mxu0 0.0
      %476 = vmatpush1.msra.mxu0 0.0
      %477 = vmatprep.subr.mxu0 0.0
      %478 = vmatpush1.msra.mxu0 0.0
      %479 = vmatprep.subr.mxu0 0.0
      %480 = vmatpush1.msra.mxu0 0.0
      %481 = vmatprep.subr.mxu0 0.0
      %482 = vmatpush1.msra.mxu0 0.0
      %483 = vmatprep.subr.mxu0 0.0
      %484 = vmatpush1.msra.mxu0 0.0
      %485 = vmatprep.subr.mxu0 0.0
      %486 = vmatpush1.msra.mxu0 0.0
      %487 = vmatprep.subr.mxu0 0.0
      %488 = vmatpush1.msra.mxu0 0.0
      %489 = vmatprep.subr.mxu0 0.0
      %490 = vmatpush1.msra.mxu0 0.0
      %491 = vmatprep.subr.mxu0 0.0
      %492 = vmatpush1.msra.mxu0 0.0
      %493 = vmatprep.subr.mxu0 0.0
      %494 = vmatpush1.msra.mxu0 0.0
      %495 = vmatprep.subr.mxu0 0.0
      %496 = vmatpush1.msra.mxu0 0.0
      %497 = vmatprep.subr.mxu0 0.0
      %498 = vmatpush1.msra.mxu0 0.0
      %499 = vmatprep.subr.mxu0 0.0
      %500 = vmatpush1.msra.mxu0 0.0
      %501 = vmatprep.subr.mxu0 0.0
      %502 = vmatpush1.msra.mxu0 0.0
      %503 = vmatprep.subr.mxu0 0.0
      %504 = vmatpush1.msra.mxu0 0.0
      %505 = vmatprep.subr.mxu0 0.0
      %506 = vmatpush1.msra.mxu0 0.0
      %507 = vmatprep.mubr.f32.mxu0 0.0
      %508 = vmatmul.mubr.f32.gmra.mrb[0].mxu0 %v432
      %v509 = vpop.f32.mrb[0].mxu0
      %v510 = vadd.f32 0.0, %v509
      %v511 = vpop.f32.mrb[0].mxu0
      %v512 = vadd.f32 0.0, %v511
      %513 = vmatprep.mubr.f32.mxu0 0.0
      %514 = vmatmul.mubr.f32.gmra.mrb[0].mxu0 %v435
      %v515 = vpop.f32.mrb[0].mxu0
      %v516 = vadd.f32 0.0, %v515
      %v517 = vpop.f32.mrb[0].mxu0
      %v518 = vadd.f32 0.0, %v517
      %519 = vmatprep.mubr.f32.mxu0 0.0
      %520 = vmatmul.mubr.f32.gmra.mrb[0].mxu0 %v438
      %v521 = vpop.f32.mrb[0].mxu0
      %v522 = vadd.f32 0.0, %v521
      %v523 = vpop.f32.mrb[0].mxu0
      %v524 = vadd.f32 0.0, %v523
      %525 = vmatprep.mubr.f32.mxu0 0.0
      %526 = vmatmul.mubr.f32.gmra.mrb[0].mxu0 %v441
      %v527 = vpop.f32.mrb[0].mxu0
      %v528 = vadd.f32 0.0, %v527
      %v529 = vpop.f32.mrb[0].mxu0
      %v530 = vadd.f32 0.0, %v529
      %531 = vdwg.mxu0
      %v532 = vld [vmem:[%s379] sm:$0xff]
      %v533 = vld [vmem:[%s379 + $0x8] sm:$0xff]
      %v534 = vld [vmem:[%s379 + $0x10] sm:$0xff]
      %v535 = vld [vmem:[%s379 + $0x18] sm:$0xff]
      %v536 = vld [vmem:[%s390] sm:$0xff]
      %v537 = vld [vmem:[%s390 + $0x8] sm:$0xff]
      %v538 = vld [vmem:[%s390 + $0x10] sm:$0xff]
      %v539 = vld [vmem:[%s390 + $0x18] sm:$0xff]
      %v540 = vld [vmem:[%s390 + $0x20] sm:$0xff]
      %v541 = vld [vmem:[%s390 + $0x28] sm:$0xff]
      %v542 = vld [vmem:[%s390 + $0x30] sm:$0xff]
      %v543 = vld [vmem:[%s390 + $0x38] sm:$0xff]
      %v544 = vld [vmem:[%s390 + $0x40] sm:$0xff]
      %v545 = vld [vmem:[%s390 + $0x48] sm:$0xff]
      %v546 = vld [vmem:[%s390 + $0x50] sm:$0xff]
      %v547 = vld [vmem:[%s390 + $0x58] sm:$0xff]
      %v548 = vld [vmem:[%s390 + $0x60] sm:$0xff]
      %v549 = vld [vmem:[%s390 + $0x68] sm:$0xff]
      %v550 = vld [vmem:[%s390 + $0x70] sm:$0xff]
      %v551 = vld [vmem:[%s390 + $0x78] sm:$0xff]
      %v553 = vsel %vm430, %v532, 0
      %v556 = vsel %vm430, %v533, 0
      %v559 = vsel %vm430, %v534, 0
      %v562 = vsel %vm430, %v535, 0
      %564 = vmatprep.subr.mxu0 %v537
      %565 = vmatpush1.msra.mxu0 %v536
      %566 = vmatprep.subr.mxu0 %v539
      %567 = vmatpush1.msra.mxu0 %v538
      %568 = vmatprep.subr.mxu0 %v541
      %569 = vmatpush1.msra.mxu0 %v540
      %570 = vmatprep.subr.mxu0 %v543
      %571 = vmatpush1.msra.mxu0 %v542
      %572 = vmatprep.subr.mxu0 %v545
      %573 = vmatpush1.msra.mxu0 %v544
      %574 = vmatprep.subr.mxu0 %v547
      %575 = vmatpush1.msra.mxu0 %v546
      %576 = vmatprep.subr.mxu0 %v549
      %577 = vmatpush1.msra.mxu0 %v548
      %578 = vmatprep.subr.mxu0 %v551
      %579 = vmatpush1.msra.mxu0 %v550
      %580 = vmatprep.subr.mxu0 0.0
      %581 = vmatpush1.msra.mxu0 0.0
      %582 = vmatprep.subr.mxu0 0.0
      %583 = vmatpush1.msra.mxu0 0.0
      %584 = vmatprep.subr.mxu0 0.0
      %585 = vmatpush1.msra.mxu0 0.0
      %586 = vmatprep.subr.mxu0 0.0
      %587 = vmatpush1.msra.mxu0 0.0
      %588 = vmatprep.subr.mxu0 0.0
      %589 = vmatpush1.msra.mxu0 0.0
      %590 = vmatprep.subr.mxu0 0.0
      %591 = vmatpush1.msra.mxu0 0.0
      %592 = vmatprep.subr.mxu0 0.0
      %593 = vmatpush1.msra.mxu0 0.0
      %594 = vmatprep.subr.mxu0 0.0
      %595 = vmatpush1.msra.mxu0 0.0
      %596 = vmatprep.subr.mxu0 0.0
      %597 = vmatpush1.msra.mxu0 0.0
      %598 = vmatprep.subr.mxu0 0.0
      %599 = vmatpush1.msra.mxu0 0.0
      %600 = vmatprep.subr.mxu0 0.0
      %601 = vmatpush1.msra.mxu0 0.0
      %602 = vmatprep.subr.mxu0 0.0
      %603 = vmatpush1.msra.mxu0 0.0
      %604 = vmatprep.subr.mxu0 0.0
      %605 = vmatpush1.msra.mxu0 0.0
      %606 = vmatprep.subr.mxu0 0.0
      %607 = vmatpush1.msra.mxu0 0.0
      %608 = vmatprep.subr.mxu0 0.0
      %609 = vmatpush1.msra.mxu0 0.0
      %610 = vmatprep.subr.mxu0 0.0
      %611 = vmatpush1.msra.mxu0 0.0
      %612 = vmatprep.subr.mxu0 0.0
      %613 = vmatpush1.msra.mxu0 0.0
      %614 = vmatprep.subr.mxu0 0.0
      %615 = vmatpush1.msra.mxu0 0.0
      %616 = vmatprep.subr.mxu0 0.0
      %617 = vmatpush1.msra.mxu0 0.0
      %618 = vmatprep.subr.mxu0 0.0
      %619 = vmatpush1.msra.mxu0 0.0
      %620 = vmatprep.subr.mxu0 0.0
      %621 = vmatpush1.msra.mxu0 0.0
      %622 = vmatprep.subr.mxu0 0.0
      %623 = vmatpush1.msra.mxu0 0.0
      %624 = vmatprep.subr.mxu0 0.0
      %625 = vmatpush1.msra.mxu0 0.0
      %626 = vmatprep.subr.mxu0 0.0
      %627 = vmatpush1.msra.mxu0 0.0
      %628 = vmatprep.mubr.f32.mxu0 0.0
      %629 = vmatmul.mubr.f32.gmra.mrb[0].mxu0 %v553
      %v630 = vpop.f32.mrb[0].mxu0
      %v631 = vadd.f32 0.0, %v630
      %v632 = vpop.f32.mrb[0].mxu0
      %v633 = vadd.f32 0.0, %v632
      %634 = vmatprep.mubr.f32.mxu0 0.0
      %635 = vmatmul.mubr.f32.gmra.mrb[0].mxu0 %v556
      %v636 = vpop.f32.mrb[0].mxu0
      %v637 = vadd.f32 0.0, %v636
      %v638 = vpop.f32.mrb[0].mxu0
      %v639 = vadd.f32 0.0, %v638
      %640 = vmatprep.mubr.f32.mxu0 0.0
      %641 = vmatmul.mubr.f32.gmra.mrb[0].mxu0 %v559
      %v642 = vpop.f32.mrb[0].mxu0
      %v643 = vadd.f32 0.0, %v642
      %v644 = vpop.f32.mrb[0].mxu0
      %v645 = vadd.f32 0.0, %v644
      %646 = vmatprep.mubr.f32.mxu0 0.0
      %647 = vmatmul.mubr.f32.gmra.mrb[0].mxu0 %v562
      %v648 = vpop.f32.mrb[0].mxu0
      %v649 = vadd.f32 0.0, %v648
      %v650 = vpop.f32.mrb[0].mxu0
      %v651 = vadd.f32 0.0, %v650
      %652 = vdwg.mxu0
      %v653 = vsub.f32 %v510, %v631
      %v654 = vsub.f32 %v512, %v633
      %v655 = vsub.f32 %v516, %v637
      %v656 = vsub.f32 %v518, %v639
      %v657 = vsub.f32 %v522, %v643
      %v658 = vsub.f32 %v524, %v645
      %v659 = vsub.f32 %v528, %v649
      %v660 = vsub.f32 %v530, %v651
      %v661 = vld [vmem:[%s5] sm:$0xff]
      %v662 = vld [vmem:[%s5 + $0x8] sm:$0xff]
      %v663 = vld [vmem:[%s5 + $0x10] sm:$0xff]
      %v664 = vld [vmem:[%s5 + $0x18] sm:$0xff]
      %vm665 = vcmask 261120
      %v667 = vsel %vm665, %v661, 0
      %v670 = vsel %vm665, %v662, 0
      %v673 = vsel %vm665, %v663, 0
      %v676 = vsel %vm665, %v664, 0
      %678 = vmatprep.subr.mxu0 %v403
      %679 = vmatpush1.msra.mxu0 %v402
      %680 = vmatprep.subr.mxu0 %v405
      %681 = vmatpush1.msra.mxu0 %v404
      %682 = vmatprep.subr.mxu0 %v407
      %683 = vmatpush1.msra.mxu0 %v406
      %684 = vmatprep.subr.mxu0 %v409
      %685 = vmatpush1.msra.mxu0 %v408
      %686 = vmatprep.subr.mxu0 0.0
      %687 = vmatpush1.msra.mxu0 0.0
      %688 = vmatprep.subr.mxu0 0.0
      %689 = vmatpush1.msra.mxu0 0.0
      %690 = vmatprep.subr.mxu0 0.0
      %691 = vmatpush1.msra.mxu0 0.0
      %692 = vmatprep.subr.mxu0 0.0
      %693 = vmatpush1.msra.mxu0 0.0
      %694 = vmatprep.subr.mxu0 0.0
      %695 = vmatpush1.msra.mxu0 0.0
      %696 = vmatprep.subr.mxu0 0.0
      %697 = vmatpush1.msra.mxu0 0.0
      %698 = vmatprep.subr.mxu0 0.0
      %699 = vmatpush1.msra.mxu0 0.0
      %700 = vmatprep.subr.mxu0 0.0
      %701 = vmatpush1.msra.mxu0 0.0
      %702 = vmatprep.subr.mxu0 0.0
      %703 = vmatpush1.msra.mxu0 0.0
      %704 = vmatprep.subr.mxu0 0.0
      %705 = vmatpush1.msra.mxu0 0.0
      %706 = vmatprep.subr.mxu0 0.0
      %707 = vmatpush1.msra.mxu0 0.0
      %708 = vmatprep.subr.mxu0 0.0
      %709 = vmatpush1.msra.mxu0 0.0
      %710 = vmatprep.subr.mxu0 0.0
      %711 = vmatpush1.msra.mxu0 0.0
      %712 = vmatprep.subr.mxu0 0.0
      %713 = vmatpush1.msra.mxu0 0.0
      %714 = vmatprep.subr.mxu0 0.0
      %715 = vmatpush1.msra.mxu0 0.0
      %716 = vmatprep.subr.mxu0 0.0
      %717 = vmatpush1.msra.mxu0 0.0
      %718 = vmatprep.subr.mxu0 0.0
      %719 = vmatpush1.msra.mxu0 0.0
      %720 = vmatprep.subr.mxu0 0.0
      %721 = vmatpush1.msra.mxu0 0.0
      %722 = vmatprep.subr.mxu0 0.0
      %723 = vmatpush1.msra.mxu0 0.0
      %724 = vmatprep.subr.mxu0 0.0
      %725 = vmatpush1.msra.mxu0 0.0
      %726 = vmatprep.subr.mxu0 0.0
      %727 = vmatpush1.msra.mxu0 0.0
      %728 = vmatprep.subr.mxu0 0.0
      %729 = vmatpush1.msra.mxu0 0.0
      %730 = vmatprep.subr.mxu0 0.0
      %731 = vmatpush1.msra.mxu0 0.0
      %732 = vmatprep.subr.mxu0 0.0
      %733 = vmatpush1.msra.mxu0 0.0
      %734 = vmatprep.subr.mxu0 0.0
      %735 = vmatpush1.msra.mxu0 0.0
      %736 = vmatprep.subr.mxu0 0.0
      %737 = vmatpush1.msra.mxu0 0.0
      %738 = vmatprep.subr.mxu0 0.0
      %739 = vmatpush1.msra.mxu0 0.0
      %740 = vmatprep.subr.mxu0 0.0
      %741 = vmatpush1.msra.mxu0 0.0
      %742 = vmatprep.mubr.f32.mxu0 0.0
      %743 = vmatmul.mubr.f32.gmra.mrb[0].mxu0 %v667
      %v744 = vpop.f32.mrb[0].mxu0
      %v745 = vadd.f32 0.0, %v744
      %v746 = vpop.f32.mrb[0].mxu0
      %v747 = vadd.f32 0.0, %v746
      %748 = vmatprep.mubr.f32.mxu0 0.0
      %749 = vmatmul.mubr.f32.gmra.mrb[0].mxu0 %v670
      %v750 = vpop.f32.mrb[0].mxu0
      %v751 = vadd.f32 0.0, %v750
      %v752 = vpop.f32.mrb[0].mxu0
      %v753 = vadd.f32 0.0, %v752
      %754 = vmatprep.mubr.f32.mxu0 0.0
      %755 = vmatmul.mubr.f32.gmra.mrb[0].mxu0 %v673
      %v756 = vpop.f32.mrb[0].mxu0
      %v757 = vadd.f32 0.0, %v756
      %v758 = vpop.f32.mrb[0].mxu0
      %v759 = vadd.f32 0.0, %v758
      %760 = vmatprep.mubr.f32.mxu0 0.0
      %761 = vmatmul.mubr.f32.gmra.mrb[0].mxu0 %v676
      %v762 = vpop.f32.mrb[0].mxu0
      %v763 = vadd.f32 0.0, %v762
      %v764 = vpop.f32.mrb[0].mxu0
      %v765 = vadd.f32 0.0, %v764
      %766 = vdwg.mxu0
      %v767 = vadd.f32 %v653, %v745
      %v768 = vadd.f32 %v654, %v747
      %v769 = vadd.f32 %v655, %v751
      %v770 = vadd.f32 %v656, %v753
      %v771 = vadd.f32 %v657, %v757
      %v772 = vadd.f32 %v658, %v759
      %v773 = vadd.f32 %v659, %v763
      %v774 = vadd.f32 %v660, %v765
      %v775 = vld [vmem:[%s6] sm:$0xff]
      %v776 = vld [vmem:[%s6 + $0x8] sm:$0xff]
      %v777 = vld [vmem:[%s6 + $0x10] sm:$0xff]
      %v778 = vld [vmem:[%s6 + $0x18] sm:$0xff]
      %780 = vset.pattern.permute.xlu0 0
      %781 = vperm.xlu0 %780, %v775
      %v782 = vpop.permute.xlu0 %781
      %785 = vset.pattern.permute.xlu0 0
      %786 = vperm.xlu0 %785, %v776
      %v787 = vpop.permute.xlu0 %786
      %790 = vset.pattern.permute.xlu0 0
      %791 = vperm.xlu0 %790, %v777
      %v792 = vpop.permute.xlu0 %791
      %795 = vset.pattern.permute.xlu0 0
      %796 = vperm.xlu0 %795, %v778
      %v797 = vpop.permute.xlu0 %796
      %v799 = vadd.f32 %v767, %v782
      %v800 = vadd.f32 %v768, %v782
      %v801 = vadd.f32 %v769, %v787
      %v802 = vadd.f32 %v770, %v787
      %v803 = vadd.f32 %v771, %v792
      %v804 = vadd.f32 %v772, %v792
      %v805 = vadd.f32 %v773, %v797
      %v806 = vadd.f32 %v774, %v797
      %v807 = vmax.f32 %v799, 0.0
      %v808 = vmax.f32 %v800, 0.0
      %v809 = vmax.f32 %v801, 0.0
      %v810 = vmax.f32 %v802, 0.0
      %v811 = vmax.f32 %v803, 0.0
      %v812 = vmax.f32 %v804, 0.0
      %v813 = vmax.f32 %v805, 0.0
      %v814 = vmax.f32 %v806, 0.0
      %815 = vst [vmem:[%s400] sm:$0xff] %v807
      %816 = vst [vmem:[%s400 + $0x8] sm:$0xff] %v808
      %817 = vst [vmem:[%s400 + $0x10] sm:$0xff] %v809
      %818 = vst [vmem:[%s400 + $0x18] sm:$0xff] %v810
      %819 = vst [vmem:[%s400 + $0x20] sm:$0xff] %v811
      %820 = vst [vmem:[%s400 + $0x28] sm:$0xff] %v812
      %821 = vst [vmem:[%s400 + $0x30] sm:$0xff] %v813
      %822 = vst [vmem:[%s400 + $0x38] sm:$0xff] %v814
      %s823 = smul.u32 2, %s23
      %p824 = scmp.lt.s32.totalorder %s22, 1
      %s825 = scalar_select %p824, %s22, 1
      %p826 = scmp.lt.s32.totalorder %s823, 1
      %s827 = scalar_select %p826, %s823, 1
      %s828 = smul.addr %s825, 8
      %s829 = sadd.s32 %s827, %s828
      %s830 = smul.addr %s829, 8
      %s831 = scalar_lea.vmem %s7, %s830
      // Predicated region
      $region49: #{fno_block_forward.3} parent=47 // pred_check
        %p832 = pneg %p224
      $region50: #{fno_block_forward.3} parent=47 // pred_check_branch
        %834 = sbr.rel (%p832) target = $region52
      $region51: #{fno_block_forward.3} parent=47 // pred_region
        %s835 = smul.u32 2, %s23
      $region52: #{fno_block_forward.3} parent=47 // pred_fallthru
        _
    $region48: #{fno_block_forward.3} parent=5 // pred_fallthru
      _
    %p836 = scmp.le.s32.totalorder 2, %s13
    // Predicated region
    $region53: #{fno_block_forward.3} parent=5 // pred_check
      %p837 = pneg %p836
    $region54: #{fno_block_forward.3} parent=5 // pred_check_branch
      %839 = sbr.rel (%p837) target = $region56
    $region55: #{fno_block_forward.3} parent=5 // pred_region
      %s840 = ssub.s32 %s13, 2
      // Predicated region
      $region57: #{fno_block_forward.3} parent=55 // pred_check
        %p841 = pneg %p230
      $region58: #{fno_block_forward.3} parent=55 // pred_check_branch
        %843 = sbr.rel (%p841) target = $region60
      $region59: #{fno_block_forward.3} parent=55 // pred_region
        %s844 = smul.u32 2, %s25
        %p845 = scmp.lt.s32.totalorder %s24, 1
        %s846 = scalar_select %p845, %s24, 1
        %p847 = scmp.lt.s32.totalorder %s844, 1
        %s848 = scalar_select %p847, %s844, 1
        %s849 = smul.addr %s846, 8
        %s850 = sadd.s32 %s848, %s849
        %s851 = smul.addr %s850, 8
        %s852 = scalar_lea.vmem %s7, %s851
      $region60: #{fno_block_forward.3} parent=55 // pred_fallthru
        _
    $region56: #{fno_block_forward.3} parent=5 // pred_fallthru
      _
  $region6: #{fno_block_forward.3} parent=0 // loop_footer
    %s17 = sadd.s32 1, %s13
  $region7: #{fno_block_forward.3} parent=0 // loop_footer_branch
    %12 = sbr.rel target = $region3
  $region8: #{fno_block_forward.3} parent=0 // loop_exit
    _

// kernel: fno_block_forward.2
$region0: #{fno_block_forward.2}
  #allocation0 [shape = 'u32[]', space=smem, size = 0x4, offset = 0x4, fixed_abs, tag = 'smem constant byte address 0x4 - core index']
  #allocation1 [shape = 'u32[144,128]{1,0:T(1,128)}', space=vmem, size = 0x12000, scoped, tag = 'internal scratch']
  %s0 = inlined_call_operand.vmem [shape: f32[64,2,32], index: 0, kind: input, shape index: {}]
  %s1 = inlined_call_operand.vmem [shape: f32[64,2,32], index: 1, kind: input, shape index: {}]
  %s2 = inlined_call_operand.vmem [shape: f32[64,32,32], index: 2, kind: input, shape index: {}]
  %s3 = inlined_call_operand.vmem [shape: f32[64,32,32], index: 3, kind: input, shape index: {}]
  %s4 = inlined_call_operand.vmem [shape: f32[64,2,32], index: 4, kind: output, shape index: {0}]
  %s5 = inlined_call_operand.vmem [shape: f32[64,2,32], index: 5, kind: output, shape index: {1}]
  %6 = xla_tuple %s4, %s5
  %s7 = sld [smem:[#allocation0]]
  $region57: #{fno_block_forward.2} parent=0
    _
  %s9 = ssub.s32 1, %s7
  %s10 = scalar_select 0, %s9, %s7
  loop: start=0, step=1, limit=4
  $region2: #{fno_block_forward.2} parent=0 // loop_pre_header
    _
  $region3: #{fno_block_forward.2} parent=0 // loop_header
    %s12 = sphi 0, %s16
    %p13 = scmp.ge.s32.totalorder %s12, 4
    %s22 = sphi 0, %s24
    %s25 = sphi 0, %s22
    %s26 = sphi 0, %s25
    %s42 = sphi 0, %s26
    %s48 = sphi 0, %s50
    %s51 = sphi 0, %s48
    %s52 = sphi 0, %s51
    %s68 = sphi 0, %s52
    %s74 = sphi 0, %s76
    %s77 = sphi 0, %s74
    %s78 = sphi 0, %s77
    %s94 = sphi 0, %s78
    %s100 = sphi 0, %s102
    %s103 = sphi 0, %s100
    %s104 = sphi 0, %s103
    %s120 = sphi 0, %s104
    %s126 = sphi 0, %s128
    %s129 = sphi 0, %s126
    %s130 = sphi 0, %s129
    %s146 = sphi 0, %s130
    %s152 = sphi 0, %s154
    %s155 = sphi 0, %s152
    %s156 = sphi 0, %s155
    %s172 = sphi 0, %s156
  $region4: #{fno_block_forward.2} parent=0 // loop_header_branch
    %15 = sbr.rel (%p13) target = $region8
  $region5: #{fno_block_forward.2} parent=0 // loop_body
    %s17 = ssub.s32 %s12, 1
    %s18 = ssub.s32 %s12, 2
    %s19 = sadd.s32 %s12, 1
    %s20 = ssub.s32 %s12, %s19
    %p21 = scmp.eq.s32.totalorder %s20, 0
    %s23 = sadd.s32 %s22, 1
    %s24 = scalar_select %p21, %s22, %s23
    %p27 = pneg %p21
    %p28 = scmp.eq.s32.totalorder %s12, 1
    %p29 = por %p27, %p28
    %p30 = scmp.ne.s32.totalorder %s22, %s25
    %p31 = scmp.eq.s32.totalorder %s12, 0
    %p32 = por %p30, %p31
    %p33 = scmp.ne.s32.totalorder %s22, %s25
    %p34 = scmp.eq.s32.totalorder %s17, 1
    %p35 = por %p33, %p34
    %p36 = scmp.ne.s32.totalorder %s25, %s26
    %p37 = scmp.eq.s32.totalorder %s17, 0
    %p38 = por %p36, %p37
    %p39 = scmp.ne.s32.totalorder %s25, %s26
    %p40 = scmp.eq.s32.totalorder %s18, 1
    %p41 = por %p39, %p40
    %p43 = scmp.ne.s32.totalorder %s26, %s42
    %p44 = scmp.eq.s32.totalorder %s18, 0
    %p45 = por %p43, %p44
    %s46 = ssub.s32 %s12, %s19
    %p47 = scmp.eq.s32.totalorder %s46, 0
    %s49 = sadd.s32 %s48, 1
    %s50 = scalar_select %p47, %s48, %s49
    %p53 = pneg %p47
    %p54 = scmp.eq.s32.totalorder %s12, 1
    %p55 = por %p53, %p54
    %p56 = scmp.ne.s32.totalorder %s48, %s51
    %p57 = scmp.eq.s32.totalorder %s12, 0
    %p58 = por %p56, %p57
    %p59 = scmp.ne.s32.totalorder %s48, %s51
    %p60 = scmp.eq.s32.totalorder %s17, 1
    %p61 = por %p59, %p60
    %p62 = scmp.ne.s32.totalorder %s51, %s52
    %p63 = scmp.eq.s32.totalorder %s17, 0
    %p64 = por %p62, %p63
    %p65 = scmp.ne.s32.totalorder %s51, %s52
    %p66 = scmp.eq.s32.totalorder %s18, 1
    %p67 = por %p65, %p66
    %p69 = scmp.ne.s32.totalorder %s52, %s68
    %p70 = scmp.eq.s32.totalorder %s18, 0
    %p71 = por %p69, %p70
    %s72 = ssub.s32 %s12, %s19
    %p73 = scmp.eq.s32.totalorder %s72, 0
    %s75 = sadd.s32 %s74, 1
    %s76 = scalar_select %p73, %s74, %s75
    %p79 = pneg %p73
    %p80 = scmp.eq.s32.totalorder %s12, 1
    %p81 = por %p79, %p80
    %p82 = scmp.ne.s32.totalorder %s74, %s77
    %p83 = scmp.eq.s32.totalorder %s12, 0
    %p84 = por %p82, %p83
    %p85 = scmp.ne.s32.totalorder %s74, %s77
    %p86 = scmp.eq.s32.totalorder %s17, 1
    %p87 = por %p85, %p86
    %p88 = scmp.ne.s32.totalorder %s77, %s78
    %p89 = scmp.eq.s32.totalorder %s17, 0
    %p90 = por %p88, %p89
    %p91 = scmp.ne.s32.totalorder %s77, %s78
    %p92 = scmp.eq.s32.totalorder %s18, 1
    %p93 = por %p91, %p92
    %p95 = scmp.ne.s32.totalorder %s78, %s94
    %p96 = scmp.eq.s32.totalorder %s18, 0
    %p97 = por %p95, %p96
    %s98 = ssub.s32 %s12, %s19
    %p99 = scmp.eq.s32.totalorder %s98, 0
    %s101 = sadd.s32 %s100, 1
    %s102 = scalar_select %p99, %s100, %s101
    %p105 = pneg %p99
    %p106 = scmp.eq.s32.totalorder %s12, 1
    %p107 = por %p105, %p106
    %p108 = scmp.ne.s32.totalorder %s100, %s103
    %p109 = scmp.eq.s32.totalorder %s12, 0
    %p110 = por %p108, %p109
    %p111 = scmp.ne.s32.totalorder %s100, %s103
    %p112 = scmp.eq.s32.totalorder %s17, 1
    %p113 = por %p111, %p112
    %p114 = scmp.ne.s32.totalorder %s103, %s104
    %p115 = scmp.eq.s32.totalorder %s17, 0
    %p116 = por %p114, %p115
    %p117 = scmp.ne.s32.totalorder %s103, %s104
    %p118 = scmp.eq.s32.totalorder %s18, 1
    %p119 = por %p117, %p118
    %p121 = scmp.ne.s32.totalorder %s104, %s120
    %p122 = scmp.eq.s32.totalorder %s18, 0
    %p123 = por %p121, %p122
    %s124 = ssub.s32 %s12, %s19
    %p125 = scmp.eq.s32.totalorder %s124, 0
    %s127 = sadd.s32 %s126, 1
    %s128 = scalar_select %p125, %s126, %s127
    %p131 = pneg %p125
    %p132 = scmp.eq.s32.totalorder %s12, 1
    %p133 = por %p131, %p132
    %p134 = scmp.ne.s32.totalorder %s126, %s129
    %p135 = scmp.eq.s32.totalorder %s12, 0
    %p136 = por %p134, %p135
    %p137 = scmp.ne.s32.totalorder %s126, %s129
    %p138 = scmp.eq.s32.totalorder %s17, 1
    %p139 = por %p137, %p138
    %p140 = scmp.ne.s32.totalorder %s129, %s130
    %p141 = scmp.eq.s32.totalorder %s17, 0
    %p142 = por %p140, %p141
    %p143 = scmp.ne.s32.totalorder %s129, %s130
    %p144 = scmp.eq.s32.totalorder %s18, 1
    %p145 = por %p143, %p144
    %p147 = scmp.ne.s32.totalorder %s130, %s146
    %p148 = scmp.eq.s32.totalorder %s18, 0
    %p149 = por %p147, %p148
    %s150 = ssub.s32 %s12, %s19
    %p151 = scmp.eq.s32.totalorder %s150, 0
    %s153 = sadd.s32 %s152, 1
    %s154 = scalar_select %p151, %s152, %s153
    %p157 = pneg %p151
    %p158 = scmp.eq.s32.totalorder %s12, 1
    %p159 = por %p157, %p158
    %p160 = scmp.ne.s32.totalorder %s152, %s155
    %p161 = scmp.eq.s32.totalorder %s12, 0
    %p162 = por %p160, %p161
    %p163 = scmp.ne.s32.totalorder %s152, %s155
    %p164 = scmp.eq.s32.totalorder %s17, 1
    %p165 = por %p163, %p164
    %p166 = scmp.ne.s32.totalorder %s155, %s156
    %p167 = scmp.eq.s32.totalorder %s17, 0
    %p168 = por %p166, %p167
    %p169 = scmp.ne.s32.totalorder %s155, %s156
    %p170 = scmp.eq.s32.totalorder %s18, 1
    %p171 = por %p169, %p170
    %p173 = scmp.ne.s32.totalorder %s156, %s172
    %p174 = scmp.eq.s32.totalorder %s18, 0
    %p175 = por %p173, %p174
    %p176 = scmp.le.s32.totalorder 1, %s12
    %p177 = scmp.lt.s32.totalorder %s12, 3
    %p178 = pnand %p176, %p177
    %p179 = pneg %p178
    // Predicated region
    $region9: #{fno_block_forward.2} parent=5 // pred_check
      _
    $region10: #{fno_block_forward.2} parent=5 // pred_check_branch
      %181 = sbr.rel (%p178) target = $region12
    $region11: #{fno_block_forward.2} parent=5 // pred_region
      %s182 = ssub.s32 %s12, 1
    $region12: #{fno_block_forward.2} parent=5 // pred_fallthru
      _
    %p183 = scmp.lt.s32.totalorder %s12, 2
    // Predicated region
    $region13: #{fno_block_forward.2} parent=5 // pred_check
      %p184 = pneg %p183
    $region14: #{fno_block_forward.2} parent=5 // pred_check_branch
      %186 = sbr.rel (%p184) target = $region16
    $region15: #{fno_block_forward.2} parent=5 // pred_region
      // Predicated region
      $region17: #{fno_block_forward.2} parent=15 // pred_check
        %p187 = pneg %p32
      $region18: #{fno_block_forward.2} parent=15 // pred_check_branch
        %189 = sbr.rel (%p187) target = $region20
      $region19: #{fno_block_forward.2} parent=15 // pred_region
        %s190 = smul.u32 32, %s12
        %p191 = scmp.lt.s32.totalorder %s190, 63
        %s192 = scalar_select %p191, %s190, 63
        %s193 = smul.addr %s192, 2
        %s194 = scalar_lea.vmem %s0, %s193
        %s195 = smul.u32 32, %s12
      $region20: #{fno_block_forward.2} parent=15 // pred_fallthru
        _
      // Predicated region
      $region21: #{fno_block_forward.2} parent=15 // pred_check
        %p196 = pneg %p58
      $region22: #{fno_block_forward.2} parent=15 // pred_check_branch
        %198 = sbr.rel (%p196) target = $region24
      $region23: #{fno_block_forward.2} parent=15 // pred_region
        %s199 = smul.u32 32, %s12
        %p200 = scmp.lt.s32.totalorder %s199, 63
        %s201 = scalar_select %p200, %s199, 63
        %s202 = smul.addr %s201, 2
        %s203 = scalar_lea.vmem %s1, %s202
        %s204 = smul.u32 32, %s12
      $region24: #{fno_block_forward.2} parent=15 // pred_fallthru
        _
      // Predicated region
      $region25: #{fno_block_forward.2} parent=15 // pred_check
        %p205 = pneg %p84
      $region26: #{fno_block_forward.2} parent=15 // pred_check_branch
        %207 = sbr.rel (%p205) target = $region28
      $region27: #{fno_block_forward.2} parent=15 // pred_region
        %s208 = smul.u32 32, %s12
        %p209 = scmp.lt.s32.totalorder %s208, 63
        %s210 = scalar_select %p209, %s208, 63
        %s211 = smul.addr %s210, 4
        %s212 = smul.addr %s211, 8
        %s213 = scalar_lea.vmem %s2, %s212
        %s214 = smul.u32 32, %s12
      $region28: #{fno_block_forward.2} parent=15 // pred_fallthru
        _
      // Predicated region
      $region29: #{fno_block_forward.2} parent=15 // pred_check
        %p215 = pneg %p110
      $region30: #{fno_block_forward.2} parent=15 // pred_check_branch
        %217 = sbr.rel (%p215) target = $region32
      $region31: #{fno_block_forward.2} parent=15 // pred_region
        %s218 = smul.u32 32, %s12
        %p219 = scmp.lt.s32.totalorder %s218, 63
        %s220 = scalar_select %p219, %s218, 63
        %s221 = smul.addr %s220, 4
        %s222 = smul.addr %s221, 8
        %s223 = scalar_lea.vmem %s3, %s222
        %s224 = smul.u32 32, %s12
      $region32: #{fno_block_forward.2} parent=15 // pred_fallthru
        _
    $region16: #{fno_block_forward.2} parent=5 // pred_fallthru
      _
    %p225 = scmp.le.s32.totalorder 1, %s12
    %p226 = scmp.lt.s32.totalorder %s12, 3
    %p227 = pnand %p225, %p226
    %p228 = pneg %p227
    // Predicated region
    $region33: #{fno_block_forward.2} parent=5 // pred_check
      _
    $region34: #{fno_block_forward.2} parent=5 // pred_check_branch
      %230 = sbr.rel (%p227) target = $region36
    $region35: #{fno_block_forward.2} parent=5 // pred_region
      %s231 = ssub.s32 %s12, 1
      %s232 = smul.u32 32, %s17
      %p233 = scmp.lt.s32.totalorder %s232, 63
      %s234 = scalar_select %p233, %s232, 63
      %s235 = smul.addr %s234, 2
      %s236 = scalar_lea.vmem %s0, %s235
      %p237 = pneg %p38
      %p238 = pneg %p35
      %s239 = smul.u32 32, %s17
      %p240 = scmp.lt.s32.totalorder %s239, 63
      %s241 = scalar_select %p240, %s239, 63
      %s242 = smul.addr %s241, 2
      %s243 = scalar_lea.vmem %s1, %s242
      %p244 = pneg %p64
      %p245 = pneg %p61
      %s246 = smul.u32 32, %s17
      %p247 = scmp.lt.s32.totalorder %s246, 63
      %s248 = scalar_select %p247, %s246, 63
      %s249 = smul.addr %s248, 4
      %s250 = smul.addr %s249, 8
      %s251 = scalar_lea.vmem %s2, %s250
      %p252 = pneg %p90
      %p253 = pneg %p87
      %s254 = smul.u32 32, %s17
      %p255 = scmp.lt.s32.totalorder %s254, 63
      %s256 = scalar_select %p255, %s254, 63
      %s257 = smul.addr %s256, 4
      %s258 = smul.addr %s257, 8
      %s259 = scalar_lea.vmem %s3, %s258
      %p260 = pneg %p116
      %p261 = pneg %p113
      %p262 = pneg %p142
      %p263 = pneg %p139
      %s264 = smul.u32 32, %s17
      %p265 = scmp.lt.s32.totalorder %s264, 63
      %s266 = scalar_select %p265, %s264, 63
      %s267 = smul.addr %s266, 2
      %s268 = scalar_lea.vmem %s4, %s267
      %p269 = pneg %p168
      %p270 = pneg %p165
      %s271 = smul.u32 32, %s17
      %p272 = scmp.lt.s32.totalorder %s271, 63
      %s273 = scalar_select %p272, %s271, 63
      %s274 = smul.addr %s273, 2
      %s275 = scalar_lea.vmem %s5, %s274
      %s276 = smul.u32 32, %s17
      %p277 = scmp.lt.s32.totalorder %s276, 63
      %s278 = scalar_select %p277, %s276, 63
      %s279 = smul.addr %s278, 2
      %s280 = scalar_lea.vmem %s0, %s279
      %s281 = smul.u32 32, %s17
      %s282 = smul.u32 32, %s17
      %p283 = scmp.lt.s32.totalorder %s282, 63
      %s284 = scalar_select %p283, %s282, 63
      %s285 = smul.addr %s284, 2
      %s286 = scalar_lea.vmem %s1, %s285
      %s287 = smul.u32 32, %s17
      %s288 = smul.u32 32, %s17
      %p289 = scmp.lt.s32.totalorder %s288, 63
      %s290 = scalar_select %p289, %s288, 63
      %s291 = smul.addr %s290, 4
      %s292 = smul.addr %s291, 8
      %s293 = scalar_lea.vmem %s2, %s292
      %s294 = smul.u32 32, %s17
      %s295 = smul.u32 32, %s17
      %p296 = scmp.lt.s32.totalorder %s295, 63
      %s297 = scalar_select %p296, %s295, 63
      %s298 = smul.addr %s297, 4
      %s299 = smul.addr %s298, 8
      %s300 = scalar_lea.vmem %s3, %s299
      %s301 = smul.u32 32, %s17
      %s302 = smul.u32 32, %s17
      %p303 = scmp.lt.s32.totalorder %s302, 63
      %s304 = scalar_select %p303, %s302, 63
      %s305 = smul.addr %s304, 2
      %s306 = scalar_lea.vmem %s4, %s305
      %s307 = smul.u32 32, %s17
      %s308 = smul.u32 32, %s17
      %p309 = scmp.lt.s32.totalorder %s308, 63
      %s310 = scalar_select %p309, %s308, 63
      %s311 = smul.addr %s310, 2
      %s312 = scalar_lea.vmem %s5, %s311
      %s313 = smul.u32 32, %s17
      %v314 = vld [vmem:[%s280] sm:$0x3]
      %v315 = vld [vmem:[%s280 + $0x2] sm:$0x3]
      %v316 = vld [vmem:[%s280 + $0x4] sm:$0x3]
      %v317 = vld [vmem:[%s280 + $0x6] sm:$0x3]
      %v318 = vld [vmem:[%s280 + $0x8] sm:$0x3]
      %v319 = vld [vmem:[%s280 + $0xa] sm:$0x3]
      %v320 = vld [vmem:[%s280 + $0xc] sm:$0x3]
      %v321 = vld [vmem:[%s280 + $0xe] sm:$0x3]
      %v322 = vld [vmem:[%s280 + $0x10] sm:$0x3]
      %v323 = vld [vmem:[%s280 + $0x12] sm:$0x3]
      %v324 = vld [vmem:[%s280 + $0x14] sm:$0x3]
      %v325 = vld [vmem:[%s280 + $0x16] sm:$0x3]
      %v326 = vld [vmem:[%s280 + $0x18] sm:$0x3]
      %v327 = vld [vmem:[%s280 + $0x1a] sm:$0x3]
      %v328 = vld [vmem:[%s280 + $0x1c] sm:$0x3]
      %v329 = vld [vmem:[%s280 + $0x1e] sm:$0x3]
      %v330 = vld [vmem:[%s280 + $0x20] sm:$0x3]
      %v331 = vld [vmem:[%s280 + $0x22] sm:$0x3]
      %v332 = vld [vmem:[%s280 + $0x24] sm:$0x3]
      %v333 = vld [vmem:[%s280 + $0x26] sm:$0x3]
      %v334 = vld [vmem:[%s280 + $0x28] sm:$0x3]
      %v335 = vld [vmem:[%s280 + $0x2a] sm:$0x3]
      %v336 = vld [vmem:[%s280 + $0x2c] sm:$0x3]
      %v337 = vld [vmem:[%s280 + $0x2e] sm:$0x3]
      %v338 = vld [vmem:[%s280 + $0x30] sm:$0x3]
      %v339 = vld [vmem:[%s280 + $0x32] sm:$0x3]
      %v340 = vld [vmem:[%s280 + $0x34] sm:$0x3]
      %v341 = vld [vmem:[%s280 + $0x36] sm:$0x3]
      %v342 = vld [vmem:[%s280 + $0x38] sm:$0x3]
      %v343 = vld [vmem:[%s280 + $0x3a] sm:$0x3]
      %v344 = vld [vmem:[%s280 + $0x3c] sm:$0x3]
      %v345 = vld [vmem:[%s280 + $0x3e] sm:$0x3]
      %v346 = vld [vmem:[%s286] sm:$0x3]
      %v347 = vld [vmem:[%s286 + $0x2] sm:$0x3]
      %v348 = vld [vmem:[%s286 + $0x4] sm:$0x3]
      %v349 = vld [vmem:[%s286 + $0x6] sm:$0x3]
      %v350 = vld [vmem:[%s286 + $0x8] sm:$0x3]
      %v351 = vld [vmem:[%s286 + $0xa] sm:$0x3]
      %v352 = vld [vmem:[%s286 + $0xc] sm:$0x3]
      %v353 = vld [vmem:[%s286 + $0xe] sm:$0x3]
      %v354 = vld [vmem:[%s286 + $0x10] sm:$0x3]
      %v355 = vld [vmem:[%s286 + $0x12] sm:$0x3]
      %v356 = vld [vmem:[%s286 + $0x14] sm:$0x3]
      %v357 = vld [vmem:[%s286 + $0x16] sm:$0x3]
      %v358 = vld [vmem:[%s286 + $0x18] sm:$0x3]
      %v359 = vld [vmem:[%s286 + $0x1a] sm:$0x3]
      %v360 = vld [vmem:[%s286 + $0x1c] sm:$0x3]
      %v361 = vld [vmem:[%s286 + $0x1e] sm:$0x3]
      %v362 = vld [vmem:[%s286 + $0x20] sm:$0x3]
      %v363 = vld [vmem:[%s286 + $0x22] sm:$0x3]
      %v364 = vld [vmem:[%s286 + $0x24] sm:$0x3]
      %v365 = vld [vmem:[%s286 + $0x26] sm:$0x3]
      %v366 = vld [vmem:[%s286 + $0x28] sm:$0x3]
      %v367 = vld [vmem:[%s286 + $0x2a] sm:$0x3]
      %v368 = vld [vmem:[%s286 + $0x2c] sm:$0x3]
      %v369 = vld [vmem:[%s286 + $0x2e] sm:$0x3]
      %v370 = vld [vmem:[%s286 + $0x30] sm:$0x3]
      %v371 = vld [vmem:[%s286 + $0x32] sm:$0x3]
      %v372 = vld [vmem:[%s286 + $0x34] sm:$0x3]
      %v373 = vld [vmem:[%s286 + $0x36] sm:$0x3]
      %v374 = vld [vmem:[%s286 + $0x38] sm:$0x3]
      %v375 = vld [vmem:[%s286 + $0x3a] sm:$0x3]
      %v376 = vld [vmem:[%s286 + $0x3c] sm:$0x3]
      %v377 = vld [vmem:[%s286 + $0x3e] sm:$0x3]
      %v378 = vld [vmem:[%s293] sm:$0xff]
      %v379 = vld [vmem:[%s293 + $0x8] sm:$0xff]
      %v380 = vld [vmem:[%s293 + $0x10] sm:$0xff]
      %v381 = vld [vmem:[%s293 + $0x18] sm:$0xff]
      %v382 = vld [vmem:[%s293 + $0x20] sm:$0xff]
      %v383 = vld [vmem:[%s293 + $0x28] sm:$0xff]
      %v384 = vld [vmem:[%s293 + $0x30] sm:$0xff]
      %v385 = vld [vmem:[%s293 + $0x38] sm:$0xff]
      %v386 = vld [vmem:[%s293 + $0x40] sm:$0xff]
      %v387 = vld [vmem:[%s293 + $0x48] sm:$0xff]
      %v388 = vld [vmem:[%s293 + $0x50] sm:$0xff]
      %v389 = vld [vmem:[%s293 + $0x58] sm:$0xff]
      %v390 = vld [vmem:[%s293 + $0x60] sm:$0xff]
      %v391 = vld [vmem:[%s293 + $0x68] sm:$0xff]
      %v392 = vld [vmem:[%s293 + $0x70] sm:$0xff]
      %v393 = vld [vmem:[%s293 + $0x78] sm:$0xff]
      %v394 = vld [vmem:[%s293 + $0x80] sm:$0xff]
      %v395 = vld [vmem:[%s293 + $0x88] sm:$0xff]
      %v396 = vld [vmem:[%s293 + $0x90] sm:$0xff]
      %v397 = vld [vmem:[%s293 + $0x98] sm:$0xff]
      %v398 = vld [vmem:[%s293 + $0xa0] sm:$0xff]
      %v399 = vld [vmem:[%s293 + $0xa8] sm:$0xff]
      %v400 = vld [vmem:[%s293 + $0xb0] sm:$0xff]
      %v401 = vld [vmem:[%s293 + $0xb8] sm:$0xff]
      %v402 = vld [vmem:[%s293 + $0xc0] sm:$0xff]
      %v403 = vld [vmem:[%s293 + $0xc8] sm:$0xff]
      %v404 = vld [vmem:[%s293 + $0xd0] sm:$0xff]
      %v405 = vld [vmem:[%s293 + $0xd8] sm:$0xff]
      %v406 = vld [vmem:[%s293 + $0xe0] sm:$0xff]
      %v407 = vld [vmem:[%s293 + $0xe8] sm:$0xff]
      %v408 = vld [vmem:[%s293 + $0xf0] sm:$0xff]
      %v409 = vld [vmem:[%s293 + $0xf8] sm:$0xff]
      %v410 = vld [vmem:[%s293 + $0x100] sm:$0xff]
      %v411 = vld [vmem:[%s293 + $0x108] sm:$0xff]
      %v412 = vld [vmem:[%s293 + $0x110] sm:$0xff]
      %v413 = vld [vmem:[%s293 + $0x118] sm:$0xff]
      %v414 = vld [vmem:[%s293 + $0x120] sm:$0xff]
      %v415 = vld [vmem:[%s293 + $0x128] sm:$0xff]
      %v416 = vld [vmem:[%s293 + $0x130] sm:$0xff]
      %v417 = vld [vmem:[%s293 + $0x138] sm:$0xff]
      %v418 = vld [vmem:[%s293 + $0x140] sm:$0xff]
      %v419 = vld [vmem:[%s293 + $0x148] sm:$0xff]
      %v420 = vld [vmem:[%s293 + $0x150] sm:$0xff]
      %v421 = vld [vmem:[%s293 + $0x158] sm:$0xff]
      %v422 = vld [vmem:[%s293 + $0x160] sm:$0xff]
      %v423 = vld [vmem:[%s293 + $0x168] sm:$0xff]
      %v424 = vld [vmem:[%s293 + $0x170] sm:$0xff]
      %v425 = vld [vmem:[%s293 + $0x178] sm:$0xff]
      %v426 = vld [vmem:[%s293 + $0x180] sm:$0xff]
      %v427 = vld [vmem:[%s293 + $0x188] sm:$0xff]
      %v428 = vld [vmem:[%s293 + $0x190] sm:$0xff]
      %v429 = vld [vmem:[%s293 + $0x198] sm:$0xff]
      %v430 = vld [vmem:[%s293 + $0x1a0] sm:$0xff]
      %v431 = vld [vmem:[%s293 + $0x1a8] sm:$0xff]
      %v432 = vld [vmem:[%s293 + $0x1b0] sm:$0xff]
      %v433 = vld [vmem:[%s293 + $0x1b8] sm:$0xff]
      %v434 = vld [vmem:[%s293 + $0x1c0] sm:$0xff]
      %v435 = vld [vmem:[%s293 + $0x1c8] sm:$0xff]
      %v436 = vld [vmem:[%s293 + $0x1d0] sm:$0xff]
      %v437 = vld [vmem:[%s293 + $0x1d8] sm:$0xff]
      %v438 = vld [vmem:[%s293 + $0x1e0] sm:$0xff]
      %v439 = vld [vmem:[%s293 + $0x1e8] sm:$0xff]
      %v440 = vld [vmem:[%s293 + $0x1f0] sm:$0xff]
      %v441 = vld [vmem:[%s293 + $0x1f8] sm:$0xff]
      %v442 = vld [vmem:[%s293 + $0x200] sm:$0xff]
      %v443 = vld [vmem:[%s293 + $0x208] sm:$0xff]
      %v444 = vld [vmem:[%s293 + $0x210] sm:$0xff]
      %v445 = vld [vmem:[%s293 + $0x218] sm:$0xff]
      %v446 = vld [vmem:[%s293 + $0x220] sm:$0xff]
      %v447 = vld [vmem:[%s293 + $0x228] sm:$0xff]
      %v448 = vld [vmem:[%s293 + $0x230] sm:$0xff]
      %v449 = vld [vmem:[%s293 + $0x238] sm:$0xff]
      %v450 = vld [vmem:[%s293 + $0x240] sm:$0xff]
      %v451 = vld [vmem:[%s293 + $0x248] sm:$0xff]
      %v452 = vld [vmem:[%s293 + $0x250] sm:$0xff]
      %v453 = vld [vmem:[%s293 + $0x258] sm:$0xff]
      %v454 = vld [vmem:[%s293 + $0x260] sm:$0xff]
      %v455 = vld [vmem:[%s293 + $0x268] sm:$0xff]
      %v456 = vld [vmem:[%s293 + $0x270] sm:$0xff]
      %v457 = vld [vmem:[%s293 + $0x278] sm:$0xff]
      %v458 = vld [vmem:[%s293 + $0x280] sm:$0xff]
      %v459 = vld [vmem:[%s293 + $0x288] sm:$0xff]
      %v460 = vld [vmem:[%s293 + $0x290] sm:$0xff]
      %v461 = vld [vmem:[%s293 + $0x298] sm:$0xff]
      %v462 = vld [vmem:[%s293 + $0x2a0] sm:$0xff]
      %v463 = vld [vmem:[%s293 + $0x2a8] sm:$0xff]
      %v464 = vld [vmem:[%s293 + $0x2b0] sm:$0xff]
      %v465 = vld [vmem:[%s293 + $0x2b8] sm:$0xff]
      %v466 = vld [vmem:[%s293 + $0x2c0] sm:$0xff]
      %v467 = vld [vmem:[%s293 + $0x2c8] sm:$0xff]
      %v468 = vld [vmem:[%s293 + $0x2d0] sm:$0xff]
      %v469 = vld [vmem:[%s293 + $0x2d8] sm:$0xff]
      %v470 = vld [vmem:[%s293 + $0x2e0] sm:$0xff]
      %v471 = vld [vmem:[%s293 + $0x2e8] sm:$0xff]
      %v472 = vld [vmem:[%s293 + $0x2f0] sm:$0xff]
      %v473 = vld [vmem:[%s293 + $0x2f8] sm:$0xff]
      %v474 = vld [vmem:[%s293 + $0x300] sm:$0xff]
      %v475 = vld [vmem:[%s293 + $0x308] sm:$0xff]
      %v476 = vld [vmem:[%s293 + $0x310] sm:$0xff]
      %v477 = vld [vmem:[%s293 + $0x318] sm:$0xff]
      %v478 = vld [vmem:[%s293 + $0x320] sm:$0xff]
      %v479 = vld [vmem:[%s293 + $0x328] sm:$0xff]
      %v480 = vld [vmem:[%s293 + $0x330] sm:$0xff]
      %v481 = vld [vmem:[%s293 + $0x338] sm:$0xff]
      %v482 = vld [vmem:[%s293 + $0x340] sm:$0xff]
      %v483 = vld [vmem:[%s293 + $0x348] sm:$0xff]
      %v484 = vld [vmem:[%s293 + $0x350] sm:$0xff]
      %v485 = vld [vmem:[%s293 + $0x358] sm:$0xff]
      %v486 = vld [vmem:[%s293 + $0x360] sm:$0xff]
      %v487 = vld [vmem:[%s293 + $0x368] sm:$0xff]
      %v488 = vld [vmem:[%s293 + $0x370] sm:$0xff]
      %v489 = vld [vmem:[%s293 + $0x378] sm:$0xff]
      %v490 = vld [vmem:[%s293 + $0x380] sm:$0xff]
      %v491 = vld [vmem:[%s293 + $0x388] sm:$0xff]
      %v492 = vld [vmem:[%s293 + $0x390] sm:$0xff]
      %v493 = vld [vmem:[%s293 + $0x398] sm:$0xff]
      %v494 = vld [vmem:[%s293 + $0x3a0] sm:$0xff]
      %v495 = vld [vmem:[%s293 + $0x3a8] sm:$0xff]
      %v496 = vld [vmem:[%s293 + $0x3b0] sm:$0xff]
      %v497 = vld [vmem:[%s293 + $0x3b8] sm:$0xff]
      %v498 = vld [vmem:[%s293 + $0x3c0] sm:$0xff]
      %v499 = vld [vmem:[%s293 + $0x3c8] sm:$0xff]
      %v500 = vld [vmem:[%s293 + $0x3d0] sm:$0xff]
      %v501 = vld [vmem:[%s293 + $0x3d8] sm:$0xff]
      %v502 = vld [vmem:[%s293 + $0x3e0] sm:$0xff]
      %v503 = vld [vmem:[%s293 + $0x3e8] sm:$0xff]
      %v504 = vld [vmem:[%s293 + $0x3f0] sm:$0xff]
      %v505 = vld [vmem:[%s293 + $0x3f8] sm:$0xff]
      %v506 = vld [vmem:[%s300] sm:$0xff]
      %v507 = vld [vmem:[%s300 + $0x8] sm:$0xff]
      %v508 = vld [vmem:[%s300 + $0x10] sm:$0xff]
      %v509 = vld [vmem:[%s300 + $0x18] sm:$0xff]
      %v510 = vld [vmem:[%s300 + $0x20] sm:$0xff]
      %v511 = vld [vmem:[%s300 + $0x28] sm:$0xff]
      %v512 = vld [vmem:[%s300 + $0x30] sm:$0xff]
      %v513 = vld [vmem:[%s300 + $0x38] sm:$0xff]
      %v514 = vld [vmem:[%s300 + $0x40] sm:$0xff]
      %v515 = vld [vmem:[%s300 + $0x48] sm:$0xff]
      %v516 = vld [vmem:[%s300 + $0x50] sm:$0xff]
      %v517 = vld [vmem:[%s300 + $0x58] sm:$0xff]
      %v518 = vld [vmem:[%s300 + $0x60] sm:$0xff]
      %v519 = vld [vmem:[%s300 + $0x68] sm:$0xff]
      %v520 = vld [vmem:[%s300 + $0x70] sm:$0xff]
      %v521 = vld [vmem:[%s300 + $0x78] sm:$0xff]
      %v522 = vld [vmem:[%s300 + $0x80] sm:$0xff]
      %v523 = vld [vmem:[%s300 + $0x88] sm:$0xff]
      %v524 = vld [vmem:[%s300 + $0x90] sm:$0xff]
      %v525 = vld [vmem:[%s300 + $0x98] sm:$0xff]
      %v526 = vld [vmem:[%s300 + $0xa0] sm:$0xff]
      %v527 = vld [vmem:[%s300 + $0xa8] sm:$0xff]
      %v528 = vld [vmem:[%s300 + $0xb0] sm:$0xff]
      %v529 = vld [vmem:[%s300 + $0xb8] sm:$0xff]
      %v530 = vld [vmem:[%s300 + $0xc0] sm:$0xff]
      %v531 = vld [vmem:[%s300 + $0xc8] sm:$0xff]
      %v532 = vld [vmem:[%s300 + $0xd0] sm:$0xff]
      %v533 = vld [vmem:[%s300 + $0xd8] sm:$0xff]
      %v534 = vld [vmem:[%s300 + $0xe0] sm:$0xff]
      %v535 = vld [vmem:[%s300 + $0xe8] sm:$0xff]
      %v536 = vld [vmem:[%s300 + $0xf0] sm:$0xff]
      %v537 = vld [vmem:[%s300 + $0xf8] sm:$0xff]
      %v538 = vld [vmem:[%s300 + $0x100] sm:$0xff]
      %v539 = vld [vmem:[%s300 + $0x108] sm:$0xff]
      %v540 = vld [vmem:[%s300 + $0x110] sm:$0xff]
      %v541 = vld [vmem:[%s300 + $0x118] sm:$0xff]
      %v542 = vld [vmem:[%s300 + $0x120] sm:$0xff]
      %v543 = vld [vmem:[%s300 + $0x128] sm:$0xff]
      %v544 = vld [vmem:[%s300 + $0x130] sm:$0xff]
      %v545 = vld [vmem:[%s300 + $0x138] sm:$0xff]
      %v546 = vld [vmem:[%s300 + $0x140] sm:$0xff]
      %v547 = vld [vmem:[%s300 + $0x148] sm:$0xff]
      %v548 = vld [vmem:[%s300 + $0x150] sm:$0xff]
      %v549 = vld [vmem:[%s300 + $0x158] sm:$0xff]
      %v550 = vld [vmem:[%s300 + $0x160] sm:$0xff]
      %v551 = vld [vmem:[%s300 + $0x168] sm:$0xff]
      %v552 = vld [vmem:[%s300 + $0x170] sm:$0xff]
      %v553 = vld [vmem:[%s300 + $0x178] sm:$0xff]
      %v554 = vld [vmem:[%s300 + $0x180] sm:$0xff]
      %v555 = vld [vmem:[%s300 + $0x188] sm:$0xff]
      %v556 = vld [vmem:[%s300 + $0x190] sm:$0xff]
      %v557 = vld [vmem:[%s300 + $0x198] sm:$0xff]
      %v558 = vld [vmem:[%s300 + $0x1a0] sm:$0xff]
      %v559 = vld [vmem:[%s300 + $0x1a8] sm:$0xff]
      %v560 = vld [vmem:[%s300 + $0x1b0] sm:$0xff]
      %v561 = vld [vmem:[%s300 + $0x1b8] sm:$0xff]
      %v562 = vld [vmem:[%s300 + $0x1c0] sm:$0xff]
      %v563 = vld [vmem:[%s300 + $0x1c8] sm:$0xff]
      %v564 = vld [vmem:[%s300 + $0x1d0] sm:$0xff]
      %v565 = vld [vmem:[%s300 + $0x1d8] sm:$0xff]
      %v566 = vld [vmem:[%s300 + $0x1e0] sm:$0xff]
      %v567 = vld [vmem:[%s300 + $0x1e8] sm:$0xff]
      %v568 = vld [vmem:[%s300 + $0x1f0] sm:$0xff]
      %v569 = vld [vmem:[%s300 + $0x1f8] sm:$0xff]
      %v570 = vld [vmem:[%s300 + $0x200] sm:$0xff]
      %v571 = vld [vmem:[%s300 + $0x208] sm:$0xff]
      %v572 = vld [vmem:[%s300 + $0x210] sm:$0xff]
      %v573 = vld [vmem:[%s300 + $0x218] sm:$0xff]
      %v574 = vld [vmem:[%s300 + $0x220] sm:$0xff]
      %v575 = vld [vmem:[%s300 + $0x228] sm:$0xff]
      %v576 = vld [vmem:[%s300 + $0x230] sm:$0xff]
      %v577 = vld [vmem:[%s300 + $0x238] sm:$0xff]
      %v578 = vld [vmem:[%s300 + $0x240] sm:$0xff]
      %v579 = vld [vmem:[%s300 + $0x248] sm:$0xff]
      %v580 = vld [vmem:[%s300 + $0x250] sm:$0xff]
      %v581 = vld [vmem:[%s300 + $0x258] sm:$0xff]
      %v582 = vld [vmem:[%s300 + $0x260] sm:$0xff]
      %v583 = vld [vmem:[%s300 + $0x268] sm:$0xff]
      %v584 = vld [vmem:[%s300 + $0x270] sm:$0xff]
      %v585 = vld [vmem:[%s300 + $0x278] sm:$0xff]
      %v586 = vld [vmem:[%s300 + $0x280] sm:$0xff]
      %v587 = vld [vmem:[%s300 + $0x288] sm:$0xff]
      %v588 = vld [vmem:[%s300 + $0x290] sm:$0xff]
      %v589 = vld [vmem:[%s300 + $0x298] sm:$0xff]
      %v590 = vld [vmem:[%s300 + $0x2a0] sm:$0xff]
      %v591 = vld [vmem:[%s300 + $0x2a8] sm:$0xff]
      %v592 = vld [vmem:[%s300 + $0x2b0] sm:$0xff]
      %v593 = vld [vmem:[%s300 + $0x2b8] sm:$0xff]
      %v594 = vld [vmem:[%s300 + $0x2c0] sm:$0xff]
      %v595 = vld [vmem:[%s300 + $0x2c8] sm:$0xff]
      %v596 = vld [vmem:[%s300 + $0x2d0] sm:$0xff]
      %v597 = vld [vmem:[%s300 + $0x2d8] sm:$0xff]
      %v598 = vld [vmem:[%s300 + $0x2e0] sm:$0xff]
      %v599 = vld [vmem:[%s300 + $0x2e8] sm:$0xff]
      %v600 = vld [vmem:[%s300 + $0x2f0] sm:$0xff]
      %v601 = vld [vmem:[%s300 + $0x2f8] sm:$0xff]
      %v602 = vld [vmem:[%s300 + $0x300] sm:$0xff]
      %v603 = vld [vmem:[%s300 + $0x308] sm:$0xff]
      %v604 = vld [vmem:[%s300 + $0x310] sm:$0xff]
      %v605 = vld [vmem:[%s300 + $0x318] sm:$0xff]
      %v606 = vld [vmem:[%s300 + $0x320] sm:$0xff]
      %v607 = vld [vmem:[%s300 + $0x328] sm:$0xff]
      %v608 = vld [vmem:[%s300 + $0x330] sm:$0xff]
      %v609 = vld [vmem:[%s300 + $0x338] sm:$0xff]
      %v610 = vld [vmem:[%s300 + $0x340] sm:$0xff]
      %v611 = vld [vmem:[%s300 + $0x348] sm:$0xff]
      %v612 = vld [vmem:[%s300 + $0x350] sm:$0xff]
      %v613 = vld [vmem:[%s300 + $0x358] sm:$0xff]
      %v614 = vld [vmem:[%s300 + $0x360] sm:$0xff]
      %v615 = vld [vmem:[%s300 + $0x368] sm:$0xff]
      %v616 = vld [vmem:[%s300 + $0x370] sm:$0xff]
      %v617 = vld [vmem:[%s300 + $0x378] sm:$0xff]
      %v618 = vld [vmem:[%s300 + $0x380] sm:$0xff]
      %v619 = vld [vmem:[%s300 + $0x388] sm:$0xff]
      %v620 = vld [vmem:[%s300 + $0x390] sm:$0xff]
      %v621 = vld [vmem:[%s300 + $0x398] sm:$0xff]
      %v622 = vld [vmem:[%s300 + $0x3a0] sm:$0xff]
      %v623 = vld [vmem:[%s300 + $0x3a8] sm:$0xff]
      %v624 = vld [vmem:[%s300 + $0x3b0] sm:$0xff]
      %v625 = vld [vmem:[%s300 + $0x3b8] sm:$0xff]
      %v626 = vld [vmem:[%s300 + $0x3c0] sm:$0xff]
      %v627 = vld [vmem:[%s300 + $0x3c8] sm:$0xff]
      %v628 = vld [vmem:[%s300 + $0x3d0] sm:$0xff]
      %v629 = vld [vmem:[%s300 + $0x3d8] sm:$0xff]
      %v630 = vld [vmem:[%s300 + $0x3e0] sm:$0xff]
      %v631 = vld [vmem:[%s300 + $0x3e8] sm:$0xff]
      %v632 = vld [vmem:[%s300 + $0x3f0] sm:$0xff]
      %v633 = vld [vmem:[%s300 + $0x3f8] sm:$0xff]
      %vm634 = vcmask 261120
      %v636 = vsel %vm634, %v314, 0
      %638 = vmatprep.subr.mxu0 0.0
      %639 = vmatpush1.msra.mxu0 %v378
      %640 = vmatprep.subr.mxu0 0.0
      %641 = vmatpush1.msra.mxu0 %v379
      %642 = vmatprep.subr.mxu0 0.0
      %643 = vmatpush1.msra.mxu0 %v380
      %644 = vmatprep.subr.mxu0 0.0
      %645 = vmatpush1.msra.mxu0 %v381
      %646 = vmatprep.subr.mxu0 0.0
      %647 = vmatpush1.msra.mxu0 0.0
      %648 = vmatprep.subr.mxu0 0.0
      %649 = vmatpush1.msra.mxu0 0.0
      %650 = vmatprep.subr.mxu0 0.0
      %651 = vmatpush1.msra.mxu0 0.0
      %652 = vmatprep.subr.mxu0 0.0
      %653 = vmatpush1.msra.mxu0 0.0
      %654 = vmatprep.subr.mxu0 0.0
      %655 = vmatpush1.msra.mxu0 0.0
      %656 = vmatprep.subr.mxu0 0.0
      %657 = vmatpush1.msra.mxu0 0.0
      %658 = vmatprep.subr.mxu0 0.0
      %659 = vmatpush1.msra.mxu0 0.0
      %660 = vmatprep.subr.mxu0 0.0
      %661 = vmatpush1.msra.mxu0 0.0
      %662 = vmatprep.subr.mxu0 0.0
      %663 = vmatpush1.msra.mxu0 0.0
      %664 = vmatprep.subr.mxu0 0.0
      %665 = vmatpush1.msra.mxu0 0.0
      %666 = vmatprep.subr.mxu0 0.0
      %667 = vmatpush1.msra.mxu0 0.0
      %668 = vmatprep.subr.mxu0 0.0
      %669 = vmatpush1.msra.mxu0 0.0
      %670 = vmatprep.subr.mxu0 0.0
      %671 = vmatpush1.msra.mxu0 0.0
      %672 = vmatprep.subr.mxu0 0.0
      %673 = vmatpush1.msra.mxu0 0.0
      %674 = vmatprep.subr.mxu0 0.0
      %675 = vmatpush1.msra.mxu0 0.0
      %676 = vmatprep.subr.mxu0 0.0
      %677 = vmatpush1.msra.mxu0 0.0
      %678 = vmatprep.subr.mxu0 0.0
      %679 = vmatpush1.msra.mxu0 0.0
      %680 = vmatprep.subr.mxu0 0.0
      %681 = vmatpush1.msra.mxu0 0.0
      %682 = vmatprep.subr.mxu0 0.0
      %683 = vmatpush1.msra.mxu0 0.0
      %684 = vmatprep.subr.mxu0 0.0
      %685 = vmatpush1.msra.mxu0 0.0
      %686 = vmatprep.subr.mxu0 0.0
      %687 = vmatpush1.msra.mxu0 0.0
      %688 = vmatprep.subr.mxu0 0.0
      %689 = vmatpush1.msra.mxu0 0.0
      %690 = vmatprep.subr.mxu0 0.0
      %691 = vmatpush1.msra.mxu0 0.0
      %692 = vmatprep.subr.mxu0 0.0
      %693 = vmatpush1.msra.mxu0 0.0
      %694 = vmatprep.subr.mxu0 0.0
      %695 = vmatpush1.msra.mxu0 0.0
      %696 = vmatprep.subr.mxu0 0.0
      %697 = vmatpush1.msra.mxu0 0.0
      %698 = vmatprep.subr.mxu0 0.0
      %699 = vmatpush1.msra.mxu0 0.0
      %700 = vmatprep.subr.mxu0 0.0
      %701 = vmatpush1.msra.mxu0 0.0
      %702 = vmatprep.mubr.f32.mxu0 0.0
      %703 = vmatmul.mubr.f32.gmra.mrb[0].mxu0 %v636
      %v704 = vpop.f32.mrb[0].mxu0
      %v705 = vadd.f32 0.0, %v704
      %v706 = vpop.f32.mrb[0].mxu0
      %707 = vdwg.mxu0
      %v709 = vsel %vm634, %v315, 0
      %711 = vmatprep.subr.mxu0 0.0
      %712 = vmatpush1.msra.mxu0 %v382
      %713 = vmatprep.subr.mxu0 0.0
      %714 = vmatpush1.msra.mxu0 %v383
      %715 = vmatprep.subr.mxu0 0.0
      %716 = vmatpush1.msra.mxu0 %v384
      %717 = vmatprep.subr.mxu0 0.0
      %718 = vmatpush1.msra.mxu0 %v385
      %719 = vmatprep.subr.mxu0 0.0
      %720 = vmatpush1.msra.mxu0 0.0
      %721 = vmatprep.subr.mxu0 0.0
      %722 = vmatpush1.msra.mxu0 0.0
      %723 = vmatprep.subr.mxu0 0.0
      %724 = vmatpush1.msra.mxu0 0.0
      %725 = vmatprep.subr.mxu0 0.0
      %726 = vmatpush1.msra.mxu0 0.0
      %727 = vmatprep.subr.mxu0 0.0
      %728 = vmatpush1.msra.mxu0 0.0
      %729 = vmatprep.subr.mxu0 0.0
      %730 = vmatpush1.msra.mxu0 0.0
      %731 = vmatprep.subr.mxu0 0.0
      %732 = vmatpush1.msra.mxu0 0.0
      %733 = vmatprep.subr.mxu0 0.0
      %734 = vmatpush1.msra.mxu0 0.0
      %735 = vmatprep.subr.mxu0 0.0
      %736 = vmatpush1.msra.mxu0 0.0
      %737 = vmatprep.subr.mxu0 0.0
      %738 = vmatpush1.msra.mxu0 0.0
      %739 = vmatprep.subr.mxu0 0.0
      %740 = vmatpush1.msra.mxu0 0.0
      %741 = vmatprep.subr.mxu0 0.0
      %742 = vmatpush1.msra.mxu0 0.0
      %743 = vmatprep.subr.mxu0 0.0
      %744 = vmatpush1.msra.mxu0 0.0
      %745 = vmatprep.subr.mxu0 0.0
      %746 = vmatpush1.msra.mxu0 0.0
      %747 = vmatprep.subr.mxu0 0.0
      %748 = vmatpush1.msra.mxu0 0.0
      %749 = vmatprep.subr.mxu0 0.0
      %750 = vmatpush1.msra.mxu0 0.0
      %751 = vmatprep.subr.mxu0 0.0
      %752 = vmatpush1.msra.mxu0 0.0
      %753 = vmatprep.subr.mxu0 0.0
      %754 = vmatpush1.msra.mxu0 0.0
      %755 = vmatprep.subr.mxu0 0.0
      %756 = vmatpush1.msra.mxu0 0.0
      %757 = vmatprep.subr.mxu0 0.0
      %758 = vmatpush1.msra.mxu0 0.0
      %759 = vmatprep.subr.mxu0 0.0
      %760 = vmatpush1.msra.mxu0 0.0
      %761 = vmatprep.subr.mxu0 0.0
      %762 = vmatpush1.msra.mxu0 0.0
      %763 = vmatprep.subr.mxu0 0.0
      %764 = vmatpush1.msra.mxu0 0.0
      %765 = vmatprep.subr.mxu0 0.0
      %766 = vmatpush1.msra.mxu0 0.0
      %767 = vmatprep.subr.mxu0 0.0
      %768 = vmatpush1.msra.mxu0 0.0
      %769 = vmatprep.subr.mxu0 0.0
      %770 = vmatpush1.msra.mxu0 0.0
      %771 = vmatprep.subr.mxu0 0.0
      %772 = vmatpush1.msra.mxu0 0.0
      %773 = vmatprep.subr.mxu0 0.0
      %774 = vmatpush1.msra.mxu0 0.0
      %775 = vmatprep.mubr.f32.mxu0 0.0
      %776 = vmatmul.mubr.f32.gmra.mrb[0].mxu0 %v709
      %v777 = vpop.f32.mrb[0].mxu0
      %v778 = vadd.f32 0.0, %v777
      %v779 = vpop.f32.mrb[0].mxu0
      %780 = vdwg.mxu0
      %v782 = vsel %vm634, %v316, 0
      %784 = vmatprep.subr.mxu0 0.0
      %785 = vmatpush1.msra.mxu0 %v386
      %786 = vmatprep.subr.mxu0 0.0
      %787 = vmatpush1.msra.mxu0 %v387
      %788 = vmatprep.subr.mxu0 0.0
      %789 = vmatpush1.msra.mxu0 %v388
      %790 = vmatprep.subr.mxu0 0.0
      %791 = vmatpush1.msra.mxu0 %v389
      %792 = vmatprep.subr.mxu0 0.0
      %793 = vmatpush1.msra.mxu0 0.0
      %794 = vmatprep.subr.mxu0 0.0
      %795 = vmatpush1.msra.mxu0 0.0
      %796 = vmatprep.subr.mxu0 0.0
      %797 = vmatpush1.msra.mxu0 0.0
      %798 = vmatprep.subr.mxu0 0.0
      %799 = vmatpush1.msra.mxu0 0.0
      %800 = vmatprep.subr.mxu0 0.0
      %801 = vmatpush1.msra.mxu0 0.0
      %802 = vmatprep.subr.mxu0 0.0
      %803 = vmatpush1.msra.mxu0 0.0
      %804 = vmatprep.subr.mxu0 0.0
      %805 = vmatpush1.msra.mxu0 0.0
      %806 = vmatprep.subr.mxu0 0.0
      %807 = vmatpush1.msra.mxu0 0.0
      %808 = vmatprep.subr.mxu0 0.0
      %809 = vmatpush1.msra.mxu0 0.0
      %810 = vmatprep.subr.mxu0 0.0
      %811 = vmatpush1.msra.mxu0 0.0
      %812 = vmatprep.subr.mxu0 0.0
      %813 = vmatpush1.msra.mxu0 0.0
      %814 = vmatprep.subr.mxu0 0.0
      %815 = vmatpush1.msra.mxu0 0.0
      %816 = vmatprep.subr.mxu0 0.0
      %817 = vmatpush1.msra.mxu0 0.0
      %818 = vmatprep.subr.mxu0 0.0
      %819 = vmatpush1.msra.mxu0 0.0
      %820 = vmatprep.subr.mxu0 0.0
      %821 = vmatpush1.msra.mxu0 0.0
      %822 = vmatprep.subr.mxu0 0.0
      %823 = vmatpush1.msra.mxu0 0.0
      %824 = vmatprep.subr.mxu0 0.0
      %825 = vmatpush1.msra.mxu0 0.0
      %826 = vmatprep.subr.mxu0 0.0
      %827 = vmatpush1.msra.mxu0 0.0
      %828 = vmatprep.subr.mxu0 0.0
      %829 = vmatpush1.msra.mxu0 0.0
      %830 = vmatprep.subr.mxu0 0.0
      %831 = vmatpush1.msra.mxu0 0.0
      %832 = vmatprep.subr.mxu0 0.0
      %833 = vmatpush1.msra.mxu0 0.0
      %834 = vmatprep.subr.mxu0 0.0
      %835 = vmatpush1.msra.mxu0 0.0
      %836 = vmatprep.subr.mxu0 0.0
      %837 = vmatpush1.msra.mxu0 0.0
      %838 = vmatprep.subr.mxu0 0.0
      %839 = vmatpush1.msra.mxu0 0.0
      %840 = vmatprep.subr.mxu0 0.0
      %841 = vmatpush1.msra.mxu0 0.0
      %842 = vmatprep.subr.mxu0 0.0
      %843 = vmatpush1.msra.mxu0 0.0
      %844 = vmatprep.subr.mxu0 0.0
      %845 = vmatpush1.msra.mxu0 0.0
      %846 = vmatprep.subr.mxu0 0.0
      %847 = vmatpush1.msra.mxu0 0.0
      %848 = vmatprep.mubr.f32.mxu0 0.0
      %849 = vmatmul.mubr.f32.gmra.mrb[0].mxu0 %v782
      %v850 = vpop.f32.mrb[0].mxu0
      %v851 = vadd.f32 0.0, %v850
      %v852 = vpop.f32.mrb[0].mxu0
      %853 = vdwg.mxu0
      %v855 = vsel %vm634, %v317, 0
      %857 = vmatprep.subr.mxu0 0.0
      %858 = vmatpush1.msra.mxu0 %v390
      %859 = vmatprep.subr.mxu0 0.0
      %860 = vmatpush1.msra.mxu0 %v391
      %861 = vmatprep.subr.mxu0 0.0
      %862 = vmatpush1.msra.mxu0 %v392
      %863 = vmatprep.subr.mxu0 0.0
      %864 = vmatpush1.msra.mxu0 %v393
      %865 = vmatprep.subr.mxu0 0.0
      %866 = vmatpush1.msra.mxu0 0.0
      %867 = vmatprep.subr.mxu0 0.0
      %868 = vmatpush1.msra.mxu0 0.0
      %869 = vmatprep.subr.mxu0 0.0
      %870 = vmatpush1.msra.mxu0 0.0
      %871 = vmatprep.subr.mxu0 0.0
      %872 = vmatpush1.msra.mxu0 0.0
      %873 = vmatprep.subr.mxu0 0.0
      %874 = vmatpush1.msra.mxu0 0.0
      %875 = vmatprep.subr.mxu0 0.0
      %876 = vmatpush1.msra.mxu0 0.0
      %877 = vmatprep.subr.mxu0 0.0
      %878 = vmatpush1.msra.mxu0 0.0
      %879 = vmatprep.subr.mxu0 0.0
      %880 = vmatpush1.msra.mxu0 0.0
      %881 = vmatprep.subr.mxu0 0.0
      %882 = vmatpush1.msra.mxu0 0.0
      %883 = vmatprep.subr.mxu0 0.0
      %884 = vmatpush1.msra.mxu0 0.0
      %885 = vmatprep.subr.mxu0 0.0
      %886 = vmatpush1.msra.mxu0 0.0
      %887 = vmatprep.subr.mxu0 0.0
      %888 = vmatpush1.msra.mxu0 0.0
      %889 = vmatprep.subr.mxu0 0.0
      %890 = vmatpush1.msra.mxu0 0.0
      %891 = vmatprep.subr.mxu0 0.0
      %892 = vmatpush1.msra.mxu0 0.0
      %893 = vmatprep.subr.mxu0 0.0
      %894 = vmatpush1.msra.mxu0 0.0
      %895 = vmatprep.subr.mxu0 0.0
      %896 = vmatpush1.msra.mxu0 0.0
      %897 = vmatprep.subr.mxu0 0.0
      %898 = vmatpush1.msra.mxu0 0.0
      %899 = vmatprep.subr.mxu0 0.0
      %900 = vmatpush1.msra.mxu0 0.0
      %901 = vmatprep.subr.mxu0 0.0
      %902 = vmatpush1.msra.mxu0 0.0
      %903 = vmatprep.subr.mxu0 0.0
      %904 = vmatpush1.msra.mxu0 0.0
      %905 = vmatprep.subr.mxu0 0.0
      %906 = vmatpush1.msra.mxu0 0.0
      %907 = vmatprep.subr.mxu0 0.0
      %908 = vmatpush1.msra.mxu0 0.0
      %909 = vmatprep.subr.mxu0 0.0
      %910 = vmatpush1.msra.mxu0 0.0
      %911 = vmatprep.subr.mxu0 0.0
      %912 = vmatpush1.msra.mxu0 0.0
      %913 = vmatprep.subr.mxu0 0.0
      %914 = vmatpush1.msra.mxu0 0.0
      %915 = vmatprep.subr.mxu0 0.0
      %916 = vmatpush1.msra.mxu0 0.0
      %917 = vmatprep.subr.mxu0 0.0
      %918 = vmatpush1.msra.mxu0 0.0
      %919 = vmatprep.subr.mxu0 0.0
      %920 = vmatpush1.msra.mxu0 0.0
      %921 = vmatprep.mubr.f32.mxu0 0.0
      %922 = vmatmul.mubr.f32.gmra.mrb[0].mxu0 %v855
      %v923 = vpop.f32.mrb[0].mxu0
      %v924 = vadd.f32 0.0, %v923
      %v925 = vpop.f32.mrb[0].mxu0
      %926 = vdwg.mxu0
      %v928 = vsel %vm634, %v318, 0
      %930 = vmatprep.subr.mxu0 0.0
      %931 = vmatpush1.msra.mxu0 %v394
      %932 = vmatprep.subr.mxu0 0.0
      %933 = vmatpush1.msra.mxu0 %v395
      %934 = vmatprep.subr.mxu0 0.0
      %935 = vmatpush1.msra.mxu0 %v396
      %936 = vmatprep.subr.mxu0 0.0
      %937 = vmatpush1.msra.mxu0 %v397
      %938 = vmatprep.subr.mxu0 0.0
      %939 = vmatpush1.msra.mxu0 0.0
      %940 = vmatprep.subr.mxu0 0.0
      %941 = vmatpush1.msra.mxu0 0.0
      %942 = vmatprep.subr.mxu0 0.0
      %943 = vmatpush1.msra.mxu0 0.0
      %944 = vmatprep.subr.mxu0 0.0
      %945 = vmatpush1.msra.mxu0 0.0
      %946 = vmatprep.subr.mxu0 0.0
      %947 = vmatpush1.msra.mxu0 0.0
      %948 = vmatprep.subr.mxu0 0.0
      %949 = vmatpush1.msra.mxu0 0.0
      %950 = vmatprep.subr.mxu0 0.0
      %951 = vmatpush1.msra.mxu0 0.0
      %952 = vmatprep.subr.mxu0 0.0
      %953 = vmatpush1.msra.mxu0 0.0
      %954 = vmatprep.subr.mxu0 0.0
      %955 = vmatpush1.msra.mxu0 0.0
      %956 = vmatprep.subr.mxu0 0.0
      %957 = vmatpush1.msra.mxu0 0.0
      %958 = vmatprep.subr.mxu0 0.0
      %959 = vmatpush1.msra.mxu0 0.0
      %960 = vmatprep.subr.mxu0 0.0
      %961 = vmatpush1.msra.mxu0 0.0
      %962 = vmatprep.subr.mxu0 0.0
      %963 = vmatpush1.msra.mxu0 0.0
      %964 = vmatprep.subr.mxu0 0.0
      %965 = vmatpush1.msra.mxu0 0.0
      %966 = vmatprep.subr.mxu0 0.0
      %967 = vmatpush1.msra.mxu0 0.0
      %968 = vmatprep.subr.mxu0 0.0
      %969 = vmatpush1.msra.mxu0 0.0
      %970 = vmatprep.subr.mxu0 0.0
      %971 = vmatpush1.msra.mxu0 0.0
      %972 = vmatprep.subr.mxu0 0.0
      %973 = vmatpush1.msra.mxu0 0.0
      %974 = vmatprep.subr.mxu0 0.0
      %975 = vmatpush1.msra.mxu0 0.0
      %976 = vmatprep.subr.mxu0 0.0
      %977 = vmatpush1.msra.mxu0 0.0
      %978 = vmatprep.subr.mxu0 0.0
      %979 = vmatpush1.msra.mxu0 0.0
      %980 = vmatprep.subr.mxu0 0.0
      %981 = vmatpush1.msra.mxu0 0.0
      %982 = vmatprep.subr.mxu0 0.0
      %983 = vmatpush1.msra.mxu0 0.0
      %984 = vmatprep.subr.mxu0 0.0
      %985 = vmatpush1.msra.mxu0 0.0
      %986 = vmatprep.subr.mxu0 0.0
      %987 = vmatpush1.msra.mxu0 0.0
      %988 = vmatprep.subr.mxu0 0.0
      %989 = vmatpush1.msra.mxu0 0.0
      %990 = vmatprep.subr.mxu0 0.0
      %991 = vmatpush1.msra.mxu0 0.0
      %992 = vmatprep.subr.mxu0 0.0
      %993 = vmatpush1.msra.mxu0 0.0
      %994 = vmatprep.mubr.f32.mxu0 0.0
      %995 = vmatmul.mubr.f32.gmra.mrb[0].mxu0 %v928
      %v996 = vpop.f32.mrb[0].mxu0
      %v997 = vadd.f32 0.0, %v996
      %v998 = vpop.f32.mrb[0].mxu0
      %999 = vdwg.mxu0
      %v1001 = vsel %vm634, %v319, 0
      %1003 = vmatprep.subr.mxu0 0.0
      %1004 = vmatpush1.msra.mxu0 %v398
      %1005 = vmatprep.subr.mxu0 0.0
      %1006 = vmatpush1.msra.mxu0 %v399
      %1007 = vmatprep.subr.mxu0 0.0
      %1008 = vmatpush1.msra.mxu0 %v400
      %1009 = vmatprep.subr.mxu0 0.0
      %1010 = vmatpush1.msra.mxu0 %v401
      %1011 = vmatprep.subr.mxu0 0.0
      %1012 = vmatpush1.msra.mxu0 0.0
      %1013 = vmatprep.subr.mxu0 0.0
      %1014 = vmatpush1.msra.mxu0 0.0
      %1015 = vmatprep.subr.mxu0 0.0
      %1016 = vmatpush1.msra.mxu0 0.0
      %1017 = vmatprep.subr.mxu0 0.0
      %1018 = vmatpush1.msra.mxu0 0.0
      %1019 = vmatprep.subr.mxu0 0.0
      %1020 = vmatpush1.msra.mxu0 0.0
      %1021 = vmatprep.subr.mxu0 0.0
      %1022 = vmatpush1.msra.mxu0 0.0
      %1023 = vmatprep.subr.mxu0 0.0
      %1024 = vmatpush1.msra.mxu0 0.0
      %1025 = vmatprep.subr.mxu0 0.0
      %1026 = vmatpush1.msra.mxu0 0.0
      %1027 = vmatprep.subr.mxu0 0.0
      %1028 = vmatpush1.msra.mxu0 0.0
      %1029 = vmatprep.subr.mxu0 0.0
      %1030 = vmatpush1.msra.mxu0 0.0
      %1031 = vmatprep.subr.mxu0 0.0
      %1032 = vmatpush1.msra.mxu0 0.0
      %1033 = vmatprep.subr.mxu0 0.0
      %1034 = vmatpush1.msra.mxu0 0.0
      %1035 = vmatprep.subr.mxu0 0.0
      %1036 = vmatpush1.msra.mxu0 0.0
      %1037 = vmatprep.subr.mxu0 0.0
      %1038 = vmatpush1.msra.mxu0 0.0
      %1039 = vmatprep.subr.mxu0 0.0
      %1040 = vmatpush1.msra.mxu0 0.0
      %1041 = vmatprep.subr.mxu0 0.0
      %1042 = vmatpush1.msra.mxu0 0.0
      %1043 = vmatprep.subr.mxu0 0.0
      %1044 = vmatpush1.msra.mxu0 0.0
      %1045 = vmatprep.subr.mxu0 0.0
      %1046 = vmatpush1.msra.mxu0 0.0
      %1047 = vmatprep.subr.mxu0 0.0
      %1048 = vmatpush1.msra.mxu0 0.0
      %1049 = vmatprep.subr.mxu0 0.0
      %1050 = vmatpush1.msra.mxu0 0.0
      %1051 = vmatprep.subr.mxu0 0.0
      %1052 = vmatpush1.msra.mxu0 0.0
      %1053 = vmatprep.subr.mxu0 0.0
      %1054 = vmatpush1.msra.mxu0 0.0
      %1055 = vmatprep.subr.mxu0 0.0
      %1056 = vmatpush1.msra.mxu0 0.0
      %1057 = vmatprep.subr.mxu0 0.0
      %1058 = vmatpush1.msra.mxu0 0.0
      %1059 = vmatprep.subr.mxu0 0.0
      %1060 = vmatpush1.msra.mxu0 0.0
      %1061 = vmatprep.subr.mxu0 0.0
      %1062 = vmatpush1.msra.mxu0 0.0
      %1063 = vmatprep.subr.mxu0 0.0
      %1064 = vmatpush1.msra.mxu0 0.0
      %1065 = vmatprep.subr.mxu0 0.0
      %1066 = vmatpush1.msra.mxu0 0.0
      %1067 = vmatprep.mubr.f32.mxu0 0.0
      %1068 = vmatmul.mubr.f32.gmra.mrb[0].mxu0 %v1001
      %v1069 = vpop.f32.mrb[0].mxu0
      %v1070 = vadd.f32 0.0, %v1069
      %v1071 = vpop.f32.mrb[0].mxu0
      %1072 = vdwg.mxu0
      %v1074 = vsel %vm634, %v320, 0
      %1076 = vmatprep.subr.mxu0 0.0
      %1077 = vmatpush1.msra.mxu0 %v402
      %1078 = vmatprep.subr.mxu0 0.0
      %1079 = vmatpush1.msra.mxu0 %v403
      %1080 = vmatprep.subr.mxu0 0.0
      %1081 = vmatpush1.msra.mxu0 %v404
      %1082 = vmatprep.subr.mxu0 0.0
      %1083 = vmatpush1.msra.mxu0 %v405
      %1084 = vmatprep.subr.mxu0 0.0
      %1085 = vmatpush1.msra.mxu0 0.0
      %1086 = vmatprep.subr.mxu0 0.0
      %1087 = vmatpush1.msra.mxu0 0.0
      %1088 = vmatprep.subr.mxu0 0.0
      %1089 = vmatpush1.msra.mxu0 0.0
      %1090 = vmatprep.subr.mxu0 0.0
      %1091 = vmatpush1.msra.mxu0 0.0
      %1092 = vmatprep.subr.mxu0 0.0
      %1093 = vmatpush1.msra.mxu0 0.0
      %1094 = vmatprep.subr.mxu0 0.0
      %1095 = vmatpush1.msra.mxu0 0.0
      %1096 = vmatprep.subr.mxu0 0.0
      %1097 = vmatpush1.msra.mxu0 0.0
      %1098 = vmatprep.subr.mxu0 0.0
      %1099 = vmatpush1.msra.mxu0 0.0
      %1100 = vmatprep.subr.mxu0 0.0
      %1101 = vmatpush1.msra.mxu0 0.0
      %1102 = vmatprep.subr.mxu0 0.0
      %1103 = vmatpush1.msra.mxu0 0.0
      %1104 = vmatprep.subr.mxu0 0.0
      %1105 = vmatpush1.msra.mxu0 0.0
      %1106 = vmatprep.subr.mxu0 0.0
      %1107 = vmatpush1.msra.mxu0 0.0
      %1108 = vmatprep.subr.mxu0 0.0
      %1109 = vmatpush1.msra.mxu0 0.0
      %1110 = vmatprep.subr.mxu0 0.0
      %1111 = vmatpush1.msra.mxu0 0.0
      %1112 = vmatprep.subr.mxu0 0.0
      %1113 = vmatpush1.msra.mxu0 0.0
      %1114 = vmatprep.subr.mxu0 0.0
      %1115 = vmatpush1.msra.mxu0 0.0
      %1116 = vmatprep.subr.mxu0 0.0
      %1117 = vmatpush1.msra.mxu0 0.0
      %1118 = vmatprep.subr.mxu0 0.0
      %1119 = vmatpush1.msra.mxu0 0.0
      %1120 = vmatprep.subr.mxu0 0.0
      %1121 = vmatpush1.msra.mxu0 0.0
      %1122 = vmatprep.subr.mxu0 0.0
      %1123 = vmatpush1.msra.mxu0 0.0
      %1124 = vmatprep.subr.mxu0 0.0
      %1125 = vmatpush1.msra.mxu0 0.0
      %1126 = vmatprep.subr.mxu0 0.0
      %1127 = vmatpush1.msra.mxu0 0.0
      %1128 = vmatprep.subr.mxu0 0.0
      %1129 = vmatpush1.msra.mxu0 0.0
      %1130 = vmatprep.subr.mxu0 0.0
      %1131 = vmatpush1.msra.mxu0 0.0
      %1132 = vmatprep.subr.mxu0 0.0
      %1133 = vmatpush1.msra.mxu0 0.0
      %1134 = vmatprep.subr.mxu0 0.0
      %1135 = vmatpush1.msra.mxu0 0.0
      %1136 = vmatprep.subr.mxu0 0.0
      %1137 = vmatpush1.msra.mxu0 0.0
      %1138 = vmatprep.subr.mxu0 0.0
      %1139 = vmatpush1.msra.mxu0 0.0
      %1140 = vmatprep.mubr.f32.mxu0 0.0
      %1141 = vmatmul.mubr.f32.gmra.mrb[0].mxu0 %v1074
      %v1142 = vpop.f32.mrb[0].mxu0
      %v1143 = vadd.f32 0.0, %v1142
      %v1144 = vpop.f32.mrb[0].mxu0
      %1145 = vdwg.mxu0
      %v1147 = vsel %vm634, %v321, 0
      %1149 = vmatprep.subr.mxu0 0.0
      %1150 = vmatpush1.msra.mxu0 %v406
      %1151 = vmatprep.subr.mxu0 0.0
      %1152 = vmatpush1.msra.mxu0 %v407
      %1153 = vmatprep.subr.mxu0 0.0
      %1154 = vmatpush1.msra.mxu0 %v408
      %1155 = vmatprep.subr.mxu0 0.0
      %1156 = vmatpush1.msra.mxu0 %v409
      %1157 = vmatprep.subr.mxu0 0.0
      %1158 = vmatpush1.msra.mxu0 0.0
      %1159 = vmatprep.subr.mxu0 0.0
      %1160 = vmatpush1.msra.mxu0 0.0
      %1161 = vmatprep.subr.mxu0 0.0
      %1162 = vmatpush1.msra.mxu0 0.0
      %1163 = vmatprep.subr.mxu0 0.0
      %1164 = vmatpush1.msra.mxu0 0.0
      %1165 = vmatprep.subr.mxu0 0.0
      %1166 = vmatpush1.msra.mxu0 0.0
      %1167 = vmatprep.subr.mxu0 0.0
      %1168 = vmatpush1.msra.mxu0 0.0
      %1169 = vmatprep.subr.mxu0 0.0
      %1170 = vmatpush1.msra.mxu0 0.0
      %1171 = vmatprep.subr.mxu0 0.0
      %1172 = vmatpush1.msra.mxu0 0.0
      %1173 = vmatprep.subr.mxu0 0.0
      %1174 = vmatpush1.msra.mxu0 0.0
      %1175 = vmatprep.subr.mxu0 0.0
      %1176 = vmatpush1.msra.mxu0 0.0
      %1177 = vmatprep.subr.mxu0 0.0
      %1178 = vmatpush1.msra.mxu0 0.0
      %1179 = vmatprep.subr.mxu0 0.0
      %1180 = vmatpush1.msra.mxu0 0.0
      %1181 = vmatprep.subr.mxu0 0.0
      %1182 = vmatpush1.msra.mxu0 0.0
      %1183 = vmatprep.subr.mxu0 0.0
      %1184 = vmatpush1.msra.mxu0 0.0
      %1185 = vmatprep.subr.mxu0 0.0
      %1186 = vmatpush1.msra.mxu0 0.0
      %1187 = vmatprep.subr.mxu0 0.0
      %1188 = vmatpush1.msra.mxu0 0.0
      %1189 = vmatprep.subr.mxu0 0.0
      %1190 = vmatpush1.msra.mxu0 0.0
      %1191 = vmatprep.subr.mxu0 0.0
      %1192 = vmatpush1.msra.mxu0 0.0
      %1193 = vmatprep.subr.mxu0 0.0
      %1194 = vmatpush1.msra.mxu0 0.0
      %1195 = vmatprep.subr.mxu0 0.0
      %1196 = vmatpush1.msra.mxu0 0.0
      %1197 = vmatprep.subr.mxu0 0.0
      %1198 = vmatpush1.msra.mxu0 0.0
      %1199 = vmatprep.subr.mxu0 0.0
      %1200 = vmatpush1.msra.mxu0 0.0
      %1201 = vmatprep.subr.mxu0 0.0
      %1202 = vmatpush1.msra.mxu0 0.0
      %1203 = vmatprep.subr.mxu0 0.0
      %1204 = vmatpush1.msra.mxu0 0.0
      %1205 = vmatprep.subr.mxu0 0.0
      %1206 = vmatpush1.msra.mxu0 0.0
      %1207 = vmatprep.subr.mxu0 0.0
      %1208 = vmatpush1.msra.mxu0 0.0
      %1209 = vmatprep.subr.mxu0 0.0
      %1210 = vmatpush1.msra.mxu0 0.0
      %1211 = vmatprep.subr.mxu0 0.0
      %1212 = vmatpush1.msra.mxu0 0.0
      %1213 = vmatprep.mubr.f32.mxu0 0.0
      %1214 = vmatmul.mubr.f32.gmra.mrb[0].mxu0 %v1147
      %v1215 = vpop.f32.mrb[0].mxu0
      %v1216 = vadd.f32 0.0, %v1215
      %v1217 = vpop.f32.mrb[0].mxu0
      %1218 = vdwg.mxu0
      %v1220 = vsel %vm634, %v322, 0
      %1222 = vmatprep.subr.mxu0 0.0
      %1223 = vmatpush1.msra.mxu0 %v410
      %1224 = vmatprep.subr.mxu0 0.0
      %1225 = vmatpush1.msra.mxu0 %v411
      %1226 = vmatprep.subr.mxu0 0.0
      %1227 = vmatpush1.msra.mxu0 %v412
      %1228 = vmatprep.subr.mxu0 0.0
      %1229 = vmatpush1.msra.mxu0 %v413
      %1230 = vmatprep.subr.mxu0 0.0
      %1231 = vmatpush1.msra.mxu0 0.0
      %1232 = vmatprep.subr.mxu0 0.0
      %1233 = vmatpush1.msra.mxu0 0.0
      %1234 = vmatprep.subr.mxu0 0.0
      %1235 = vmatpush1.msra.mxu0 0.0
      %1236 = vmatprep.subr.mxu0 0.0
      %1237 = vmatpush1.msra.mxu0 0.0
      %1238 = vmatprep.subr.mxu0 0.0
      %1239 = vmatpush1.msra.mxu0 0.0
      %1240 = vmatprep.subr.mxu0 0.0
      %1241 = vmatpush1.msra.mxu0 0.0
      %1242 = vmatprep.subr.mxu0 0.0
      %1243 = vmatpush1.msra.mxu0 0.0
      %1244 = vmatprep.subr.mxu0 0.0
      %1245 = vmatpush1.msra.mxu0 0.0
      %1246 = vmatprep.subr.mxu0 0.0
      %1247 = vmatpush1.msra.mxu0 0.0
      %1248 = vmatprep.subr.mxu0 0.0
      %1249 = vmatpush1.msra.mxu0 0.0
      %1250 = vmatprep.subr.mxu0 0.0
      %1251 = vmatpush1.msra.mxu0 0.0
      %1252 = vmatprep.subr.mxu0 0.0
      %1253 = vmatpush1.msra.mxu0 0.0
      %1254 = vmatprep.subr.mxu0 0.0
      %1255 = vmatpush1.msra.mxu0 0.0
      %1256 = vmatprep.subr.mxu0 0.0
      %1257 = vmatpush1.msra.mxu0 0.0
      %1258 = vmatprep.subr.mxu0 0.0
      %1259 = vmatpush1.msra.mxu0 0.0
      %1260 = vmatprep.subr.mxu0 0.0
      %1261 = vmatpush1.msra.mxu0 0.0
      %1262 = vmatprep.subr.mxu0 0.0
      %1263 = vmatpush1.msra.mxu0 0.0
      %1264 = vmatprep.subr.mxu0 0.0
      %1265 = vmatpush1.msra.mxu0 0.0
      %1266 = vmatprep.subr.mxu0 0.0
      %1267 = vmatpush1.msra.mxu0 0.0
      %1268 = vmatprep.subr.mxu0 0.0
      %1269 = vmatpush1.msra.mxu0 0.0
      %1270 = vmatprep.subr.mxu0 0.0
      %1271 = vmatpush1.msra.mxu0 0.0
      %1272 = vmatprep.subr.mxu0 0.0
      %1273 = vmatpush1.msra.mxu0 0.0
      %1274 = vmatprep.subr.mxu0 0.0
      %1275 = vmatpush1.msra.mxu0 0.0
      %1276 = vmatprep.subr.mxu0 0.0
      %1277 = vmatpush1.msra.mxu0 0.0
      %1278 = vmatprep.subr.mxu0 0.0
      %1279 = vmatpush1.msra.mxu0 0.0
      %1280 = vmatprep.subr.mxu0 0.0
      %1281 = vmatpush1.msra.mxu0 0.0
      %1282 = vmatprep.subr.mxu0 0.0
      %1283 = vmatpush1.msra.mxu0 0.0
      %1284 = vmatprep.subr.mxu0 0.0
      %1285 = vmatpush1.msra.mxu0 0.0
      %1286 = vmatprep.mubr.f32.mxu0 0.0
      %1287 = vmatmul.mubr.f32.gmra.mrb[0].mxu0 %v1220
      %v1288 = vpop.f32.mrb[0].mxu0
      %v1289 = vadd.f32 0.0, %v1288
      %v1290 = vpop.f32.mrb[0].mxu0
      %1291 = vdwg.mxu0
      %v1293 = vsel %vm634, %v323, 0
      %1295 = vmatprep.subr.mxu0 0.0
      %1296 = vmatpush1.msra.mxu0 %v414
      %1297 = vmatprep.subr.mxu0 0.0
      %1298 = vmatpush1.msra.mxu0 %v415
      %1299 = vmatprep.subr.mxu0 0.0
      %1300 = vmatpush1.msra.mxu0 %v416
      %1301 = vmatprep.subr.mxu0 0.0
      %1302 = vmatpush1.msra.mxu0 %v417
      %1303 = vmatprep.subr.mxu0 0.0
      %1304 = vmatpush1.msra.mxu0 0.0
      %1305 = vmatprep.subr.mxu0 0.0
      %1306 = vmatpush1.msra.mxu0 0.0
      %1307 = vmatprep.subr.mxu0 0.0
      %1308 = vmatpush1.msra.mxu0 0.0
      %1309 = vmatprep.subr.mxu0 0.0
      %1310 = vmatpush1.msra.mxu0 0.0
      %1311 = vmatprep.subr.mxu0 0.0
      %1312 = vmatpush1.msra.mxu0 0.0
      %1313 = vmatprep.subr.mxu0 0.0
      %1314 = vmatpush1.msra.mxu0 0.0
      %1315 = vmatprep.subr.mxu0 0.0
      %1316 = vmatpush1.msra.mxu0 0.0
      %1317 = vmatprep.subr.mxu0 0.0
      %1318 = vmatpush1.msra.mxu0 0.0
      %1319 = vmatprep.subr.mxu0 0.0
      %1320 = vmatpush1.msra.mxu0 0.0
      %1321 = vmatprep.subr.mxu0 0.0
      %1322 = vmatpush1.msra.mxu0 0.0
      %1323 = vmatprep.subr.mxu0 0.0
      %1324 = vmatpush1.msra.mxu0 0.0
      %1325 = vmatprep.subr.mxu0 0.0
      %1326 = vmatpush1.msra.mxu0 0.0
      %1327 = vmatprep.subr.mxu0 0.0
      %1328 = vmatpush1.msra.mxu0 0.0
      %1329 = vmatprep.subr.mxu0 0.0
      %1330 = vmatpush1.msra.mxu0 0.0
      %1331 = vmatprep.subr.mxu0 0.0
      %1332 = vmatpush1.msra.mxu0 0.0
      %1333 = vmatprep.subr.mxu0 0.0
      %1334 = vmatpush1.msra.mxu0 0.0
      %1335 = vmatprep.subr.mxu0 0.0
      %1336 = vmatpush1.msra.mxu0 0.0
      %1337 = vmatprep.subr.mxu0 0.0
      %1338 = vmatpush1.msra.mxu0 0.0
      %1339 = vmatprep.subr.mxu0 0.0
      %1340 = vmatpush1.msra.mxu0 0.0
      %1341 = vmatprep.subr.mxu0 0.0
      %1342 = vmatpush1.msra.mxu0 0.0
      %1343 = vmatprep.subr.mxu0 0.0
      %1344 = vmatpush1.msra.mxu0 0.0
      %1345 = vmatprep.subr.mxu0 0.0
      %1346 = vmatpush1.msra.mxu0 0.0
      %1347 = vmatprep.subr.mxu0 0.0
      %1348 = vmatpush1.msra.mxu0 0.0
      %1349 = vmatprep.subr.mxu0 0.0
      %1350 = vmatpush1.msra.mxu0 0.0
      %1351 = vmatprep.subr.mxu0 0.0
      %1352 = vmatpush1.msra.mxu0 0.0
      %1353 = vmatprep.subr.mxu0 0.0
      %1354 = vmatpush1.msra.mxu0 0.0
      %1355 = vmatprep.subr.mxu0 0.0
      %1356 = vmatpush1.msra.mxu0 0.0
      %1357 = vmatprep.subr.mxu0 0.0
      %1358 = vmatpush1.msra.mxu0 0.0
      %1359 = vmatprep.mubr.f32.mxu0 0.0
      %1360 = vmatmul.mubr.f32.gmra.mrb[0].mxu0 %v1293
      %v1361 = vpop.f32.mrb[0].mxu0
      %v1362 = vadd.f32 0.0, %v1361
      %v1363 = vpop.f32.mrb[0].mxu0
      %1364 = vdwg.mxu0
      %v1366 = vsel %vm634, %v324, 0
      %1368 = vmatprep.subr.mxu0 0.0
      %1369 = vmatpush1.msra.mxu0 %v418
      %1370 = vmatprep.subr.mxu0 0.0
      %1371 = vmatpush1.msra.mxu0 %v419
      %1372 = vmatprep.subr.mxu0 0.0
      %1373 = vmatpush1.msra.mxu0 %v420
      %1374 = vmatprep.subr.mxu0 0.0
      %1375 = vmatpush1.msra.mxu0 %v421
      %1376 = vmatprep.subr.mxu0 0.0
      %1377 = vmatpush1.msra.mxu0 0.0
      %1378 = vmatprep.subr.mxu0 0.0
      %1379 = vmatpush1.msra.mxu0 0.0
      %1380 = vmatprep.subr.mxu0 0.0
      %1381 = vmatpush1.msra.mxu0 0.0
      %1382 = vmatprep.subr.mxu0 0.0
      %1383 = vmatpush1.msra.mxu0 0.0
      %1384 = vmatprep.subr.mxu0 0.0
      %1385 = vmatpush1.msra.mxu0 0.0
      %1386 = vmatprep.subr.mxu0 0.0
      %1387 = vmatpush1.msra.mxu0 0.0
      %1388 = vmatprep.subr.mxu0 0.0
      %1389 = vmatpush1.msra.mxu0 0.0
      %1390 = vmatprep.subr.mxu0 0.0
      %1391 = vmatpush1.msra.mxu0 0.0
      %1392 = vmatprep.subr.mxu0 0.0
      %1393 = vmatpush1.msra.mxu0 0.0
      %1394 = vmatprep.subr.mxu0 0.0
      %1395 = vmatpush1.msra.mxu0 0.0
      %1396 = vmatprep.subr.mxu0 0.0
      %1397 = vmatpush1.msra.mxu0 0.0
      %1398 = vmatprep.subr.mxu0 0.0
      %1399 = vmatpush1.msra.mxu0 0.0
      %1400 = vmatprep.subr.mxu0 0.0
      %1401 = vmatpush1.msra.mxu0 0.0
      %1402 = vmatprep.subr.mxu0 0.0
      %1403 = vmatpush1.msra.mxu0 0.0
      %1404 = vmatprep.subr.mxu0 0.0
      %1405 = vmatpush1.msra.mxu0 0.0
      %1406 = vmatprep.subr.mxu0 0.0
      %1407 = vmatpush1.msra.mxu0 0.0
      %1408 = vmatprep.subr.mxu0 0.0
      %1409 = vmatpush1.msra.mxu0 0.0
      %1410 = vmatprep.subr.mxu0 0.0
      %1411 = vmatpush1.msra.mxu0 0.0
      %1412 = vmatprep.subr.mxu0 0.0
      %1413 = vmatpush1.msra.mxu0 0.0
      %1414 = vmatprep.subr.mxu0 0.0
      %1415 = vmatpush1.msra.mxu0 0.0
      %1416 = vmatprep.subr.mxu0 0.0
      %1417 = vmatpush1.msra.mxu0 0.0
      %1418 = vmatprep.subr.mxu0 0.0
      %1419 = vmatpush1.msra.mxu0 0.0
      %1420 = vmatprep.subr.mxu0 0.0
      %1421 = vmatpush1.msra.mxu0 0.0
      %1422 = vmatprep.subr.mxu0 0.0
      %1423 = vmatpush1.msra.mxu0 0.0
      %1424 = vmatprep.subr.mxu0 0.0
      %1425 = vmatpush1.msra.mxu0 0.0
      %1426 = vmatprep.subr.mxu0 0.0
      %1427 = vmatpush1.msra.mxu0 0.0
      %1428 = vmatprep.subr.mxu0 0.0
      %1429 = vmatpush1.msra.mxu0 0.0
      %1430 = vmatprep.subr.mxu0 0.0
      %1431 = vmatpush1.msra.mxu0 0.0
      %1432 = vmatprep.mubr.f32.mxu0 0.0
      %1433 = vmatmul.mubr.f32.gmra.mrb[0].mxu0 %v1366
      %v1434 = vpop.f32.mrb[0].mxu0
      %v1435 = vadd.f32 0.0, %v1434
      %v1436 = vpop.f32.mrb[0].mxu0
      %1437 = vdwg.mxu0
      %v1439 = vsel %vm634, %v325, 0
      %1441 = vmatprep.subr.mxu0 0.0
      %1442 = vmatpush1.msra.mxu0 %v422
      %1443 = vmatprep.subr.mxu0 0.0
      %1444 = vmatpush1.msra.mxu0 %v423
      %1445 = vmatprep.subr.mxu0 0.0
      %1446 = vmatpush1.msra.mxu0 %v424
      %1447 = vmatprep.subr.mxu0 0.0
      %1448 = vmatpush1.msra.mxu0 %v425
      %1449 = vmatprep.subr.mxu0 0.0
      %1450 = vmatpush1.msra.mxu0 0.0
      %1451 = vmatprep.subr.mxu0 0.0
      %1452 = vmatpush1.msra.mxu0 0.0
      %1453 = vmatprep.subr.mxu0 0.0
      %1454 = vmatpush1.msra.mxu0 0.0
      %1455 = vmatprep.subr.mxu0 0.0
      %1456 = vmatpush1.msra.mxu0 0.0
      %1457 = vmatprep.subr.mxu0 0.0
      %1458 = vmatpush1.msra.mxu0 0.0
      %1459 = vmatprep.subr.mxu0 0.0
      %1460 = vmatpush1.msra.mxu0 0.0
      %1461 = vmatprep.subr.mxu0 0.0
      %1462 = vmatpush1.msra.mxu0 0.0
      %1463 = vmatprep.subr.mxu0 0.0
      %1464 = vmatpush1.msra.mxu0 0.0
      %1465 = vmatprep.subr.mxu0 0.0
      %1466 = vmatpush1.msra.mxu0 0.0
      %1467 = vmatprep.subr.mxu0 0.0
      %1468 = vmatpush1.msra.mxu0 0.0
      %1469 = vmatprep.subr.mxu0 0.0
      %1470 = vmatpush1.msra.mxu0 0.0
      %1471 = vmatprep.subr.mxu0 0.0
      %1472 = vmatpush1.msra.mxu0 0.0
      %1473 = vmatprep.subr.mxu0 0.0
      %1474 = vmatpush1.msra.mxu0 0.0
      %1475 = vmatprep.subr.mxu0 0.0
      %1476 = vmatpush1.msra.mxu0 0.0
      %1477 = vmatprep.subr.mxu0 0.0
      %1478 = vmatpush1.msra.mxu0 0.0
      %1479 = vmatprep.subr.mxu0 0.0
      %1480 = vmatpush1.msra.mxu0 0.0
      %1481 = vmatprep.subr.mxu0 0.0
      %1482 = vmatpush1.msra.mxu0 0.0
      %1483 = vmatprep.subr.mxu0 0.0
      %1484 = vmatpush1.msra.mxu0 0.0
      %1485 = vmatprep.subr.mxu0 0.0
      %1486 = vmatpush1.msra.mxu0 0.0
      %1487 = vmatprep.subr.mxu0 0.0
      %1488 = vmatpush1.msra.mxu0 0.0
      %1489 = vmatprep.subr.mxu0 0.0
      %1490 = vmatpush1.msra.mxu0 0.0
      %1491 = vmatprep.subr.mxu0 0.0
      %1492 = vmatpush1.msra.mxu0 0.0
      %1493 = vmatprep.subr.mxu0 0.0
      %1494 = vmatpush1.msra.mxu0 0.0
      %1495 = vmatprep.subr.mxu0 0.0
      %1496 = vmatpush1.msra.mxu0 0.0
      %1497 = vmatprep.subr.mxu0 0.0
      %1498 = vmatpush1.msra.mxu0 0.0
      %1499 = vmatprep.subr.mxu0 0.0
      %1500 = vmatpush1.msra.mxu0 0.0
      %1501 = vmatprep.subr.mxu0 0.0
      %1502 = vmatpush1.msra.mxu0 0.0
      %1503 = vmatprep.subr.mxu0 0.0
      %1504 = vmatpush1.msra.mxu0 0.0
      %1505 = vmatprep.mubr.f32.mxu0 0.0
      %1506 = vmatmul.mubr.f32.gmra.mrb[0].mxu0 %v1439
      %v1507 = vpop.f32.mrb[0].mxu0
      %v1508 = vadd.f32 0.0, %v1507
      %v1509 = vpop.f32.mrb[0].mxu0
      %1510 = vdwg.mxu0
      %v1512 = vsel %vm634, %v326, 0
      %1514 = vmatprep.subr.mxu0 0.0
      %1515 = vmatpush1.msra.mxu0 %v426
      %1516 = vmatprep.subr.mxu0 0.0
      %1517 = vmatpush1.msra.mxu0 %v427
      %1518 = vmatprep.subr.mxu0 0.0
      %1519 = vmatpush1.msra.mxu0 %v428
      %1520 = vmatprep.subr.mxu0 0.0
      %1521 = vmatpush1.msra.mxu0 %v429
      %1522 = vmatprep.subr.mxu0 0.0
      %1523 = vmatpush1.msra.mxu0 0.0
      %1524 = vmatprep.subr.mxu0 0.0
      %1525 = vmatpush1.msra.mxu0 0.0
      %1526 = vmatprep.subr.mxu0 0.0
      %1527 = vmatpush1.msra.mxu0 0.0
      %1528 = vmatprep.subr.mxu0 0.0
      %1529 = vmatpush1.msra.mxu0 0.0
      %1530 = vmatprep.subr.mxu0 0.0
      %1531 = vmatpush1.msra.mxu0 0.0
      %1532 = vmatprep.subr.mxu0 0.0
      %1533 = vmatpush1.msra.mxu0 0.0
      %1534 = vmatprep.subr.mxu0 0.0
      %1535 = vmatpush1.msra.mxu0 0.0
      %1536 = vmatprep.subr.mxu0 0.0
      %1537 = vmatpush1.msra.mxu0 0.0
      %1538 = vmatprep.subr.mxu0 0.0
      %1539 = vmatpush1.msra.mxu0 0.0
      %1540 = vmatprep.subr.mxu0 0.0
      %1541 = vmatpush1.msra.mxu0 0.0
      %1542 = vmatprep.subr.mxu0 0.0
      %1543 = vmatpush1.msra.mxu0 0.0
      %1544 = vmatprep.subr.mxu0 0.0
      %1545 = vmatpush1.msra.mxu0 0.0
      %1546 = vmatprep.subr.mxu0 0.0
      %1547 = vmatpush1.msra.mxu0 0.0
      %1548 = vmatprep.subr.mxu0 0.0
      %1549 = vmatpush1.msra.mxu0 0.0
      %1550 = vmatprep.subr.mxu0 0.0
      %1551 = vmatpush1.msra.mxu0 0.0
      %1552 = vmatprep.subr.mxu0 0.0
      %1553 = vmatpush1.msra.mxu0 0.0
      %1554 = vmatprep.subr.mxu0 0.0
      %1555 = vmatpush1.msra.mxu0 0.0
      %1556 = vmatprep.subr.mxu0 0.0
      %1557 = vmatpush1.msra.mxu0 0.0
      %1558 = vmatprep.subr.mxu0 0.0
      %1559 = vmatpush1.msra.mxu0 0.0
      %1560 = vmatprep.subr.mxu0 0.0
      %1561 = vmatpush1.msra.mxu0 0.0
      %1562 = vmatprep.subr.mxu0 0.0
      %1563 = vmatpush1.msra.mxu0 0.0
      %1564 = vmatprep.subr.mxu0 0.0
      %1565 = vmatpush1.msra.mxu0 0.0
      %1566 = vmatprep.subr.mxu0 0.0
      %1567 = vmatpush1.msra.mxu0 0.0
      %1568 = vmatprep.subr.mxu0 0.0
      %1569 = vmatpush1.msra.mxu0 0.0
      %1570 = vmatprep.subr.mxu0 0.0
      %1571 = vmatpush1.msra.mxu0 0.0
      %1572 = vmatprep.subr.mxu0 0.0
      %1573 = vmatpush1.msra.mxu0 0.0
      %1574 = vmatprep.subr.mxu0 0.0
      %1575 = vmatpush1.msra.mxu0 0.0
      %1576 = vmatprep.subr.mxu0 0.0
      %1577 = vmatpush1.msra.mxu0 0.0
      %1578 = vmatprep.mubr.f32.mxu0 0.0
      %1579 = vmatmul.mubr.f32.gmra.mrb[0].mxu0 %v1512
      %v1580 = vpop.f32.mrb[0].mxu0
      %v1581 = vadd.f32 0.0, %v1580
      %v1582 = vpop.f32.mrb[0].mxu0
      %1583 = vdwg.mxu0
      %v1585 = vsel %vm634, %v327, 0
      %1587 = vmatprep.subr.mxu0 0.0
      %1588 = vmatpush1.msra.mxu0 %v430
      %1589 = vmatprep.subr.mxu0 0.0
      %1590 = vmatpush1.msra.mxu0 %v431
      %1591 = vmatprep.subr.mxu0 0.0
      %1592 = vmatpush1.msra.mxu0 %v432
      %1593 = vmatprep.subr.mxu0 0.0
      %1594 = vmatpush1.msra.mxu0 %v433
      %1595 = vmatprep.subr.mxu0 0.0
      %1596 = vmatpush1.msra.mxu0 0.0
      %1597 = vmatprep.subr.mxu0 0.0
      %1598 = vmatpush1.msra.mxu0 0.0
      %1599 = vmatprep.subr.mxu0 0.0
      %1600 = vmatpush1.msra.mxu0 0.0
      %1601 = vmatprep.subr.mxu0 0.0
      %1602 = vmatpush1.msra.mxu0 0.0
      %1603 = vmatprep.subr.mxu0 0.0
      %1604 = vmatpush1.msra.mxu0 0.0
      %1605 = vmatprep.subr.mxu0 0.0
      %1606 = vmatpush1.msra.mxu0 0.0
      %1607 = vmatprep.subr.mxu0 0.0
      %1608 = vmatpush1.msra.mxu0 0.0
      %1609 = vmatprep.subr.mxu0 0.0
      %1610 = vmatpush1.msra.mxu0 0.0
      %1611 = vmatprep.subr.mxu0 0.0
      %1612 = vmatpush1.msra.mxu0 0.0
      %1613 = vmatprep.subr.mxu0 0.0
      %1614 = vmatpush1.msra.mxu0 0.0
      %1615 = vmatprep.subr.mxu0 0.0
      %1616 = vmatpush1.msra.mxu0 0.0
      %1617 = vmatprep.subr.mxu0 0.0
      %1618 = vmatpush1.msra.mxu0 0.0
      %1619 = vmatprep.subr.mxu0 0.0
      %1620 = vmatpush1.msra.mxu0 0.0
      %1621 = vmatprep.subr.mxu0 0.0
      %1622 = vmatpush1.msra.mxu0 0.0
      %1623 = vmatprep.subr.mxu0 0.0
      %1624 = vmatpush1.msra.mxu0 0.0
      %1625 = vmatprep.subr.mxu0 0.0
      %1626 = vmatpush1.msra.mxu0 0.0
      %1627 = vmatprep.subr.mxu0 0.0
      %1628 = vmatpush1.msra.mxu0 0.0
      %1629 = vmatprep.subr.mxu0 0.0
      %1630 = vmatpush1.msra.mxu0 0.0
      %1631 = vmatprep.subr.mxu0 0.0
      %1632 = vmatpush1.msra.mxu0 0.0
      %1633 = vmatprep.subr.mxu0 0.0
      %1634 = vmatpush1.msra.mxu0 0.0
      %1635 = vmatprep.subr.mxu0 0.0
      %1636 = vmatpush1.msra.mxu0 0.0
      %1637 = vmatprep.subr.mxu0 0.0
      %1638 = vmatpush1.msra.mxu0 0.0
      %1639 = vmatprep.subr.mxu0 0.0
      %1640 = vmatpush1.msra.mxu0 0.0
      %1641 = vmatprep.subr.mxu0 0.0
      %1642 = vmatpush1.msra.mxu0 0.0
      %1643 = vmatprep.subr.mxu0 0.0
      %1644 = vmatpush1.msra.mxu0 0.0
      %1645 = vmatprep.subr.mxu0 0.0
      %1646 = vmatpush1.msra.mxu0 0.0
      %1647 = vmatprep.subr.mxu0 0.0
      %1648 = vmatpush1.msra.mxu0 0.0
      %1649 = vmatprep.subr.mxu0 0.0
      %1650 = vmatpush1.msra.mxu0 0.0
      %1651 = vmatprep.mubr.f32.mxu0 0.0
      %1652 = vmatmul.mubr.f32.gmra.mrb[0].mxu0 %v1585
      %v1653 = vpop.f32.mrb[0].mxu0
      %v1654 = vadd.f32 0.0, %v1653
      %v1655 = vpop.f32.mrb[0].mxu0
      %1656 = vdwg.mxu0
      %v1658 = vsel %vm634, %v328, 0
      %1660 = vmatprep.subr.mxu0 0.0
      %1661 = vmatpush1.msra.mxu0 %v434
      %1662 = vmatprep.subr.mxu0 0.0
      %1663 = vmatpush1.msra.mxu0 %v435
      %1664 = vmatprep.subr.mxu0 0.0
      %1665 = vmatpush1.msra.mxu0 %v436
      %1666 = vmatprep.subr.mxu0 0.0
      %1667 = vmatpush1.msra.mxu0 %v437
      %1668 = vmatprep.subr.mxu0 0.0
      %1669 = vmatpush1.msra.mxu0 0.0
      %1670 = vmatprep.subr.mxu0 0.0
      %1671 = vmatpush1.msra.mxu0 0.0
      %1672 = vmatprep.subr.mxu0 0.0
      %1673 = vmatpush1.msra.mxu0 0.0
      %1674 = vmatprep.subr.mxu0 0.0
      %1675 = vmatpush1.msra.mxu0 0.0
      %1676 = vmatprep.subr.mxu0 0.0
      %1677 = vmatpush1.msra.mxu0 0.0
      %1678 = vmatprep.subr.mxu0 0.0
      %1679 = vmatpush1.msra.mxu0 0.0
      %1680 = vmatprep.subr.mxu0 0.0
      %1681 = vmatpush1.msra.mxu0 0.0
      %1682 = vmatprep.subr.mxu0 0.0
      %1683 = vmatpush1.msra.mxu0 0.0
      %1684 = vmatprep.subr.mxu0 0.0
      %1685 = vmatpush1.msra.mxu0 0.0
      %1686 = vmatprep.subr.mxu0 0.0
      %1687 = vmatpush1.msra.mxu0 0.0
      %1688 = vmatprep.subr.mxu0 0.0
      %1689 = vmatpush1.msra.mxu0 0.0
      %1690 = vmatprep.subr.mxu0 0.0
      %1691 = vmatpush1.msra.mxu0 0.0
      %1692 = vmatprep.subr.mxu0 0.0
      %1693 = vmatpush1.msra.mxu0 0.0
      %1694 = vmatprep.subr.mxu0 0.0
      %1695 = vmatpush1.msra.mxu0 0.0
      %1696 = vmatprep.subr.mxu0 0.0
      %1697 = vmatpush1.msra.mxu0 0.0
      %1698 = vmatprep.subr.mxu0 0.0
      %1699 = vmatpush1.msra.mxu0 0.0
      %1700 = vmatprep.subr.mxu0 0.0
      %1701 = vmatpush1.msra.mxu0 0.0
      %1702 = vmatprep.subr.mxu0 0.0
      %1703 = vmatpush1.msra.mxu0 0.0
      %1704 = vmatprep.subr.mxu0 0.0
      %1705 = vmatpush1.msra.mxu0 0.0
      %1706 = vmatprep.subr.mxu0 0.0
      %1707 = vmatpush1.msra.mxu0 0.0
      %1708 = vmatprep.subr.mxu0 0.0
      %1709 = vmatpush1.msra.mxu0 0.0
      %1710 = vmatprep.subr.mxu0 0.0
      %1711 = vmatpush1.msra.mxu0 0.0
      %1712 = vmatprep.subr.mxu0 0.0
      %1713 = vmatpush1.msra.mxu0 0.0
      %1714 = vmatprep.subr.mxu0 0.0
      %1715 = vmatpush1.msra.mxu0 0.0
      %1716 = vmatprep.subr.mxu0 0.0
      %1717 = vmatpush1.msra.mxu0 0.0
      %1718 = vmatprep.subr.mxu0 0.0
      %1719 = vmatpush1.msra.mxu0 0.0
      %1720 = vmatprep.subr.mxu0 0.0
      %1721 = vmatpush1.msra.mxu0 0.0
      %1722 = vmatprep.subr.mxu0 0.0
      %1723 = vmatpush1.msra.mxu0 0.0
      %1724 = vmatprep.mubr.f32.mxu0 0.0
      %1725 = vmatmul.mubr.f32.gmra.mrb[0].mxu0 %v1658
      %v1726 = vpop.f32.mrb[0].mxu0
      %v1727 = vadd.f32 0.0, %v1726
      %v1728 = vpop.f32.mrb[0].mxu0
      %1729 = vdwg.mxu0
      %v1731 = vsel %vm634, %v329, 0
      %1733 = vmatprep.subr.mxu0 0.0
      %1734 = vmatpush1.msra.mxu0 %v438
      %1735 = vmatprep.subr.mxu0 0.0
      %1736 = vmatpush1.msra.mxu0 %v439
      %1737 = vmatprep.subr.mxu0 0.0
      %1738 = vmatpush1.msra.mxu0 %v440
      %1739 = vmatprep.subr.mxu0 0.0
      %1740 = vmatpush1.msra.mxu0 %v441
      %1741 = vmatprep.subr.mxu0 0.0
      %1742 = vmatpush1.msra.mxu0 0.0
      %1743 = vmatprep.subr.mxu0 0.0
      %1744 = vmatpush1.msra.mxu0 0.0
      %1745 = vmatprep.subr.mxu0 0.0
      %1746 = vmatpush1.msra.mxu0 0.0
      %1747 = vmatprep.subr.mxu0 0.0
      %1748 = vmatpush1.msra.mxu0 0.0
      %1749 = vmatprep.subr.mxu0 0.0
      %1750 = vmatpush1.msra.mxu0 0.0
      %1751 = vmatprep.subr.mxu0 0.0
      %1752 = vmatpush1.msra.mxu0 0.0
      %1753 = vmatprep.subr.mxu0 0.0
      %1754 = vmatpush1.msra.mxu0 0.0
      %1755 = vmatprep.subr.mxu0 0.0
      %1756 = vmatpush1.msra.mxu0 0.0
      %1757 = vmatprep.subr.mxu0 0.0
      %1758 = vmatpush1.msra.mxu0 0.0
      %1759 = vmatprep.subr.mxu0 0.0
      %1760 = vmatpush1.msra.mxu0 0.0
      %1761 = vmatprep.subr.mxu0 0.0
      %1762 = vmatpush1.msra.mxu0 0.0
      %1763 = vmatprep.subr.mxu0 0.0
      %1764 = vmatpush1.msra.mxu0 0.0
      %1765 = vmatprep.subr.mxu0 0.0
      %1766 = vmatpush1.msra.mxu0 0.0
      %1767 = vmatprep.subr.mxu0 0.0
      %1768 = vmatpush1.msra.mxu0 0.0
      %1769 = vmatprep.subr.mxu0 0.0
      %1770 = vmatpush1.msra.mxu0 0.0
      %1771 = vmatprep.subr.mxu0 0.0
      %1772 = vmatpush1.msra.mxu0 0.0
      %1773 = vmatprep.subr.mxu0 0.0
      %1774 = vmatpush1.msra.mxu0 0.0
      %1775 = vmatprep.subr.mxu0 0.0
      %1776 = vmatpush1.msra.mxu0 0.0
      %1777 = vmatprep.subr.mxu0 0.0
      %1778 = vmatpush1.msra.mxu0 0.0
      %1779 = vmatprep.subr.mxu0 0.0
      %1780 = vmatpush1.msra.mxu0 0.0
      %1781 = vmatprep.subr.mxu0 0.0
      %1782 = vmatpush1.msra.mxu0 0.0
      %1783 = vmatprep.subr.mxu0 0.0
      %1784 = vmatpush1.msra.mxu0 0.0
      %1785 = vmatprep.subr.mxu0 0.0
      %1786 = vmatpush1.msra.mxu0 0.0
      %1787 = vmatprep.subr.mxu0 0.0
      %1788 = vmatpush1.msra.mxu0 0.0
      %1789 = vmatprep.subr.mxu0 0.0
      %1790 = vmatpush1.msra.mxu0 0.0
      %1791 = vmatprep.subr.mxu0 0.0
      %1792 = vmatpush1.msra.mxu0 0.0
      %1793 = vmatprep.subr.mxu0 0.0
      %1794 = vmatpush1.msra.mxu0 0.0
      %1795 = vmatprep.subr.mxu0 0.0
      %1796 = vmatpush1.msra.mxu0 0.0
      %1797 = vmatprep.mubr.f32.mxu0 0.0
      %1798 = vmatmul.mubr.f32.gmra.mrb[0].mxu0 %v1731
      %v1799 = vpop.f32.mrb[0].mxu0
      %v1800 = vadd.f32 0.0, %v1799
      %v1801 = vpop.f32.mrb[0].mxu0
      %1802 = vdwg.mxu0
      %v1804 = vsel %vm634, %v330, 0
      %1806 = vmatprep.subr.mxu0 0.0
      %1807 = vmatpush1.msra.mxu0 %v442
      %1808 = vmatprep.subr.mxu0 0.0
      %1809 = vmatpush1.msra.mxu0 %v443
      %1810 = vmatprep.subr.mxu0 0.0
      %1811 = vmatpush1.msra.mxu0 %v444
      %1812 = vmatprep.subr.mxu0 0.0
      %1813 = vmatpush1.msra.mxu0 %v445
      %1814 = vmatprep.subr.mxu0 0.0
      %1815 = vmatpush1.msra.mxu0 0.0
      %1816 = vmatprep.subr.mxu0 0.0
      %1817 = vmatpush1.msra.mxu0 0.0
      %1818 = vmatprep.subr.mxu0 0.0
      %1819 = vmatpush1.msra.mxu0 0.0
      %1820 = vmatprep.subr.mxu0 0.0
      %1821 = vmatpush1.msra.mxu0 0.0
      %1822 = vmatprep.subr.mxu0 0.0
      %1823 = vmatpush1.msra.mxu0 0.0
      %1824 = vmatprep.subr.mxu0 0.0
      %1825 = vmatpush1.msra.mxu0 0.0
      %1826 = vmatprep.subr.mxu0 0.0
      %1827 = vmatpush1.msra.mxu0 0.0
      %1828 = vmatprep.subr.mxu0 0.0
      %1829 = vmatpush1.msra.mxu0 0.0
      %1830 = vmatprep.subr.mxu0 0.0
      %1831 = vmatpush1.msra.mxu0 0.0
      %1832 = vmatprep.subr.mxu0 0.0
      %1833 = vmatpush1.msra.mxu0 0.0
      %1834 = vmatprep.subr.mxu0 0.0
      %1835 = vmatpush1.msra.mxu0 0.0
      %1836 = vmatprep.subr.mxu0 0.0
      %1837 = vmatpush1.msra.mxu0 0.0
      %1838 = vmatprep.subr.mxu0 0.0
      %1839 = vmatpush1.msra.mxu0 0.0
      %1840 = vmatprep.subr.mxu0 0.0
      %1841 = vmatpush1.msra.mxu0 0.0
      %1842 = vmatprep.subr.mxu0 0.0
      %1843 = vmatpush1.msra.mxu0 0.0
      %1844 = vmatprep.subr.mxu0 0.0
      %1845 = vmatpush1.msra.mxu0 0.0
      %1846 = vmatprep.subr.mxu0 0.0
      %1847 = vmatpush1.msra.mxu0 0.0
      %1848 = vmatprep.subr.mxu0 0.0
      %1849 = vmatpush1.msra.mxu0 0.0
      %1850 = vmatprep.subr.mxu0 0.0
      %1851 = vmatpush1.msra.mxu0 0.0
      %1852 = vmatprep.subr.mxu0 0.0
      %1853 = vmatpush1.msra.mxu0 0.0
      %1854 = vmatprep.subr.mxu0 0.0
      %1855 = vmatpush1.msra.mxu0 0.0
      %1856 = vmatprep.subr.mxu0 0.0
      %1857 = vmatpush1.msra.mxu0 0.0
      %1858 = vmatprep.subr.mxu0 0.0
      %1859 = vmatpush1.msra.mxu0 0.0
      %1860 = vmatprep.subr.mxu0 0.0
      %1861 = vmatpush1.msra.mxu0 0.0
      %1862 = vmatprep.subr.mxu0 0.0
      %1863 = vmatpush1.msra.mxu0 0.0
      %1864 = vmatprep.subr.mxu0 0.0
      %1865 = vmatpush1.msra.mxu0 0.0
      %1866 = vmatprep.subr.mxu0 0.0
      %1867 = vmatpush1.msra.mxu0 0.0
      %1868 = vmatprep.subr.mxu0 0.0
      %1869 = vmatpush1.msra.mxu0 0.0
      %1870 = vmatprep.mubr.f32.mxu0 0.0
      %1871 = vmatmul.mubr.f32.gmra.mrb[0].mxu0 %v1804
      %v1872 = vpop.f32.mrb[0].mxu0
      %v1873 = vadd.f32 0.0, %v1872
      %v1874 = vpop.f32.mrb[0].mxu0
      %1875 = vdwg.mxu0
      %v1877 = vsel %vm634, %v331, 0
      %1879 = vmatprep.subr.mxu0 0.0
      %1880 = vmatpush1.msra.mxu0 %v446
      %1881 = vmatprep.subr.mxu0 0.0
      %1882 = vmatpush1.msra.mxu0 %v447
      %1883 = vmatprep.subr.mxu0 0.0
      %1884 = vmatpush1.msra.mxu0 %v448
      %1885 = vmatprep.subr.mxu0 0.0
      %1886 = vmatpush1.msra.mxu0 %v449
      %1887 = vmatprep.subr.mxu0 0.0
      %1888 = vmatpush1.msra.mxu0 0.0
      %1889 = vmatprep.subr.mxu0 0.0
      %1890 = vmatpush1.msra.mxu0 0.0
      %1891 = vmatprep.subr.mxu0 0.0
      %1892 = vmatpush1.msra.mxu0 0.0
      %1893 = vmatprep.subr.mxu0 0.0
      %1894 = vmatpush1.msra.mxu0 0.0
      %1895 = vmatprep.subr.mxu0 0.0
      %1896 = vmatpush1.msra.mxu0 0.0
      %1897 = vmatprep.subr.mxu0 0.0
      %1898 = vmatpush1.msra.mxu0 0.0
      %1899 = vmatprep.subr.mxu0 0.0
      %1900 = vmatpush1.msra.mxu0 0.0
      %1901 = vmatprep.subr.mxu0 0.0
      %1902 = vmatpush1.msra.mxu0 0.0
      %1903 = vmatprep.subr.mxu0 0.0
      %1904 = vmatpush1.msra.mxu0 0.0
      %1905 = vmatprep.subr.mxu0 0.0
      %1906 = vmatpush1.msra.mxu0 0.0
      %1907 = vmatprep.subr.mxu0 0.0
      %1908 = vmatpush1.msra.mxu0 0.0
      %1909 = vmatprep.subr.mxu0 0.0
      %1910 = vmatpush1.msra.mxu0 0.0
      %1911 = vmatprep.subr.mxu0 0.0
      %1912 = vmatpush1.msra.mxu0 0.0
      %1913 = vmatprep.subr.mxu0 0.0
      %1914 = vmatpush1.msra.mxu0 0.0
      %1915 = vmatprep.subr.mxu0 0.0
      %1916 = vmatpush1.msra.mxu0 0.0
      %1917 = vmatprep.subr.mxu0 0.0
      %1918 = vmatpush1.msra.mxu0 0.0
      %1919 = vmatprep.subr.mxu0 0.0
      %1920 = vmatpush1.msra.mxu0 0.0
      %1921 = vmatprep.subr.mxu0 0.0
      %1922 = vmatpush1.msra.mxu0 0.0
      %1923 = vmatprep.subr.mxu0 0.0
      %1924 = vmatpush1.msra.mxu0 0.0
      %1925 = vmatprep.subr.mxu0 0.0
      %1926 = vmatpush1.msra.mxu0 0.0
      %1927 = vmatprep.subr.mxu0 0.0
      %1928 = vmatpush1.msra.mxu0 0.0
      %1929 = vmatprep.subr.mxu0 0.0
      %1930 = vmatpush1.msra.mxu0 0.0
      %1931 = vmatprep.subr.mxu0 0.0
      %1932 = vmatpush1.msra.mxu0 0.0
      %1933 = vmatprep.subr.mxu0 0.0
      %1934 = vmatpush1.msra.mxu0 0.0
      %1935 = vmatprep.subr.mxu0 0.0
      %1936 = vmatpush1.msra.mxu0 0.0
      %1937 = vmatprep.subr.mxu0 0.0
      %1938 = vmatpush1.msra.mxu0 0.0
      %1939 = vmatprep.subr.mxu0 0.0
      %1940 = vmatpush1.msra.mxu0 0.0
      %1941 = vmatprep.subr.mxu0 0.0
      %1942 = vmatpush1.msra.mxu0 0.0
      %1943 = vmatprep.mubr.f32.mxu0 0.0
      %1944 = vmatmul.mubr.f32.gmra.mrb[0].mxu0 %v1877
      %v1945 = vpop.f32.mrb[0].mxu0
      %v1946 = vadd.f32 0.0, %v1945
      %v1947 = vpop.f32.mrb[0].mxu0
      %1948 = vdwg.mxu0
      %v1950 = vsel %vm634, %v332, 0
      %1952 = vmatprep.subr.mxu0 0.0
      %1953 = vmatpush1.msra.mxu0 %v450
      %1954 = vmatprep.subr.mxu0 0.0
      %1955 = vmatpush1.msra.mxu0 %v451
      %1956 = vmatprep.subr.mxu0 0.0
      %1957 = vmatpush1.msra.mxu0 %v452
      %1958 = vmatprep.subr.mxu0 0.0
      %1959 = vmatpush1.msra.mxu0 %v453
      %1960 = vmatprep.subr.mxu0 0.0
      %1961 = vmatpush1.msra.mxu0 0.0
      %1962 = vmatprep.subr.mxu0 0.0
      %1963 = vmatpush1.msra.mxu0 0.0
      %1964 = vmatprep.subr.mxu0 0.0
      %1965 = vmatpush1.msra.mxu0 0.0
      %1966 = vmatprep.subr.mxu0 0.0
      %1967 = vmatpush1.msra.mxu0 0.0
      %1968 = vmatprep.subr.mxu0 0.0
      %1969 = vmatpush1.msra.mxu0 0.0
      %1970 = vmatprep.subr.mxu0 0.0
      %1971 = vmatpush1.msra.mxu0 0.0
      %1972 = vmatprep.subr.mxu0 0.0
      %1973 = vmatpush1.msra.mxu0 0.0
      %1974 = vmatprep.subr.mxu0 0.0
      %1975 = vmatpush1.msra.mxu0 0.0
      %1976 = vmatprep.subr.mxu0 0.0
      %1977 = vmatpush1.msra.mxu0 0.0
      %1978 = vmatprep.subr.mxu0 0.0
      %1979 = vmatpush1.msra.mxu0 0.0
      %1980 = vmatprep.subr.mxu0 0.0
      %1981 = vmatpush1.msra.mxu0 0.0
      %1982 = vmatprep.subr.mxu0 0.0
      %1983 = vmatpush1.msra.mxu0 0.0
      %1984 = vmatprep.subr.mxu0 0.0
      %1985 = vmatpush1.msra.mxu0 0.0
      %1986 = vmatprep.subr.mxu0 0.0
      %1987 = vmatpush1.msra.mxu0 0.0
      %1988 = vmatprep.subr.mxu0 0.0
      %1989 = vmatpush1.msra.mxu0 0.0
      %1990 = vmatprep.subr.mxu0 0.0
      %1991 = vmatpush1.msra.mxu0 0.0
      %1992 = vmatprep.subr.mxu0 0.0
      %1993 = vmatpush1.msra.mxu0 0.0
      %1994 = vmatprep.subr.mxu0 0.0
      %1995 = vmatpush1.msra.mxu0 0.0
      %1996 = vmatprep.subr.mxu0 0.0
      %1997 = vmatpush1.msra.mxu0 0.0
      %1998 = vmatprep.subr.mxu0 0.0
      %1999 = vmatpush1.msra.mxu0 0.0
      %2000 = vmatprep.subr.mxu0 0.0
      %2001 = vmatpush1.msra.mxu0 0.0
      %2002 = vmatprep.subr.mxu0 0.0
      %2003 = vmatpush1.msra.mxu0 0.0
      %2004 = vmatprep.subr.mxu0 0.0
      %2005 = vmatpush1.msra.mxu0 0.0
      %2006 = vmatprep.subr.mxu0 0.0
      %2007 = vmatpush1.msra.mxu0 0.0
      %2008 = vmatprep.subr.mxu0 0.0
      %2009 = vmatpush1.msra.mxu0 0.0
      %2010 = vmatprep.subr.mxu0 0.0
      %2011 = vmatpush1.msra.mxu0 0.0
      %2012 = vmatprep.subr.mxu0 0.0
      %2013 = vmatpush1.msra.mxu0 0.0
      %2014 = vmatprep.subr.mxu0 0.0
      %2015 = vmatpush1.msra.mxu0 0.0
      %2016 = vmatprep.mubr.f32.mxu0 0.0
      %2017 = vmatmul.mubr.f32.gmra.mrb[0].mxu0 %v1950
      %v2018 = vpop.f32.mrb[0].mxu0
      %v2019 = vadd.f32 0.0, %v2018
      %v2020 = vpop.f32.mrb[0].mxu0
      %2021 = vdwg.mxu0
      %v2023 = vsel %vm634, %v333, 0
      %2025 = vmatprep.subr.mxu0 0.0
      %2026 = vmatpush1.msra.mxu0 %v454
      %2027 = vmatprep.subr.mxu0 0.0
      %2028 = vmatpush1.msra.mxu0 %v455
      %2029 = vmatprep.subr.mxu0 0.0
      %2030 = vmatpush1.msra.mxu0 %v456
      %2031 = vmatprep.subr.mxu0 0.0
      %2032 = vmatpush1.msra.mxu0 %v457
      %2033 = vmatprep.subr.mxu0 0.0
      %2034 = vmatpush1.msra.mxu0 0.0
      %2035 = vmatprep.subr.mxu0 0.0
      %2036 = vmatpush1.msra.mxu0 0.0
      %2037 = vmatprep.subr.mxu0 0.0
      %2038 = vmatpush1.msra.mxu0 0.0
      %2039 = vmatprep.subr.mxu0 0.0
      %2040 = vmatpush1.msra.mxu0 0.0
      %2041 = vmatprep.subr.mxu0 0.0
      %2042 = vmatpush1.msra.mxu0 0.0
      %2043 = vmatprep.subr.mxu0 0.0
      %2044 = vmatpush1.msra.mxu0 0.0
      %2045 = vmatprep.subr.mxu0 0.0
      %2046 = vmatpush1.msra.mxu0 0.0
      %2047 = vmatprep.subr.mxu0 0.0
      %2048 = vmatpush1.msra.mxu0 0.0
      %2049 = vmatprep.subr.mxu0 0.0
      %2050 = vmatpush1.msra.mxu0 0.0
      %2051 = vmatprep.subr.mxu0 0.0
      %2052 = vmatpush1.msra.mxu0 0.0
      %2053 = vmatprep.subr.mxu0 0.0
      %2054 = vmatpush1.msra.mxu0 0.0
      %2055 = vmatprep.subr.mxu0 0.0
      %2056 = vmatpush1.msra.mxu0 0.0
      %2057 = vmatprep.subr.mxu0 0.0
      %2058 = vmatpush1.msra.mxu0 0.0
      %2059 = vmatprep.subr.mxu0 0.0
      %2060 = vmatpush1.msra.mxu0 0.0
      %2061 = vmatprep.subr.mxu0 0.0
      %2062 = vmatpush1.msra.mxu0 0.0
      %2063 = vmatprep.subr.mxu0 0.0
      %2064 = vmatpush1.msra.mxu0 0.0
      %2065 = vmatprep.subr.mxu0 0.0
      %2066 = vmatpush1.msra.mxu0 0.0
      %2067 = vmatprep.subr.mxu0 0.0
      %2068 = vmatpush1.msra.mxu0 0.0
      %2069 = vmatprep.subr.mxu0 0.0
      %2070 = vmatpush1.msra.mxu0 0.0
      %2071 = vmatprep.subr.mxu0 0.0
      %2072 = vmatpush1.msra.mxu0 0.0
      %2073 = vmatprep.subr.mxu0 0.0
      %2074 = vmatpush1.msra.mxu0 0.0
      %2075 = vmatprep.subr.mxu0 0.0
      %2076 = vmatpush1.msra.mxu0 0.0
      %2077 = vmatprep.subr.mxu0 0.0
      %2078 = vmatpush1.msra.mxu0 0.0
      %2079 = vmatprep.subr.mxu0 0.0
      %2080 = vmatpush1.msra.mxu0 0.0
      %2081 = vmatprep.subr.mxu0 0.0
      %2082 = vmatpush1.msra.mxu0 0.0
      %2083 = vmatprep.subr.mxu0 0.0
      %2084 = vmatpush1.msra.mxu0 0.0
      %2085 = vmatprep.subr.mxu0 0.0
      %2086 = vmatpush1.msra.mxu0 0.0
      %2087 = vmatprep.subr.mxu0 0.0
      %2088 = vmatpush1.msra.mxu0 0.0
      %2089 = vmatprep.mubr.f32.mxu0 0.0
      %2090 = vmatmul.mubr.f32.gmra.mrb[0].mxu0 %v2023
      %v2091 = vpop.f32.mrb[0].mxu0
      %v2092 = vadd.f32 0.0, %v2091
      %v2093 = vpop.f32.mrb[0].mxu0
      %2094 = vdwg.mxu0
      %v2096 = vsel %vm634, %v334, 0
      %2098 = vmatprep.subr.mxu0 0.0
      %2099 = vmatpush1.msra.mxu0 %v458
      %2100 = vmatprep.subr.mxu0 0.0
      %2101 = vmatpush1.msra.mxu0 %v459
      %2102 = vmatprep.subr.mxu0 0.0
      %2103 = vmatpush1.msra.mxu0 %v460
      %2104 = vmatprep.subr.mxu0 0.0
      %2105 = vmatpush1.msra.mxu0 %v461
      %2106 = vmatprep.subr.mxu0 0.0
      %2107 = vmatpush1.msra.mxu0 0.0
      %2108 = vmatprep.subr.mxu0 0.0
      %2109 = vmatpush1.msra.mxu0 0.0
      %2110 = vmatprep.subr.mxu0 0.0
      %2111 = vmatpush1.msra.mxu0 0.0
      %2112 = vmatprep.subr.mxu0 0.0
      %2113 = vmatpush1.msra.mxu0 0.0
      %2114 = vmatprep.subr.mxu0 0.0
      %2115 = vmatpush1.msra.mxu0 0.0
      %2116 = vmatprep.subr.mxu0 0.0
      %2117 = vmatpush1.msra.mxu0 0.0
      %2118 = vmatprep.subr.mxu0 0.0
      %2119 = vmatpush1.msra.mxu0 0.0
      %2120 = vmatprep.subr.mxu0 0.0
      %2121 = vmatpush1.msra.mxu0 0.0
      %2122 = vmatprep.subr.mxu0 0.0
      %2123 = vmatpush1.msra.mxu0 0.0
      %2124 = vmatprep.subr.mxu0 0.0
      %2125 = vmatpush1.msra.mxu0 0.0
      %2126 = vmatprep.subr.mxu0 0.0
      %2127 = vmatpush1.msra.mxu0 0.0
      %2128 = vmatprep.subr.mxu0 0.0
      %2129 = vmatpush1.msra.mxu0 0.0
      %2130 = vmatprep.subr.mxu0 0.0
      %2131 = vmatpush1.msra.mxu0 0.0
      %2132 = vmatprep.subr.mxu0 0.0
      %2133 = vmatpush1.msra.mxu0 0.0
      %2134 = vmatprep.subr.mxu0 0.0
      %2135 = vmatpush1.msra.mxu0 0.0
      %2136 = vmatprep.subr.mxu0 0.0
      %2137 = vmatpush1.msra.mxu0 0.0
      %2138 = vmatprep.subr.mxu0 0.0
      %2139 = vmatpush1.msra.mxu0 0.0
      %2140 = vmatprep.subr.mxu0 0.0
      %2141 = vmatpush1.msra.mxu0 0.0
      %2142 = vmatprep.subr.mxu0 0.0
      %2143 = vmatpush1.msra.mxu0 0.0
      %2144 = vmatprep.subr.mxu0 0.0
      %2145 = vmatpush1.msra.mxu0 0.0
      %2146 = vmatprep.subr.mxu0 0.0
      %2147 = vmatpush1.msra.mxu0 0.0
      %2148 = vmatprep.subr.mxu0 0.0
      %2149 = vmatpush1.msra.mxu0 0.0
      %2150 = vmatprep.subr.mxu0 0.0
      %2151 = vmatpush1.msra.mxu0 0.0
      %2152 = vmatprep.subr.mxu0 0.0
      %2153 = vmatpush1.msra.mxu0 0.0
      %2154 = vmatprep.subr.mxu0 0.0
      %2155 = vmatpush1.msra.mxu0 0.0
      %2156 = vmatprep.subr.mxu0 0.0
      %2157 = vmatpush1.msra.mxu0 0.0
      %2158 = vmatprep.subr.mxu0 0.0
      %2159 = vmatpush1.msra.mxu0 0.0
      %2160 = vmatprep.subr.mxu0 0.0
      %2161 = vmatpush1.msra.mxu0 0.0
      %2162 = vmatprep.mubr.f32.mxu0 0.0
      %2163 = vmatmul.mubr.f32.gmra.mrb[0].mxu0 %v2096
      %v2164 = vpop.f32.mrb[0].mxu0
      %v2165 = vadd.f32 0.0, %v2164
      %v2166 = vpop.f32.mrb[0].mxu0
      %2167 = vdwg.mxu0
      %v2169 = vsel %vm634, %v335, 0
      %2171 = vmatprep.subr.mxu0 0.0
      %2172 = vmatpush1.msra.mxu0 %v462
      %2173 = vmatprep.subr.mxu0 0.0
      %2174 = vmatpush1.msra.mxu0 %v463
      %2175 = vmatprep.subr.mxu0 0.0
      %2176 = vmatpush1.msra.mxu0 %v464
      %2177 = vmatprep.subr.mxu0 0.0
      %2178 = vmatpush1.msra.mxu0 %v465
      %2179 = vmatprep.subr.mxu0 0.0
      %2180 = vmatpush1.msra.mxu0 0.0
      %2181 = vmatprep.subr.mxu0 0.0
      %2182 = vmatpush1.msra.mxu0 0.0
      %2183 = vmatprep.subr.mxu0 0.0
      %2184 = vmatpush1.msra.mxu0 0.0
      %2185 = vmatprep.subr.mxu0 0.0
      %2186 = vmatpush1.msra.mxu0 0.0
      %2187 = vmatprep.subr.mxu0 0.0
      %2188 = vmatpush1.msra.mxu0 0.0
      %2189 = vmatprep.subr.mxu0 0.0
      %2190 = vmatpush1.msra.mxu0 0.0
      %2191 = vmatprep.subr.mxu0 0.0
      %2192 = vmatpush1.msra.mxu0 0.0
      %2193 = vmatprep.subr.mxu0 0.0
      %2194 = vmatpush1.msra.mxu0 0.0
      %2195 = vmatprep.subr.mxu0 0.0
      %2196 = vmatpush1.msra.mxu0 0.0
      %2197 = vmatprep.subr.mxu0 0.0
      %2198 = vmatpush1.msra.mxu0 0.0
      %2199 = vmatprep.subr.mxu0 0.0
      %2200 = vmatpush1.msra.mxu0 0.0
      %2201 = vmatprep.subr.mxu0 0.0
      %2202 = vmatpush1.msra.mxu0 0.0
      %2203 = vmatprep.subr.mxu0 0.0
      %2204 = vmatpush1.msra.mxu0 0.0
      %2205 = vmatprep.subr.mxu0 0.0
      %2206 = vmatpush1.msra.mxu0 0.0
      %2207 = vmatprep.subr.mxu0 0.0
      %2208 = vmatpush1.msra.mxu0 0.0
      %2209 = vmatprep.subr.mxu0 0.0
      %2210 = vmatpush1.msra.mxu0 0.0
      %2211 = vmatprep.subr.mxu0 0.0
      %2212 = vmatpush1.msra.mxu0 0.0
      %2213 = vmatprep.subr.mxu0 0.0
      %2214 = vmatpush1.msra.mxu0 0.0
      %2215 = vmatprep.subr.mxu0 0.0
      %2216 = vmatpush1.msra.mxu0 0.0
      %2217 = vmatprep.subr.mxu0 0.0
      %2218 = vmatpush1.msra.mxu0 0.0
      %2219 = vmatprep.subr.mxu0 0.0
      %2220 = vmatpush1.msra.mxu0 0.0
      %2221 = vmatprep.subr.mxu0 0.0
      %2222 = vmatpush1.msra.mxu0 0.0
      %2223 = vmatprep.subr.mxu0 0.0
      %2224 = vmatpush1.msra.mxu0 0.0
      %2225 = vmatprep.subr.mxu0 0.0
      %2226 = vmatpush1.msra.mxu0 0.0
      %2227 = vmatprep.subr.mxu0 0.0
      %2228 = vmatpush1.msra.mxu0 0.0
      %2229 = vmatprep.subr.mxu0 0.0
      %2230 = vmatpush1.msra.mxu0 0.0
      %2231 = vmatprep.subr.mxu0 0.0
      %2232 = vmatpush1.msra.mxu0 0.0
      %2233 = vmatprep.subr.mxu0 0.0
      %2234 = vmatpush1.msra.mxu0 0.0
      %2235 = vmatprep.mubr.f32.mxu0 0.0
      %2236 = vmatmul.mubr.f32.gmra.mrb[0].mxu0 %v2169
      %v2237 = vpop.f32.mrb[0].mxu0
      %v2238 = vadd.f32 0.0, %v2237
      %v2239 = vpop.f32.mrb[0].mxu0
      %2240 = vdwg.mxu0
      %v2242 = vsel %vm634, %v336, 0
      %2244 = vmatprep.subr.mxu0 0.0
      %2245 = vmatpush1.msra.mxu0 %v466
      %2246 = vmatprep.subr.mxu0 0.0
      %2247 = vmatpush1.msra.mxu0 %v467
      %2248 = vmatprep.subr.mxu0 0.0
      %2249 = vmatpush1.msra.mxu0 %v468
      %2250 = vmatprep.subr.mxu0 0.0
      %2251 = vmatpush1.msra.mxu0 %v469
      %2252 = vmatprep.subr.mxu0 0.0
      %2253 = vmatpush1.msra.mxu0 0.0
      %2254 = vmatprep.subr.mxu0 0.0
      %2255 = vmatpush1.msra.mxu0 0.0
      %2256 = vmatprep.subr.mxu0 0.0
      %2257 = vmatpush1.msra.mxu0 0.0
      %2258 = vmatprep.subr.mxu0 0.0
      %2259 = vmatpush1.msra.mxu0 0.0
      %2260 = vmatprep.subr.mxu0 0.0
      %2261 = vmatpush1.msra.mxu0 0.0
      %2262 = vmatprep.subr.mxu0 0.0
      %2263 = vmatpush1.msra.mxu0 0.0
      %2264 = vmatprep.subr.mxu0 0.0
      %2265 = vmatpush1.msra.mxu0 0.0
      %2266 = vmatprep.subr.mxu0 0.0
      %2267 = vmatpush1.msra.mxu0 0.0
      %2268 = vmatprep.subr.mxu0 0.0
      %2269 = vmatpush1.msra.mxu0 0.0
      %2270 = vmatprep.subr.mxu0 0.0
      %2271 = vmatpush1.msra.mxu0 0.0
      %2272 = vmatprep.subr.mxu0 0.0
      %2273 = vmatpush1.msra.mxu0 0.0
      %2274 = vmatprep.subr.mxu0 0.0
      %2275 = vmatpush1.msra.mxu0 0.0
      %2276 = vmatprep.subr.mxu0 0.0
      %2277 = vmatpush1.msra.mxu0 0.0
      %2278 = vmatprep.subr.mxu0 0.0
      %2279 = vmatpush1.msra.mxu0 0.0
      %2280 = vmatprep.subr.mxu0 0.0
      %2281 = vmatpush1.msra.mxu0 0.0
      %2282 = vmatprep.subr.mxu0 0.0
      %2283 = vmatpush1.msra.mxu0 0.0
      %2284 = vmatprep.subr.mxu0 0.0
      %2285 = vmatpush1.msra.mxu0 0.0
      %2286 = vmatprep.subr.mxu0 0.0
      %2287 = vmatpush1.msra.mxu0 0.0
      %2288 = vmatprep.subr.mxu0 0.0
      %2289 = vmatpush1.msra.mxu0 0.0
      %2290 = vmatprep.subr.mxu0 0.0
      %2291 = vmatpush1.msra.mxu0 0.0
      %2292 = vmatprep.subr.mxu0 0.0
      %2293 = vmatpush1.msra.mxu0 0.0
      %2294 = vmatprep.subr.mxu0 0.0
      %2295 = vmatpush1.msra.mxu0 0.0
      %2296 = vmatprep.subr.mxu0 0.0
      %2297 = vmatpush1.msra.mxu0 0.0
      %2298 = vmatprep.subr.mxu0 0.0
      %2299 = vmatpush1.msra.mxu0 0.0
      %2300 = vmatprep.subr.mxu0 0.0
      %2301 = vmatpush1.msra.mxu0 0.0
      %2302 = vmatprep.subr.mxu0 0.0
      %2303 = vmatpush1.msra.mxu0 0.0
      %2304 = vmatprep.subr.mxu0 0.0
      %2305 = vmatpush1.msra.mxu0 0.0
      %2306 = vmatprep.subr.mxu0 0.0
      %2307 = vmatpush1.msra.mxu0 0.0
      %2308 = vmatprep.mubr.f32.mxu0 0.0
      %2309 = vmatmul.mubr.f32.gmra.mrb[0].mxu0 %v2242
      %v2310 = vpop.f32.mrb[0].mxu0
      %v2311 = vadd.f32 0.0, %v2310
      %v2312 = vpop.f32.mrb[0].mxu0
      %2313 = vdwg.mxu0
      %v2315 = vsel %vm634, %v337, 0
      %2317 = vmatprep.subr.mxu0 0.0
      %2318 = vmatpush1.msra.mxu0 %v470
      %2319 = vmatprep.subr.mxu0 0.0
      %2320 = vmatpush1.msra.mxu0 %v471
      %2321 = vmatprep.subr.mxu0 0.0
      %2322 = vmatpush1.msra.mxu0 %v472
      %2323 = vmatprep.subr.mxu0 0.0
      %2324 = vmatpush1.msra.mxu0 %v473
      %2325 = vmatprep.subr.mxu0 0.0
      %2326 = vmatpush1.msra.mxu0 0.0
      %2327 = vmatprep.subr.mxu0 0.0
      %2328 = vmatpush1.msra.mxu0 0.0
      %2329 = vmatprep.subr.mxu0 0.0
      %2330 = vmatpush1.msra.mxu0 0.0
      %2331 = vmatprep.subr.mxu0 0.0
      %2332 = vmatpush1.msra.mxu0 0.0
      %2333 = vmatprep.subr.mxu0 0.0
      %2334 = vmatpush1.msra.mxu0 0.0
      %2335 = vmatprep.subr.mxu0 0.0
      %2336 = vmatpush1.msra.mxu0 0.0
      %2337 = vmatprep.subr.mxu0 0.0
      %2338 = vmatpush1.msra.mxu0 0.0
      %2339 = vmatprep.subr.mxu0 0.0
      %2340 = vmatpush1.msra.mxu0 0.0
      %2341 = vmatprep.subr.mxu0 0.0
      %2342 = vmatpush1.msra.mxu0 0.0
      %2343 = vmatprep.subr.mxu0 0.0
      %2344 = vmatpush1.msra.mxu0 0.0
      %2345 = vmatprep.subr.mxu0 0.0
      %2346 = vmatpush1.msra.mxu0 0.0
      %2347 = vmatprep.subr.mxu0 0.0
      %2348 = vmatpush1.msra.mxu0 0.0
      %2349 = vmatprep.subr.mxu0 0.0
      %2350 = vmatpush1.msra.mxu0 0.0
      %2351 = vmatprep.subr.mxu0 0.0
      %2352 = vmatpush1.msra.mxu0 0.0
      %2353 = vmatprep.subr.mxu0 0.0
      %2354 = vmatpush1.msra.mxu0 0.0
      %2355 = vmatprep.subr.mxu0 0.0
      %2356 = vmatpush1.msra.mxu0 0.0
      %2357 = vmatprep.subr.mxu0 0.0
      %2358 = vmatpush1.msra.mxu0 0.0
      %2359 = vmatprep.subr.mxu0 0.0
      %2360 = vmatpush1.msra.mxu0 0.0
      %2361 = vmatprep.subr.mxu0 0.0
      %2362 = vmatpush1.msra.mxu0 0.0
      %2363 = vmatprep.subr.mxu0 0.0
      %2364 = vmatpush1.msra.mxu0 0.0
      %2365 = vmatprep.subr.mxu0 0.0
      %2366 = vmatpush1.msra.mxu0 0.0
      %2367 = vmatprep.subr.mxu0 0.0
      %2368 = vmatpush1.msra.mxu0 0.0
      %2369 = vmatprep.subr.mxu0 0.0
      %2370 = vmatpush1.msra.mxu0 0.0
      %2371 = vmatprep.subr.mxu0 0.0
      %2372 = vmatpush1.msra.mxu0 0.0
      %2373 = vmatprep.subr.mxu0 0.0
      %2374 = vmatpush1.msra.mxu0 0.0
      %2375 = vmatprep.subr.mxu0 0.0
      %2376 = vmatpush1.msra.mxu0 0.0
      %2377 = vmatprep.subr.mxu0 0.0
      %2378 = vmatpush1.msra.mxu0 0.0
      %2379 = vmatprep.subr.mxu0 0.0
      %2380 = vmatpush1.msra.mxu0 0.0
      %2381 = vmatprep.mubr.f32.mxu0 0.0
      %2382 = vmatmul.mubr.f32.gmra.mrb[0].mxu0 %v2315
      %v2383 = vpop.f32.mrb[0].mxu0
      %v2384 = vadd.f32 0.0, %v2383
      %v2385 = vpop.f32.mrb[0].mxu0
      %2386 = vdwg.mxu0
      %v2388 = vsel %vm634, %v338, 0
      %2390 = vmatprep.subr.mxu0 0.0
      %2391 = vmatpush1.msra.mxu0 %v474
      %2392 = vmatprep.subr.mxu0 0.0
      %2393 = vmatpush1.msra.mxu0 %v475
      %2394 = vmatprep.subr.mxu0 0.0
      %2395 = vmatpush1.msra.mxu0 %v476
      %2396 = vmatprep.subr.mxu0 0.0
      %2397 = vmatpush1.msra.mxu0 %v477
      %2398 = vmatprep.subr.mxu0 0.0
      %2399 = vmatpush1.msra.mxu0 0.0
      %2400 = vmatprep.subr.mxu0 0.0
      %2401 = vmatpush1.msra.mxu0 0.0
      %2402 = vmatprep.subr.mxu0 0.0
      %2403 = vmatpush1.msra.mxu0 0.0
      %2404 = vmatprep.subr.mxu0 0.0
      %2405 = vmatpush1.msra.mxu0 0.0
      %2406 = vmatprep.subr.mxu0 0.0
      %2407 = vmatpush1.msra.mxu0 0.0
      %2408 = vmatprep.subr.mxu0 0.0
      %2409 = vmatpush1.msra.mxu0 0.0
      %2410 = vmatprep.subr.mxu0 0.0
      %2411 = vmatpush1.msra.mxu0 0.0
      %2412 = vmatprep.subr.mxu0 0.0
      %2413 = vmatpush1.msra.mxu0 0.0
      %2414 = vmatprep.subr.mxu0 0.0
      %2415 = vmatpush1.msra.mxu0 0.0
      %2416 = vmatprep.subr.mxu0 0.0
      %2417 = vmatpush1.msra.mxu0 0.0
      %2418 = vmatprep.subr.mxu0 0.0
      %2419 = vmatpush1.msra.mxu0 0.0
      %2420 = vmatprep.subr.mxu0 0.0
      %2421 = vmatpush1.msra.mxu0 0.0
      %2422 = vmatprep.subr.mxu0 0.0
      %2423 = vmatpush1.msra.mxu0 0.0
      %2424 = vmatprep.subr.mxu0 0.0
      %2425 = vmatpush1.msra.mxu0 0.0
      %2426 = vmatprep.subr.mxu0 0.0
      %2427 = vmatpush1.msra.mxu0 0.0
      %2428 = vmatprep.subr.mxu0 0.0
      %2429 = vmatpush1.msra.mxu0 0.0
      %2430 = vmatprep.subr.mxu0 0.0
      %2431 = vmatpush1.msra.mxu0 0.0
      %2432 = vmatprep.subr.mxu0 0.0
      %2433 = vmatpush1.msra.mxu0 0.0
      %2434 = vmatprep.subr.mxu0 0.0
      %2435 = vmatpush1.msra.mxu0 0.0
      %2436 = vmatprep.subr.mxu0 0.0
      %2437 = vmatpush1.msra.mxu0 0.0
      %2438 = vmatprep.subr.mxu0 0.0
      %2439 = vmatpush1.msra.mxu0 0.0
      %2440 = vmatprep.subr.mxu0 0.0
      %2441 = vmatpush1.msra.mxu0 0.0
      %2442 = vmatprep.subr.mxu0 0.0
      %2443 = vmatpush1.msra.mxu0 0.0
      %2444 = vmatprep.subr.mxu0 0.0
      %2445 = vmatpush1.msra.mxu0 0.0
      %2446 = vmatprep.subr.mxu0 0.0
      %2447 = vmatpush1.msra.mxu0 0.0
      %2448 = vmatprep.subr.mxu0 0.0
      %2449 = vmatpush1.msra.mxu0 0.0
      %2450 = vmatprep.subr.mxu0 0.0
      %2451 = vmatpush1.msra.mxu0 0.0
      %2452 = vmatprep.subr.mxu0 0.0
      %2453 = vmatpush1.msra.mxu0 0.0
      %2454 = vmatprep.mubr.f32.mxu0 0.0
      %2455 = vmatmul.mubr.f32.gmra.mrb[0].mxu0 %v2388
      %v2456 = vpop.f32.mrb[0].mxu0
      %v2457 = vadd.f32 0.0, %v2456
      %v2458 = vpop.f32.mrb[0].mxu0
      %2459 = vdwg.mxu0
      %v2461 = vsel %vm634, %v339, 0
      %2463 = vmatprep.subr.mxu0 0.0
      %2464 = vmatpush1.msra.mxu0 %v478
      %2465 = vmatprep.subr.mxu0 0.0
      %2466 = vmatpush1.msra.mxu0 %v479
      %2467 = vmatprep.subr.mxu0 0.0
      %2468 = vmatpush1.msra.mxu0 %v480
      %2469 = vmatprep.subr.mxu0 0.0
      %2470 = vmatpush1.msra.mxu0 %v481
      %2471 = vmatprep.subr.mxu0 0.0
      %2472 = vmatpush1.msra.mxu0 0.0
      %2473 = vmatprep.subr.mxu0 0.0
      %2474 = vmatpush1.msra.mxu0 0.0
      %2475 = vmatprep.subr.mxu0 0.0
      %2476 = vmatpush1.msra.mxu0 0.0
      %2477 = vmatprep.subr.mxu0 0.0
      %2478 = vmatpush1.msra.mxu0 0.0
      %2479 = vmatprep.subr.mxu0 0.0
      %2480 = vmatpush1.msra.mxu0 0.0
      %2481 = vmatprep.subr.mxu0 0.0
      %2482 = vmatpush1.msra.mxu0 0.0
      %2483 = vmatprep.subr.mxu0 0.0
      %2484 = vmatpush1.msra.mxu0 0.0
      %2485 = vmatprep.subr.mxu0 0.0
      %2486 = vmatpush1.msra.mxu0 0.0
      %2487 = vmatprep.subr.mxu0 0.0
      %2488 = vmatpush1.msra.mxu0 0.0
      %2489 = vmatprep.subr.mxu0 0.0
      %2490 = vmatpush1.msra.mxu0 0.0
      %2491 = vmatprep.subr.mxu0 0.0
      %2492 = vmatpush1.msra.mxu0 0.0
      %2493 = vmatprep.subr.mxu0 0.0
      %2494 = vmatpush1.msra.mxu0 0.0
      %2495 = vmatprep.subr.mxu0 0.0
      %2496 = vmatpush1.msra.mxu0 0.0
      %2497 = vmatprep.subr.mxu0 0.0
      %2498 = vmatpush1.msra.mxu0 0.0
      %2499 = vmatprep.subr.mxu0 0.0
      %2500 = vmatpush1.msra.mxu0 0.0
      %2501 = vmatprep.subr.mxu0 0.0
      %2502 = vmatpush1.msra.mxu0 0.0
      %2503 = vmatprep.subr.mxu0 0.0
      %2504 = vmatpush1.msra.mxu0 0.0
      %2505 = vmatprep.subr.mxu0 0.0
      %2506 = vmatpush1.msra.mxu0 0.0
      %2507 = vmatprep.subr.mxu0 0.0
      %2508 = vmatpush1.msra.mxu0 0.0
      %2509 = vmatprep.subr.mxu0 0.0
      %2510 = vmatpush1.msra.mxu0 0.0
      %2511 = vmatprep.subr.mxu0 0.0
      %2512 = vmatpush1.msra.mxu0 0.0
      %2513 = vmatprep.subr.mxu0 0.0
      %2514 = vmatpush1.msra.mxu0 0.0
      %2515 = vmatprep.subr.mxu0 0.0
      %2516 = vmatpush1.msra.mxu0 0.0
      %2517 = vmatprep.subr.mxu0 0.0
      %2518 = vmatpush1.msra.mxu0 0.0
      %2519 = vmatprep.subr.mxu0 0.0
      %2520 = vmatpush1.msra.mxu0 0.0
      %2521 = vmatprep.subr.mxu0 0.0
      %2522 = vmatpush1.msra.mxu0 0.0
      %2523 = vmatprep.subr.mxu0 0.0
      %2524 = vmatpush1.msra.mxu0 0.0
      %2525 = vmatprep.subr.mxu0 0.0
      %2526 = vmatpush1.msra.mxu0 0.0
      %2527 = vmatprep.mubr.f32.mxu0 0.0
      %2528 = vmatmul.mubr.f32.gmra.mrb[0].mxu0 %v2461
      %v2529 = vpop.f32.mrb[0].mxu0
      %v2530 = vadd.f32 0.0, %v2529
      %v2531 = vpop.f32.mrb[0].mxu0
      %2532 = vdwg.mxu0
      %v2534 = vsel %vm634, %v340, 0
      %2536 = vmatprep.subr.mxu0 0.0
      %2537 = vmatpush1.msra.mxu0 %v482
      %2538 = vmatprep.subr.mxu0 0.0
      %2539 = vmatpush1.msra.mxu0 %v483
      %2540 = vmatprep.subr.mxu0 0.0
      %2541 = vmatpush1.msra.mxu0 %v484
      %2542 = vmatprep.subr.mxu0 0.0
      %2543 = vmatpush1.msra.mxu0 %v485
      %2544 = vmatprep.subr.mxu0 0.0
      %2545 = vmatpush1.msra.mxu0 0.0
      %2546 = vmatprep.subr.mxu0 0.0
      %2547 = vmatpush1.msra.mxu0 0.0
      %2548 = vmatprep.subr.mxu0 0.0
      %2549 = vmatpush1.msra.mxu0 0.0
      %2550 = vmatprep.subr.mxu0 0.0
      %2551 = vmatpush1.msra.mxu0 0.0
      %2552 = vmatprep.subr.mxu0 0.0
      %2553 = vmatpush1.msra.mxu0 0.0
      %2554 = vmatprep.subr.mxu0 0.0
      %2555 = vmatpush1.msra.mxu0 0.0
      %2556 = vmatprep.subr.mxu0 0.0
      %2557 = vmatpush1.msra.mxu0 0.0
      %2558 = vmatprep.subr.mxu0 0.0
      %2559 = vmatpush1.msra.mxu0 0.0
      %2560 = vmatprep.subr.mxu0 0.0
      %2561 = vmatpush1.msra.mxu0 0.0
      %2562 = vmatprep.subr.mxu0 0.0
      %2563 = vmatpush1.msra.mxu0 0.0
      %2564 = vmatprep.subr.mxu0 0.0
      %2565 = vmatpush1.msra.mxu0 0.0
      %2566 = vmatprep.subr.mxu0 0.0
      %2567 = vmatpush1.msra.mxu0 0.0
      %2568 = vmatprep.subr.mxu0 0.0
      %2569 = vmatpush1.msra.mxu0 0.0
      %2570 = vmatprep.subr.mxu0 0.0
      %2571 = vmatpush1.msra.mxu0 0.0
      %2572 = vmatprep.subr.mxu0 0.0
      %2573 = vmatpush1.msra.mxu0 0.0
      %2574 = vmatprep.subr.mxu0 0.0
      %2575 = vmatpush1.msra.mxu0 0.0
      %2576 = vmatprep.subr.mxu0 0.0
      %2577 = vmatpush1.msra.mxu0 0.0
      %2578 = vmatprep.subr.mxu0 0.0
      %2579 = vmatpush1.msra.mxu0 0.0
      %2580 = vmatprep.subr.mxu0 0.0
      %2581 = vmatpush1.msra.mxu0 0.0
      %2582 = vmatprep.subr.mxu0 0.0
      %2583 = vmatpush1.msra.mxu0 0.0
      %2584 = vmatprep.subr.mxu0 0.0
      %2585 = vmatpush1.msra.mxu0 0.0
      %2586 = vmatprep.subr.mxu0 0.0
      %2587 = vmatpush1.msra.mxu0 0.0
      %2588 = vmatprep.subr.mxu0 0.0
      %2589 = vmatpush1.msra.mxu0 0.0
      %2590 = vmatprep.subr.mxu0 0.0
      %2591 = vmatpush1.msra.mxu0 0.0
      %2592 = vmatprep.subr.mxu0 0.0
      %2593 = vmatpush1.msra.mxu0 0.0
      %2594 = vmatprep.subr.mxu0 0.0
      %2595 = vmatpush1.msra.mxu0 0.0
      %2596 = vmatprep.subr.mxu0 0.0
      %2597 = vmatpush1.msra.mxu0 0.0
      %2598 = vmatprep.subr.mxu0 0.0
      %2599 = vmatpush1.msra.mxu0 0.0
      %2600 = vmatprep.mubr.f32.mxu0 0.0
      %2601 = vmatmul.mubr.f32.gmra.mrb[0].mxu0 %v2534
      %v2602 = vpop.f32.mrb[0].mxu0
      %v2603 = vadd.f32 0.0, %v2602
      %v2604 = vpop.f32.mrb[0].mxu0
      %2605 = vdwg.mxu0
      %v2607 = vsel %vm634, %v341, 0
      %2609 = vmatprep.subr.mxu0 0.0
      %2610 = vmatpush1.msra.mxu0 %v486
      %2611 = vmatprep.subr.mxu0 0.0
      %2612 = vmatpush1.msra.mxu0 %v487
      %2613 = vmatprep.subr.mxu0 0.0
      %2614 = vmatpush1.msra.mxu0 %v488
      %2615 = vmatprep.subr.mxu0 0.0
      %2616 = vmatpush1.msra.mxu0 %v489
      %2617 = vmatprep.subr.mxu0 0.0
      %2618 = vmatpush1.msra.mxu0 0.0
      %2619 = vmatprep.subr.mxu0 0.0
      %2620 = vmatpush1.msra.mxu0 0.0
      %2621 = vmatprep.subr.mxu0 0.0
      %2622 = vmatpush1.msra.mxu0 0.0
      %2623 = vmatprep.subr.mxu0 0.0
      %2624 = vmatpush1.msra.mxu0 0.0
      %2625 = vmatprep.subr.mxu0 0.0
      %2626 = vmatpush1.msra.mxu0 0.0
      %2627 = vmatprep.subr.mxu0 0.0
      %2628 = vmatpush1.msra.mxu0 0.0
      %2629 = vmatprep.subr.mxu0 0.0
      %2630 = vmatpush1.msra.mxu0 0.0
      %2631 = vmatprep.subr.mxu0 0.0
      %2632 = vmatpush1.msra.mxu0 0.0
      %2633 = vmatprep.subr.mxu0 0.0
      %2634 = vmatpush1.msra.mxu0 0.0
      %2635 = vmatprep.subr.mxu0 0.0
      %2636 = vmatpush1.msra.mxu0 0.0
      %2637 = vmatprep.subr.mxu0 0.0
      %2638 = vmatpush1.msra.mxu0 0.0
      %2639 = vmatprep.subr.mxu0 0.0
      %2640 = vmatpush1.msra.mxu0 0.0
      %2641 = vmatprep.subr.mxu0 0.0
      %2642 = vmatpush1.msra.mxu0 0.0
      %2643 = vmatprep.subr.mxu0 0.0
      %2644 = vmatpush1.msra.mxu0 0.0
      %2645 = vmatprep.subr.mxu0 0.0
      %2646 = vmatpush1.msra.mxu0 0.0
      %2647 = vmatprep.subr.mxu0 0.0
      %2648 = vmatpush1.msra.mxu0 0.0
      %2649 = vmatprep.subr.mxu0 0.0
      %2650 = vmatpush1.msra.mxu0 0.0
      %2651 = vmatprep.subr.mxu0 0.0
      %2652 = vmatpush1.msra.mxu0 0.0
      %2653 = vmatprep.subr.mxu0 0.0
      %2654 = vmatpush1.msra.mxu0 0.0
      %2655 = vmatprep.subr.mxu0 0.0
      %2656 = vmatpush1.msra.mxu0 0.0
      %2657 = vmatprep.subr.mxu0 0.0
      %2658 = vmatpush1.msra.mxu0 0.0
      %2659 = vmatprep.subr.mxu0 0.0
      %2660 = vmatpush1.msra.mxu0 0.0
      %2661 = vmatprep.subr.mxu0 0.0
      %2662 = vmatpush1.msra.mxu0 0.0
      %2663 = vmatprep.subr.mxu0 0.0
      %2664 = vmatpush1.msra.mxu0 0.0
      %2665 = vmatprep.subr.mxu0 0.0
      %2666 = vmatpush1.msra.mxu0 0.0
      %2667 = vmatprep.subr.mxu0 0.0
      %2668 = vmatpush1.msra.mxu0 0.0
      %2669 = vmatprep.subr.mxu0 0.0
      %2670 = vmatpush1.msra.mxu0 0.0
      %2671 = vmatprep.subr.mxu0 0.0
      %2672 = vmatpush1.msra.mxu0 0.0
      %2673 = vmatprep.mubr.f32.mxu0 0.0
      %2674 = vmatmul.mubr.f32.gmra.mrb[0].mxu0 %v2607
      %v2675 = vpop.f32.mrb[0].mxu0
      %v2676 = vadd.f32 0.0, %v2675
      %v2677 = vpop.f32.mrb[0].mxu0
      %2678 = vdwg.mxu0
      %v2680 = vsel %vm634, %v342, 0
      %2682 = vmatprep.subr.mxu0 0.0
      %2683 = vmatpush1.msra.mxu0 %v490
      %2684 = vmatprep.subr.mxu0 0.0
      %2685 = vmatpush1.msra.mxu0 %v491
      %2686 = vmatprep.subr.mxu0 0.0
      %2687 = vmatpush1.msra.mxu0 %v492
      %2688 = vmatprep.subr.mxu0 0.0
      %2689 = vmatpush1.msra.mxu0 %v493
      %2690 = vmatprep.subr.mxu0 0.0
      %2691 = vmatpush1.msra.mxu0 0.0
      %2692 = vmatprep.subr.mxu0 0.0
      %2693 = vmatpush1.msra.mxu0 0.0
      %2694 = vmatprep.subr.mxu0 0.0
      %2695 = vmatpush1.msra.mxu0 0.0
      %2696 = vmatprep.subr.mxu0 0.0
      %2697 = vmatpush1.msra.mxu0 0.0
      %2698 = vmatprep.subr.mxu0 0.0
      %2699 = vmatpush1.msra.mxu0 0.0
      %2700 = vmatprep.subr.mxu0 0.0
      %2701 = vmatpush1.msra.mxu0 0.0
      %2702 = vmatprep.subr.mxu0 0.0
      %2703 = vmatpush1.msra.mxu0 0.0
      %2704 = vmatprep.subr.mxu0 0.0
      %2705 = vmatpush1.msra.mxu0 0.0
      %2706 = vmatprep.subr.mxu0 0.0
      %2707 = vmatpush1.msra.mxu0 0.0
      %2708 = vmatprep.subr.mxu0 0.0
      %2709 = vmatpush1.msra.mxu0 0.0
      %2710 = vmatprep.subr.mxu0 0.0
      %2711 = vmatpush1.msra.mxu0 0.0
      %2712 = vmatprep.subr.mxu0 0.0
      %2713 = vmatpush1.msra.mxu0 0.0
      %2714 = vmatprep.subr.mxu0 0.0
      %2715 = vmatpush1.msra.mxu0 0.0
      %2716 = vmatprep.subr.mxu0 0.0
      %2717 = vmatpush1.msra.mxu0 0.0
      %2718 = vmatprep.subr.mxu0 0.0
      %2719 = vmatpush1.msra.mxu0 0.0
      %2720 = vmatprep.subr.mxu0 0.0
      %2721 = vmatpush1.msra.mxu0 0.0
      %2722 = vmatprep.subr.mxu0 0.0
      %2723 = vmatpush1.msra.mxu0 0.0
      %2724 = vmatprep.subr.mxu0 0.0
      %2725 = vmatpush1.msra.mxu0 0.0
      %2726 = vmatprep.subr.mxu0 0.0
      %2727 = vmatpush1.msra.mxu0 0.0
      %2728 = vmatprep.subr.mxu0 0.0
      %2729 = vmatpush1.msra.mxu0 0.0
      %2730 = vmatprep.subr.mxu0 0.0
      %2731 = vmatpush1.msra.mxu0 0.0
      %2732 = vmatprep.subr.mxu0 0.0
      %2733 = vmatpush1.msra.mxu0 0.0
      %2734 = vmatprep.subr.mxu0 0.0
      %2735 = vmatpush1.msra.mxu0 0.0
      %2736 = vmatprep.subr.mxu0 0.0
      %2737 = vmatpush1.msra.mxu0 0.0
      %2738 = vmatprep.subr.mxu0 0.0
      %2739 = vmatpush1.msra.mxu0 0.0
      %2740 = vmatprep.subr.mxu0 0.0
      %2741 = vmatpush1.msra.mxu0 0.0
      %2742 = vmatprep.subr.mxu0 0.0
      %2743 = vmatpush1.msra.mxu0 0.0
      %2744 = vmatprep.subr.mxu0 0.0
      %2745 = vmatpush1.msra.mxu0 0.0
      %2746 = vmatprep.mubr.f32.mxu0 0.0
      %2747 = vmatmul.mubr.f32.gmra.mrb[0].mxu0 %v2680
      %v2748 = vpop.f32.mrb[0].mxu0
      %v2749 = vadd.f32 0.0, %v2748
      %v2750 = vpop.f32.mrb[0].mxu0
      %2751 = vdwg.mxu0
      %v2753 = vsel %vm634, %v343, 0
      %2755 = vmatprep.subr.mxu0 0.0
      %2756 = vmatpush1.msra.mxu0 %v494
      %2757 = vmatprep.subr.mxu0 0.0
      %2758 = vmatpush1.msra.mxu0 %v495
      %2759 = vmatprep.subr.mxu0 0.0
      %2760 = vmatpush1.msra.mxu0 %v496
      %2761 = vmatprep.subr.mxu0 0.0
      %2762 = vmatpush1.msra.mxu0 %v497
      %2763 = vmatprep.subr.mxu0 0.0
      %2764 = vmatpush1.msra.mxu0 0.0
      %2765 = vmatprep.subr.mxu0 0.0
      %2766 = vmatpush1.msra.mxu0 0.0
      %2767 = vmatprep.subr.mxu0 0.0
      %2768 = vmatpush1.msra.mxu0 0.0
      %2769 = vmatprep.subr.mxu0 0.0
      %2770 = vmatpush1.msra.mxu0 0.0
      %2771 = vmatprep.subr.mxu0 0.0
      %2772 = vmatpush1.msra.mxu0 0.0
      %2773 = vmatprep.subr.mxu0 0.0
      %2774 = vmatpush1.msra.mxu0 0.0
      %2775 = vmatprep.subr.mxu0 0.0
      %2776 = vmatpush1.msra.mxu0 0.0
      %2777 = vmatprep.subr.mxu0 0.0
      %2778 = vmatpush1.msra.mxu0 0.0
      %2779 = vmatprep.subr.mxu0 0.0
      %2780 = vmatpush1.msra.mxu0 0.0
      %2781 = vmatprep.subr.mxu0 0.0
      %2782 = vmatpush1.msra.mxu0 0.0
      %2783 = vmatprep.subr.mxu0 0.0
      %2784 = vmatpush1.msra.mxu0 0.0
      %2785 = vmatprep.subr.mxu0 0.0
      %2786 = vmatpush1.msra.mxu0 0.0
      %2787 = vmatprep.subr.mxu0 0.0
      %2788 = vmatpush1.msra.mxu0 0.0
      %2789 = vmatprep.subr.mxu0 0.0
      %2790 = vmatpush1.msra.mxu0 0.0
      %2791 = vmatprep.subr.mxu0 0.0
      %2792 = vmatpush1.msra.mxu0 0.0
      %2793 = vmatprep.subr.mxu0 0.0
      %2794 = vmatpush1.msra.mxu0 0.0
      %2795 = vmatprep.subr.mxu0 0.0
      %2796 = vmatpush1.msra.mxu0 0.0
      %2797 = vmatprep.subr.mxu0 0.0
      %2798 = vmatpush1.msra.mxu0 0.0
      %2799 = vmatprep.subr.mxu0 0.0
      %2800 = vmatpush1.msra.mxu0 0.0
      %2801 = vmatprep.subr.mxu0 0.0
      %2802 = vmatpush1.msra.mxu0 0.0
      %2803 = vmatprep.subr.mxu0 0.0
      %2804 = vmatpush1.msra.mxu0 0.0
      %2805 = vmatprep.subr.mxu0 0.0
      %2806 = vmatpush1.msra.mxu0 0.0
      %2807 = vmatprep.subr.mxu0 0.0
      %2808 = vmatpush1.msra.mxu0 0.0
      %2809 = vmatprep.subr.mxu0 0.0
      %2810 = vmatpush1.msra.mxu0 0.0
      %2811 = vmatprep.subr.mxu0 0.0
      %2812 = vmatpush1.msra.mxu0 0.0
      %2813 = vmatprep.subr.mxu0 0.0
      %2814 = vmatpush1.msra.mxu0 0.0
      %2815 = vmatprep.subr.mxu0 0.0
      %2816 = vmatpush1.msra.mxu0 0.0
      %2817 = vmatprep.subr.mxu0 0.0
      %2818 = vmatpush1.msra.mxu0 0.0
      %2819 = vmatprep.mubr.f32.mxu0 0.0
      %2820 = vmatmul.mubr.f32.gmra.mrb[0].mxu0 %v2753
      %v2821 = vpop.f32.mrb[0].mxu0
      %v2822 = vadd.f32 0.0, %v2821
      %v2823 = vpop.f32.mrb[0].mxu0
      %2824 = vdwg.mxu0
      %v2826 = vsel %vm634, %v344, 0
      %2828 = vmatprep.subr.mxu0 0.0
      %2829 = vmatpush1.msra.mxu0 %v498
      %2830 = vmatprep.subr.mxu0 0.0
      %2831 = vmatpush1.msra.mxu0 %v499
      %2832 = vmatprep.subr.mxu0 0.0
      %2833 = vmatpush1.msra.mxu0 %v500
      %2834 = vmatprep.subr.mxu0 0.0
      %2835 = vmatpush1.msra.mxu0 %v501
      %2836 = vmatprep.subr.mxu0 0.0
      %2837 = vmatpush1.msra.mxu0 0.0
      %2838 = vmatprep.subr.mxu0 0.0
      %2839 = vmatpush1.msra.mxu0 0.0
      %2840 = vmatprep.subr.mxu0 0.0
      %2841 = vmatpush1.msra.mxu0 0.0
      %2842 = vmatprep.subr.mxu0 0.0
      %2843 = vmatpush1.msra.mxu0 0.0
      %2844 = vmatprep.subr.mxu0 0.0
      %2845 = vmatpush1.msra.mxu0 0.0
      %2846 = vmatprep.subr.mxu0 0.0
      %2847 = vmatpush1.msra.mxu0 0.0
      %2848 = vmatprep.subr.mxu0 0.0
      %2849 = vmatpush1.msra.mxu0 0.0
      %2850 = vmatprep.subr.mxu0 0.0
      %2851 = vmatpush1.msra.mxu0 0.0
      %2852 = vmatprep.subr.mxu0 0.0
      %2853 = vmatpush1.msra.mxu0 0.0
      %2854 = vmatprep.subr.mxu0 0.0
      %2855 = vmatpush1.msra.mxu0 0.0
      %2856 = vmatprep.subr.mxu0 0.0
      %2857 = vmatpush1.msra.mxu0 0.0
      %2858 = vmatprep.subr.mxu0 0.0
      %2859 = vmatpush1.msra.mxu0 0.0
      %2860 = vmatprep.subr.mxu0 0.0
      %2861 = vmatpush1.msra.mxu0 0.0
      %2862 = vmatprep.subr.mxu0 0.0
      %2863 = vmatpush1.msra.mxu0 0.0
      %2864 = vmatprep.subr.mxu0 0.0
      %2865 = vmatpush1.msra.mxu0 0.0
      %2866 = vmatprep.subr.mxu0 0.0
      %2867 = vmatpush1.msra.mxu0 0.0
      %2868 = vmatprep.subr.mxu0 0.0
      %2869 = vmatpush1.msra.mxu0 0.0
      %2870 = vmatprep.subr.mxu0 0.0
      %2871 = vmatpush1.msra.mxu0 0.0
      %2872 = vmatprep.subr.mxu0 0.0
      %2873 = vmatpush1.msra.mxu0 0.0
      %2874 = vmatprep.subr.mxu0 0.0
      %2875 = vmatpush1.msra.mxu0 0.0
      %2876 = vmatprep.subr.mxu0 0.0
      %2877 = vmatpush1.msra.mxu0 0.0
      %2878 = vmatprep.subr.mxu0 0.0
      %2879 = vmatpush1.msra.mxu0 0.0
      %2880 = vmatprep.subr.mxu0 0.0
      %2881 = vmatpush1.msra.mxu0 0.0
      %2882 = vmatprep.subr.mxu0 0.0
      %2883 = vmatpush1.msra.mxu0 0.0
      %2884 = vmatprep.subr.mxu0 0.0
      %2885 = vmatpush1.msra.mxu0 0.0
      %2886 = vmatprep.subr.mxu0 0.0
      %2887 = vmatpush1.msra.mxu0 0.0
      %2888 = vmatprep.subr.mxu0 0.0
      %2889 = vmatpush1.msra.mxu0 0.0
      %2890 = vmatprep.subr.mxu0 0.0
      %2891 = vmatpush1.msra.mxu0 0.0
      %2892 = vmatprep.mubr.f32.mxu0 0.0
      %2893 = vmatmul.mubr.f32.gmra.mrb[0].mxu0 %v2826
      %v2894 = vpop.f32.mrb[0].mxu0
      %v2895 = vadd.f32 0.0, %v2894
      %v2896 = vpop.f32.mrb[0].mxu0
      %2897 = vdwg.mxu0
      %v2899 = vsel %vm634, %v345, 0
      %2901 = vmatprep.subr.mxu0 0.0
      %2902 = vmatpush1.msra.mxu0 %v502
      %2903 = vmatprep.subr.mxu0 0.0
      %2904 = vmatpush1.msra.mxu0 %v503
      %2905 = vmatprep.subr.mxu0 0.0
      %2906 = vmatpush1.msra.mxu0 %v504
      %2907 = vmatprep.subr.mxu0 0.0
      %2908 = vmatpush1.msra.mxu0 %v505
      %2909 = vmatprep.subr.mxu0 0.0
      %2910 = vmatpush1.msra.mxu0 0.0
      %2911 = vmatprep.subr.mxu0 0.0
      %2912 = vmatpush1.msra.mxu0 0.0
      %2913 = vmatprep.subr.mxu0 0.0
      %2914 = vmatpush1.msra.mxu0 0.0
      %2915 = vmatprep.subr.mxu0 0.0
      %2916 = vmatpush1.msra.mxu0 0.0
      %2917 = vmatprep.subr.mxu0 0.0
      %2918 = vmatpush1.msra.mxu0 0.0
      %2919 = vmatprep.subr.mxu0 0.0
      %2920 = vmatpush1.msra.mxu0 0.0
      %2921 = vmatprep.subr.mxu0 0.0
      %2922 = vmatpush1.msra.mxu0 0.0
      %2923 = vmatprep.subr.mxu0 0.0
      %2924 = vmatpush1.msra.mxu0 0.0
      %2925 = vmatprep.subr.mxu0 0.0
      %2926 = vmatpush1.msra.mxu0 0.0
      %2927 = vmatprep.subr.mxu0 0.0
      %2928 = vmatpush1.msra.mxu0 0.0
      %2929 = vmatprep.subr.mxu0 0.0
      %2930 = vmatpush1.msra.mxu0 0.0
      %2931 = vmatprep.subr.mxu0 0.0
      %2932 = vmatpush1.msra.mxu0 0.0
      %2933 = vmatprep.subr.mxu0 0.0
      %2934 = vmatpush1.msra.mxu0 0.0
      %2935 = vmatprep.subr.mxu0 0.0
      %2936 = vmatpush1.msra.mxu0 0.0
      %2937 = vmatprep.subr.mxu0 0.0
      %2938 = vmatpush1.msra.mxu0 0.0
      %2939 = vmatprep.subr.mxu0 0.0
      %2940 = vmatpush1.msra.mxu0 0.0
      %2941 = vmatprep.subr.mxu0 0.0
      %2942 = vmatpush1.msra.mxu0 0.0
      %2943 = vmatprep.subr.mxu0 0.0
      %2944 = vmatpush1.msra.mxu0 0.0
      %2945 = vmatprep.subr.mxu0 0.0
      %2946 = vmatpush1.msra.mxu0 0.0
      %2947 = vmatprep.subr.mxu0 0.0
      %2948 = vmatpush1.msra.mxu0 0.0
      %2949 = vmatprep.subr.mxu0 0.0
      %2950 = vmatpush1.msra.mxu0 0.0
      %2951 = vmatprep.subr.mxu0 0.0
      %2952 = vmatpush1.msra.mxu0 0.0
      %2953 = vmatprep.subr.mxu0 0.0
      %2954 = vmatpush1.msra.mxu0 0.0
      %2955 = vmatprep.subr.mxu0 0.0
      %2956 = vmatpush1.msra.mxu0 0.0
      %2957 = vmatprep.subr.mxu0 0.0
      %2958 = vmatpush1.msra.mxu0 0.0
      %2959 = vmatprep.subr.mxu0 0.0
      %2960 = vmatpush1.msra.mxu0 0.0
      %2961 = vmatprep.subr.mxu0 0.0
      %2962 = vmatpush1.msra.mxu0 0.0
      %2963 = vmatprep.subr.mxu0 0.0
      %2964 = vmatpush1.msra.mxu0 0.0
      %2965 = vmatprep.mubr.f32.mxu0 0.0
      %2966 = vmatmul.mubr.f32.gmra.mrb[0].mxu0 %v2899
      %v2967 = vpop.f32.mrb[0].mxu0
      %v2968 = vadd.f32 0.0, %v2967
      %v2969 = vpop.f32.mrb[0].mxu0
      %2970 = vdwg.mxu0
      %v2972 = vsel %vm634, %v346, 0
      %2974 = vmatprep.subr.mxu0 0.0
      %2975 = vmatpush1.msra.mxu0 %v506
      %2976 = vmatprep.subr.mxu0 0.0
      %2977 = vmatpush1.msra.mxu0 %v507
      %2978 = vmatprep.subr.mxu0 0.0
      %2979 = vmatpush1.msra.mxu0 %v508
      %2980 = vmatprep.subr.mxu0 0.0
      %2981 = vmatpush1.msra.mxu0 %v509
      %2982 = vmatprep.subr.mxu0 0.0
      %2983 = vmatpush1.msra.mxu0 0.0
      %2984 = vmatprep.subr.mxu0 0.0
      %2985 = vmatpush1.msra.mxu0 0.0
      %2986 = vmatprep.subr.mxu0 0.0
      %2987 = vmatpush1.msra.mxu0 0.0
      %2988 = vmatprep.subr.mxu0 0.0
      %2989 = vmatpush1.msra.mxu0 0.0
      %2990 = vmatprep.subr.mxu0 0.0
      %2991 = vmatpush1.msra.mxu0 0.0
      %2992 = vmatprep.subr.mxu0 0.0
      %2993 = vmatpush1.msra.mxu0 0.0
      %2994 = vmatprep.subr.mxu0 0.0
      %2995 = vmatpush1.msra.mxu0 0.0
      %2996 = vmatprep.subr.mxu0 0.0
      %2997 = vmatpush1.msra.mxu0 0.0
      %2998 = vmatprep.subr.mxu0 0.0
      %2999 = vmatpush1.msra.mxu0 0.0
      %3000 = vmatprep.subr.mxu0 0.0
      %3001 = vmatpush1.msra.mxu0 0.0
      %3002 = vmatprep.subr.mxu0 0.0
      %3003 = vmatpush1.msra.mxu0 0.0
      %3004 = vmatprep.subr.mxu0 0.0
      %3005 = vmatpush1.msra.mxu0 0.0
      %3006 = vmatprep.subr.mxu0 0.0
      %3007 = vmatpush1.msra.mxu0 0.0
      %3008 = vmatprep.subr.mxu0 0.0
      %3009 = vmatpush1.msra.mxu0 0.0
      %3010 = vmatprep.subr.mxu0 0.0
      %3011 = vmatpush1.msra.mxu0 0.0
      %3012 = vmatprep.subr.mxu0 0.0
      %3013 = vmatpush1.msra.mxu0 0.0
      %3014 = vmatprep.subr.mxu0 0.0
      %3015 = vmatpush1.msra.mxu0 0.0
      %3016 = vmatprep.subr.mxu0 0.0
      %3017 = vmatpush1.msra.mxu0 0.0
      %3018 = vmatprep.subr.mxu0 0.0
      %3019 = vmatpush1.msra.mxu0 0.0
      %3020 = vmatprep.subr.mxu0 0.0
      %3021 = vmatpush1.msra.mxu0 0.0
      %3022 = vmatprep.subr.mxu0 0.0
      %3023 = vmatpush1.msra.mxu0 0.0
      %3024 = vmatprep.subr.mxu0 0.0
      %3025 = vmatpush1.msra.mxu0 0.0
      %3026 = vmatprep.subr.mxu0 0.0
      %3027 = vmatpush1.msra.mxu0 0.0
      %3028 = vmatprep.subr.mxu0 0.0
      %3029 = vmatpush1.msra.mxu0 0.0
      %3030 = vmatprep.subr.mxu0 0.0
      %3031 = vmatpush1.msra.mxu0 0.0
      %3032 = vmatprep.subr.mxu0 0.0
      %3033 = vmatpush1.msra.mxu0 0.0
      %3034 = vmatprep.subr.mxu0 0.0
      %3035 = vmatpush1.msra.mxu0 0.0
      %3036 = vmatprep.subr.mxu0 0.0
      %3037 = vmatpush1.msra.mxu0 0.0
      %3038 = vmatprep.mubr.f32.mxu0 0.0
      %3039 = vmatmul.mubr.f32.gmra.mrb[0].mxu0 %v2972
      %v3040 = vpop.f32.mrb[0].mxu0
      %v3041 = vadd.f32 0.0, %v3040
      %v3042 = vpop.f32.mrb[0].mxu0
      %3043 = vdwg.mxu0
      %v3045 = vsel %vm634, %v347, 0
      %3047 = vmatprep.subr.mxu0 0.0
      %3048 = vmatpush1.msra.mxu0 %v510
      %3049 = vmatprep.subr.mxu0 0.0
      %3050 = vmatpush1.msra.mxu0 %v511
      %3051 = vmatprep.subr.mxu0 0.0
      %3052 = vmatpush1.msra.mxu0 %v512
      %3053 = vmatprep.subr.mxu0 0.0
      %3054 = vmatpush1.msra.mxu0 %v513
      %3055 = vmatprep.subr.mxu0 0.0
      %3056 = vmatpush1.msra.mxu0 0.0
      %3057 = vmatprep.subr.mxu0 0.0
      %3058 = vmatpush1.msra.mxu0 0.0
      %3059 = vmatprep.subr.mxu0 0.0
      %3060 = vmatpush1.msra.mxu0 0.0
      %3061 = vmatprep.subr.mxu0 0.0
      %3062 = vmatpush1.msra.mxu0 0.0
      %3063 = vmatprep.subr.mxu0 0.0
      %3064 = vmatpush1.msra.mxu0 0.0
      %3065 = vmatprep.subr.mxu0 0.0
      %3066 = vmatpush1.msra.mxu0 0.0
      %3067 = vmatprep.subr.mxu0 0.0
      %3068 = vmatpush1.msra.mxu0 0.0
      %3069 = vmatprep.subr.mxu0 0.0
      %3070 = vmatpush1.msra.mxu0 0.0
      %3071 = vmatprep.subr.mxu0 0.0
      %3072 = vmatpush1.msra.mxu0 0.0
      %3073 = vmatprep.subr.mxu0 0.0
      %3074 = vmatpush1.msra.mxu0 0.0
      %3075 = vmatprep.subr.mxu0 0.0
      %3076 = vmatpush1.msra.mxu0 0.0
      %3077 = vmatprep.subr.mxu0 0.0
      %3078 = vmatpush1.msra.mxu0 0.0
      %3079 = vmatprep.subr.mxu0 0.0
      %3080 = vmatpush1.msra.mxu0 0.0
      %3081 = vmatprep.subr.mxu0 0.0
      %3082 = vmatpush1.msra.mxu0 0.0
      %3083 = vmatprep.subr.mxu0 0.0
      %3084 = vmatpush1.msra.mxu0 0.0
      %3085 = vmatprep.subr.mxu0 0.0
      %3086 = vmatpush1.msra.mxu0 0.0
      %3087 = vmatprep.subr.mxu0 0.0
      %3088 = vmatpush1.msra.mxu0 0.0
      %3089 = vmatprep.subr.mxu0 0.0
      %3090 = vmatpush1.msra.mxu0 0.0
      %3091 = vmatprep.subr.mxu0 0.0
      %3092 = vmatpush1.msra.mxu0 0.0
      %3093 = vmatprep.subr.mxu0 0.0
      %3094 = vmatpush1.msra.mxu0 0.0
      %3095 = vmatprep.subr.mxu0 0.0
      %3096 = vmatpush1.msra.mxu0 0.0
      %3097 = vmatprep.subr.mxu0 0.0
      %3098 = vmatpush1.msra.mxu0 0.0
      %3099 = vmatprep.subr.mxu0 0.0
      %3100 = vmatpush1.msra.mxu0 0.0
      %3101 = vmatprep.subr.mxu0 0.0
      %3102 = vmatpush1.msra.mxu0 0.0
      %3103 = vmatprep.subr.mxu0 0.0
      %3104 = vmatpush1.msra.mxu0 0.0
      %3105 = vmatprep.subr.mxu0 0.0
      %3106 = vmatpush1.msra.mxu0 0.0
      %3107 = vmatprep.subr.mxu0 0.0
      %3108 = vmatpush1.msra.mxu0 0.0
      %3109 = vmatprep.subr.mxu0 0.0
      %3110 = vmatpush1.msra.mxu0 0.0
      %3111 = vmatprep.mubr.f32.mxu0 0.0
      %3112 = vmatmul.mubr.f32.gmra.mrb[0].mxu0 %v3045
      %v3113 = vpop.f32.mrb[0].mxu0
      %v3114 = vadd.f32 0.0, %v3113
      %v3115 = vpop.f32.mrb[0].mxu0
      %3116 = vdwg.mxu0
      %v3118 = vsel %vm634, %v348, 0
      %3120 = vmatprep.subr.mxu0 0.0
      %3121 = vmatpush1.msra.mxu0 %v514
      %3122 = vmatprep.subr.mxu0 0.0
      %3123 = vmatpush1.msra.mxu0 %v515
      %3124 = vmatprep.subr.mxu0 0.0
      %3125 = vmatpush1.msra.mxu0 %v516
      %3126 = vmatprep.subr.mxu0 0.0
      %3127 = vmatpush1.msra.mxu0 %v517
      %3128 = vmatprep.subr.mxu0 0.0
      %3129 = vmatpush1.msra.mxu0 0.0
      %3130 = vmatprep.subr.mxu0 0.0
      %3131 = vmatpush1.msra.mxu0 0.0
      %3132 = vmatprep.subr.mxu0 0.0
      %3133 = vmatpush1.msra.mxu0 0.0
      %3134 = vmatprep.subr.mxu0 0.0
      %3135 = vmatpush1.msra.mxu0 0.0
      %3136 = vmatprep.subr.mxu0 0.0
      %3137 = vmatpush1.msra.mxu0 0.0
      %3138 = vmatprep.subr.mxu0 0.0
      %3139 = vmatpush1.msra.mxu0 0.0
      %3140 = vmatprep.subr.mxu0 0.0
      %3141 = vmatpush1.msra.mxu0 0.0
      %3142 = vmatprep.subr.mxu0 0.0
      %3143 = vmatpush1.msra.mxu0 0.0
      %3144 = vmatprep.subr.mxu0 0.0
      %3145 = vmatpush1.msra.mxu0 0.0
      %3146 = vmatprep.subr.mxu0 0.0
      %3147 = vmatpush1.msra.mxu0 0.0
      %3148 = vmatprep.subr.mxu0 0.0
      %3149 = vmatpush1.msra.mxu0 0.0
      %3150 = vmatprep.subr.mxu0 0.0
      %3151 = vmatpush1.msra.mxu0 0.0
      %3152 = vmatprep.subr.mxu0 0.0
      %3153 = vmatpush1.msra.mxu0 0.0
      %3154 = vmatprep.subr.mxu0 0.0
      %3155 = vmatpush1.msra.mxu0 0.0
      %3156 = vmatprep.subr.mxu0 0.0
      %3157 = vmatpush1.msra.mxu0 0.0
      %3158 = vmatprep.subr.mxu0 0.0
      %3159 = vmatpush1.msra.mxu0 0.0
      %3160 = vmatprep.subr.mxu0 0.0
      %3161 = vmatpush1.msra.mxu0 0.0
      %3162 = vmatprep.subr.mxu0 0.0
      %3163 = vmatpush1.msra.mxu0 0.0
      %3164 = vmatprep.subr.mxu0 0.0
      %3165 = vmatpush1.msra.mxu0 0.0
      %3166 = vmatprep.subr.mxu0 0.0
      %3167 = vmatpush1.msra.mxu0 0.0
      %3168 = vmatprep.subr.mxu0 0.0
      %3169 = vmatpush1.msra.mxu0 0.0
      %3170 = vmatprep.subr.mxu0 0.0
      %3171 = vmatpush1.msra.mxu0 0.0
      %3172 = vmatprep.subr.mxu0 0.0
      %3173 = vmatpush1.msra.mxu0 0.0
      %3174 = vmatprep.subr.mxu0 0.0
      %3175 = vmatpush1.msra.mxu0 0.0
      %3176 = vmatprep.subr.mxu0 0.0
      %3177 = vmatpush1.msra.mxu0 0.0
      %3178 = vmatprep.subr.mxu0 0.0
      %3179 = vmatpush1.msra.mxu0 0.0
      %3180 = vmatprep.subr.mxu0 0.0
      %3181 = vmatpush1.msra.mxu0 0.0
      %3182 = vmatprep.subr.mxu0 0.0
      %3183 = vmatpush1.msra.mxu0 0.0
      %3184 = vmatprep.mubr.f32.mxu0 0.0
      %3185 = vmatmul.mubr.f32.gmra.mrb[0].mxu0 %v3118
      %v3186 = vpop.f32.mrb[0].mxu0
      %v3187 = vadd.f32 0.0, %v3186
      %v3188 = vpop.f32.mrb[0].mxu0
      %3189 = vdwg.mxu0
      %v3191 = vsel %vm634, %v349, 0
      %3193 = vmatprep.subr.mxu0 0.0
      %3194 = vmatpush1.msra.mxu0 %v518
      %3195 = vmatprep.subr.mxu0 0.0
      %3196 = vmatpush1.msra.mxu0 %v519
      %3197 = vmatprep.subr.mxu0 0.0
      %3198 = vmatpush1.msra.mxu0 %v520
      %3199 = vmatprep.subr.mxu0 0.0
      %3200 = vmatpush1.msra.mxu0 %v521
      %3201 = vmatprep.subr.mxu0 0.0
      %3202 = vmatpush1.msra.mxu0 0.0
      %3203 = vmatprep.subr.mxu0 0.0
      %3204 = vmatpush1.msra.mxu0 0.0
      %3205 = vmatprep.subr.mxu0 0.0
      %3206 = vmatpush1.msra.mxu0 0.0
      %3207 = vmatprep.subr.mxu0 0.0
      %3208 = vmatpush1.msra.mxu0 0.0
      %3209 = vmatprep.subr.mxu0 0.0
      %3210 = vmatpush1.msra.mxu0 0.0
      %3211 = vmatprep.subr.mxu0 0.0
      %3212 = vmatpush1.msra.mxu0 0.0
      %3213 = vmatprep.subr.mxu0 0.0
      %3214 = vmatpush1.msra.mxu0 0.0
      %3215 = vmatprep.subr.mxu0 0.0
      %3216 = vmatpush1.msra.mxu0 0.0
      %3217 = vmatprep.subr.mxu0 0.0
      %3218 = vmatpush1.msra.mxu0 0.0
      %3219 = vmatprep.subr.mxu0 0.0
      %3220 = vmatpush1.msra.mxu0 0.0
      %3221 = vmatprep.subr.mxu0 0.0
      %3222 = vmatpush1.msra.mxu0 0.0
      %3223 = vmatprep.subr.mxu0 0.0
      %3224 = vmatpush1.msra.mxu0 0.0
      %3225 = vmatprep.subr.mxu0 0.0
      %3226 = vmatpush1.msra.mxu0 0.0
      %3227 = vmatprep.subr.mxu0 0.0
      %3228 = vmatpush1.msra.mxu0 0.0
      %3229 = vmatprep.subr.mxu0 0.0
      %3230 = vmatpush1.msra.mxu0 0.0
      %3231 = vmatprep.subr.mxu0 0.0
      %3232 = vmatpush1.msra.mxu0 0.0
      %3233 = vmatprep.subr.mxu0 0.0
      %3234 = vmatpush1.msra.mxu0 0.0
      %3235 = vmatprep.subr.mxu0 0.0
      %3236 = vmatpush1.msra.mxu0 0.0
      %3237 = vmatprep.subr.mxu0 0.0
      %3238 = vmatpush1.msra.mxu0 0.0
      %3239 = vmatprep.subr.mxu0 0.0
      %3240 = vmatpush1.msra.mxu0 0.0
      %3241 = vmatprep.subr.mxu0 0.0
      %3242 = vmatpush1.msra.mxu0 0.0
      %3243 = vmatprep.subr.mxu0 0.0
      %3244 = vmatpush1.msra.mxu0 0.0
      %3245 = vmatprep.subr.mxu0 0.0
      %3246 = vmatpush1.msra.mxu0 0.0
      %3247 = vmatprep.subr.mxu0 0.0
      %3248 = vmatpush1.msra.mxu0 0.0
      %3249 = vmatprep.subr.mxu0 0.0
      %3250 = vmatpush1.msra.mxu0 0.0
      %3251 = vmatprep.subr.mxu0 0.0
      %3252 = vmatpush1.msra.mxu0 0.0
      %3253 = vmatprep.subr.mxu0 0.0
      %3254 = vmatpush1.msra.mxu0 0.0
      %3255 = vmatprep.subr.mxu0 0.0
      %3256 = vmatpush1.msra.mxu0 0.0
      %3257 = vmatprep.mubr.f32.mxu0 0.0
      %3258 = vmatmul.mubr.f32.gmra.mrb[0].mxu0 %v3191
      %v3259 = vpop.f32.mrb[0].mxu0
      %v3260 = vadd.f32 0.0, %v3259
      %v3261 = vpop.f32.mrb[0].mxu0
      %3262 = vdwg.mxu0
      %v3264 = vsel %vm634, %v350, 0
      %3266 = vmatprep.subr.mxu0 0.0
      %3267 = vmatpush1.msra.mxu0 %v522
      %3268 = vmatprep.subr.mxu0 0.0
      %3269 = vmatpush1.msra.mxu0 %v523
      %3270 = vmatprep.subr.mxu0 0.0
      %3271 = vmatpush1.msra.mxu0 %v524
      %3272 = vmatprep.subr.mxu0 0.0
      %3273 = vmatpush1.msra.mxu0 %v525
      %3274 = vmatprep.subr.mxu0 0.0
      %3275 = vmatpush1.msra.mxu0 0.0
      %3276 = vmatprep.subr.mxu0 0.0
      %3277 = vmatpush1.msra.mxu0 0.0
      %3278 = vmatprep.subr.mxu0 0.0
      %3279 = vmatpush1.msra.mxu0 0.0
      %3280 = vmatprep.subr.mxu0 0.0
      %3281 = vmatpush1.msra.mxu0 0.0
      %3282 = vmatprep.subr.mxu0 0.0
      %3283 = vmatpush1.msra.mxu0 0.0
      %3284 = vmatprep.subr.mxu0 0.0
      %3285 = vmatpush1.msra.mxu0 0.0
      %3286 = vmatprep.subr.mxu0 0.0
      %3287 = vmatpush1.msra.mxu0 0.0
      %3288 = vmatprep.subr.mxu0 0.0
      %3289 = vmatpush1.msra.mxu0 0.0
      %3290 = vmatprep.subr.mxu0 0.0
      %3291 = vmatpush1.msra.mxu0 0.0
      %3292 = vmatprep.subr.mxu0 0.0
      %3293 = vmatpush1.msra.mxu0 0.0
      %3294 = vmatprep.subr.mxu0 0.0
      %3295 = vmatpush1.msra.mxu0 0.0
      %3296 = vmatprep.subr.mxu0 0.0
      %3297 = vmatpush1.msra.mxu0 0.0
      %3298 = vmatprep.subr.mxu0 0.0
      %3299 = vmatpush1.msra.mxu0 0.0
      %3300 = vmatprep.subr.mxu0 0.0
      %3301 = vmatpush1.msra.mxu0 0.0
      %3302 = vmatprep.subr.mxu0 0.0
      %3303 = vmatpush1.msra.mxu0 0.0
      %3304 = vmatprep.subr.mxu0 0.0
      %3305 = vmatpush1.msra.mxu0 0.0
      %3306 = vmatprep.subr.mxu0 0.0
      %3307 = vmatpush1.msra.mxu0 0.0
      %3308 = vmatprep.subr.mxu0 0.0
      %3309 = vmatpush1.msra.mxu0 0.0
      %3310 = vmatprep.subr.mxu0 0.0
      %3311 = vmatpush1.msra.mxu0 0.0
      %3312 = vmatprep.subr.mxu0 0.0
      %3313 = vmatpush1.msra.mxu0 0.0
      %3314 = vmatprep.subr.mxu0 0.0
      %3315 = vmatpush1.msra.mxu0 0.0
      %3316 = vmatprep.subr.mxu0 0.0
      %3317 = vmatpush1.msra.mxu0 0.0
      %3318 = vmatprep.subr.mxu0 0.0
      %3319 = vmatpush1.msra.mxu0 0.0
      %3320 = vmatprep.subr.mxu0 0.0
      %3321 = vmatpush1.msra.mxu0 0.0
      %3322 = vmatprep.subr.mxu0 0.0
      %3323 = vmatpush1.msra.mxu0 0.0
      %3324 = vmatprep.subr.mxu0 0.0
      %3325 = vmatpush1.msra.mxu0 0.0
      %3326 = vmatprep.subr.mxu0 0.0
      %3327 = vmatpush1.msra.mxu0 0.0
      %3328 = vmatprep.subr.mxu0 0.0
      %3329 = vmatpush1.msra.mxu0 0.0
      %3330 = vmatprep.mubr.f32.mxu0 0.0
      %3331 = vmatmul.mubr.f32.gmra.mrb[0].mxu0 %v3264
      %v3332 = vpop.f32.mrb[0].mxu0
      %v3333 = vadd.f32 0.0, %v3332
      %v3334 = vpop.f32.mrb[0].mxu0
      %3335 = vdwg.mxu0
      %v3337 = vsel %vm634, %v351, 0
      %3339 = vmatprep.subr.mxu0 0.0
      %3340 = vmatpush1.msra.mxu0 %v526
      %3341 = vmatprep.subr.mxu0 0.0
      %3342 = vmatpush1.msra.mxu0 %v527
      %3343 = vmatprep.subr.mxu0 0.0
      %3344 = vmatpush1.msra.mxu0 %v528
      %3345 = vmatprep.subr.mxu0 0.0
      %3346 = vmatpush1.msra.mxu0 %v529
      %3347 = vmatprep.subr.mxu0 0.0
      %3348 = vmatpush1.msra.mxu0 0.0
      %3349 = vmatprep.subr.mxu0 0.0
      %3350 = vmatpush1.msra.mxu0 0.0
      %3351 = vmatprep.subr.mxu0 0.0
      %3352 = vmatpush1.msra.mxu0 0.0
      %3353 = vmatprep.subr.mxu0 0.0
      %3354 = vmatpush1.msra.mxu0 0.0
      %3355 = vmatprep.subr.mxu0 0.0
      %3356 = vmatpush1.msra.mxu0 0.0
      %3357 = vmatprep.subr.mxu0 0.0
      %3358 = vmatpush1.msra.mxu0 0.0
      %3359 = vmatprep.subr.mxu0 0.0
      %3360 = vmatpush1.msra.mxu0 0.0
      %3361 = vmatprep.subr.mxu0 0.0
      %3362 = vmatpush1.msra.mxu0 0.0
      %3363 = vmatprep.subr.mxu0 0.0
      %3364 = vmatpush1.msra.mxu0 0.0
      %3365 = vmatprep.subr.mxu0 0.0
      %3366 = vmatpush1.msra.mxu0 0.0
      %3367 = vmatprep.subr.mxu0 0.0
      %3368 = vmatpush1.msra.mxu0 0.0
      %3369 = vmatprep.subr.mxu0 0.0
      %3370 = vmatpush1.msra.mxu0 0.0
      %3371 = vmatprep.subr.mxu0 0.0
      %3372 = vmatpush1.msra.mxu0 0.0
      %3373 = vmatprep.subr.mxu0 0.0
      %3374 = vmatpush1.msra.mxu0 0.0
      %3375 = vmatprep.subr.mxu0 0.0
      %3376 = vmatpush1.msra.mxu0 0.0
      %3377 = vmatprep.subr.mxu0 0.0
      %3378 = vmatpush1.msra.mxu0 0.0
      %3379 = vmatprep.subr.mxu0 0.0
      %3380 = vmatpush1.msra.mxu0 0.0
      %3381 = vmatprep.subr.mxu0 0.0
      %3382 = vmatpush1.msra.mxu0 0.0
      %3383 = vmatprep.subr.mxu0 0.0
      %3384 = vmatpush1.msra.mxu0 0.0
      %3385 = vmatprep.subr.mxu0 0.0
      %3386 = vmatpush1.msra.mxu0 0.0
      %3387 = vmatprep.subr.mxu0 0.0
      %3388 = vmatpush1.msra.mxu0 0.0
      %3389 = vmatprep.subr.mxu0 0.0
      %3390 = vmatpush1.msra.mxu0 0.0
      %3391 = vmatprep.subr.mxu0 0.0
      %3392 = vmatpush1.msra.mxu0 0.0
      %3393 = vmatprep.subr.mxu0 0.0
      %3394 = vmatpush1.msra.mxu0 0.0
      %3395 = vmatprep.subr.mxu0 0.0
      %3396 = vmatpush1.msra.mxu0 0.0
      %3397 = vmatprep.subr.mxu0 0.0
      %3398 = vmatpush1.msra.mxu0 0.0
      %3399 = vmatprep.subr.mxu0 0.0
      %3400 = vmatpush1.msra.mxu0 0.0
      %3401 = vmatprep.subr.mxu0 0.0
      %3402 = vmatpush1.msra.mxu0 0.0
      %3403 = vmatprep.mubr.f32.mxu0 0.0
      %3404 = vmatmul.mubr.f32.gmra.mrb[0].mxu0 %v3337
      %v3405 = vpop.f32.mrb[0].mxu0
      %v3406 = vadd.f32 0.0, %v3405
      %v3407 = vpop.f32.mrb[0].mxu0
      %3408 = vdwg.mxu0
      %v3410 = vsel %vm634, %v352, 0
      %3412 = vmatprep.subr.mxu0 0.0
      %3413 = vmatpush1.msra.mxu0 %v530
      %3414 = vmatprep.subr.mxu0 0.0
      %3415 = vmatpush1.msra.mxu0 %v531
      %3416 = vmatprep.subr.mxu0 0.0
      %3417 = vmatpush1.msra.mxu0 %v532
      %3418 = vmatprep.subr.mxu0 0.0
      %3419 = vmatpush1.msra.mxu0 %v533
      %3420 = vmatprep.subr.mxu0 0.0
      %3421 = vmatpush1.msra.mxu0 0.0
      %3422 = vmatprep.subr.mxu0 0.0
      %3423 = vmatpush1.msra.mxu0 0.0
      %3424 = vmatprep.subr.mxu0 0.0
      %3425 = vmatpush1.msra.mxu0 0.0
      %3426 = vmatprep.subr.mxu0 0.0
      %3427 = vmatpush1.msra.mxu0 0.0
      %3428 = vmatprep.subr.mxu0 0.0
      %3429 = vmatpush1.msra.mxu0 0.0
      %3430 = vmatprep.subr.mxu0 0.0
      %3431 = vmatpush1.msra.mxu0 0.0
      %3432 = vmatprep.subr.mxu0 0.0
      %3433 = vmatpush1.msra.mxu0 0.0
      %3434 = vmatprep.subr.mxu0 0.0
      %3435 = vmatpush1.msra.mxu0 0.0
      %3436 = vmatprep.subr.mxu0 0.0
      %3437 = vmatpush1.msra.mxu0 0.0
      %3438 = vmatprep.subr.mxu0 0.0
      %3439 = vmatpush1.msra.mxu0 0.0
      %3440 = vmatprep.subr.mxu0 0.0
      %3441 = vmatpush1.msra.mxu0 0.0
      %3442 = vmatprep.subr.mxu0 0.0
      %3443 = vmatpush1.msra.mxu0 0.0
      %3444 = vmatprep.subr.mxu0 0.0
      %3445 = vmatpush1.msra.mxu0 0.0
      %3446 = vmatprep.subr.mxu0 0.0
      %3447 = vmatpush1.msra.mxu0 0.0
      %3448 = vmatprep.subr.mxu0 0.0
      %3449 = vmatpush1.msra.mxu0 0.0
      %3450 = vmatprep.subr.mxu0 0.0
      %3451 = vmatpush1.msra.mxu0 0.0
      %3452 = vmatprep.subr.mxu0 0.0
      %3453 = vmatpush1.msra.mxu0 0.0
      %3454 = vmatprep.subr.mxu0 0.0
      %3455 = vmatpush1.msra.mxu0 0.0
      %3456 = vmatprep.subr.mxu0 0.0
      %3457 = vmatpush1.msra.mxu0 0.0
      %3458 = vmatprep.subr.mxu0 0.0
      %3459 = vmatpush1.msra.mxu0 0.0
      %3460 = vmatprep.subr.mxu0 0.0
      %3461 = vmatpush1.msra.mxu0 0.0
      %3462 = vmatprep.subr.mxu0 0.0
      %3463 = vmatpush1.msra.mxu0 0.0
      %3464 = vmatprep.subr.mxu0 0.0
      %3465 = vmatpush1.msra.mxu0 0.0
      %3466 = vmatprep.subr.mxu0 0.0
      %3467 = vmatpush1.msra.mxu0 0.0
      %3468 = vmatprep.subr.mxu0 0.0
      %3469 = vmatpush1.msra.mxu0 0.0
      %3470 = vmatprep.subr.mxu0 0.0
      %3471 = vmatpush1.msra.mxu0 0.0
      %3472 = vmatprep.subr.mxu0 0.0
      %3473 = vmatpush1.msra.mxu0 0.0
      %3474 = vmatprep.subr.mxu0 0.0
      %3475 = vmatpush1.msra.mxu0 0.0
      %3476 = vmatprep.mubr.f32.mxu0 0.0
      %3477 = vmatmul.mubr.f32.gmra.mrb[0].mxu0 %v3410
      %v3478 = vpop.f32.mrb[0].mxu0
      %v3479 = vadd.f32 0.0, %v3478
      %v3480 = vpop.f32.mrb[0].mxu0
      %3481 = vdwg.mxu0
      %v3483 = vsel %vm634, %v353, 0
      %3485 = vmatprep.subr.mxu0 0.0
      %3486 = vmatpush1.msra.mxu0 %v534
      %3487 = vmatprep.subr.mxu0 0.0
      %3488 = vmatpush1.msra.mxu0 %v535
      %3489 = vmatprep.subr.mxu0 0.0
      %3490 = vmatpush1.msra.mxu0 %v536
      %3491 = vmatprep.subr.mxu0 0.0
      %3492 = vmatpush1.msra.mxu0 %v537
      %3493 = vmatprep.subr.mxu0 0.0
      %3494 = vmatpush1.msra.mxu0 0.0
      %3495 = vmatprep.subr.mxu0 0.0
      %3496 = vmatpush1.msra.mxu0 0.0
      %3497 = vmatprep.subr.mxu0 0.0
      %3498 = vmatpush1.msra.mxu0 0.0
      %3499 = vmatprep.subr.mxu0 0.0
      %3500 = vmatpush1.msra.mxu0 0.0
      %3501 = vmatprep.subr.mxu0 0.0
      %3502 = vmatpush1.msra.mxu0 0.0
      %3503 = vmatprep.subr.mxu0 0.0
      %3504 = vmatpush1.msra.mxu0 0.0
      %3505 = vmatprep.subr.mxu0 0.0
      %3506 = vmatpush1.msra.mxu0 0.0
      %3507 = vmatprep.subr.mxu0 0.0
      %3508 = vmatpush1.msra.mxu0 0.0
      %3509 = vmatprep.subr.mxu0 0.0
      %3510 = vmatpush1.msra.mxu0 0.0
      %3511 = vmatprep.subr.mxu0 0.0
      %3512 = vmatpush1.msra.mxu0 0.0
      %3513 = vmatprep.subr.mxu0 0.0
      %3514 = vmatpush1.msra.mxu0 0.0
      %3515 = vmatprep.subr.mxu0 0.0
      %3516 = vmatpush1.msra.mxu0 0.0
      %3517 = vmatprep.subr.mxu0 0.0
      %3518 = vmatpush1.msra.mxu0 0.0
      %3519 = vmatprep.subr.mxu0 0.0
      %3520 = vmatpush1.msra.mxu0 0.0
      %3521 = vmatprep.subr.mxu0 0.0
      %3522 = vmatpush1.msra.mxu0 0.0
      %3523 = vmatprep.subr.mxu0 0.0
      %3524 = vmatpush1.msra.mxu0 0.0
      %3525 = vmatprep.subr.mxu0 0.0
      %3526 = vmatpush1.msra.mxu0 0.0
      %3527 = vmatprep.subr.mxu0 0.0
      %3528 = vmatpush1.msra.mxu0 0.0
      %3529 = vmatprep.subr.mxu0 0.0
      %3530 = vmatpush1.msra.mxu0 0.0
      %3531 = vmatprep.subr.mxu0 0.0
      %3532 = vmatpush1.msra.mxu0 0.0
      %3533 = vmatprep.subr.mxu0 0.0
      %3534 = vmatpush1.msra.mxu0 0.0
      %3535 = vmatprep.subr.mxu0 0.0
      %3536 = vmatpush1.msra.mxu0 0.0
      %3537 = vmatprep.subr.mxu0 0.0
      %3538 = vmatpush1.msra.mxu0 0.0
      %3539 = vmatprep.subr.mxu0 0.0
      %3540 = vmatpush1.msra.mxu0 0.0
      %3541 = vmatprep.subr.mxu0 0.0
      %3542 = vmatpush1.msra.mxu0 0.0
      %3543 = vmatprep.subr.mxu0 0.0
      %3544 = vmatpush1.msra.mxu0 0.0
      %3545 = vmatprep.subr.mxu0 0.0
      %3546 = vmatpush1.msra.mxu0 0.0
      %3547 = vmatprep.subr.mxu0 0.0
      %3548 = vmatpush1.msra.mxu0 0.0
      %3549 = vmatprep.mubr.f32.mxu0 0.0
      %3550 = vmatmul.mubr.f32.gmra.mrb[0].mxu0 %v3483
      %v3551 = vpop.f32.mrb[0].mxu0
      %v3552 = vadd.f32 0.0, %v3551
      %v3553 = vpop.f32.mrb[0].mxu0
      %3554 = vdwg.mxu0
      %v3556 = vsel %vm634, %v354, 0
      %3558 = vmatprep.subr.mxu0 0.0
      %3559 = vmatpush1.msra.mxu0 %v538
      %3560 = vmatprep.subr.mxu0 0.0
      %3561 = vmatpush1.msra.mxu0 %v539
      %3562 = vmatprep.subr.mxu0 0.0
      %3563 = vmatpush1.msra.mxu0 %v540
      %3564 = vmatprep.subr.mxu0 0.0
      %3565 = vmatpush1.msra.mxu0 %v541
      %3566 = vmatprep.subr.mxu0 0.0
      %3567 = vmatpush1.msra.mxu0 0.0
      %3568 = vmatprep.subr.mxu0 0.0
      %3569 = vmatpush1.msra.mxu0 0.0
      %3570 = vmatprep.subr.mxu0 0.0
      %3571 = vmatpush1.msra.mxu0 0.0
      %3572 = vmatprep.subr.mxu0 0.0
      %3573 = vmatpush1.msra.mxu0 0.0
      %3574 = vmatprep.subr.mxu0 0.0
      %3575 = vmatpush1.msra.mxu0 0.0
      %3576 = vmatprep.subr.mxu0 0.0
      %3577 = vmatpush1.msra.mxu0 0.0
      %3578 = vmatprep.subr.mxu0 0.0
      %3579 = vmatpush1.msra.mxu0 0.0
      %3580 = vmatprep.subr.mxu0 0.0
      %3581 = vmatpush1.msra.mxu0 0.0
      %3582 = vmatprep.subr.mxu0 0.0
      %3583 = vmatpush1.msra.mxu0 0.0
      %3584 = vmatprep.subr.mxu0 0.0
      %3585 = vmatpush1.msra.mxu0 0.0
      %3586 = vmatprep.subr.mxu0 0.0
      %3587 = vmatpush1.msra.mxu0 0.0
      %3588 = vmatprep.subr.mxu0 0.0
      %3589 = vmatpush1.msra.mxu0 0.0
      %3590 = vmatprep.subr.mxu0 0.0
      %3591 = vmatpush1.msra.mxu0 0.0
      %3592 = vmatprep.subr.mxu0 0.0
      %3593 = vmatpush1.msra.mxu0 0.0
      %3594 = vmatprep.subr.mxu0 0.0
      %3595 = vmatpush1.msra.mxu0 0.0
      %3596 = vmatprep.subr.mxu0 0.0
      %3597 = vmatpush1.msra.mxu0 0.0
      %3598 = vmatprep.subr.mxu0 0.0
      %3599 = vmatpush1.msra.mxu0 0.0
      %3600 = vmatprep.subr.mxu0 0.0
      %3601 = vmatpush1.msra.mxu0 0.0
      %3602 = vmatprep.subr.mxu0 0.0
      %3603 = vmatpush1.msra.mxu0 0.0
      %3604 = vmatprep.subr.mxu0 0.0
      %3605 = vmatpush1.msra.mxu0 0.0
      %3606 = vmatprep.subr.mxu0 0.0
      %3607 = vmatpush1.msra.mxu0 0.0
      %3608 = vmatprep.subr.mxu0 0.0
      %3609 = vmatpush1.msra.mxu0 0.0
      %3610 = vmatprep.subr.mxu0 0.0
      %3611 = vmatpush1.msra.mxu0 0.0
      %3612 = vmatprep.subr.mxu0 0.0
      %3613 = vmatpush1.msra.mxu0 0.0
      %3614 = vmatprep.subr.mxu0 0.0
      %3615 = vmatpush1.msra.mxu0 0.0
      %3616 = vmatprep.subr.mxu0 0.0
      %3617 = vmatpush1.msra.mxu0 0.0
      %3618 = vmatprep.subr.mxu0 0.0
      %3619 = vmatpush1.msra.mxu0 0.0
      %3620 = vmatprep.subr.mxu0 0.0
      %3621 = vmatpush1.msra.mxu0 0.0
      %3622 = vmatprep.mubr.f32.mxu0 0.0
      %3623 = vmatmul.mubr.f32.gmra.mrb[0].mxu0 %v3556
      %v3624 = vpop.f32.mrb[0].mxu0
      %v3625 = vadd.f32 0.0, %v3624
      %v3626 = vpop.f32.mrb[0].mxu0
      %3627 = vdwg.mxu0
      %v3629 = vsel %vm634, %v355, 0
      %3631 = vmatprep.subr.mxu0 0.0
      %3632 = vmatpush1.msra.mxu0 %v542
      %3633 = vmatprep.subr.mxu0 0.0
      %3634 = vmatpush1.msra.mxu0 %v543
      %3635 = vmatprep.subr.mxu0 0.0
      %3636 = vmatpush1.msra.mxu0 %v544
      %3637 = vmatprep.subr.mxu0 0.0
      %3638 = vmatpush1.msra.mxu0 %v545
      %3639 = vmatprep.subr.mxu0 0.0
      %3640 = vmatpush1.msra.mxu0 0.0
      %3641 = vmatprep.subr.mxu0 0.0
      %3642 = vmatpush1.msra.mxu0 0.0
      %3643 = vmatprep.subr.mxu0 0.0
      %3644 = vmatpush1.msra.mxu0 0.0
      %3645 = vmatprep.subr.mxu0 0.0
      %3646 = vmatpush1.msra.mxu0 0.0
      %3647 = vmatprep.subr.mxu0 0.0
      %3648 = vmatpush1.msra.mxu0 0.0
      %3649 = vmatprep.subr.mxu0 0.0
      %3650 = vmatpush1.msra.mxu0 0.0
      %3651 = vmatprep.subr.mxu0 0.0
      %3652 = vmatpush1.msra.mxu0 0.0
      %3653 = vmatprep.subr.mxu0 0.0
      %3654 = vmatpush1.msra.mxu0 0.0
      %3655 = vmatprep.subr.mxu0 0.0
      %3656 = vmatpush1.msra.mxu0 0.0
      %3657 = vmatprep.subr.mxu0 0.0
      %3658 = vmatpush1.msra.mxu0 0.0
      %3659 = vmatprep.subr.mxu0 0.0
      %3660 = vmatpush1.msra.mxu0 0.0
      %3661 = vmatprep.subr.mxu0 0.0
      %3662 = vmatpush1.msra.mxu0 0.0
      %3663 = vmatprep.subr.mxu0 0.0
      %3664 = vmatpush1.msra.mxu0 0.0
      %3665 = vmatprep.subr.mxu0 0.0
      %3666 = vmatpush1.msra.mxu0 0.0
      %3667 = vmatprep.subr.mxu0 0.0
      %3668 = vmatpush1.msra.mxu0 0.0
      %3669 = vmatprep.subr.mxu0 0.0
      %3670 = vmatpush1.msra.mxu0 0.0
      %3671 = vmatprep.subr.mxu0 0.0
      %3672 = vmatpush1.msra.mxu0 0.0
      %3673 = vmatprep.subr.mxu0 0.0
      %3674 = vmatpush1.msra.mxu0 0.0
      %3675 = vmatprep.subr.mxu0 0.0
      %3676 = vmatpush1.msra.mxu0 0.0
      %3677 = vmatprep.subr.mxu0 0.0
      %3678 = vmatpush1.msra.mxu0 0.0
      %3679 = vmatprep.subr.mxu0 0.0
      %3680 = vmatpush1.msra.mxu0 0.0
      %3681 = vmatprep.subr.mxu0 0.0
      %3682 = vmatpush1.msra.mxu0 0.0
      %3683 = vmatprep.subr.mxu0 0.0
      %3684 = vmatpush1.msra.mxu0 0.0
      %3685 = vmatprep.subr.mxu0 0.0
      %3686 = vmatpush1.msra.mxu0 0.0
      %3687 = vmatprep.subr.mxu0 0.0
      %3688 = vmatpush1.msra.mxu0 0.0
      %3689 = vmatprep.subr.mxu0 0.0
      %3690 = vmatpush1.msra.mxu0 0.0
      %3691 = vmatprep.subr.mxu0 0.0
      %3692 = vmatpush1.msra.mxu0 0.0
      %3693 = vmatprep.subr.mxu0 0.0
      %3694 = vmatpush1.msra.mxu0 0.0
      %3695 = vmatprep.mubr.f32.mxu0 0.0
      %3696 = vmatmul.mubr.f32.gmra.mrb[0].mxu0 %v3629
      %v3697 = vpop.f32.mrb[0].mxu0
      %v3698 = vadd.f32 0.0, %v3697
      %v3699 = vpop.f32.mrb[0].mxu0
      %3700 = vdwg.mxu0
      %v3702 = vsel %vm634, %v356, 0
      %3704 = vmatprep.subr.mxu0 0.0
      %3705 = vmatpush1.msra.mxu0 %v546
      %3706 = vmatprep.subr.mxu0 0.0
      %3707 = vmatpush1.msra.mxu0 %v547
      %3708 = vmatprep.subr.mxu0 0.0
      %3709 = vmatpush1.msra.mxu0 %v548
      %3710 = vmatprep.subr.mxu0 0.0
      %3711 = vmatpush1.msra.mxu0 %v549
      %3712 = vmatprep.subr.mxu0 0.0
      %3713 = vmatpush1.msra.mxu0 0.0
      %3714 = vmatprep.subr.mxu0 0.0
      %3715 = vmatpush1.msra.mxu0 0.0
      %3716 = vmatprep.subr.mxu0 0.0
      %3717 = vmatpush1.msra.mxu0 0.0
      %3718 = vmatprep.subr.mxu0 0.0
      %3719 = vmatpush1.msra.mxu0 0.0
      %3720 = vmatprep.subr.mxu0 0.0
      %3721 = vmatpush1.msra.mxu0 0.0
      %3722 = vmatprep.subr.mxu0 0.0
      %3723 = vmatpush1.msra.mxu0 0.0
      %3724 = vmatprep.subr.mxu0 0.0
      %3725 = vmatpush1.msra.mxu0 0.0
      %3726 = vmatprep.subr.mxu0 0.0
      %3727 = vmatpush1.msra.mxu0 0.0
      %3728 = vmatprep.subr.mxu0 0.0
      %3729 = vmatpush1.msra.mxu0 0.0
      %3730 = vmatprep.subr.mxu0 0.0
      %3731 = vmatpush1.msra.mxu0 0.0
      %3732 = vmatprep.subr.mxu0 0.0
      %3733 = vmatpush1.msra.mxu0 0.0
      %3734 = vmatprep.subr.mxu0 0.0
      %3735 = vmatpush1.msra.mxu0 0.0
      %3736 = vmatprep.subr.mxu0 0.0
      %3737 = vmatpush1.msra.mxu0 0.0
      %3738 = vmatprep.subr.mxu0 0.0
      %3739 = vmatpush1.msra.mxu0 0.0
      %3740 = vmatprep.subr.mxu0 0.0
      %3741 = vmatpush1.msra.mxu0 0.0
      %3742 = vmatprep.subr.mxu0 0.0
      %3743 = vmatpush1.msra.mxu0 0.0
      %3744 = vmatprep.subr.mxu0 0.0
      %3745 = vmatpush1.msra.mxu0 0.0
      %3746 = vmatprep.subr.mxu0 0.0
      %3747 = vmatpush1.msra.mxu0 0.0
      %3748 = vmatprep.subr.mxu0 0.0
      %3749 = vmatpush1.msra.mxu0 0.0
      %3750 = vmatprep.subr.mxu0 0.0
      %3751 = vmatpush1.msra.mxu0 0.0
      %3752 = vmatprep.subr.mxu0 0.0
      %3753 = vmatpush1.msra.mxu0 0.0
      %3754 = vmatprep.subr.mxu0 0.0
      %3755 = vmatpush1.msra.mxu0 0.0
      %3756 = vmatprep.subr.mxu0 0.0
      %3757 = vmatpush1.msra.mxu0 0.0
      %3758 = vmatprep.subr.mxu0 0.0
      %3759 = vmatpush1.msra.mxu0 0.0
      %3760 = vmatprep.subr.mxu0 0.0
      %3761 = vmatpush1.msra.mxu0 0.0
      %3762 = vmatprep.subr.mxu0 0.0
      %3763 = vmatpush1.msra.mxu0 0.0
      %3764 = vmatprep.subr.mxu0 0.0
      %3765 = vmatpush1.msra.mxu0 0.0
      %3766 = vmatprep.subr.mxu0 0.0
      %3767 = vmatpush1.msra.mxu0 0.0
      %3768 = vmatprep.mubr.f32.mxu0 0.0
      %3769 = vmatmul.mubr.f32.gmra.mrb[0].mxu0 %v3702
      %v3770 = vpop.f32.mrb[0].mxu0
      %v3771 = vadd.f32 0.0, %v3770
      %v3772 = vpop.f32.mrb[0].mxu0
      %3773 = vdwg.mxu0
      %v3775 = vsel %vm634, %v357, 0
      %3777 = vmatprep.subr.mxu0 0.0
      %3778 = vmatpush1.msra.mxu0 %v550
      %3779 = vmatprep.subr.mxu0 0.0
      %3780 = vmatpush1.msra.mxu0 %v551
      %3781 = vmatprep.subr.mxu0 0.0
      %3782 = vmatpush1.msra.mxu0 %v552
      %3783 = vmatprep.subr.mxu0 0.0
      %3784 = vmatpush1.msra.mxu0 %v553
      %3785 = vmatprep.subr.mxu0 0.0
      %3786 = vmatpush1.msra.mxu0 0.0
      %3787 = vmatprep.subr.mxu0 0.0
      %3788 = vmatpush1.msra.mxu0 0.0
      %3789 = vmatprep.subr.mxu0 0.0
      %3790 = vmatpush1.msra.mxu0 0.0
      %3791 = vmatprep.subr.mxu0 0.0
      %3792 = vmatpush1.msra.mxu0 0.0
      %3793 = vmatprep.subr.mxu0 0.0
      %3794 = vmatpush1.msra.mxu0 0.0
      %3795 = vmatprep.subr.mxu0 0.0
      %3796 = vmatpush1.msra.mxu0 0.0
      %3797 = vmatprep.subr.mxu0 0.0
      %3798 = vmatpush1.msra.mxu0 0.0
      %3799 = vmatprep.subr.mxu0 0.0
      %3800 = vmatpush1.msra.mxu0 0.0
      %3801 = vmatprep.subr.mxu0 0.0
      %3802 = vmatpush1.msra.mxu0 0.0
      %3803 = vmatprep.subr.mxu0 0.0
      %3804 = vmatpush1.msra.mxu0 0.0
      %3805 = vmatprep.subr.mxu0 0.0
      %3806 = vmatpush1.msra.mxu0 0.0
      %3807 = vmatprep.subr.mxu0 0.0
      %3808 = vmatpush1.msra.mxu0 0.0
      %3809 = vmatprep.subr.mxu0 0.0
      %3810 = vmatpush1.msra.mxu0 0.0
      %3811 = vmatprep.subr.mxu0 0.0
      %3812 = vmatpush1.msra.mxu0 0.0
      %3813 = vmatprep.subr.mxu0 0.0
      %3814 = vmatpush1.msra.mxu0 0.0
      %3815 = vmatprep.subr.mxu0 0.0
      %3816 = vmatpush1.msra.mxu0 0.0
      %3817 = vmatprep.subr.mxu0 0.0
      %3818 = vmatpush1.msra.mxu0 0.0
      %3819 = vmatprep.subr.mxu0 0.0
      %3820 = vmatpush1.msra.mxu0 0.0
      %3821 = vmatprep.subr.mxu0 0.0
      %3822 = vmatpush1.msra.mxu0 0.0
      %3823 = vmatprep.subr.mxu0 0.0
      %3824 = vmatpush1.msra.mxu0 0.0
      %3825 = vmatprep.subr.mxu0 0.0
      %3826 = vmatpush1.msra.mxu0 0.0
      %3827 = vmatprep.subr.mxu0 0.0
      %3828 = vmatpush1.msra.mxu0 0.0
      %3829 = vmatprep.subr.mxu0 0.0
      %3830 = vmatpush1.msra.mxu0 0.0
      %3831 = vmatprep.subr.mxu0 0.0
      %3832 = vmatpush1.msra.mxu0 0.0
      %3833 = vmatprep.subr.mxu0 0.0
      %3834 = vmatpush1.msra.mxu0 0.0
      %3835 = vmatprep.subr.mxu0 0.0
      %3836 = vmatpush1.msra.mxu0 0.0
      %3837 = vmatprep.subr.mxu0 0.0
      %3838 = vmatpush1.msra.mxu0 0.0
      %3839 = vmatprep.subr.mxu0 0.0
      %3840 = vmatpush1.msra.mxu0 0.0
      %3841 = vmatprep.mubr.f32.mxu0 0.0
      %3842 = vmatmul.mubr.f32.gmra.mrb[0].mxu0 %v3775
      %v3843 = vpop.f32.mrb[0].mxu0
      %v3844 = vadd.f32 0.0, %v3843
      %v3845 = vpop.f32.mrb[0].mxu0
      %3846 = vdwg.mxu0
      %v3848 = vsel %vm634, %v358, 0
      %3850 = vmatprep.subr.mxu0 0.0
      %3851 = vmatpush1.msra.mxu0 %v554
      %3852 = vmatprep.subr.mxu0 0.0
      %3853 = vmatpush1.msra.mxu0 %v555
      %3854 = vmatprep.subr.mxu0 0.0
      %3855 = vmatpush1.msra.mxu0 %v556
      %3856 = vmatprep.subr.mxu0 0.0
      %3857 = vmatpush1.msra.mxu0 %v557
      %3858 = vmatprep.subr.mxu0 0.0
      %3859 = vmatpush1.msra.mxu0 0.0
      %3860 = vmatprep.subr.mxu0 0.0
      %3861 = vmatpush1.msra.mxu0 0.0
      %3862 = vmatprep.subr.mxu0 0.0
      %3863 = vmatpush1.msra.mxu0 0.0
      %3864 = vmatprep.subr.mxu0 0.0
      %3865 = vmatpush1.msra.mxu0 0.0
      %3866 = vmatprep.subr.mxu0 0.0
      %3867 = vmatpush1.msra.mxu0 0.0
      %3868 = vmatprep.subr.mxu0 0.0
      %3869 = vmatpush1.msra.mxu0 0.0
      %3870 = vmatprep.subr.mxu0 0.0
      %3871 = vmatpush1.msra.mxu0 0.0
      %3872 = vmatprep.subr.mxu0 0.0
      %3873 = vmatpush1.msra.mxu0 0.0
      %3874 = vmatprep.subr.mxu0 0.0
      %3875 = vmatpush1.msra.mxu0 0.0
      %3876 = vmatprep.subr.mxu0 0.0
      %3877 = vmatpush1.msra.mxu0 0.0
      %3878 = vmatprep.subr.mxu0 0.0
      %3879 = vmatpush1.msra.mxu0 0.0
      %3880 = vmatprep.subr.mxu0 0.0
      %3881 = vmatpush1.msra.mxu0 0.0
      %3882 = vmatprep.subr.mxu0 0.0
      %3883 = vmatpush1.msra.mxu0 0.0
      %3884 = vmatprep.subr.mxu0 0.0
      %3885 = vmatpush1.msra.mxu0 0.0
      %3886 = vmatprep.subr.mxu0 0.0
      %3887 = vmatpush1.msra.mxu0 0.0
      %3888 = vmatprep.subr.mxu0 0.0
      %3889 = vmatpush1.msra.mxu0 0.0
      %3890 = vmatprep.subr.mxu0 0.0
      %3891 = vmatpush1.msra.mxu0 0.0
      %3892 = vmatprep.subr.mxu0 0.0
      %3893 = vmatpush1.msra.mxu0 0.0
      %3894 = vmatprep.subr.mxu0 0.0
      %3895 = vmatpush1.msra.mxu0 0.0
      %3896 = vmatprep.subr.mxu0 0.0
      %3897 = vmatpush1.msra.mxu0 0.0
      %3898 = vmatprep.subr.mxu0 0.0
      %3899 = vmatpush1.msra.mxu0 0.0
      %3900 = vmatprep.subr.mxu0 0.0
      %3901 = vmatpush1.msra.mxu0 0.0
      %3902 = vmatprep.subr.mxu0 0.0
      %3903 = vmatpush1.msra.mxu0 0.0
      %3904 = vmatprep.subr.mxu0 0.0
      %3905 = vmatpush1.msra.mxu0 0.0
      %3906 = vmatprep.subr.mxu0 0.0
      %3907 = vmatpush1.msra.mxu0 0.0
      %3908 = vmatprep.subr.mxu0 0.0
      %3909 = vmatpush1.msra.mxu0 0.0
      %3910 = vmatprep.subr.mxu0 0.0
      %3911 = vmatpush1.msra.mxu0 0.0
      %3912 = vmatprep.subr.mxu0 0.0
      %3913 = vmatpush1.msra.mxu0 0.0
      %3914 = vmatprep.mubr.f32.mxu0 0.0
      %3915 = vmatmul.mubr.f32.gmra.mrb[0].mxu0 %v3848
      %v3916 = vpop.f32.mrb[0].mxu0
      %v3917 = vadd.f32 0.0, %v3916
      %v3918 = vpop.f32.mrb[0].mxu0
      %3919 = vdwg.mxu0
      %v3921 = vsel %vm634, %v359, 0
      %3923 = vmatprep.subr.mxu0 0.0
      %3924 = vmatpush1.msra.mxu0 %v558
      %3925 = vmatprep.subr.mxu0 0.0
      %3926 = vmatpush1.msra.mxu0 %v559
      %3927 = vmatprep.subr.mxu0 0.0
      %3928 = vmatpush1.msra.mxu0 %v560
      %3929 = vmatprep.subr.mxu0 0.0
      %3930 = vmatpush1.msra.mxu0 %v561
      %3931 = vmatprep.subr.mxu0 0.0
      %3932 = vmatpush1.msra.mxu0 0.0
      %3933 = vmatprep.subr.mxu0 0.0
      %3934 = vmatpush1.msra.mxu0 0.0
      %3935 = vmatprep.subr.mxu0 0.0
      %3936 = vmatpush1.msra.mxu0 0.0
      %3937 = vmatprep.subr.mxu0 0.0
      %3938 = vmatpush1.msra.mxu0 0.0
      %3939 = vmatprep.subr.mxu0 0.0
      %3940 = vmatpush1.msra.mxu0 0.0
      %3941 = vmatprep.subr.mxu0 0.0
      %3942 = vmatpush1.msra.mxu0 0.0
      %3943 = vmatprep.subr.mxu0 0.0
      %3944 = vmatpush1.msra.mxu0 0.0
      %3945 = vmatprep.subr.mxu0 0.0
      %3946 = vmatpush1.msra.mxu0 0.0
      %3947 = vmatprep.subr.mxu0 0.0
      %3948 = vmatpush1.msra.mxu0 0.0
      %3949 = vmatprep.subr.mxu0 0.0
      %3950 = vmatpush1.msra.mxu0 0.0
      %3951 = vmatprep.subr.mxu0 0.0
      %3952 = vmatpush1.msra.mxu0 0.0
      %3953 = vmatprep.subr.mxu0 0.0
      %3954 = vmatpush1.msra.mxu0 0.0
      %3955 = vmatprep.subr.mxu0 0.0
      %3956 = vmatpush1.msra.mxu0 0.0
      %3957 = vmatprep.subr.mxu0 0.0
      %3958 = vmatpush1.msra.mxu0 0.0
      %3959 = vmatprep.subr.mxu0 0.0
      %3960 = vmatpush1.msra.mxu0 0.0
      %3961 = vmatprep.subr.mxu0 0.0
      %3962 = vmatpush1.msra.mxu0 0.0
      %3963 = vmatprep.subr.mxu0 0.0
      %3964 = vmatpush1.msra.mxu0 0.0
      %3965 = vmatprep.subr.mxu0 0.0
      %3966 = vmatpush1.msra.mxu0 0.0
      %3967 = vmatprep.subr.mxu0 0.0
      %3968 = vmatpush1.msra.mxu0 0.0
      %3969 = vmatprep.subr.mxu0 0.0
      %3970 = vmatpush1.msra.mxu0 0.0
      %3971 = vmatprep.subr.mxu0 0.0
      %3972 = vmatpush1.msra.mxu0 0.0
      %3973 = vmatprep.subr.mxu0 0.0
      %3974 = vmatpush1.msra.mxu0 0.0
      %3975 = vmatprep.subr.mxu0 0.0
      %3976 = vmatpush1.msra.mxu0 0.0
      %3977 = vmatprep.subr.mxu0 0.0
      %3978 = vmatpush1.msra.mxu0 0.0
      %3979 = vmatprep.subr.mxu0 0.0
      %3980 = vmatpush1.msra.mxu0 0.0
      %3981 = vmatprep.subr.mxu0 0.0
      %3982 = vmatpush1.msra.mxu0 0.0
      %3983 = vmatprep.subr.mxu0 0.0
      %3984 = vmatpush1.msra.mxu0 0.0
      %3985 = vmatprep.subr.mxu0 0.0
      %3986 = vmatpush1.msra.mxu0 0.0
      %3987 = vmatprep.mubr.f32.mxu0 0.0
      %3988 = vmatmul.mubr.f32.gmra.mrb[0].mxu0 %v3921
      %v3989 = vpop.f32.mrb[0].mxu0
      %v3990 = vadd.f32 0.0, %v3989
      %v3991 = vpop.f32.mrb[0].mxu0
      %3992 = vdwg.mxu0
      %v3994 = vsel %vm634, %v360, 0
      %3996 = vmatprep.subr.mxu0 0.0
      %3997 = vmatpush1.msra.mxu0 %v562
      %3998 = vmatprep.subr.mxu0 0.0
      %3999 = vmatpush1.msra.mxu0 %v563
      %4000 = vmatprep.subr.mxu0 0.0
      %4001 = vmatpush1.msra.mxu0 %v564
      %4002 = vmatprep.subr.mxu0 0.0
      %4003 = vmatpush1.msra.mxu0 %v565
      %4004 = vmatprep.subr.mxu0 0.0
      %4005 = vmatpush1.msra.mxu0 0.0
      %4006 = vmatprep.subr.mxu0 0.0
      %4007 = vmatpush1.msra.mxu0 0.0
      %4008 = vmatprep.subr.mxu0 0.0
      %4009 = vmatpush1.msra.mxu0 0.0
      %4010 = vmatprep.subr.mxu0 0.0
      %4011 = vmatpush1.msra.mxu0 0.0
      %4012 = vmatprep.subr.mxu0 0.0
      %4013 = vmatpush1.msra.mxu0 0.0
      %4014 = vmatprep.subr.mxu0 0.0
      %4015 = vmatpush1.msra.mxu0 0.0
      %4016 = vmatprep.subr.mxu0 0.0
      %4017 = vmatpush1.msra.mxu0 0.0
      %4018 = vmatprep.subr.mxu0 0.0
      %4019 = vmatpush1.msra.mxu0 0.0
      %4020 = vmatprep.subr.mxu0 0.0
      %4021 = vmatpush1.msra.mxu0 0.0
      %4022 = vmatprep.subr.mxu0 0.0
      %4023 = vmatpush1.msra.mxu0 0.0
      %4024 = vmatprep.subr.mxu0 0.0
      %4025 = vmatpush1.msra.mxu0 0.0
      %4026 = vmatprep.subr.mxu0 0.0
      %4027 = vmatpush1.msra.mxu0 0.0
      %4028 = vmatprep.subr.mxu0 0.0
      %4029 = vmatpush1.msra.mxu0 0.0
      %4030 = vmatprep.subr.mxu0 0.0
      %4031 = vmatpush1.msra.mxu0 0.0
      %4032 = vmatprep.subr.mxu0 0.0
      %4033 = vmatpush1.msra.mxu0 0.0
      %4034 = vmatprep.subr.mxu0 0.0
      %4035 = vmatpush1.msra.mxu0 0.0
      %4036 = vmatprep.subr.mxu0 0.0
      %4037 = vmatpush1.msra.mxu0 0.0
      %4038 = vmatprep.subr.mxu0 0.0
      %4039 = vmatpush1.msra.mxu0 0.0
      %4040 = vmatprep.subr.mxu0 0.0
      %4041 = vmatpush1.msra.mxu0 0.0
      %4042 = vmatprep.subr.mxu0 0.0
      %4043 = vmatpush1.msra.mxu0 0.0
      %4044 = vmatprep.subr.mxu0 0.0
      %4045 = vmatpush1.msra.mxu0 0.0
      %4046 = vmatprep.subr.mxu0 0.0
      %4047 = vmatpush1.msra.mxu0 0.0
      %4048 = vmatprep.subr.mxu0 0.0
      %4049 = vmatpush1.msra.mxu0 0.0
      %4050 = vmatprep.subr.mxu0 0.0
      %4051 = vmatpush1.msra.mxu0 0.0
      %4052 = vmatprep.subr.mxu0 0.0
      %4053 = vmatpush1.msra.mxu0 0.0
      %4054 = vmatprep.subr.mxu0 0.0
      %4055 = vmatpush1.msra.mxu0 0.0
      %4056 = vmatprep.subr.mxu0 0.0
      %4057 = vmatpush1.msra.mxu0 0.0
      %4058 = vmatprep.subr.mxu0 0.0
      %4059 = vmatpush1.msra.mxu0 0.0
      %4060 = vmatprep.mubr.f32.mxu0 0.0
      %4061 = vmatmul.mubr.f32.gmra.mrb[0].mxu0 %v3994
      %v4062 = vpop.f32.mrb[0].mxu0
      %v4063 = vadd.f32 0.0, %v4062
      %v4064 = vpop.f32.mrb[0].mxu0
      %4065 = vdwg.mxu0
      %v4067 = vsel %vm634, %v361, 0
      %4069 = vmatprep.subr.mxu0 0.0
      %4070 = vmatpush1.msra.mxu0 %v566
      %4071 = vmatprep.subr.mxu0 0.0
      %4072 = vmatpush1.msra.mxu0 %v567
      %4073 = vmatprep.subr.mxu0 0.0
      %4074 = vmatpush1.msra.mxu0 %v568
      %4075 = vmatprep.subr.mxu0 0.0
      %4076 = vmatpush1.msra.mxu0 %v569
      %4077 = vmatprep.subr.mxu0 0.0
      %4078 = vmatpush1.msra.mxu0 0.0
      %4079 = vmatprep.subr.mxu0 0.0
      %4080 = vmatpush1.msra.mxu0 0.0
      %4081 = vmatprep.subr.mxu0 0.0
      %4082 = vmatpush1.msra.mxu0 0.0
      %4083 = vmatprep.subr.mxu0 0.0
      %4084 = vmatpush1.msra.mxu0 0.0
      %4085 = vmatprep.subr.mxu0 0.0
      %4086 = vmatpush1.msra.mxu0 0.0
      %4087 = vmatprep.subr.mxu0 0.0
      %4088 = vmatpush1.msra.mxu0 0.0
      %4089 = vmatprep.subr.mxu0 0.0
      %4090 = vmatpush1.msra.mxu0 0.0
      %4091 = vmatprep.subr.mxu0 0.0
      %4092 = vmatpush1.msra.mxu0 0.0
      %4093 = vmatprep.subr.mxu0 0.0
      %4094 = vmatpush1.msra.mxu0 0.0
      %4095 = vmatprep.subr.mxu0 0.0
      %4096 = vmatpush1.msra.mxu0 0.0
      %4097 = vmatprep.subr.mxu0 0.0
      %4098 = vmatpush1.msra.mxu0 0.0
      %4099 = vmatprep.subr.mxu0 0.0
      %4100 = vmatpush1.msra.mxu0 0.0
      %4101 = vmatprep.subr.mxu0 0.0
      %4102 = vmatpush1.msra.mxu0 0.0
      %4103 = vmatprep.subr.mxu0 0.0
      %4104 = vmatpush1.msra.mxu0 0.0
      %4105 = vmatprep.subr.mxu0 0.0
      %4106 = vmatpush1.msra.mxu0 0.0
      %4107 = vmatprep.subr.mxu0 0.0
      %4108 = vmatpush1.msra.mxu0 0.0
      %4109 = vmatprep.subr.mxu0 0.0
      %4110 = vmatpush1.msra.mxu0 0.0
      %4111 = vmatprep.subr.mxu0 0.0
      %4112 = vmatpush1.msra.mxu0 0.0
      %4113 = vmatprep.subr.mxu0 0.0
      %4114 = vmatpush1.msra.mxu0 0.0
      %4115 = vmatprep.subr.mxu0 0.0
      %4116 = vmatpush1.msra.mxu0 0.0
      %4117 = vmatprep.subr.mxu0 0.0
      %4118 = vmatpush1.msra.mxu0 0.0
      %4119 = vmatprep.subr.mxu0 0.0
      %4120 = vmatpush1.msra.mxu0 0.0
      %4121 = vmatprep.subr.mxu0 0.0
      %4122 = vmatpush1.msra.mxu0 0.0
      %4123 = vmatprep.subr.mxu0 0.0
      %4124 = vmatpush1.msra.mxu0 0.0
      %4125 = vmatprep.subr.mxu0 0.0
      %4126 = vmatpush1.msra.mxu0 0.0
      %4127 = vmatprep.subr.mxu0 0.0
      %4128 = vmatpush1.msra.mxu0 0.0
      %4129 = vmatprep.subr.mxu0 0.0
      %4130 = vmatpush1.msra.mxu0 0.0
      %4131 = vmatprep.subr.mxu0 0.0
      %4132 = vmatpush1.msra.mxu0 0.0
      %4133 = vmatprep.mubr.f32.mxu0 0.0
      %4134 = vmatmul.mubr.f32.gmra.mrb[0].mxu0 %v4067
      %v4135 = vpop.f32.mrb[0].mxu0
      %v4136 = vadd.f32 0.0, %v4135
      %v4137 = vpop.f32.mrb[0].mxu0
      %4138 = vdwg.mxu0
      %v4140 = vsel %vm634, %v362, 0
      %4142 = vmatprep.subr.mxu0 0.0
      %4143 = vmatpush1.msra.mxu0 %v570
      %4144 = vmatprep.subr.mxu0 0.0
      %4145 = vmatpush1.msra.mxu0 %v571
      %4146 = vmatprep.subr.mxu0 0.0
      %4147 = vmatpush1.msra.mxu0 %v572
      %4148 = vmatprep.subr.mxu0 0.0
      %4149 = vmatpush1.msra.mxu0 %v573
      %4150 = vmatprep.subr.mxu0 0.0
      %4151 = vmatpush1.msra.mxu0 0.0
      %4152 = vmatprep.subr.mxu0 0.0
      %4153 = vmatpush1.msra.mxu0 0.0
      %4154 = vmatprep.subr.mxu0 0.0
      %4155 = vmatpush1.msra.mxu0 0.0
      %4156 = vmatprep.subr.mxu0 0.0
      %4157 = vmatpush1.msra.mxu0 0.0
      %4158 = vmatprep.subr.mxu0 0.0
      %4159 = vmatpush1.msra.mxu0 0.0
      %4160 = vmatprep.subr.mxu0 0.0
      %4161 = vmatpush1.msra.mxu0 0.0
      %4162 = vmatprep.subr.mxu0 0.0
      %4163 = vmatpush1.msra.mxu0 0.0
      %4164 = vmatprep.subr.mxu0 0.0
      %4165 = vmatpush1.msra.mxu0 0.0
      %4166 = vmatprep.subr.mxu0 0.0
      %4167 = vmatpush1.msra.mxu0 0.0
      %4168 = vmatprep.subr.mxu0 0.0
      %4169 = vmatpush1.msra.mxu0 0.0
      %4170 = vmatprep.subr.mxu0 0.0
      %4171 = vmatpush1.msra.mxu0 0.0
      %4172 = vmatprep.subr.mxu0 0.0
      %4173 = vmatpush1.msra.mxu0 0.0
      %4174 = vmatprep.subr.mxu0 0.0
      %4175 = vmatpush1.msra.mxu0 0.0
      %4176 = vmatprep.subr.mxu0 0.0
      %4177 = vmatpush1.msra.mxu0 0.0
      %4178 = vmatprep.subr.mxu0 0.0
      %4179 = vmatpush1.msra.mxu0 0.0
      %4180 = vmatprep.subr.mxu0 0.0
      %4181 = vmatpush1.msra.mxu0 0.0
      %4182 = vmatprep.subr.mxu0 0.0
      %4183 = vmatpush1.msra.mxu0 0.0
      %4184 = vmatprep.subr.mxu0 0.0
      %4185 = vmatpush1.msra.mxu0 0.0
      %4186 = vmatprep.subr.mxu0 0.0
      %4187 = vmatpush1.msra.mxu0 0.0
      %4188 = vmatprep.subr.mxu0 0.0
      %4189 = vmatpush1.msra.mxu0 0.0
      %4190 = vmatprep.subr.mxu0 0.0
      %4191 = vmatpush1.msra.mxu0 0.0
      %4192 = vmatprep.subr.mxu0 0.0
      %4193 = vmatpush1.msra.mxu0 0.0
      %4194 = vmatprep.subr.mxu0 0.0
      %4195 = vmatpush1.msra.mxu0 0.0
      %4196 = vmatprep.subr.mxu0 0.0
      %4197 = vmatpush1.msra.mxu0 0.0
      %4198 = vmatprep.subr.mxu0 0.0
      %4199 = vmatpush1.msra.mxu0 0.0
      %4200 = vmatprep.subr.mxu0 0.0
      %4201 = vmatpush1.msra.mxu0 0.0
      %4202 = vmatprep.subr.mxu0 0.0
      %4203 = vmatpush1.msra.mxu0 0.0
      %4204 = vmatprep.subr.mxu0 0.0
      %4205 = vmatpush1.msra.mxu0 0.0
      %4206 = vmatprep.mubr.f32.mxu0 0.0
      %4207 = vmatmul.mubr.f32.gmra.mrb[0].mxu0 %v4140
      %v4208 = vpop.f32.mrb[0].mxu0
      %v4209 = vadd.f32 0.0, %v4208
      %v4210 = vpop.f32.mrb[0].mxu0
      %4211 = vdwg.mxu0
      %v4213 = vsel %vm634, %v363, 0
      %4215 = vmatprep.subr.mxu0 0.0
      %4216 = vmatpush1.msra.mxu0 %v574
      %4217 = vmatprep.subr.mxu0 0.0
      %4218 = vmatpush1.msra.mxu0 %v575
      %4219 = vmatprep.subr.mxu0 0.0
      %4220 = vmatpush1.msra.mxu0 %v576
      %4221 = vmatprep.subr.mxu0 0.0
      %4222 = vmatpush1.msra.mxu0 %v577
      %4223 = vmatprep.subr.mxu0 0.0
      %4224 = vmatpush1.msra.mxu0 0.0
      %4225 = vmatprep.subr.mxu0 0.0
      %4226 = vmatpush1.msra.mxu0 0.0
      %4227 = vmatprep.subr.mxu0 0.0
      %4228 = vmatpush1.msra.mxu0 0.0
      %4229 = vmatprep.subr.mxu0 0.0
      %4230 = vmatpush1.msra.mxu0 0.0
      %4231 = vmatprep.subr.mxu0 0.0
      %4232 = vmatpush1.msra.mxu0 0.0
      %4233 = vmatprep.subr.mxu0 0.0
      %4234 = vmatpush1.msra.mxu0 0.0
      %4235 = vmatprep.subr.mxu0 0.0
      %4236 = vmatpush1.msra.mxu0 0.0
      %4237 = vmatprep.subr.mxu0 0.0
      %4238 = vmatpush1.msra.mxu0 0.0
      %4239 = vmatprep.subr.mxu0 0.0
      %4240 = vmatpush1.msra.mxu0 0.0
      %4241 = vmatprep.subr.mxu0 0.0
      %4242 = vmatpush1.msra.mxu0 0.0
      %4243 = vmatprep.subr.mxu0 0.0
      %4244 = vmatpush1.msra.mxu0 0.0
      %4245 = vmatprep.subr.mxu0 0.0
      %4246 = vmatpush1.msra.mxu0 0.0
      %4247 = vmatprep.subr.mxu0 0.0
      %4248 = vmatpush1.msra.mxu0 0.0
      %4249 = vmatprep.subr.mxu0 0.0
      %4250 = vmatpush1.msra.mxu0 0.0
      %4251 = vmatprep.subr.mxu0 0.0
      %4252 = vmatpush1.msra.mxu0 0.0
      %4253 = vmatprep.subr.mxu0 0.0
      %4254 = vmatpush1.msra.mxu0 0.0
      %4255 = vmatprep.subr.mxu0 0.0
      %4256 = vmatpush1.msra.mxu0 0.0
      %4257 = vmatprep.subr.mxu0 0.0
      %4258 = vmatpush1.msra.mxu0 0.0
      %4259 = vmatprep.subr.mxu0 0.0
      %4260 = vmatpush1.msra.mxu0 0.0
      %4261 = vmatprep.subr.mxu0 0.0
      %4262 = vmatpush1.msra.mxu0 0.0
      %4263 = vmatprep.subr.mxu0 0.0
      %4264 = vmatpush1.msra.mxu0 0.0
      %4265 = vmatprep.subr.mxu0 0.0
      %4266 = vmatpush1.msra.mxu0 0.0
      %4267 = vmatprep.subr.mxu0 0.0
      %4268 = vmatpush1.msra.mxu0 0.0
      %4269 = vmatprep.subr.mxu0 0.0
      %4270 = vmatpush1.msra.mxu0 0.0
      %4271 = vmatprep.subr.mxu0 0.0
      %4272 = vmatpush1.msra.mxu0 0.0
      %4273 = vmatprep.subr.mxu0 0.0
      %4274 = vmatpush1.msra.mxu0 0.0
      %4275 = vmatprep.subr.mxu0 0.0
      %4276 = vmatpush1.msra.mxu0 0.0
      %4277 = vmatprep.subr.mxu0 0.0
      %4278 = vmatpush1.msra.mxu0 0.0
      %4279 = vmatprep.mubr.f32.mxu0 0.0
      %4280 = vmatmul.mubr.f32.gmra.mrb[0].mxu0 %v4213
      %v4281 = vpop.f32.mrb[0].mxu0
      %v4282 = vadd.f32 0.0, %v4281
      %v4283 = vpop.f32.mrb[0].mxu0
      %4284 = vdwg.mxu0
      %v4286 = vsel %vm634, %v364, 0
      %4288 = vmatprep.subr.mxu0 0.0
      %4289 = vmatpush1.msra.mxu0 %v578
      %4290 = vmatprep.subr.mxu0 0.0
      %4291 = vmatpush1.msra.mxu0 %v579
      %4292 = vmatprep.subr.mxu0 0.0
      %4293 = vmatpush1.msra.mxu0 %v580
      %4294 = vmatprep.subr.mxu0 0.0
      %4295 = vmatpush1.msra.mxu0 %v581
      %4296 = vmatprep.subr.mxu0 0.0
      %4297 = vmatpush1.msra.mxu0 0.0
      %4298 = vmatprep.subr.mxu0 0.0
      %4299 = vmatpush1.msra.mxu0 0.0
      %4300 = vmatprep.subr.mxu0 0.0
      %4301 = vmatpush1.msra.mxu0 0.0
      %4302 = vmatprep.subr.mxu0 0.0
      %4303 = vmatpush1.msra.mxu0 0.0
      %4304 = vmatprep.subr.mxu0 0.0
      %4305 = vmatpush1.msra.mxu0 0.0
      %4306 = vmatprep.subr.mxu0 0.0
      %4307 = vmatpush1.msra.mxu0 0.0
      %4308 = vmatprep.subr.mxu0 0.0
      %4309 = vmatpush1.msra.mxu0 0.0
      %4310 = vmatprep.subr.mxu0 0.0
      %4311 = vmatpush1.msra.mxu0 0.0
      %4312 = vmatprep.subr.mxu0 0.0
      %4313 = vmatpush1.msra.mxu0 0.0
      %4314 = vmatprep.subr.mxu0 0.0
      %4315 = vmatpush1.msra.mxu0 0.0
      %4316 = vmatprep.subr.mxu0 0.0
      %4317 = vmatpush1.msra.mxu0 0.0
      %4318 = vmatprep.subr.mxu0 0.0
      %4319 = vmatpush1.msra.mxu0 0.0
      %4320 = vmatprep.subr.mxu0 0.0
      %4321 = vmatpush1.msra.mxu0 0.0
      %4322 = vmatprep.subr.mxu0 0.0
      %4323 = vmatpush1.msra.mxu0 0.0
      %4324 = vmatprep.subr.mxu0 0.0
      %4325 = vmatpush1.msra.mxu0 0.0
      %4326 = vmatprep.subr.mxu0 0.0
      %4327 = vmatpush1.msra.mxu0 0.0
      %4328 = vmatprep.subr.mxu0 0.0
      %4329 = vmatpush1.msra.mxu0 0.0
      %4330 = vmatprep.subr.mxu0 0.0
      %4331 = vmatpush1.msra.mxu0 0.0
      %4332 = vmatprep.subr.mxu0 0.0
      %4333 = vmatpush1.msra.mxu0 0.0
      %4334 = vmatprep.subr.mxu0 0.0
      %4335 = vmatpush1.msra.mxu0 0.0
      %4336 = vmatprep.subr.mxu0 0.0
      %4337 = vmatpush1.msra.mxu0 0.0
      %4338 = vmatprep.subr.mxu0 0.0
      %4339 = vmatpush1.msra.mxu0 0.0
      %4340 = vmatprep.subr.mxu0 0.0
      %4341 = vmatpush1.msra.mxu0 0.0
      %4342 = vmatprep.subr.mxu0 0.0
      %4343 = vmatpush1.msra.mxu0 0.0
      %4344 = vmatprep.subr.mxu0 0.0
      %4345 = vmatpush1.msra.mxu0 0.0
      %4346 = vmatprep.subr.mxu0 0.0
      %4347 = vmatpush1.msra.mxu0 0.0
      %4348 = vmatprep.subr.mxu0 0.0
      %4349 = vmatpush1.msra.mxu0 0.0
      %4350 = vmatprep.subr.mxu0 0.0
      %4351 = vmatpush1.msra.mxu0 0.0
      %4352 = vmatprep.mubr.f32.mxu0 0.0
      %4353 = vmatmul.mubr.f32.gmra.mrb[0].mxu0 %v4286
      %v4354 = vpop.f32.mrb[0].mxu0
      %v4355 = vadd.f32 0.0, %v4354
      %v4356 = vpop.f32.mrb[0].mxu0
      %4357 = vdwg.mxu0
      %v4359 = vsel %vm634, %v365, 0
      %4361 = vmatprep.subr.mxu0 0.0
      %4362 = vmatpush1.msra.mxu0 %v582
      %4363 = vmatprep.subr.mxu0 0.0
      %4364 = vmatpush1.msra.mxu0 %v583
      %4365 = vmatprep.subr.mxu0 0.0
      %4366 = vmatpush1.msra.mxu0 %v584
      %4367 = vmatprep.subr.mxu0 0.0
      %4368 = vmatpush1.msra.mxu0 %v585
      %4369 = vmatprep.subr.mxu0 0.0
      %4370 = vmatpush1.msra.mxu0 0.0
      %4371 = vmatprep.subr.mxu0 0.0
      %4372 = vmatpush1.msra.mxu0 0.0
      %4373 = vmatprep.subr.mxu0 0.0
      %4374 = vmatpush1.msra.mxu0 0.0
      %4375 = vmatprep.subr.mxu0 0.0
      %4376 = vmatpush1.msra.mxu0 0.0
      %4377 = vmatprep.subr.mxu0 0.0
      %4378 = vmatpush1.msra.mxu0 0.0
      %4379 = vmatprep.subr.mxu0 0.0
      %4380 = vmatpush1.msra.mxu0 0.0
      %4381 = vmatprep.subr.mxu0 0.0
      %4382 = vmatpush1.msra.mxu0 0.0
      %4383 = vmatprep.subr.mxu0 0.0
      %4384 = vmatpush1.msra.mxu0 0.0
      %4385 = vmatprep.subr.mxu0 0.0
      %4386 = vmatpush1.msra.mxu0 0.0
      %4387 = vmatprep.subr.mxu0 0.0
      %4388 = vmatpush1.msra.mxu0 0.0
      %4389 = vmatprep.subr.mxu0 0.0
      %4390 = vmatpush1.msra.mxu0 0.0
      %4391 = vmatprep.subr.mxu0 0.0
      %4392 = vmatpush1.msra.mxu0 0.0
      %4393 = vmatprep.subr.mxu0 0.0
      %4394 = vmatpush1.msra.mxu0 0.0
      %4395 = vmatprep.subr.mxu0 0.0
      %4396 = vmatpush1.msra.mxu0 0.0
      %4397 = vmatprep.subr.mxu0 0.0
      %4398 = vmatpush1.msra.mxu0 0.0
      %4399 = vmatprep.subr.mxu0 0.0
      %4400 = vmatpush1.msra.mxu0 0.0
      %4401 = vmatprep.subr.mxu0 0.0
      %4402 = vmatpush1.msra.mxu0 0.0
      %4403 = vmatprep.subr.mxu0 0.0
      %4404 = vmatpush1.msra.mxu0 0.0
      %4405 = vmatprep.subr.mxu0 0.0
      %4406 = vmatpush1.msra.mxu0 0.0
      %4407 = vmatprep.subr.mxu0 0.0
      %4408 = vmatpush1.msra.mxu0 0.0
      %4409 = vmatprep.subr.mxu0 0.0
      %4410 = vmatpush1.msra.mxu0 0.0
      %4411 = vmatprep.subr.mxu0 0.0
      %4412 = vmatpush1.msra.mxu0 0.0
      %4413 = vmatprep.subr.mxu0 0.0
      %4414 = vmatpush1.msra.mxu0 0.0
      %4415 = vmatprep.subr.mxu0 0.0
      %4416 = vmatpush1.msra.mxu0 0.0
      %4417 = vmatprep.subr.mxu0 0.0
      %4418 = vmatpush1.msra.mxu0 0.0
      %4419 = vmatprep.subr.mxu0 0.0
      %4420 = vmatpush1.msra.mxu0 0.0
      %4421 = vmatprep.subr.mxu0 0.0
      %4422 = vmatpush1.msra.mxu0 0.0
      %4423 = vmatprep.subr.mxu0 0.0
      %4424 = vmatpush1.msra.mxu0 0.0
      %4425 = vmatprep.mubr.f32.mxu0 0.0
      %4426 = vmatmul.mubr.f32.gmra.mrb[0].mxu0 %v4359
      %v4427 = vpop.f32.mrb[0].mxu0
      %v4428 = vadd.f32 0.0, %v4427
      %v4429 = vpop.f32.mrb[0].mxu0
      %4430 = vdwg.mxu0
      %v4432 = vsel %vm634, %v366, 0
      %4434 = vmatprep.subr.mxu0 0.0
      %4435 = vmatpush1.msra.mxu0 %v586
      %4436 = vmatprep.subr.mxu0 0.0
      %4437 = vmatpush1.msra.mxu0 %v587
      %4438 = vmatprep.subr.mxu0 0.0
      %4439 = vmatpush1.msra.mxu0 %v588
      %4440 = vmatprep.subr.mxu0 0.0
      %4441 = vmatpush1.msra.mxu0 %v589
      %4442 = vmatprep.subr.mxu0 0.0
      %4443 = vmatpush1.msra.mxu0 0.0
      %4444 = vmatprep.subr.mxu0 0.0
      %4445 = vmatpush1.msra.mxu0 0.0
      %4446 = vmatprep.subr.mxu0 0.0
      %4447 = vmatpush1.msra.mxu0 0.0
      %4448 = vmatprep.subr.mxu0 0.0
      %4449 = vmatpush1.msra.mxu0 0.0
      %4450 = vmatprep.subr.mxu0 0.0
      %4451 = vmatpush1.msra.mxu0 0.0
      %4452 = vmatprep.subr.mxu0 0.0
      %4453 = vmatpush1.msra.mxu0 0.0
      %4454 = vmatprep.subr.mxu0 0.0
      %4455 = vmatpush1.msra.mxu0 0.0
      %4456 = vmatprep.subr.mxu0 0.0
      %4457 = vmatpush1.msra.mxu0 0.0
      %4458 = vmatprep.subr.mxu0 0.0
      %4459 = vmatpush1.msra.mxu0 0.0
      %4460 = vmatprep.subr.mxu0 0.0
      %4461 = vmatpush1.msra.mxu0 0.0
      %4462 = vmatprep.subr.mxu0 0.0
      %4463 = vmatpush1.msra.mxu0 0.0
      %4464 = vmatprep.subr.mxu0 0.0
      %4465 = vmatpush1.msra.mxu0 0.0
      %4466 = vmatprep.subr.mxu0 0.0
      %4467 = vmatpush1.msra.mxu0 0.0
      %4468 = vmatprep.subr.mxu0 0.0
      %4469 = vmatpush1.msra.mxu0 0.0
      %4470 = vmatprep.subr.mxu0 0.0
      %4471 = vmatpush1.msra.mxu0 0.0
      %4472 = vmatprep.subr.mxu0 0.0
      %4473 = vmatpush1.msra.mxu0 0.0
      %4474 = vmatprep.subr.mxu0 0.0
      %4475 = vmatpush1.msra.mxu0 0.0
      %4476 = vmatprep.subr.mxu0 0.0
      %4477 = vmatpush1.msra.mxu0 0.0
      %4478 = vmatprep.subr.mxu0 0.0
      %4479 = vmatpush1.msra.mxu0 0.0
      %4480 = vmatprep.subr.mxu0 0.0
      %4481 = vmatpush1.msra.mxu0 0.0
      %4482 = vmatprep.subr.mxu0 0.0
      %4483 = vmatpush1.msra.mxu0 0.0
      %4484 = vmatprep.subr.mxu0 0.0
      %4485 = vmatpush1.msra.mxu0 0.0
      %4486 = vmatprep.subr.mxu0 0.0
      %4487 = vmatpush1.msra.mxu0 0.0
      %4488 = vmatprep.subr.mxu0 0.0
      %4489 = vmatpush1.msra.mxu0 0.0
      %4490 = vmatprep.subr.mxu0 0.0
      %4491 = vmatpush1.msra.mxu0 0.0
      %4492 = vmatprep.subr.mxu0 0.0
      %4493 = vmatpush1.msra.mxu0 0.0
      %4494 = vmatprep.subr.mxu0 0.0
      %4495 = vmatpush1.msra.mxu0 0.0
      %4496 = vmatprep.subr.mxu0 0.0
      %4497 = vmatpush1.msra.mxu0 0.0
      %4498 = vmatprep.mubr.f32.mxu0 0.0
      %4499 = vmatmul.mubr.f32.gmra.mrb[0].mxu0 %v4432
      %v4500 = vpop.f32.mrb[0].mxu0
      %v4501 = vadd.f32 0.0, %v4500
      %v4502 = vpop.f32.mrb[0].mxu0
      %4503 = vdwg.mxu0
      %v4505 = vsel %vm634, %v367, 0
      %4507 = vmatprep.subr.mxu0 0.0
      %4508 = vmatpush1.msra.mxu0 %v590
      %4509 = vmatprep.subr.mxu0 0.0
      %4510 = vmatpush1.msra.mxu0 %v591
      %4511 = vmatprep.subr.mxu0 0.0
      %4512 = vmatpush1.msra.mxu0 %v592
      %4513 = vmatprep.subr.mxu0 0.0
      %4514 = vmatpush1.msra.mxu0 %v593
      %4515 = vmatprep.subr.mxu0 0.0
      %4516 = vmatpush1.msra.mxu0 0.0
      %4517 = vmatprep.subr.mxu0 0.0
      %4518 = vmatpush1.msra.mxu0 0.0
      %4519 = vmatprep.subr.mxu0 0.0
      %4520 = vmatpush1.msra.mxu0 0.0
      %4521 = vmatprep.subr.mxu0 0.0
      %4522 = vmatpush1.msra.mxu0 0.0
      %4523 = vmatprep.subr.mxu0 0.0
      %4524 = vmatpush1.msra.mxu0 0.0
      %4525 = vmatprep.subr.mxu0 0.0
      %4526 = vmatpush1.msra.mxu0 0.0
      %4527 = vmatprep.subr.mxu0 0.0
      %4528 = vmatpush1.msra.mxu0 0.0
      %4529 = vmatprep.subr.mxu0 0.0
      %4530 = vmatpush1.msra.mxu0 0.0
      %4531 = vmatprep.subr.mxu0 0.0
      %4532 = vmatpush1.msra.mxu0 0.0
      %4533 = vmatprep.subr.mxu0 0.0
      %4534 = vmatpush1.msra.mxu0 0.0
      %4535 = vmatprep.subr.mxu0 0.0
      %4536 = vmatpush1.msra.mxu0 0.0
      %4537 = vmatprep.subr.mxu0 0.0
      %4538 = vmatpush1.msra.mxu0 0.0
      %4539 = vmatprep.subr.mxu0 0.0
      %4540 = vmatpush1.msra.mxu0 0.0
      %4541 = vmatprep.subr.mxu0 0.0
      %4542 = vmatpush1.msra.mxu0 0.0
      %4543 = vmatprep.subr.mxu0 0.0
      %4544 = vmatpush1.msra.mxu0 0.0
      %4545 = vmatprep.subr.mxu0 0.0
      %4546 = vmatpush1.msra.mxu0 0.0
      %4547 = vmatprep.subr.mxu0 0.0
      %4548 = vmatpush1.msra.mxu0 0.0
      %4549 = vmatprep.subr.mxu0 0.0
      %4550 = vmatpush1.msra.mxu0 0.0
      %4551 = vmatprep.subr.mxu0 0.0
      %4552 = vmatpush1.msra.mxu0 0.0
      %4553 = vmatprep.subr.mxu0 0.0
      %4554 = vmatpush1.msra.mxu0 0.0
      %4555 = vmatprep.subr.mxu0 0.0
      %4556 = vmatpush1.msra.mxu0 0.0
      %4557 = vmatprep.subr.mxu0 0.0
      %4558 = vmatpush1.msra.mxu0 0.0
      %4559 = vmatprep.subr.mxu0 0.0
      %4560 = vmatpush1.msra.mxu0 0.0
      %4561 = vmatprep.subr.mxu0 0.0
      %4562 = vmatpush1.msra.mxu0 0.0
      %4563 = vmatprep.subr.mxu0 0.0
      %4564 = vmatpush1.msra.mxu0 0.0
      %4565 = vmatprep.subr.mxu0 0.0
      %4566 = vmatpush1.msra.mxu0 0.0
      %4567 = vmatprep.subr.mxu0 0.0
      %4568 = vmatpush1.msra.mxu0 0.0
      %4569 = vmatprep.subr.mxu0 0.0
      %4570 = vmatpush1.msra.mxu0 0.0
      %4571 = vmatprep.mubr.f32.mxu0 0.0
      %4572 = vmatmul.mubr.f32.gmra.mrb[0].mxu0 %v4505
      %v4573 = vpop.f32.mrb[0].mxu0
      %v4574 = vadd.f32 0.0, %v4573
      %v4575 = vpop.f32.mrb[0].mxu0
      %4576 = vdwg.mxu0
      %v4578 = vsel %vm634, %v368, 0
      %4580 = vmatprep.subr.mxu0 0.0
      %4581 = vmatpush1.msra.mxu0 %v594
      %4582 = vmatprep.subr.mxu0 0.0
      %4583 = vmatpush1.msra.mxu0 %v595
      %4584 = vmatprep.subr.mxu0 0.0
      %4585 = vmatpush1.msra.mxu0 %v596
      %4586 = vmatprep.subr.mxu0 0.0
      %4587 = vmatpush1.msra.mxu0 %v597
      %4588 = vmatprep.subr.mxu0 0.0
      %4589 = vmatpush1.msra.mxu0 0.0
      %4590 = vmatprep.subr.mxu0 0.0
      %4591 = vmatpush1.msra.mxu0 0.0
      %4592 = vmatprep.subr.mxu0 0.0
      %4593 = vmatpush1.msra.mxu0 0.0
      %4594 = vmatprep.subr.mxu0 0.0
      %4595 = vmatpush1.msra.mxu0 0.0
      %4596 = vmatprep.subr.mxu0 0.0
      %4597 = vmatpush1.msra.mxu0 0.0
      %4598 = vmatprep.subr.mxu0 0.0
      %4599 = vmatpush1.msra.mxu0 0.0
      %4600 = vmatprep.subr.mxu0 0.0
      %4601 = vmatpush1.msra.mxu0 0.0
      %4602 = vmatprep.subr.mxu0 0.0
      %4603 = vmatpush1.msra.mxu0 0.0
      %4604 = vmatprep.subr.mxu0 0.0
      %4605 = vmatpush1.msra.mxu0 0.0
      %4606 = vmatprep.subr.mxu0 0.0
      %4607 = vmatpush1.msra.mxu0 0.0
      %4608 = vmatprep.subr.mxu0 0.0
      %4609 = vmatpush1.msra.mxu0 0.0
      %4610 = vmatprep.subr.mxu0 0.0
      %4611 = vmatpush1.msra.mxu0 0.0
      %4612 = vmatprep.subr.mxu0 0.0
      %4613 = vmatpush1.msra.mxu0 0.0
      %4614 = vmatprep.subr.mxu0 0.0
      %4615 = vmatpush1.msra.mxu0 0.0
      %4616 = vmatprep.subr.mxu0 0.0
      %4617 = vmatpush1.msra.mxu0 0.0
      %4618 = vmatprep.subr.mxu0 0.0
      %4619 = vmatpush1.msra.mxu0 0.0
      %4620 = vmatprep.subr.mxu0 0.0
      %4621 = vmatpush1.msra.mxu0 0.0
      %4622 = vmatprep.subr.mxu0 0.0
      %4623 = vmatpush1.msra.mxu0 0.0
      %4624 = vmatprep.subr.mxu0 0.0
      %4625 = vmatpush1.msra.mxu0 0.0
      %4626 = vmatprep.subr.mxu0 0.0
      %4627 = vmatpush1.msra.mxu0 0.0
      %4628 = vmatprep.subr.mxu0 0.0
      %4629 = vmatpush1.msra.mxu0 0.0
      %4630 = vmatprep.subr.mxu0 0.0
      %4631 = vmatpush1.msra.mxu0 0.0
      %4632 = vmatprep.subr.mxu0 0.0
      %4633 = vmatpush1.msra.mxu0 0.0
      %4634 = vmatprep.subr.mxu0 0.0
      %4635 = vmatpush1.msra.mxu0 0.0
      %4636 = vmatprep.subr.mxu0 0.0
      %4637 = vmatpush1.msra.mxu0 0.0
      %4638 = vmatprep.subr.mxu0 0.0
      %4639 = vmatpush1.msra.mxu0 0.0
      %4640 = vmatprep.subr.mxu0 0.0
      %4641 = vmatpush1.msra.mxu0 0.0
      %4642 = vmatprep.subr.mxu0 0.0
      %4643 = vmatpush1.msra.mxu0 0.0
      %4644 = vmatprep.mubr.f32.mxu0 0.0
      %4645 = vmatmul.mubr.f32.gmra.mrb[0].mxu0 %v4578
      %v4646 = vpop.f32.mrb[0].mxu0
      %v4647 = vadd.f32 0.0, %v4646
      %v4648 = vpop.f32.mrb[0].mxu0
      %4649 = vdwg.mxu0
      %v4651 = vsel %vm634, %v369, 0
      %4653 = vmatprep.subr.mxu0 0.0
      %4654 = vmatpush1.msra.mxu0 %v598
      %4655 = vmatprep.subr.mxu0 0.0
      %4656 = vmatpush1.msra.mxu0 %v599
      %4657 = vmatprep.subr.mxu0 0.0
      %4658 = vmatpush1.msra.mxu0 %v600
      %4659 = vmatprep.subr.mxu0 0.0
      %4660 = vmatpush1.msra.mxu0 %v601
      %4661 = vmatprep.subr.mxu0 0.0
      %4662 = vmatpush1.msra.mxu0 0.0
      %4663 = vmatprep.subr.mxu0 0.0
      %4664 = vmatpush1.msra.mxu0 0.0
      %4665 = vmatprep.subr.mxu0 0.0
      %4666 = vmatpush1.msra.mxu0 0.0
      %4667 = vmatprep.subr.mxu0 0.0
      %4668 = vmatpush1.msra.mxu0 0.0
      %4669 = vmatprep.subr.mxu0 0.0
      %4670 = vmatpush1.msra.mxu0 0.0
      %4671 = vmatprep.subr.mxu0 0.0
      %4672 = vmatpush1.msra.mxu0 0.0
      %4673 = vmatprep.subr.mxu0 0.0
      %4674 = vmatpush1.msra.mxu0 0.0
      %4675 = vmatprep.subr.mxu0 0.0
      %4676 = vmatpush1.msra.mxu0 0.0
      %4677 = vmatprep.subr.mxu0 0.0
      %4678 = vmatpush1.msra.mxu0 0.0
      %4679 = vmatprep.subr.mxu0 0.0
      %4680 = vmatpush1.msra.mxu0 0.0
      %4681 = vmatprep.subr.mxu0 0.0
      %4682 = vmatpush1.msra.mxu0 0.0
      %4683 = vmatprep.subr.mxu0 0.0
      %4684 = vmatpush1.msra.mxu0 0.0
      %4685 = vmatprep.subr.mxu0 0.0
      %4686 = vmatpush1.msra.mxu0 0.0
      %4687 = vmatprep.subr.mxu0 0.0
      %4688 = vmatpush1.msra.mxu0 0.0
      %4689 = vmatprep.subr.mxu0 0.0
      %4690 = vmatpush1.msra.mxu0 0.0
      %4691 = vmatprep.subr.mxu0 0.0
      %4692 = vmatpush1.msra.mxu0 0.0
      %4693 = vmatprep.subr.mxu0 0.0
      %4694 = vmatpush1.msra.mxu0 0.0
      %4695 = vmatprep.subr.mxu0 0.0
      %4696 = vmatpush1.msra.mxu0 0.0
      %4697 = vmatprep.subr.mxu0 0.0
      %4698 = vmatpush1.msra.mxu0 0.0
      %4699 = vmatprep.subr.mxu0 0.0
      %4700 = vmatpush1.msra.mxu0 0.0
      %4701 = vmatprep.subr.mxu0 0.0
      %4702 = vmatpush1.msra.mxu0 0.0
      %4703 = vmatprep.subr.mxu0 0.0
      %4704 = vmatpush1.msra.mxu0 0.0
      %4705 = vmatprep.subr.mxu0 0.0
      %4706 = vmatpush1.msra.mxu0 0.0
      %4707 = vmatprep.subr.mxu0 0.0
      %4708 = vmatpush1.msra.mxu0 0.0
      %4709 = vmatprep.subr.mxu0 0.0
      %4710 = vmatpush1.msra.mxu0 0.0
      %4711 = vmatprep.subr.mxu0 0.0
      %4712 = vmatpush1.msra.mxu0 0.0
      %4713 = vmatprep.subr.mxu0 0.0
      %4714 = vmatpush1.msra.mxu0 0.0
      %4715 = vmatprep.subr.mxu0 0.0
      %4716 = vmatpush1.msra.mxu0 0.0
      %4717 = vmatprep.mubr.f32.mxu0 0.0
      %4718 = vmatmul.mubr.f32.gmra.mrb[0].mxu0 %v4651
      %v4719 = vpop.f32.mrb[0].mxu0
      %v4720 = vadd.f32 0.0, %v4719
      %v4721 = vpop.f32.mrb[0].mxu0
      %4722 = vdwg.mxu0
      %v4724 = vsel %vm634, %v370, 0
      %4726 = vmatprep.subr.mxu0 0.0
      %4727 = vmatpush1.msra.mxu0 %v602
      %4728 = vmatprep.subr.mxu0 0.0
      %4729 = vmatpush1.msra.mxu0 %v603
      %4730 = vmatprep.subr.mxu0 0.0
      %4731 = vmatpush1.msra.mxu0 %v604
      %4732 = vmatprep.subr.mxu0 0.0
      %4733 = vmatpush1.msra.mxu0 %v605
      %4734 = vmatprep.subr.mxu0 0.0
      %4735 = vmatpush1.msra.mxu0 0.0
      %4736 = vmatprep.subr.mxu0 0.0
      %4737 = vmatpush1.msra.mxu0 0.0
      %4738 = vmatprep.subr.mxu0 0.0
      %4739 = vmatpush1.msra.mxu0 0.0
      %4740 = vmatprep.subr.mxu0 0.0
      %4741 = vmatpush1.msra.mxu0 0.0
      %4742 = vmatprep.subr.mxu0 0.0
      %4743 = vmatpush1.msra.mxu0 0.0
      %4744 = vmatprep.subr.mxu0 0.0
      %4745 = vmatpush1.msra.mxu0 0.0
      %4746 = vmatprep.subr.mxu0 0.0
      %4747 = vmatpush1.msra.mxu0 0.0
      %4748 = vmatprep.subr.mxu0 0.0
      %4749 = vmatpush1.msra.mxu0 0.0
      %4750 = vmatprep.subr.mxu0 0.0
      %4751 = vmatpush1.msra.mxu0 0.0
      %4752 = vmatprep.subr.mxu0 0.0
      %4753 = vmatpush1.msra.mxu0 0.0
      %4754 = vmatprep.subr.mxu0 0.0
      %4755 = vmatpush1.msra.mxu0 0.0
      %4756 = vmatprep.subr.mxu0 0.0
      %4757 = vmatpush1.msra.mxu0 0.0
      %4758 = vmatprep.subr.mxu0 0.0
      %4759 = vmatpush1.msra.mxu0 0.0
      %4760 = vmatprep.subr.mxu0 0.0
      %4761 = vmatpush1.msra.mxu0 0.0
      %4762 = vmatprep.subr.mxu0 0.0
      %4763 = vmatpush1.msra.mxu0 0.0
      %4764 = vmatprep.subr.mxu0 0.0
      %4765 = vmatpush1.msra.mxu0 0.0
      %4766 = vmatprep.subr.mxu0 0.0
      %4767 = vmatpush1.msra.mxu0 0.0
      %4768 = vmatprep.subr.mxu0 0.0
      %4769 = vmatpush1.msra.mxu0 0.0
      %4770 = vmatprep.subr.mxu0 0.0
      %4771 = vmatpush1.msra.mxu0 0.0
      %4772 = vmatprep.subr.mxu0 0.0
      %4773 = vmatpush1.msra.mxu0 0.0
      %4774 = vmatprep.subr.mxu0 0.0
      %4775 = vmatpush1.msra.mxu0 0.0
      %4776 = vmatprep.subr.mxu0 0.0
      %4777 = vmatpush1.msra.mxu0 0.0
      %4778 = vmatprep.subr.mxu0 0.0
      %4779 = vmatpush1.msra.mxu0 0.0
      %4780 = vmatprep.subr.mxu0 0.0
      %4781 = vmatpush1.msra.mxu0 0.0
      %4782 = vmatprep.subr.mxu0 0.0
      %4783 = vmatpush1.msra.mxu0 0.0
      %4784 = vmatprep.subr.mxu0 0.0
      %4785 = vmatpush1.msra.mxu0 0.0
      %4786 = vmatprep.subr.mxu0 0.0
      %4787 = vmatpush1.msra.mxu0 0.0
      %4788 = vmatprep.subr.mxu0 0.0
      %4789 = vmatpush1.msra.mxu0 0.0
      %4790 = vmatprep.mubr.f32.mxu0 0.0
      %4791 = vmatmul.mubr.f32.gmra.mrb[0].mxu0 %v4724
      %v4792 = vpop.f32.mrb[0].mxu0
      %v4793 = vadd.f32 0.0, %v4792
      %v4794 = vpop.f32.mrb[0].mxu0
      %4795 = vdwg.mxu0
      %v4797 = vsel %vm634, %v371, 0
      %4799 = vmatprep.subr.mxu0 0.0
      %4800 = vmatpush1.msra.mxu0 %v606
      %4801 = vmatprep.subr.mxu0 0.0
      %4802 = vmatpush1.msra.mxu0 %v607
      %4803 = vmatprep.subr.mxu0 0.0
      %4804 = vmatpush1.msra.mxu0 %v608
      %4805 = vmatprep.subr.mxu0 0.0
      %4806 = vmatpush1.msra.mxu0 %v609
      %4807 = vmatprep.subr.mxu0 0.0
      %4808 = vmatpush1.msra.mxu0 0.0
      %4809 = vmatprep.subr.mxu0 0.0
      %4810 = vmatpush1.msra.mxu0 0.0
      %4811 = vmatprep.subr.mxu0 0.0
      %4812 = vmatpush1.msra.mxu0 0.0
      %4813 = vmatprep.subr.mxu0 0.0
      %4814 = vmatpush1.msra.mxu0 0.0
      %4815 = vmatprep.subr.mxu0 0.0
      %4816 = vmatpush1.msra.mxu0 0.0
      %4817 = vmatprep.subr.mxu0 0.0
      %4818 = vmatpush1.msra.mxu0 0.0
      %4819 = vmatprep.subr.mxu0 0.0
      %4820 = vmatpush1.msra.mxu0 0.0
      %4821 = vmatprep.subr.mxu0 0.0
      %4822 = vmatpush1.msra.mxu0 0.0
      %4823 = vmatprep.subr.mxu0 0.0
      %4824 = vmatpush1.msra.mxu0 0.0
      %4825 = vmatprep.subr.mxu0 0.0
      %4826 = vmatpush1.msra.mxu0 0.0
      %4827 = vmatprep.subr.mxu0 0.0
      %4828 = vmatpush1.msra.mxu0 0.0
      %4829 = vmatprep.subr.mxu0 0.0
      %4830 = vmatpush1.msra.mxu0 0.0
      %4831 = vmatprep.subr.mxu0 0.0
      %4832 = vmatpush1.msra.mxu0 0.0
      %4833 = vmatprep.subr.mxu0 0.0
      %4834 = vmatpush1.msra.mxu0 0.0
      %4835 = vmatprep.subr.mxu0 0.0
      %4836 = vmatpush1.msra.mxu0 0.0
      %4837 = vmatprep.subr.mxu0 0.0
      %4838 = vmatpush1.msra.mxu0 0.0
      %4839 = vmatprep.subr.mxu0 0.0
      %4840 = vmatpush1.msra.mxu0 0.0
      %4841 = vmatprep.subr.mxu0 0.0
      %4842 = vmatpush1.msra.mxu0 0.0
      %4843 = vmatprep.subr.mxu0 0.0
      %4844 = vmatpush1.msra.mxu0 0.0
      %4845 = vmatprep.subr.mxu0 0.0
      %4846 = vmatpush1.msra.mxu0 0.0
      %4847 = vmatprep.subr.mxu0 0.0
      %4848 = vmatpush1.msra.mxu0 0.0
      %4849 = vmatprep.subr.mxu0 0.0
      %4850 = vmatpush1.msra.mxu0 0.0
      %4851 = vmatprep.subr.mxu0 0.0
      %4852 = vmatpush1.msra.mxu0 0.0
      %4853 = vmatprep.subr.mxu0 0.0
      %4854 = vmatpush1.msra.mxu0 0.0
      %4855 = vmatprep.subr.mxu0 0.0
      %4856 = vmatpush1.msra.mxu0 0.0
      %4857 = vmatprep.subr.mxu0 0.0
      %4858 = vmatpush1.msra.mxu0 0.0
      %4859 = vmatprep.subr.mxu0 0.0
      %4860 = vmatpush1.msra.mxu0 0.0
      %4861 = vmatprep.subr.mxu0 0.0
      %4862 = vmatpush1.msra.mxu0 0.0
      %4863 = vmatprep.mubr.f32.mxu0 0.0
      %4864 = vmatmul.mubr.f32.gmra.mrb[0].mxu0 %v4797
      %v4865 = vpop.f32.mrb[0].mxu0
      %v4866 = vadd.f32 0.0, %v4865
      %v4867 = vpop.f32.mrb[0].mxu0
      %4868 = vdwg.mxu0
      %v4870 = vsel %vm634, %v372, 0
      %4872 = vmatprep.subr.mxu0 0.0
      %4873 = vmatpush1.msra.mxu0 %v610
      %4874 = vmatprep.subr.mxu0 0.0
      %4875 = vmatpush1.msra.mxu0 %v611
      %4876 = vmatprep.subr.mxu0 0.0
      %4877 = vmatpush1.msra.mxu0 %v612
      %4878 = vmatprep.subr.mxu0 0.0
      %4879 = vmatpush1.msra.mxu0 %v613
      %4880 = vmatprep.subr.mxu0 0.0
      %4881 = vmatpush1.msra.mxu0 0.0
      %4882 = vmatprep.subr.mxu0 0.0
      %4883 = vmatpush1.msra.mxu0 0.0
      %4884 = vmatprep.subr.mxu0 0.0
      %4885 = vmatpush1.msra.mxu0 0.0
      %4886 = vmatprep.subr.mxu0 0.0
      %4887 = vmatpush1.msra.mxu0 0.0
      %4888 = vmatprep.subr.mxu0 0.0
      %4889 = vmatpush1.msra.mxu0 0.0
      %4890 = vmatprep.subr.mxu0 0.0
      %4891 = vmatpush1.msra.mxu0 0.0
      %4892 = vmatprep.subr.mxu0 0.0
      %4893 = vmatpush1.msra.mxu0 0.0
      %4894 = vmatprep.subr.mxu0 0.0
      %4895 = vmatpush1.msra.mxu0 0.0
      %4896 = vmatprep.subr.mxu0 0.0
      %4897 = vmatpush1.msra.mxu0 0.0
      %4898 = vmatprep.subr.mxu0 0.0
      %4899 = vmatpush1.msra.mxu0 0.0
      %4900 = vmatprep.subr.mxu0 0.0
      %4901 = vmatpush1.msra.mxu0 0.0
      %4902 = vmatprep.subr.mxu0 0.0
      %4903 = vmatpush1.msra.mxu0 0.0
      %4904 = vmatprep.subr.mxu0 0.0
      %4905 = vmatpush1.msra.mxu0 0.0
      %4906 = vmatprep.subr.mxu0 0.0
      %4907 = vmatpush1.msra.mxu0 0.0
      %4908 = vmatprep.subr.mxu0 0.0
      %4909 = vmatpush1.msra.mxu0 0.0
      %4910 = vmatprep.subr.mxu0 0.0
      %4911 = vmatpush1.msra.mxu0 0.0
      %4912 = vmatprep.subr.mxu0 0.0
      %4913 = vmatpush1.msra.mxu0 0.0
      %4914 = vmatprep.subr.mxu0 0.0
      %4915 = vmatpush1.msra.mxu0 0.0
      %4916 = vmatprep.subr.mxu0 0.0
      %4917 = vmatpush1.msra.mxu0 0.0
      %4918 = vmatprep.subr.mxu0 0.0
      %4919 = vmatpush1.msra.mxu0 0.0
      %4920 = vmatprep.subr.mxu0 0.0
      %4921 = vmatpush1.msra.mxu0 0.0
      %4922 = vmatprep.subr.mxu0 0.0
      %4923 = vmatpush1.msra.mxu0 0.0
      %4924 = vmatprep.subr.mxu0 0.0
      %4925 = vmatpush1.msra.mxu0 0.0
      %4926 = vmatprep.subr.mxu0 0.0
      %4927 = vmatpush1.msra.mxu0 0.0
      %4928 = vmatprep.subr.mxu0 0.0
      %4929 = vmatpush1.msra.mxu0 0.0
      %4930 = vmatprep.subr.mxu0 0.0
      %4931 = vmatpush1.msra.mxu0 0.0
      %4932 = vmatprep.subr.mxu0 0.0
      %4933 = vmatpush1.msra.mxu0 0.0
      %4934 = vmatprep.subr.mxu0 0.0
      %4935 = vmatpush1.msra.mxu0 0.0
      %4936 = vmatprep.mubr.f32.mxu0 0.0
      %4937 = vmatmul.mubr.f32.gmra.mrb[0].mxu0 %v4870
      %v4938 = vpop.f32.mrb[0].mxu0
      %v4939 = vadd.f32 0.0, %v4938
      %v4940 = vpop.f32.mrb[0].mxu0
      %4941 = vdwg.mxu0
      %v4943 = vsel %vm634, %v373, 0
      %4945 = vmatprep.subr.mxu0 0.0
      %4946 = vmatpush1.msra.mxu0 %v614
      %4947 = vmatprep.subr.mxu0 0.0
      %4948 = vmatpush1.msra.mxu0 %v615
      %4949 = vmatprep.subr.mxu0 0.0
      %4950 = vmatpush1.msra.mxu0 %v616
      %4951 = vmatprep.subr.mxu0 0.0
      %4952 = vmatpush1.msra.mxu0 %v617
      %4953 = vmatprep.subr.mxu0 0.0
      %4954 = vmatpush1.msra.mxu0 0.0
      %4955 = vmatprep.subr.mxu0 0.0
      %4956 = vmatpush1.msra.mxu0 0.0
      %4957 = vmatprep.subr.mxu0 0.0
      %4958 = vmatpush1.msra.mxu0 0.0
      %4959 = vmatprep.subr.mxu0 0.0
      %4960 = vmatpush1.msra.mxu0 0.0
      %4961 = vmatprep.subr.mxu0 0.0
      %4962 = vmatpush1.msra.mxu0 0.0
      %4963 = vmatprep.subr.mxu0 0.0
      %4964 = vmatpush1.msra.mxu0 0.0
      %4965 = vmatprep.subr.mxu0 0.0
      %4966 = vmatpush1.msra.mxu0 0.0
      %4967 = vmatprep.subr.mxu0 0.0
      %4968 = vmatpush1.msra.mxu0 0.0
      %4969 = vmatprep.subr.mxu0 0.0
      %4970 = vmatpush1.msra.mxu0 0.0
      %4971 = vmatprep.subr.mxu0 0.0
      %4972 = vmatpush1.msra.mxu0 0.0
      %4973 = vmatprep.subr.mxu0 0.0
      %4974 = vmatpush1.msra.mxu0 0.0
      %4975 = vmatprep.subr.mxu0 0.0
      %4976 = vmatpush1.msra.mxu0 0.0
      %4977 = vmatprep.subr.mxu0 0.0
      %4978 = vmatpush1.msra.mxu0 0.0
      %4979 = vmatprep.subr.mxu0 0.0
      %4980 = vmatpush1.msra.mxu0 0.0
      %4981 = vmatprep.subr.mxu0 0.0
      %4982 = vmatpush1.msra.mxu0 0.0
      %4983 = vmatprep.subr.mxu0 0.0
      %4984 = vmatpush1.msra.mxu0 0.0
      %4985 = vmatprep.subr.mxu0 0.0
      %4986 = vmatpush1.msra.mxu0 0.0
      %4987 = vmatprep.subr.mxu0 0.0
      %4988 = vmatpush1.msra.mxu0 0.0
      %4989 = vmatprep.subr.mxu0 0.0
      %4990 = vmatpush1.msra.mxu0 0.0
      %4991 = vmatprep.subr.mxu0 0.0
      %4992 = vmatpush1.msra.mxu0 0.0
      %4993 = vmatprep.subr.mxu0 0.0
      %4994 = vmatpush1.msra.mxu0 0.0
      %4995 = vmatprep.subr.mxu0 0.0
      %4996 = vmatpush1.msra.mxu0 0.0
      %4997 = vmatprep.subr.mxu0 0.0
      %4998 = vmatpush1.msra.mxu0 0.0
      %4999 = vmatprep.subr.mxu0 0.0
      %5000 = vmatpush1.msra.mxu0 0.0
      %5001 = vmatprep.subr.mxu0 0.0
      %5002 = vmatpush1.msra.mxu0 0.0
      %5003 = vmatprep.subr.mxu0 0.0
      %5004 = vmatpush1.msra.mxu0 0.0
      %5005 = vmatprep.subr.mxu0 0.0
      %5006 = vmatpush1.msra.mxu0 0.0
      %5007 = vmatprep.subr.mxu0 0.0
      %5008 = vmatpush1.msra.mxu0 0.0
      %5009 = vmatprep.mubr.f32.mxu0 0.0
      %5010 = vmatmul.mubr.f32.gmra.mrb[0].mxu0 %v4943
      %v5011 = vpop.f32.mrb[0].mxu0
      %v5012 = vadd.f32 0.0, %v5011
      %v5013 = vpop.f32.mrb[0].mxu0
      %5014 = vdwg.mxu0
      %v5016 = vsel %vm634, %v374, 0
      %5018 = vmatprep.subr.mxu0 0.0
      %5019 = vmatpush1.msra.mxu0 %v618
      %5020 = vmatprep.subr.mxu0 0.0
      %5021 = vmatpush1.msra.mxu0 %v619
      %5022 = vmatprep.subr.mxu0 0.0
      %5023 = vmatpush1.msra.mxu0 %v620
      %5024 = vmatprep.subr.mxu0 0.0
      %5025 = vmatpush1.msra.mxu0 %v621
      %5026 = vmatprep.subr.mxu0 0.0
      %5027 = vmatpush1.msra.mxu0 0.0
      %5028 = vmatprep.subr.mxu0 0.0
      %5029 = vmatpush1.msra.mxu0 0.0
      %5030 = vmatprep.subr.mxu0 0.0
      %5031 = vmatpush1.msra.mxu0 0.0
      %5032 = vmatprep.subr.mxu0 0.0
      %5033 = vmatpush1.msra.mxu0 0.0
      %5034 = vmatprep.subr.mxu0 0.0
      %5035 = vmatpush1.msra.mxu0 0.0
      %5036 = vmatprep.subr.mxu0 0.0
      %5037 = vmatpush1.msra.mxu0 0.0
      %5038 = vmatprep.subr.mxu0 0.0
      %5039 = vmatpush1.msra.mxu0 0.0
      %5040 = vmatprep.subr.mxu0 0.0
      %5041 = vmatpush1.msra.mxu0 0.0
      %5042 = vmatprep.subr.mxu0 0.0
      %5043 = vmatpush1.msra.mxu0 0.0
      %5044 = vmatprep.subr.mxu0 0.0
      %5045 = vmatpush1.msra.mxu0 0.0
      %5046 = vmatprep.subr.mxu0 0.0
      %5047 = vmatpush1.msra.mxu0 0.0
      %5048 = vmatprep.subr.mxu0 0.0
      %5049 = vmatpush1.msra.mxu0 0.0
      %5050 = vmatprep.subr.mxu0 0.0
      %5051 = vmatpush1.msra.mxu0 0.0
      %5052 = vmatprep.subr.mxu0 0.0
      %5053 = vmatpush1.msra.mxu0 0.0
      %5054 = vmatprep.subr.mxu0 0.0
      %5055 = vmatpush1.msra.mxu0 0.0
      %5056 = vmatprep.subr.mxu0 0.0
      %5057 = vmatpush1.msra.mxu0 0.0
      %5058 = vmatprep.subr.mxu0 0.0
      %5059 = vmatpush1.msra.mxu0 0.0
      %5060 = vmatprep.subr.mxu0 0.0
      %5061 = vmatpush1.msra.mxu0 0.0
      %5062 = vmatprep.subr.mxu0 0.0
      %5063 = vmatpush1.msra.mxu0 0.0
      %5064 = vmatprep.subr.mxu0 0.0
      %5065 = vmatpush1.msra.mxu0 0.0
      %5066 = vmatprep.subr.mxu0 0.0
      %5067 = vmatpush1.msra.mxu0 0.0
      %5068 = vmatprep.subr.mxu0 0.0
      %5069 = vmatpush1.msra.mxu0 0.0
      %5070 = vmatprep.subr.mxu0 0.0
      %5071 = vmatpush1.msra.mxu0 0.0
      %5072 = vmatprep.subr.mxu0 0.0
      %5073 = vmatpush1.msra.mxu0 0.0
      %5074 = vmatprep.subr.mxu0 0.0
      %5075 = vmatpush1.msra.mxu0 0.0
      %5076 = vmatprep.subr.mxu0 0.0
      %5077 = vmatpush1.msra.mxu0 0.0
      %5078 = vmatprep.subr.mxu0 0.0
      %5079 = vmatpush1.msra.mxu0 0.0
      %5080 = vmatprep.subr.mxu0 0.0
      %5081 = vmatpush1.msra.mxu0 0.0
      %5082 = vmatprep.mubr.f32.mxu0 0.0
      %5083 = vmatmul.mubr.f32.gmra.mrb[0].mxu0 %v5016
      %v5084 = vpop.f32.mrb[0].mxu0
      %v5085 = vadd.f32 0.0, %v5084
      %v5086 = vpop.f32.mrb[0].mxu0
      %5087 = vdwg.mxu0
      %v5089 = vsel %vm634, %v375, 0
      %5091 = vmatprep.subr.mxu0 0.0
      %5092 = vmatpush1.msra.mxu0 %v622
      %5093 = vmatprep.subr.mxu0 0.0
      %5094 = vmatpush1.msra.mxu0 %v623
      %5095 = vmatprep.subr.mxu0 0.0
      %5096 = vmatpush1.msra.mxu0 %v624
      %5097 = vmatprep.subr.mxu0 0.0
      %5098 = vmatpush1.msra.mxu0 %v625
      %5099 = vmatprep.subr.mxu0 0.0
      %5100 = vmatpush1.msra.mxu0 0.0
      %5101 = vmatprep.subr.mxu0 0.0
      %5102 = vmatpush1.msra.mxu0 0.0
      %5103 = vmatprep.subr.mxu0 0.0
      %5104 = vmatpush1.msra.mxu0 0.0
      %5105 = vmatprep.subr.mxu0 0.0
      %5106 = vmatpush1.msra.mxu0 0.0
      %5107 = vmatprep.subr.mxu0 0.0
      %5108 = vmatpush1.msra.mxu0 0.0
      %5109 = vmatprep.subr.mxu0 0.0
      %5110 = vmatpush1.msra.mxu0 0.0
      %5111 = vmatprep.subr.mxu0 0.0
      %5112 = vmatpush1.msra.mxu0 0.0
      %5113 = vmatprep.subr.mxu0 0.0
      %5114 = vmatpush1.msra.mxu0 0.0
      %5115 = vmatprep.subr.mxu0 0.0
      %5116 = vmatpush1.msra.mxu0 0.0
      %5117 = vmatprep.subr.mxu0 0.0
      %5118 = vmatpush1.msra.mxu0 0.0
      %5119 = vmatprep.subr.mxu0 0.0
      %5120 = vmatpush1.msra.mxu0 0.0
      %5121 = vmatprep.subr.mxu0 0.0
      %5122 = vmatpush1.msra.mxu0 0.0
      %5123 = vmatprep.subr.mxu0 0.0
      %5124 = vmatpush1.msra.mxu0 0.0
      %5125 = vmatprep.subr.mxu0 0.0
      %5126 = vmatpush1.msra.mxu0 0.0
      %5127 = vmatprep.subr.mxu0 0.0
      %5128 = vmatpush1.msra.mxu0 0.0
      %5129 = vmatprep.subr.mxu0 0.0
      %5130 = vmatpush1.msra.mxu0 0.0
      %5131 = vmatprep.subr.mxu0 0.0
      %5132 = vmatpush1.msra.mxu0 0.0
      %5133 = vmatprep.subr.mxu0 0.0
      %5134 = vmatpush1.msra.mxu0 0.0
      %5135 = vmatprep.subr.mxu0 0.0
      %5136 = vmatpush1.msra.mxu0 0.0
      %5137 = vmatprep.subr.mxu0 0.0
      %5138 = vmatpush1.msra.mxu0 0.0
      %5139 = vmatprep.subr.mxu0 0.0
      %5140 = vmatpush1.msra.mxu0 0.0
      %5141 = vmatprep.subr.mxu0 0.0
      %5142 = vmatpush1.msra.mxu0 0.0
      %5143 = vmatprep.subr.mxu0 0.0
      %5144 = vmatpush1.msra.mxu0 0.0
      %5145 = vmatprep.subr.mxu0 0.0
      %5146 = vmatpush1.msra.mxu0 0.0
      %5147 = vmatprep.subr.mxu0 0.0
      %5148 = vmatpush1.msra.mxu0 0.0
      %5149 = vmatprep.subr.mxu0 0.0
      %5150 = vmatpush1.msra.mxu0 0.0
      %5151 = vmatprep.subr.mxu0 0.0
      %5152 = vmatpush1.msra.mxu0 0.0
      %5153 = vmatprep.subr.mxu0 0.0
      %5154 = vmatpush1.msra.mxu0 0.0
      %5155 = vmatprep.mubr.f32.mxu0 0.0
      %5156 = vmatmul.mubr.f32.gmra.mrb[0].mxu0 %v5089
      %v5157 = vpop.f32.mrb[0].mxu0
      %v5158 = vadd.f32 0.0, %v5157
      %v5159 = vpop.f32.mrb[0].mxu0
      %5160 = vdwg.mxu0
      %v5162 = vsel %vm634, %v376, 0
      %5164 = vmatprep.subr.mxu0 0.0
      %5165 = vmatpush1.msra.mxu0 %v626
      %5166 = vmatprep.subr.mxu0 0.0
      %5167 = vmatpush1.msra.mxu0 %v627
      %5168 = vmatprep.subr.mxu0 0.0
      %5169 = vmatpush1.msra.mxu0 %v628
      %5170 = vmatprep.subr.mxu0 0.0
      %5171 = vmatpush1.msra.mxu0 %v629
      %5172 = vmatprep.subr.mxu0 0.0
      %5173 = vmatpush1.msra.mxu0 0.0
      %5174 = vmatprep.subr.mxu0 0.0
      %5175 = vmatpush1.msra.mxu0 0.0
      %5176 = vmatprep.subr.mxu0 0.0
      %5177 = vmatpush1.msra.mxu0 0.0
      %5178 = vmatprep.subr.mxu0 0.0
      %5179 = vmatpush1.msra.mxu0 0.0
      %5180 = vmatprep.subr.mxu0 0.0
      %5181 = vmatpush1.msra.mxu0 0.0
      %5182 = vmatprep.subr.mxu0 0.0
      %5183 = vmatpush1.msra.mxu0 0.0
      %5184 = vmatprep.subr.mxu0 0.0
      %5185 = vmatpush1.msra.mxu0 0.0
      %5186 = vmatprep.subr.mxu0 0.0
      %5187 = vmatpush1.msra.mxu0 0.0
      %5188 = vmatprep.subr.mxu0 0.0
      %5189 = vmatpush1.msra.mxu0 0.0
      %5190 = vmatprep.subr.mxu0 0.0
      %5191 = vmatpush1.msra.mxu0 0.0
      %5192 = vmatprep.subr.mxu0 0.0
      %5193 = vmatpush1.msra.mxu0 0.0
      %5194 = vmatprep.subr.mxu0 0.0
      %5195 = vmatpush1.msra.mxu0 0.0
      %5196 = vmatprep.subr.mxu0 0.0
      %5197 = vmatpush1.msra.mxu0 0.0
      %5198 = vmatprep.subr.mxu0 0.0
      %5199 = vmatpush1.msra.mxu0 0.0
      %5200 = vmatprep.subr.mxu0 0.0
      %5201 = vmatpush1.msra.mxu0 0.0
      %5202 = vmatprep.subr.mxu0 0.0
      %5203 = vmatpush1.msra.mxu0 0.0
      %5204 = vmatprep.subr.mxu0 0.0
      %5205 = vmatpush1.msra.mxu0 0.0
      %5206 = vmatprep.subr.mxu0 0.0
      %5207 = vmatpush1.msra.mxu0 0.0
      %5208 = vmatprep.subr.mxu0 0.0
      %5209 = vmatpush1.msra.mxu0 0.0
      %5210 = vmatprep.subr.mxu0 0.0
      %5211 = vmatpush1.msra.mxu0 0.0
      %5212 = vmatprep.subr.mxu0 0.0
      %5213 = vmatpush1.msra.mxu0 0.0
      %5214 = vmatprep.subr.mxu0 0.0
      %5215 = vmatpush1.msra.mxu0 0.0
      %5216 = vmatprep.subr.mxu0 0.0
      %5217 = vmatpush1.msra.mxu0 0.0
      %5218 = vmatprep.subr.mxu0 0.0
      %5219 = vmatpush1.msra.mxu0 0.0
      %5220 = vmatprep.subr.mxu0 0.0
      %5221 = vmatpush1.msra.mxu0 0.0
      %5222 = vmatprep.subr.mxu0 0.0
      %5223 = vmatpush1.msra.mxu0 0.0
      %5224 = vmatprep.subr.mxu0 0.0
      %5225 = vmatpush1.msra.mxu0 0.0
      %5226 = vmatprep.subr.mxu0 0.0
      %5227 = vmatpush1.msra.mxu0 0.0
      %5228 = vmatprep.mubr.f32.mxu0 0.0
      %5229 = vmatmul.mubr.f32.gmra.mrb[0].mxu0 %v5162
      %v5230 = vpop.f32.mrb[0].mxu0
      %v5231 = vadd.f32 0.0, %v5230
      %v5232 = vpop.f32.mrb[0].mxu0
      %5233 = vdwg.mxu0
      %v5235 = vsel %vm634, %v377, 0
      %5237 = vmatprep.subr.mxu0 0.0
      %5238 = vmatpush1.msra.mxu0 %v630
      %5239 = vmatprep.subr.mxu0 0.0
      %5240 = vmatpush1.msra.mxu0 %v631
      %5241 = vmatprep.subr.mxu0 0.0
      %5242 = vmatpush1.msra.mxu0 %v632
      %5243 = vmatprep.subr.mxu0 0.0
      %5244 = vmatpush1.msra.mxu0 %v633
      %5245 = vmatprep.subr.mxu0 0.0
      %5246 = vmatpush1.msra.mxu0 0.0
      %5247 = vmatprep.subr.mxu0 0.0
      %5248 = vmatpush1.msra.mxu0 0.0
      %5249 = vmatprep.subr.mxu0 0.0
      %5250 = vmatpush1.msra.mxu0 0.0
      %5251 = vmatprep.subr.mxu0 0.0
      %5252 = vmatpush1.msra.mxu0 0.0
      %5253 = vmatprep.subr.mxu0 0.0
      %5254 = vmatpush1.msra.mxu0 0.0
      %5255 = vmatprep.subr.mxu0 0.0
      %5256 = vmatpush1.msra.mxu0 0.0
      %5257 = vmatprep.subr.mxu0 0.0
      %5258 = vmatpush1.msra.mxu0 0.0
      %5259 = vmatprep.subr.mxu0 0.0
      %5260 = vmatpush1.msra.mxu0 0.0
      %5261 = vmatprep.subr.mxu0 0.0
      %5262 = vmatpush1.msra.mxu0 0.0
      %5263 = vmatprep.subr.mxu0 0.0
      %5264 = vmatpush1.msra.mxu0 0.0
      %5265 = vmatprep.subr.mxu0 0.0
      %5266 = vmatpush1.msra.mxu0 0.0
      %5267 = vmatprep.subr.mxu0 0.0
      %5268 = vmatpush1.msra.mxu0 0.0
      %5269 = vmatprep.subr.mxu0 0.0
      %5270 = vmatpush1.msra.mxu0 0.0
      %5271 = vmatprep.subr.mxu0 0.0
      %5272 = vmatpush1.msra.mxu0 0.0
      %5273 = vmatprep.subr.mxu0 0.0
      %5274 = vmatpush1.msra.mxu0 0.0
      %5275 = vmatprep.subr.mxu0 0.0
      %5276 = vmatpush1.msra.mxu0 0.0
      %5277 = vmatprep.subr.mxu0 0.0
      %5278 = vmatpush1.msra.mxu0 0.0
      %5279 = vmatprep.subr.mxu0 0.0
      %5280 = vmatpush1.msra.mxu0 0.0
      %5281 = vmatprep.subr.mxu0 0.0
      %5282 = vmatpush1.msra.mxu0 0.0
      %5283 = vmatprep.subr.mxu0 0.0
      %5284 = vmatpush1.msra.mxu0 0.0
      %5285 = vmatprep.subr.mxu0 0.0
      %5286 = vmatpush1.msra.mxu0 0.0
      %5287 = vmatprep.subr.mxu0 0.0
      %5288 = vmatpush1.msra.mxu0 0.0
      %5289 = vmatprep.subr.mxu0 0.0
      %5290 = vmatpush1.msra.mxu0 0.0
      %5291 = vmatprep.subr.mxu0 0.0
      %5292 = vmatpush1.msra.mxu0 0.0
      %5293 = vmatprep.subr.mxu0 0.0
      %5294 = vmatpush1.msra.mxu0 0.0
      %5295 = vmatprep.subr.mxu0 0.0
      %5296 = vmatpush1.msra.mxu0 0.0
      %5297 = vmatprep.subr.mxu0 0.0
      %5298 = vmatpush1.msra.mxu0 0.0
      %5299 = vmatprep.subr.mxu0 0.0
      %5300 = vmatpush1.msra.mxu0 0.0
      %5301 = vmatprep.mubr.f32.mxu0 0.0
      %5302 = vmatmul.mubr.f32.gmra.mrb[0].mxu0 %v5235
      %v5303 = vpop.f32.mrb[0].mxu0
      %v5304 = vadd.f32 0.0, %v5303
      %v5305 = vpop.f32.mrb[0].mxu0
      %5306 = vdwg.mxu0
      %v5307 = vadd.f32 %v314, %v346
      %v5308 = vadd.f32 %v315, %v347
      %v5309 = vadd.f32 %v316, %v348
      %v5310 = vadd.f32 %v317, %v349
      %v5311 = vadd.f32 %v318, %v350
      %v5312 = vadd.f32 %v319, %v351
      %v5313 = vadd.f32 %v320, %v352
      %v5314 = vadd.f32 %v321, %v353
      %v5315 = vadd.f32 %v322, %v354
      %v5316 = vadd.f32 %v323, %v355
      %v5317 = vadd.f32 %v324, %v356
      %v5318 = vadd.f32 %v325, %v357
      %v5319 = vadd.f32 %v326, %v358
      %v5320 = vadd.f32 %v327, %v359
      %v5321 = vadd.f32 %v328, %v360
      %v5322 = vadd.f32 %v329, %v361
      %v5323 = vadd.f32 %v330, %v362
      %v5324 = vadd.f32 %v331, %v363
      %v5325 = vadd.f32 %v332, %v364
      %v5326 = vadd.f32 %v333, %v365
      %v5327 = vadd.f32 %v334, %v366
      %v5328 = vadd.f32 %v335, %v367
      %v5329 = vadd.f32 %v336, %v368
      %v5330 = vadd.f32 %v337, %v369
      %v5331 = vadd.f32 %v338, %v370
      %v5332 = vadd.f32 %v339, %v371
      %v5333 = vadd.f32 %v340, %v372
      %v5334 = vadd.f32 %v341, %v373
      %v5335 = vadd.f32 %v342, %v374
      %v5336 = vadd.f32 %v343, %v375
      %v5337 = vadd.f32 %v344, %v376
      %v5338 = vadd.f32 %v345, %v377
      %v5339 = vadd.f32 %v378, %v506
      %v5340 = vadd.f32 %v379, %v507
      %v5341 = vadd.f32 %v380, %v508
      %v5342 = vadd.f32 %v381, %v509
      %v5343 = vadd.f32 %v382, %v510
      %v5344 = vadd.f32 %v383, %v511
      %v5345 = vadd.f32 %v384, %v512
      %v5346 = vadd.f32 %v385, %v513
      %v5347 = vadd.f32 %v386, %v514
      %v5348 = vadd.f32 %v387, %v515
      %v5349 = vadd.f32 %v388, %v516
      %v5350 = vadd.f32 %v389, %v517
      %v5351 = vadd.f32 %v390, %v518
      %v5352 = vadd.f32 %v391, %v519
      %v5353 = vadd.f32 %v392, %v520
      %v5354 = vadd.f32 %v393, %v521
      %v5355 = vadd.f32 %v394, %v522
      %v5356 = vadd.f32 %v395, %v523
      %v5357 = vadd.f32 %v396, %v524
      %v5358 = vadd.f32 %v397, %v525
      %v5359 = vadd.f32 %v398, %v526
      %v5360 = vadd.f32 %v399, %v527
      %v5361 = vadd.f32 %v400, %v528
      %v5362 = vadd.f32 %v401, %v529
      %v5363 = vadd.f32 %v402, %v530
      %v5364 = vadd.f32 %v403, %v531
      %v5365 = vadd.f32 %v404, %v532
      %v5366 = vadd.f32 %v405, %v533
      %v5367 = vadd.f32 %v406, %v534
      %v5368 = vadd.f32 %v407, %v535
      %v5369 = vadd.f32 %v408, %v536
      %v5370 = vadd.f32 %v409, %v537
      %v5371 = vadd.f32 %v410, %v538
      %v5372 = vadd.f32 %v411, %v539
      %v5373 = vadd.f32 %v412, %v540
      %v5374 = vadd.f32 %v413, %v541
      %v5375 = vadd.f32 %v414, %v542
      %v5376 = vadd.f32 %v415, %v543
      %v5377 = vadd.f32 %v416, %v544
      %v5378 = vadd.f32 %v417, %v545
      %v5379 = vadd.f32 %v418, %v546
      %v5380 = vadd.f32 %v419, %v547
      %v5381 = vadd.f32 %v420, %v548
      %v5382 = vadd.f32 %v421, %v549
      %v5383 = vadd.f32 %v422, %v550
      %v5384 = vadd.f32 %v423, %v551
      %v5385 = vadd.f32 %v424, %v552
      %v5386 = vadd.f32 %v425, %v553
      %v5387 = vadd.f32 %v426, %v554
      %v5388 = vadd.f32 %v427, %v555
      %v5389 = vadd.f32 %v428, %v556
      %v5390 = vadd.f32 %v429, %v557
      %v5391 = vadd.f32 %v430, %v558
      %v5392 = vadd.f32 %v431, %v559
      %v5393 = vadd.f32 %v432, %v560
      %v5394 = vadd.f32 %v433, %v561
      %v5395 = vadd.f32 %v434, %v562
      %v5396 = vadd.f32 %v435, %v563
      %v5397 = vadd.f32 %v436, %v564
      %v5398 = vadd.f32 %v437, %v565
      %v5399 = vadd.f32 %v438, %v566
      %v5400 = vadd.f32 %v439, %v567
      %v5401 = vadd.f32 %v440, %v568
      %v5402 = vadd.f32 %v441, %v569
      %v5403 = vadd.f32 %v442, %v570
      %v5404 = vadd.f32 %v443, %v571
      %v5405 = vadd.f32 %v444, %v572
      %v5406 = vadd.f32 %v445, %v573
      %v5407 = vadd.f32 %v446, %v574
      %v5408 = vadd.f32 %v447, %v575
      %v5409 = vadd.f32 %v448, %v576
      %v5410 = vadd.f32 %v449, %v577
      %v5411 = vadd.f32 %v450, %v578
      %v5412 = vadd.f32 %v451, %v579
      %v5413 = vadd.f32 %v452, %v580
      %v5414 = vadd.f32 %v453, %v581
      %v5415 = vadd.f32 %v454, %v582
      %v5416 = vadd.f32 %v455, %v583
      %v5417 = vadd.f32 %v456, %v584
      %v5418 = vadd.f32 %v457, %v585
      %v5419 = vadd.f32 %v458, %v586
      %v5420 = vadd.f32 %v459, %v587
      %v5421 = vadd.f32 %v460, %v588
      %v5422 = vadd.f32 %v461, %v589
      %v5423 = vadd.f32 %v462, %v590
      %v5424 = vadd.f32 %v463, %v591
      %v5425 = vadd.f32 %v464, %v592
      %v5426 = vadd.f32 %v465, %v593
      %v5427 = vadd.f32 %v466, %v594
      %v5428 = vadd.f32 %v467, %v595
      %v5429 = vadd.f32 %v468, %v596
      %v5430 = vadd.f32 %v469, %v597
      %v5431 = vadd.f32 %v470, %v598
      %v5432 = vadd.f32 %v471, %v599
      %v5433 = vadd.f32 %v472, %v600
      %v5434 = vadd.f32 %v473, %v601
      %v5435 = vadd.f32 %v474, %v602
      %v5436 = vadd.f32 %v475, %v603
      %v5437 = vadd.f32 %v476, %v604
      %v5438 = vadd.f32 %v477, %v605
      %v5439 = vadd.f32 %v478, %v606
      %v5440 = vadd.f32 %v479, %v607
      %v5441 = vadd.f32 %v480, %v608
      %v5442 = vadd.f32 %v481, %v609
      %v5443 = vadd.f32 %v482, %v610
      %v5444 = vadd.f32 %v483, %v611
      %v5445 = vadd.f32 %v484, %v612
      %v5446 = vadd.f32 %v485, %v613
      %v5447 = vadd.f32 %v486, %v614
      %v5448 = vadd.f32 %v487, %v615
      %v5449 = vadd.f32 %v488, %v616
      %v5450 = vadd.f32 %v489, %v617
      %v5451 = vadd.f32 %v490, %v618
      %v5452 = vadd.f32 %v491, %v619
      %v5453 = vadd.f32 %v492, %v620
      %v5454 = vadd.f32 %v493, %v621
      %v5455 = vadd.f32 %v494, %v622
      %v5456 = vadd.f32 %v495, %v623
      %v5457 = vadd.f32 %v496, %v624
      %v5458 = vadd.f32 %v497, %v625
      %v5459 = vadd.f32 %v498, %v626
      %v5460 = vadd.f32 %v499, %v627
      %v5461 = vadd.f32 %v500, %v628
      %v5462 = vadd.f32 %v501, %v629
      %v5463 = vadd.f32 %v502, %v630
      %v5464 = vadd.f32 %v503, %v631
      %v5465 = vadd.f32 %v504, %v632
      %v5466 = vadd.f32 %v505, %v633
      %v5468 = vsel %vm634, %v5307, 0
      %5470 = vmatprep.subr.mxu0 0.0
      %5471 = vmatpush1.msra.mxu0 %v5339
      %5472 = vmatprep.subr.mxu0 0.0
      %5473 = vmatpush1.msra.mxu0 %v5340
      %5474 = vmatprep.subr.mxu0 0.0
      %5475 = vmatpush1.msra.mxu0 %v5341
      %5476 = vmatprep.subr.mxu0 0.0
      %5477 = vmatpush1.msra.mxu0 %v5342
      %5478 = vmatprep.subr.mxu0 0.0
      %5479 = vmatpush1.msra.mxu0 0.0
      %5480 = vmatprep.subr.mxu0 0.0
      %5481 = vmatpush1.msra.mxu0 0.0
      %5482 = vmatprep.subr.mxu0 0.0
      %5483 = vmatpush1.msra.mxu0 0.0
      %5484 = vmatprep.subr.mxu0 0.0
      %5485 = vmatpush1.msra.mxu0 0.0
      %5486 = vmatprep.subr.mxu0 0.0
      %5487 = vmatpush1.msra.mxu0 0.0
      %5488 = vmatprep.subr.mxu0 0.0
      %5489 = vmatpush1.msra.mxu0 0.0
      %5490 = vmatprep.subr.mxu0 0.0
      %5491 = vmatpush1.msra.mxu0 0.0
      %5492 = vmatprep.subr.mxu0 0.0
      %5493 = vmatpush1.msra.mxu0 0.0
      %5494 = vmatprep.subr.mxu0 0.0
      %5495 = vmatpush1.msra.mxu0 0.0
      %5496 = vmatprep.subr.mxu0 0.0
      %5497 = vmatpush1.msra.mxu0 0.0
      %5498 = vmatprep.subr.mxu0 0.0
      %5499 = vmatpush1.msra.mxu0 0.0
      %5500 = vmatprep.subr.mxu0 0.0
      %5501 = vmatpush1.msra.mxu0 0.0
      %5502 = vmatprep.subr.mxu0 0.0
      %5503 = vmatpush1.msra.mxu0 0.0
      %5504 = vmatprep.subr.mxu0 0.0
      %5505 = vmatpush1.msra.mxu0 0.0
      %5506 = vmatprep.subr.mxu0 0.0
      %5507 = vmatpush1.msra.mxu0 0.0
      %5508 = vmatprep.subr.mxu0 0.0
      %5509 = vmatpush1.msra.mxu0 0.0
      %5510 = vmatprep.subr.mxu0 0.0
      %5511 = vmatpush1.msra.mxu0 0.0
      %5512 = vmatprep.subr.mxu0 0.0
      %5513 = vmatpush1.msra.mxu0 0.0
      %5514 = vmatprep.subr.mxu0 0.0
      %5515 = vmatpush1.msra.mxu0 0.0
      %5516 = vmatprep.subr.mxu0 0.0
      %5517 = vmatpush1.msra.mxu0 0.0
      %5518 = vmatprep.subr.mxu0 0.0
      %5519 = vmatpush1.msra.mxu0 0.0
      %5520 = vmatprep.subr.mxu0 0.0
      %5521 = vmatpush1.msra.mxu0 0.0
      %5522 = vmatprep.subr.mxu0 0.0
      %5523 = vmatpush1.msra.mxu0 0.0
      %5524 = vmatprep.subr.mxu0 0.0
      %5525 = vmatpush1.msra.mxu0 0.0
      %5526 = vmatprep.subr.mxu0 0.0
      %5527 = vmatpush1.msra.mxu0 0.0
      %5528 = vmatprep.subr.mxu0 0.0
      %5529 = vmatpush1.msra.mxu0 0.0
      %5530 = vmatprep.subr.mxu0 0.0
      %5531 = vmatpush1.msra.mxu0 0.0
      %5532 = vmatprep.subr.mxu0 0.0
      %5533 = vmatpush1.msra.mxu0 0.0
      %5534 = vmatprep.mubr.f32.mxu0 0.0
      %5535 = vmatmul.mubr.f32.gmra.mrb[0].mxu0 %v5468
      %v5536 = vpop.f32.mrb[0].mxu0
      %v5537 = vadd.f32 0.0, %v5536
      %v5538 = vpop.f32.mrb[0].mxu0
      %5539 = vdwg.mxu0
      %v5541 = vsel %vm634, %v5308, 0
      %5543 = vmatprep.subr.mxu0 0.0
      %5544 = vmatpush1.msra.mxu0 %v5343
      %5545 = vmatprep.subr.mxu0 0.0
      %5546 = vmatpush1.msra.mxu0 %v5344
      %5547 = vmatprep.subr.mxu0 0.0
      %5548 = vmatpush1.msra.mxu0 %v5345
      %5549 = vmatprep.subr.mxu0 0.0
      %5550 = vmatpush1.msra.mxu0 %v5346
      %5551 = vmatprep.subr.mxu0 0.0
      %5552 = vmatpush1.msra.mxu0 0.0
      %5553 = vmatprep.subr.mxu0 0.0
      %5554 = vmatpush1.msra.mxu0 0.0
      %5555 = vmatprep.subr.mxu0 0.0
      %5556 = vmatpush1.msra.mxu0 0.0
      %5557 = vmatprep.subr.mxu0 0.0
      %5558 = vmatpush1.msra.mxu0 0.0
      %5559 = vmatprep.subr.mxu0 0.0
      %5560 = vmatpush1.msra.mxu0 0.0
      %5561 = vmatprep.subr.mxu0 0.0
      %5562 = vmatpush1.msra.mxu0 0.0
      %5563 = vmatprep.subr.mxu0 0.0
      %5564 = vmatpush1.msra.mxu0 0.0
      %5565 = vmatprep.subr.mxu0 0.0
      %5566 = vmatpush1.msra.mxu0 0.0
      %5567 = vmatprep.subr.mxu0 0.0
      %5568 = vmatpush1.msra.mxu0 0.0
      %5569 = vmatprep.subr.mxu0 0.0
      %5570 = vmatpush1.msra.mxu0 0.0
      %5571 = vmatprep.subr.mxu0 0.0
      %5572 = vmatpush1.msra.mxu0 0.0
      %5573 = vmatprep.subr.mxu0 0.0
      %5574 = vmatpush1.msra.mxu0 0.0
      %5575 = vmatprep.subr.mxu0 0.0
      %5576 = vmatpush1.msra.mxu0 0.0
      %5577 = vmatprep.subr.mxu0 0.0
      %5578 = vmatpush1.msra.mxu0 0.0
      %5579 = vmatprep.subr.mxu0 0.0
      %5580 = vmatpush1.msra.mxu0 0.0
      %5581 = vmatprep.subr.mxu0 0.0
      %5582 = vmatpush1.msra.mxu0 0.0
      %5583 = vmatprep.subr.mxu0 0.0
      %5584 = vmatpush1.msra.mxu0 0.0
      %5585 = vmatprep.subr.mxu0 0.0
      %5586 = vmatpush1.msra.mxu0 0.0
      %5587 = vmatprep.subr.mxu0 0.0
      %5588 = vmatpush1.msra.mxu0 0.0
      %5589 = vmatprep.subr.mxu0 0.0
      %5590 = vmatpush1.msra.mxu0 0.0
      %5591 = vmatprep.subr.mxu0 0.0
      %5592 = vmatpush1.msra.mxu0 0.0
      %5593 = vmatprep.subr.mxu0 0.0
      %5594 = vmatpush1.msra.mxu0 0.0
      %5595 = vmatprep.subr.mxu0 0.0
      %5596 = vmatpush1.msra.mxu0 0.0
      %5597 = vmatprep.subr.mxu0 0.0
      %5598 = vmatpush1.msra.mxu0 0.0
      %5599 = vmatprep.subr.mxu0 0.0
      %5600 = vmatpush1.msra.mxu0 0.0
      %5601 = vmatprep.subr.mxu0 0.0
      %5602 = vmatpush1.msra.mxu0 0.0
      %5603 = vmatprep.subr.mxu0 0.0
      %5604 = vmatpush1.msra.mxu0 0.0
      %5605 = vmatprep.subr.mxu0 0.0
      %5606 = vmatpush1.msra.mxu0 0.0
      %5607 = vmatprep.mubr.f32.mxu0 0.0
      %5608 = vmatmul.mubr.f32.gmra.mrb[0].mxu0 %v5541
      %v5609 = vpop.f32.mrb[0].mxu0
      %v5610 = vadd.f32 0.0, %v5609
      %v5611 = vpop.f32.mrb[0].mxu0
      %5612 = vdwg.mxu0
      %v5614 = vsel %vm634, %v5309, 0
      %5616 = vmatprep.subr.mxu0 0.0
      %5617 = vmatpush1.msra.mxu0 %v5347
      %5618 = vmatprep.subr.mxu0 0.0
      %5619 = vmatpush1.msra.mxu0 %v5348
      %5620 = vmatprep.subr.mxu0 0.0
      %5621 = vmatpush1.msra.mxu0 %v5349
      %5622 = vmatprep.subr.mxu0 0.0
      %5623 = vmatpush1.msra.mxu0 %v5350
      %5624 = vmatprep.subr.mxu0 0.0
      %5625 = vmatpush1.msra.mxu0 0.0
      %5626 = vmatprep.subr.mxu0 0.0
      %5627 = vmatpush1.msra.mxu0 0.0
      %5628 = vmatprep.subr.mxu0 0.0
      %5629 = vmatpush1.msra.mxu0 0.0
      %5630 = vmatprep.subr.mxu0 0.0
      %5631 = vmatpush1.msra.mxu0 0.0
      %5632 = vmatprep.subr.mxu0 0.0
      %5633 = vmatpush1.msra.mxu0 0.0
      %5634 = vmatprep.subr.mxu0 0.0
      %5635 = vmatpush1.msra.mxu0 0.0
      %5636 = vmatprep.subr.mxu0 0.0
      %5637 = vmatpush1.msra.mxu0 0.0
      %5638 = vmatprep.subr.mxu0 0.0
      %5639 = vmatpush1.msra.mxu0 0.0
      %5640 = vmatprep.subr.mxu0 0.0
      %5641 = vmatpush1.msra.mxu0 0.0
      %5642 = vmatprep.subr.mxu0 0.0
      %5643 = vmatpush1.msra.mxu0 0.0
      %5644 = vmatprep.subr.mxu0 0.0
      %5645 = vmatpush1.msra.mxu0 0.0
      %5646 = vmatprep.subr.mxu0 0.0
      %5647 = vmatpush1.msra.mxu0 0.0
      %5648 = vmatprep.subr.mxu0 0.0
      %5649 = vmatpush1.msra.mxu0 0.0
      %5650 = vmatprep.subr.mxu0 0.0
      %5651 = vmatpush1.msra.mxu0 0.0
      %5652 = vmatprep.subr.mxu0 0.0
      %5653 = vmatpush1.msra.mxu0 0.0
      %5654 = vmatprep.subr.mxu0 0.0
      %5655 = vmatpush1.msra.mxu0 0.0
      %5656 = vmatprep.subr.mxu0 0.0
      %5657 = vmatpush1.msra.mxu0 0.0
      %5658 = vmatprep.subr.mxu0 0.0
      %5659 = vmatpush1.msra.mxu0 0.0
      %5660 = vmatprep.subr.mxu0 0.0
      %5661 = vmatpush1.msra.mxu0 0.0
      %5662 = vmatprep.subr.mxu0 0.0
      %5663 = vmatpush1.msra.mxu0 0.0
      %5664 = vmatprep.subr.mxu0 0.0
      %5665 = vmatpush1.msra.mxu0 0.0
      %5666 = vmatprep.subr.mxu0 0.0
      %5667 = vmatpush1.msra.mxu0 0.0
      %5668 = vmatprep.subr.mxu0 0.0
      %5669 = vmatpush1.msra.mxu0 0.0
      %5670 = vmatprep.subr.mxu0 0.0
      %5671 = vmatpush1.msra.mxu0 0.0
      %5672 = vmatprep.subr.mxu0 0.0
      %5673 = vmatpush1.msra.mxu0 0.0
      %5674 = vmatprep.subr.mxu0 0.0
      %5675 = vmatpush1.msra.mxu0 0.0
      %5676 = vmatprep.subr.mxu0 0.0
      %5677 = vmatpush1.msra.mxu0 0.0
      %5678 = vmatprep.subr.mxu0 0.0
      %5679 = vmatpush1.msra.mxu0 0.0
      %5680 = vmatprep.mubr.f32.mxu0 0.0
      %5681 = vmatmul.mubr.f32.gmra.mrb[0].mxu0 %v5614
      %v5682 = vpop.f32.mrb[0].mxu0
      %v5683 = vadd.f32 0.0, %v5682
      %v5684 = vpop.f32.mrb[0].mxu0
      %5685 = vdwg.mxu0
      %v5687 = vsel %vm634, %v5310, 0
      %5689 = vmatprep.subr.mxu0 0.0
      %5690 = vmatpush1.msra.mxu0 %v5351
      %5691 = vmatprep.subr.mxu0 0.0
      %5692 = vmatpush1.msra.mxu0 %v5352
      %5693 = vmatprep.subr.mxu0 0.0
      %5694 = vmatpush1.msra.mxu0 %v5353
      %5695 = vmatprep.subr.mxu0 0.0
      %5696 = vmatpush1.msra.mxu0 %v5354
      %5697 = vmatprep.subr.mxu0 0.0
      %5698 = vmatpush1.msra.mxu0 0.0
      %5699 = vmatprep.subr.mxu0 0.0
      %5700 = vmatpush1.msra.mxu0 0.0
      %5701 = vmatprep.subr.mxu0 0.0
      %5702 = vmatpush1.msra.mxu0 0.0
      %5703 = vmatprep.subr.mxu0 0.0
      %5704 = vmatpush1.msra.mxu0 0.0
      %5705 = vmatprep.subr.mxu0 0.0
      %5706 = vmatpush1.msra.mxu0 0.0
      %5707 = vmatprep.subr.mxu0 0.0
      %5708 = vmatpush1.msra.mxu0 0.0
      %5709 = vmatprep.subr.mxu0 0.0
      %5710 = vmatpush1.msra.mxu0 0.0
      %5711 = vmatprep.subr.mxu0 0.0
      %5712 = vmatpush1.msra.mxu0 0.0
      %5713 = vmatprep.subr.mxu0 0.0
      %5714 = vmatpush1.msra.mxu0 0.0
      %5715 = vmatprep.subr.mxu0 0.0
      %5716 = vmatpush1.msra.mxu0 0.0
      %5717 = vmatprep.subr.mxu0 0.0
      %5718 = vmatpush1.msra.mxu0 0.0
      %5719 = vmatprep.subr.mxu0 0.0
      %5720 = vmatpush1.msra.mxu0 0.0
      %5721 = vmatprep.subr.mxu0 0.0
      %5722 = vmatpush1.msra.mxu0 0.0
      %5723 = vmatprep.subr.mxu0 0.0
      %5724 = vmatpush1.msra.mxu0 0.0
      %5725 = vmatprep.subr.mxu0 0.0
      %5726 = vmatpush1.msra.mxu0 0.0
      %5727 = vmatprep.subr.mxu0 0.0
      %5728 = vmatpush1.msra.mxu0 0.0
      %5729 = vmatprep.subr.mxu0 0.0
      %5730 = vmatpush1.msra.mxu0 0.0
      %5731 = vmatprep.subr.mxu0 0.0
      %5732 = vmatpush1.msra.mxu0 0.0
      %5733 = vmatprep.subr.mxu0 0.0
      %5734 = vmatpush1.msra.mxu0 0.0
      %5735 = vmatprep.subr.mxu0 0.0
      %5736 = vmatpush1.msra.mxu0 0.0
      %5737 = vmatprep.subr.mxu0 0.0
      %5738 = vmatpush1.msra.mxu0 0.0
      %5739 = vmatprep.subr.mxu0 0.0
      %5740 = vmatpush1.msra.mxu0 0.0
      %5741 = vmatprep.subr.mxu0 0.0
      %5742 = vmatpush1.msra.mxu0 0.0
      %5743 = vmatprep.subr.mxu0 0.0
      %5744 = vmatpush1.msra.mxu0 0.0
      %5745 = vmatprep.subr.mxu0 0.0
      %5746 = vmatpush1.msra.mxu0 0.0
      %5747 = vmatprep.subr.mxu0 0.0
      %5748 = vmatpush1.msra.mxu0 0.0
      %5749 = vmatprep.subr.mxu0 0.0
      %5750 = vmatpush1.msra.mxu0 0.0
      %5751 = vmatprep.subr.mxu0 0.0
      %5752 = vmatpush1.msra.mxu0 0.0
      %5753 = vmatprep.mubr.f32.mxu0 0.0
      %5754 = vmatmul.mubr.f32.gmra.mrb[0].mxu0 %v5687
      %v5755 = vpop.f32.mrb[0].mxu0
      %v5756 = vadd.f32 0.0, %v5755
      %v5757 = vpop.f32.mrb[0].mxu0
      %5758 = vdwg.mxu0
      %v5760 = vsel %vm634, %v5311, 0
      %5762 = vmatprep.subr.mxu0 0.0
      %5763 = vmatpush1.msra.mxu0 %v5355
      %5764 = vmatprep.subr.mxu0 0.0
      %5765 = vmatpush1.msra.mxu0 %v5356
      %5766 = vmatprep.subr.mxu0 0.0
      %5767 = vmatpush1.msra.mxu0 %v5357
      %5768 = vmatprep.subr.mxu0 0.0
      %5769 = vmatpush1.msra.mxu0 %v5358
      %5770 = vmatprep.subr.mxu0 0.0
      %5771 = vmatpush1.msra.mxu0 0.0
      %5772 = vmatprep.subr.mxu0 0.0
      %5773 = vmatpush1.msra.mxu0 0.0
      %5774 = vmatprep.subr.mxu0 0.0
      %5775 = vmatpush1.msra.mxu0 0.0
      %5776 = vmatprep.subr.mxu0 0.0
      %5777 = vmatpush1.msra.mxu0 0.0
      %5778 = vmatprep.subr.mxu0 0.0
      %5779 = vmatpush1.msra.mxu0 0.0
      %5780 = vmatprep.subr.mxu0 0.0
      %5781 = vmatpush1.msra.mxu0 0.0
      %5782 = vmatprep.subr.mxu0 0.0
      %5783 = vmatpush1.msra.mxu0 0.0
      %5784 = vmatprep.subr.mxu0 0.0
      %5785 = vmatpush1.msra.mxu0 0.0
      %5786 = vmatprep.subr.mxu0 0.0
      %5787 = vmatpush1.msra.mxu0 0.0
      %5788 = vmatprep.subr.mxu0 0.0
      %5789 = vmatpush1.msra.mxu0 0.0
      %5790 = vmatprep.subr.mxu0 0.0
      %5791 = vmatpush1.msra.mxu0 0.0
      %5792 = vmatprep.subr.mxu0 0.0
      %5793 = vmatpush1.msra.mxu0 0.0
      %5794 = vmatprep.subr.mxu0 0.0
      %5795 = vmatpush1.msra.mxu0 0.0
      %5796 = vmatprep.subr.mxu0 0.0
      %5797 = vmatpush1.msra.mxu0 0.0
      %5798 = vmatprep.subr.mxu0 0.0
      %5799 = vmatpush1.msra.mxu0 0.0
      %5800 = vmatprep.subr.mxu0 0.0
      %5801 = vmatpush1.msra.mxu0 0.0
      %5802 = vmatprep.subr.mxu0 0.0
      %5803 = vmatpush1.msra.mxu0 0.0
      %5804 = vmatprep.subr.mxu0 0.0
      %5805 = vmatpush1.msra.mxu0 0.0
      %5806 = vmatprep.subr.mxu0 0.0
      %5807 = vmatpush1.msra.mxu0 0.0
      %5808 = vmatprep.subr.mxu0 0.0
      %5809 = vmatpush1.msra.mxu0 0.0
      %5810 = vmatprep.subr.mxu0 0.0
      %5811 = vmatpush1.msra.mxu0 0.0
      %5812 = vmatprep.subr.mxu0 0.0
      %5813 = vmatpush1.msra.mxu0 0.0
      %5814 = vmatprep.subr.mxu0 0.0
      %5815 = vmatpush1.msra.mxu0 0.0
      %5816 = vmatprep.subr.mxu0 0.0
      %5817 = vmatpush1.msra.mxu0 0.0
      %5818 = vmatprep.subr.mxu0 0.0
      %5819 = vmatpush1.msra.mxu0 0.0
      %5820 = vmatprep.subr.mxu0 0.0
      %5821 = vmatpush1.msra.mxu0 0.0
      %5822 = vmatprep.subr.mxu0 0.0
      %5823 = vmatpush1.msra.mxu0 0.0
      %5824 = vmatprep.subr.mxu0 0.0
      %5825 = vmatpush1.msra.mxu0 0.0
      %5826 = vmatprep.mubr.f32.mxu0 0.0
      %5827 = vmatmul.mubr.f32.gmra.mrb[0].mxu0 %v5760
      %v5828 = vpop.f32.mrb[0].mxu0
      %v5829 = vadd.f32 0.0, %v5828
      %v5830 = vpop.f32.mrb[0].mxu0
      %5831 = vdwg.mxu0
      %v5833 = vsel %vm634, %v5312, 0
      %5835 = vmatprep.subr.mxu0 0.0
      %5836 = vmatpush1.msra.mxu0 %v5359
      %5837 = vmatprep.subr.mxu0 0.0
      %5838 = vmatpush1.msra.mxu0 %v5360
      %5839 = vmatprep.subr.mxu0 0.0
      %5840 = vmatpush1.msra.mxu0 %v5361
      %5841 = vmatprep.subr.mxu0 0.0
      %5842 = vmatpush1.msra.mxu0 %v5362
      %5843 = vmatprep.subr.mxu0 0.0
      %5844 = vmatpush1.msra.mxu0 0.0
      %5845 = vmatprep.subr.mxu0 0.0
      %5846 = vmatpush1.msra.mxu0 0.0
      %5847 = vmatprep.subr.mxu0 0.0
      %5848 = vmatpush1.msra.mxu0 0.0
      %5849 = vmatprep.subr.mxu0 0.0
      %5850 = vmatpush1.msra.mxu0 0.0
      %5851 = vmatprep.subr.mxu0 0.0
      %5852 = vmatpush1.msra.mxu0 0.0
      %5853 = vmatprep.subr.mxu0 0.0
      %5854 = vmatpush1.msra.mxu0 0.0
      %5855 = vmatprep.subr.mxu0 0.0
      %5856 = vmatpush1.msra.mxu0 0.0
      %5857 = vmatprep.subr.mxu0 0.0
      %5858 = vmatpush1.msra.mxu0 0.0
      %5859 = vmatprep.subr.mxu0 0.0
      %5860 = vmatpush1.msra.mxu0 0.0
      %5861 = vmatprep.subr.mxu0 0.0
      %5862 = vmatpush1.msra.mxu0 0.0
      %5863 = vmatprep.subr.mxu0 0.0
      %5864 = vmatpush1.msra.mxu0 0.0
      %5865 = vmatprep.subr.mxu0 0.0
      %5866 = vmatpush1.msra.mxu0 0.0
      %5867 = vmatprep.subr.mxu0 0.0
      %5868 = vmatpush1.msra.mxu0 0.0
      %5869 = vmatprep.subr.mxu0 0.0
      %5870 = vmatpush1.msra.mxu0 0.0
      %5871 = vmatprep.subr.mxu0 0.0
      %5872 = vmatpush1.msra.mxu0 0.0
      %5873 = vmatprep.subr.mxu0 0.0
      %5874 = vmatpush1.msra.mxu0 0.0
      %5875 = vmatprep.subr.mxu0 0.0
      %5876 = vmatpush1.msra.mxu0 0.0
      %5877 = vmatprep.subr.mxu0 0.0
      %5878 = vmatpush1.msra.mxu0 0.0
      %5879 = vmatprep.subr.mxu0 0.0
      %5880 = vmatpush1.msra.mxu0 0.0
      %5881 = vmatprep.subr.mxu0 0.0
      %5882 = vmatpush1.msra.mxu0 0.0
      %5883 = vmatprep.subr.mxu0 0.0
      %5884 = vmatpush1.msra.mxu0 0.0
      %5885 = vmatprep.subr.mxu0 0.0
      %5886 = vmatpush1.msra.mxu0 0.0
      %5887 = vmatprep.subr.mxu0 0.0
      %5888 = vmatpush1.msra.mxu0 0.0
      %5889 = vmatprep.subr.mxu0 0.0
      %5890 = vmatpush1.msra.mxu0 0.0
      %5891 = vmatprep.subr.mxu0 0.0
      %5892 = vmatpush1.msra.mxu0 0.0
      %5893 = vmatprep.subr.mxu0 0.0
      %5894 = vmatpush1.msra.mxu0 0.0
      %5895 = vmatprep.subr.mxu0 0.0
      %5896 = vmatpush1.msra.mxu0 0.0
      %5897 = vmatprep.subr.mxu0 0.0
      %5898 = vmatpush1.msra.mxu0 0.0
      %5899 = vmatprep.mubr.f32.mxu0 0.0
      %5900 = vmatmul.mubr.f32.gmra.mrb[0].mxu0 %v5833
      %v5901 = vpop.f32.mrb[0].mxu0
      %v5902 = vadd.f32 0.0, %v5901
      %v5903 = vpop.f32.mrb[0].mxu0
      %5904 = vdwg.mxu0
      %v5906 = vsel %vm634, %v5313, 0
      %5908 = vmatprep.subr.mxu0 0.0
      %5909 = vmatpush1.msra.mxu0 %v5363
      %5910 = vmatprep.subr.mxu0 0.0
      %5911 = vmatpush1.msra.mxu0 %v5364
      %5912 = vmatprep.subr.mxu0 0.0
      %5913 = vmatpush1.msra.mxu0 %v5365
      %5914 = vmatprep.subr.mxu0 0.0
      %5915 = vmatpush1.msra.mxu0 %v5366
      %5916 = vmatprep.subr.mxu0 0.0
      %5917 = vmatpush1.msra.mxu0 0.0
      %5918 = vmatprep.subr.mxu0 0.0
      %5919 = vmatpush1.msra.mxu0 0.0
      %5920 = vmatprep.subr.mxu0 0.0
      %5921 = vmatpush1.msra.mxu0 0.0
      %5922 = vmatprep.subr.mxu0 0.0
      %5923 = vmatpush1.msra.mxu0 0.0
      %5924 = vmatprep.subr.mxu0 0.0
      %5925 = vmatpush1.msra.mxu0 0.0
      %5926 = vmatprep.subr.mxu0 0.0
      %5927 = vmatpush1.msra.mxu0 0.0
      %5928 = vmatprep.subr.mxu0 0.0
      %5929 = vmatpush1.msra.mxu0 0.0
      %5930 = vmatprep.subr.mxu0 0.0
      %5931 = vmatpush1.msra.mxu0 0.0
      %5932 = vmatprep.subr.mxu0 0.0
      %5933 = vmatpush1.msra.mxu0 0.0
      %5934 = vmatprep.subr.mxu0 0.0
      %5935 = vmatpush1.msra.mxu0 0.0
      %5936 = vmatprep.subr.mxu0 0.0
      %5937 = vmatpush1.msra.mxu0 0.0
      %5938 = vmatprep.subr.mxu0 0.0
      %5939 = vmatpush1.msra.mxu0 0.0
      %5940 = vmatprep.subr.mxu0 0.0
      %5941 = vmatpush1.msra.mxu0 0.0
      %5942 = vmatprep.subr.mxu0 0.0
      %5943 = vmatpush1.msra.mxu0 0.0
      %5944 = vmatprep.subr.mxu0 0.0
      %5945 = vmatpush1.msra.mxu0 0.0
      %5946 = vmatprep.subr.mxu0 0.0
      %5947 = vmatpush1.msra.mxu0 0.0
      %5948 = vmatprep.subr.mxu0 0.0
      %5949 = vmatpush1.msra.mxu0 0.0
      %5950 = vmatprep.subr.mxu0 0.0
      %5951 = vmatpush1.msra.mxu0 0.0
      %5952 = vmatprep.subr.mxu0 0.0
      %5953 = vmatpush1.msra.mxu0 0.0
      %5954 = vmatprep.subr.mxu0 0.0
      %5955 = vmatpush1.msra.mxu0 0.0
      %5956 = vmatprep.subr.mxu0 0.0
      %5957 = vmatpush1.msra.mxu0 0.0
      %5958 = vmatprep.subr.mxu0 0.0
      %5959 = vmatpush1.msra.mxu0 0.0
      %5960 = vmatprep.subr.mxu0 0.0
      %5961 = vmatpush1.msra.mxu0 0.0
      %5962 = vmatprep.subr.mxu0 0.0
      %5963 = vmatpush1.msra.mxu0 0.0
      %5964 = vmatprep.subr.mxu0 0.0
      %5965 = vmatpush1.msra.mxu0 0.0
      %5966 = vmatprep.subr.mxu0 0.0
      %5967 = vmatpush1.msra.mxu0 0.0
      %5968 = vmatprep.subr.mxu0 0.0
      %5969 = vmatpush1.msra.mxu0 0.0
      %5970 = vmatprep.subr.mxu0 0.0
      %5971 = vmatpush1.msra.mxu0 0.0
      %5972 = vmatprep.mubr.f32.mxu0 0.0
      %5973 = vmatmul.mubr.f32.gmra.mrb[0].mxu0 %v5906
      %v5974 = vpop.f32.mrb[0].mxu0
      %v5975 = vadd.f32 0.0, %v5974
      %v5976 = vpop.f32.mrb[0].mxu0
      %5977 = vdwg.mxu0
      %v5979 = vsel %vm634, %v5314, 0
      %5981 = vmatprep.subr.mxu0 0.0
      %5982 = vmatpush1.msra.mxu0 %v5367
      %5983 = vmatprep.subr.mxu0 0.0
      %5984 = vmatpush1.msra.mxu0 %v5368
      %5985 = vmatprep.subr.mxu0 0.0
      %5986 = vmatpush1.msra.mxu0 %v5369
      %5987 = vmatprep.subr.mxu0 0.0
      %5988 = vmatpush1.msra.mxu0 %v5370
      %5989 = vmatprep.subr.mxu0 0.0
      %5990 = vmatpush1.msra.mxu0 0.0
      %5991 = vmatprep.subr.mxu0 0.0
      %5992 = vmatpush1.msra.mxu0 0.0
      %5993 = vmatprep.subr.mxu0 0.0
      %5994 = vmatpush1.msra.mxu0 0.0
      %5995 = vmatprep.subr.mxu0 0.0
      %5996 = vmatpush1.msra.mxu0 0.0
      %5997 = vmatprep.subr.mxu0 0.0
      %5998 = vmatpush1.msra.mxu0 0.0
      %5999 = vmatprep.subr.mxu0 0.0
      %6000 = vmatpush1.msra.mxu0 0.0
      %6001 = vmatprep.subr.mxu0 0.0
      %6002 = vmatpush1.msra.mxu0 0.0
      %6003 = vmatprep.subr.mxu0 0.0
      %6004 = vmatpush1.msra.mxu0 0.0
      %6005 = vmatprep.subr.mxu0 0.0
      %6006 = vmatpush1.msra.mxu0 0.0
      %6007 = vmatprep.subr.mxu0 0.0
      %6008 = vmatpush1.msra.mxu0 0.0
      %6009 = vmatprep.subr.mxu0 0.0
      %6010 = vmatpush1.msra.mxu0 0.0
      %6011 = vmatprep.subr.mxu0 0.0
      %6012 = vmatpush1.msra.mxu0 0.0
      %6013 = vmatprep.subr.mxu0 0.0
      %6014 = vmatpush1.msra.mxu0 0.0
      %6015 = vmatprep.subr.mxu0 0.0
      %6016 = vmatpush1.msra.mxu0 0.0
      %6017 = vmatprep.subr.mxu0 0.0
      %6018 = vmatpush1.msra.mxu0 0.0
      %6019 = vmatprep.subr.mxu0 0.0
      %6020 = vmatpush1.msra.mxu0 0.0
      %6021 = vmatprep.subr.mxu0 0.0
      %6022 = vmatpush1.msra.mxu0 0.0
      %6023 = vmatprep.subr.mxu0 0.0
      %6024 = vmatpush1.msra.mxu0 0.0
      %6025 = vmatprep.subr.mxu0 0.0
      %6026 = vmatpush1.msra.mxu0 0.0
      %6027 = vmatprep.subr.mxu0 0.0
      %6028 = vmatpush1.msra.mxu0 0.0
      %6029 = vmatprep.subr.mxu0 0.0
      %6030 = vmatpush1.msra.mxu0 0.0
      %6031 = vmatprep.subr.mxu0 0.0
      %6032 = vmatpush1.msra.mxu0 0.0
      %6033 = vmatprep.subr.mxu0 0.0
      %6034 = vmatpush1.msra.mxu0 0.0
      %6035 = vmatprep.subr.mxu0 0.0
      %6036 = vmatpush1.msra.mxu0 0.0
      %6037 = vmatprep.subr.mxu0 0.0
      %6038 = vmatpush1.msra.mxu0 0.0
      %6039 = vmatprep.subr.mxu0 0.0
      %6040 = vmatpush1.msra.mxu0 0.0
      %6041 = vmatprep.subr.mxu0 0.0
      %6042 = vmatpush1.msra.mxu0 0.0
      %6043 = vmatprep.subr.mxu0 0.0
      %6044 = vmatpush1.msra.mxu0 0.0
      %6045 = vmatprep.mubr.f32.mxu0 0.0
      %6046 = vmatmul.mubr.f32.gmra.mrb[0].mxu0 %v5979
      %v6047 = vpop.f32.mrb[0].mxu0
      %v6048 = vadd.f32 0.0, %v6047
      %v6049 = vpop.f32.mrb[0].mxu0
      %6050 = vdwg.mxu0
      %v6052 = vsel %vm634, %v5315, 0
      %6054 = vmatprep.subr.mxu0 0.0
      %6055 = vmatpush1.msra.mxu0 %v5371
      %6056 = vmatprep.subr.mxu0 0.0
      %6057 = vmatpush1.msra.mxu0 %v5372
      %6058 = vmatprep.subr.mxu0 0.0
      %6059 = vmatpush1.msra.mxu0 %v5373
      %6060 = vmatprep.subr.mxu0 0.0
      %6061 = vmatpush1.msra.mxu0 %v5374
      %6062 = vmatprep.subr.mxu0 0.0
      %6063 = vmatpush1.msra.mxu0 0.0
      %6064 = vmatprep.subr.mxu0 0.0
      %6065 = vmatpush1.msra.mxu0 0.0
      %6066 = vmatprep.subr.mxu0 0.0
      %6067 = vmatpush1.msra.mxu0 0.0
      %6068 = vmatprep.subr.mxu0 0.0
      %6069 = vmatpush1.msra.mxu0 0.0
      %6070 = vmatprep.subr.mxu0 0.0
      %6071 = vmatpush1.msra.mxu0 0.0
      %6072 = vmatprep.subr.mxu0 0.0
      %6073 = vmatpush1.msra.mxu0 0.0
      %6074 = vmatprep.subr.mxu0 0.0
      %6075 = vmatpush1.msra.mxu0 0.0
      %6076 = vmatprep.subr.mxu0 0.0
      %6077 = vmatpush1.msra.mxu0 0.0
      %6078 = vmatprep.subr.mxu0 0.0
      %6079 = vmatpush1.msra.mxu0 0.0
      %6080 = vmatprep.subr.mxu0 0.0
      %6081 = vmatpush1.msra.mxu0 0.0
      %6082 = vmatprep.subr.mxu0 0.0
      %6083 = vmatpush1.msra.mxu0 0.0
      %6084 = vmatprep.subr.mxu0 0.0
      %6085 = vmatpush1.msra.mxu0 0.0
      %6086 = vmatprep.subr.mxu0 0.0
      %6087 = vmatpush1.msra.mxu0 0.0
      %6088 = vmatprep.subr.mxu0 0.0
      %6089 = vmatpush1.msra.mxu0 0.0
      %6090 = vmatprep.subr.mxu0 0.0
      %6091 = vmatpush1.msra.mxu0 0.0
      %6092 = vmatprep.subr.mxu0 0.0
      %6093 = vmatpush1.msra.mxu0 0.0
      %6094 = vmatprep.subr.mxu0 0.0
      %6095 = vmatpush1.msra.mxu0 0.0
      %6096 = vmatprep.subr.mxu0 0.0
      %6097 = vmatpush1.msra.mxu0 0.0
      %6098 = vmatprep.subr.mxu0 0.0
      %6099 = vmatpush1.msra.mxu0 0.0
      %6100 = vmatprep.subr.mxu0 0.0
      %6101 = vmatpush1.msra.mxu0 0.0
      %6102 = vmatprep.subr.mxu0 0.0
      %6103 = vmatpush1.msra.mxu0 0.0
      %6104 = vmatprep.subr.mxu0 0.0
      %6105 = vmatpush1.msra.mxu0 0.0
      %6106 = vmatprep.subr.mxu0 0.0
      %6107 = vmatpush1.msra.mxu0 0.0
      %6108 = vmatprep.subr.mxu0 0.0
      %6109 = vmatpush1.msra.mxu0 0.0
      %6110 = vmatprep.subr.mxu0 0.0
      %6111 = vmatpush1.msra.mxu0 0.0
      %6112 = vmatprep.subr.mxu0 0.0
      %6113 = vmatpush1.msra.mxu0 0.0
      %6114 = vmatprep.subr.mxu0 0.0
      %6115 = vmatpush1.msra.mxu0 0.0
      %6116 = vmatprep.subr.mxu0 0.0
      %6117 = vmatpush1.msra.mxu0 0.0
      %6118 = vmatprep.mubr.f32.mxu0 0.0
      %6119 = vmatmul.mubr.f32.gmra.mrb[0].mxu0 %v6052
      %v6120 = vpop.f32.mrb[0].mxu0
      %v6121 = vadd.f32 0.0, %v6120
      %v6122 = vpop.f32.mrb[0].mxu0
      %6123 = vdwg.mxu0
      %v6125 = vsel %vm634, %v5316, 0
      %6127 = vmatprep.subr.mxu0 0.0
      %6128 = vmatpush1.msra.mxu0 %v5375
      %6129 = vmatprep.subr.mxu0 0.0
      %6130 = vmatpush1.msra.mxu0 %v5376
      %6131 = vmatprep.subr.mxu0 0.0
      %6132 = vmatpush1.msra.mxu0 %v5377
      %6133 = vmatprep.subr.mxu0 0.0
      %6134 = vmatpush1.msra.mxu0 %v5378
      %6135 = vmatprep.subr.mxu0 0.0
      %6136 = vmatpush1.msra.mxu0 0.0
      %6137 = vmatprep.subr.mxu0 0.0
      %6138 = vmatpush1.msra.mxu0 0.0
      %6139 = vmatprep.subr.mxu0 0.0
      %6140 = vmatpush1.msra.mxu0 0.0
      %6141 = vmatprep.subr.mxu0 0.0
      %6142 = vmatpush1.msra.mxu0 0.0
      %6143 = vmatprep.subr.mxu0 0.0
      %6144 = vmatpush1.msra.mxu0 0.0
      %6145 = vmatprep.subr.mxu0 0.0
      %6146 = vmatpush1.msra.mxu0 0.0
      %6147 = vmatprep.subr.mxu0 0.0
      %6148 = vmatpush1.msra.mxu0 0.0
      %6149 = vmatprep.subr.mxu0 0.0
      %6150 = vmatpush1.msra.mxu0 0.0
      %6151 = vmatprep.subr.mxu0 0.0
      %6152 = vmatpush1.msra.mxu0 0.0
      %6153 = vmatprep.subr.mxu0 0.0
      %6154 = vmatpush1.msra.mxu0 0.0
      %6155 = vmatprep.subr.mxu0 0.0
      %6156 = vmatpush1.msra.mxu0 0.0
      %6157 = vmatprep.subr.mxu0 0.0
      %6158 = vmatpush1.msra.mxu0 0.0
      %6159 = vmatprep.subr.mxu0 0.0
      %6160 = vmatpush1.msra.mxu0 0.0
      %6161 = vmatprep.subr.mxu0 0.0
      %6162 = vmatpush1.msra.mxu0 0.0
      %6163 = vmatprep.subr.mxu0 0.0
      %6164 = vmatpush1.msra.mxu0 0.0
      %6165 = vmatprep.subr.mxu0 0.0
      %6166 = vmatpush1.msra.mxu0 0.0
      %6167 = vmatprep.subr.mxu0 0.0
      %6168 = vmatpush1.msra.mxu0 0.0
      %6169 = vmatprep.subr.mxu0 0.0
      %6170 = vmatpush1.msra.mxu0 0.0
      %6171 = vmatprep.subr.mxu0 0.0
      %6172 = vmatpush1.msra.mxu0 0.0
      %6173 = vmatprep.subr.mxu0 0.0
      %6174 = vmatpush1.msra.mxu0 0.0
      %6175 = vmatprep.subr.mxu0 0.0
      %6176 = vmatpush1.msra.mxu0 0.0
      %6177 = vmatprep.subr.mxu0 0.0
      %6178 = vmatpush1.msra.mxu0 0.0
      %6179 = vmatprep.subr.mxu0 0.0
      %6180 = vmatpush1.msra.mxu0 0.0
      %6181 = vmatprep.subr.mxu0 0.0
      %6182 = vmatpush1.msra.mxu0 0.0
      %6183 = vmatprep.subr.mxu0 0.0
      %6184 = vmatpush1.msra.mxu0 0.0
      %6185 = vmatprep.subr.mxu0 0.0
      %6186 = vmatpush1.msra.mxu0 0.0
      %6187 = vmatprep.subr.mxu0 0.0
      %6188 = vmatpush1.msra.mxu0 0.0
      %6189 = vmatprep.subr.mxu0 0.0
      %6190 = vmatpush1.msra.mxu0 0.0
      %6191 = vmatprep.mubr.f32.mxu0 0.0
      %6192 = vmatmul.mubr.f32.gmra.mrb[0].mxu0 %v6125
      %v6193 = vpop.f32.mrb[0].mxu0
      %v6194 = vadd.f32 0.0, %v6193
      %v6195 = vpop.f32.mrb[0].mxu0
      %6196 = vdwg.mxu0
      %v6198 = vsel %vm634, %v5317, 0
      %6200 = vmatprep.subr.mxu0 0.0
      %6201 = vmatpush1.msra.mxu0 %v5379
      %6202 = vmatprep.subr.mxu0 0.0
      %6203 = vmatpush1.msra.mxu0 %v5380
      %6204 = vmatprep.subr.mxu0 0.0
      %6205 = vmatpush1.msra.mxu0 %v5381
      %6206 = vmatprep.subr.mxu0 0.0
      %6207 = vmatpush1.msra.mxu0 %v5382
      %6208 = vmatprep.subr.mxu0 0.0
      %6209 = vmatpush1.msra.mxu0 0.0
      %6210 = vmatprep.subr.mxu0 0.0
      %6211 = vmatpush1.msra.mxu0 0.0
      %6212 = vmatprep.subr.mxu0 0.0
      %6213 = vmatpush1.msra.mxu0 0.0
      %6214 = vmatprep.subr.mxu0 0.0
      %6215 = vmatpush1.msra.mxu0 0.0
      %6216 = vmatprep.subr.mxu0 0.0
      %6217 = vmatpush1.msra.mxu0 0.0
      %6218 = vmatprep.subr.mxu0 0.0
      %6219 = vmatpush1.msra.mxu0 0.0
      %6220 = vmatprep.subr.mxu0 0.0
      %6221 = vmatpush1.msra.mxu0 0.0
      %6222 = vmatprep.subr.mxu0 0.0
      %6223 = vmatpush1.msra.mxu0 0.0
      %6224 = vmatprep.subr.mxu0 0.0
      %6225 = vmatpush1.msra.mxu0 0.0
      %6226 = vmatprep.subr.mxu0 0.0
      %6227 = vmatpush1.msra.mxu0 0.0
      %6228 = vmatprep.subr.mxu0 0.0
      %6229 = vmatpush1.msra.mxu0 0.0
      %6230 = vmatprep.subr.mxu0 0.0
      %6231 = vmatpush1.msra.mxu0 0.0
      %6232 = vmatprep.subr.mxu0 0.0
      %6233 = vmatpush1.msra.mxu0 0.0
      %6234 = vmatprep.subr.mxu0 0.0
      %6235 = vmatpush1.msra.mxu0 0.0
      %6236 = vmatprep.subr.mxu0 0.0
      %6237 = vmatpush1.msra.mxu0 0.0
      %6238 = vmatprep.subr.mxu0 0.0
      %6239 = vmatpush1.msra.mxu0 0.0
      %6240 = vmatprep.subr.mxu0 0.0
      %6241 = vmatpush1.msra.mxu0 0.0
      %6242 = vmatprep.subr.mxu0 0.0
      %6243 = vmatpush1.msra.mxu0 0.0
      %6244 = vmatprep.subr.mxu0 0.0
      %6245 = vmatpush1.msra.mxu0 0.0
      %6246 = vmatprep.subr.mxu0 0.0
      %6247 = vmatpush1.msra.mxu0 0.0
      %6248 = vmatprep.subr.mxu0 0.0
      %6249 = vmatpush1.msra.mxu0 0.0
      %6250 = vmatprep.subr.mxu0 0.0
      %6251 = vmatpush1.msra.mxu0 0.0
      %6252 = vmatprep.subr.mxu0 0.0
      %6253 = vmatpush1.msra.mxu0 0.0
      %6254 = vmatprep.subr.mxu0 0.0
      %6255 = vmatpush1.msra.mxu0 0.0
      %6256 = vmatprep.subr.mxu0 0.0
      %6257 = vmatpush1.msra.mxu0 0.0
      %6258 = vmatprep.subr.mxu0 0.0
      %6259 = vmatpush1.msra.mxu0 0.0
      %6260 = vmatprep.subr.mxu0 0.0
      %6261 = vmatpush1.msra.mxu0 0.0
      %6262 = vmatprep.subr.mxu0 0.0
      %6263 = vmatpush1.msra.mxu0 0.0
      %6264 = vmatprep.mubr.f32.mxu0 0.0
      %6265 = vmatmul.mubr.f32.gmra.mrb[0].mxu0 %v6198
      %v6266 = vpop.f32.mrb[0].mxu0
      %v6267 = vadd.f32 0.0, %v6266
      %v6268 = vpop.f32.mrb[0].mxu0
      %6269 = vdwg.mxu0
      %v6271 = vsel %vm634, %v5318, 0
      %6273 = vmatprep.subr.mxu0 0.0
      %6274 = vmatpush1.msra.mxu0 %v5383
      %6275 = vmatprep.subr.mxu0 0.0
      %6276 = vmatpush1.msra.mxu0 %v5384
      %6277 = vmatprep.subr.mxu0 0.0
      %6278 = vmatpush1.msra.mxu0 %v5385
      %6279 = vmatprep.subr.mxu0 0.0
      %6280 = vmatpush1.msra.mxu0 %v5386
      %6281 = vmatprep.subr.mxu0 0.0
      %6282 = vmatpush1.msra.mxu0 0.0
      %6283 = vmatprep.subr.mxu0 0.0
      %6284 = vmatpush1.msra.mxu0 0.0
      %6285 = vmatprep.subr.mxu0 0.0
      %6286 = vmatpush1.msra.mxu0 0.0
      %6287 = vmatprep.subr.mxu0 0.0
      %6288 = vmatpush1.msra.mxu0 0.0
      %6289 = vmatprep.subr.mxu0 0.0
      %6290 = vmatpush1.msra.mxu0 0.0
      %6291 = vmatprep.subr.mxu0 0.0
      %6292 = vmatpush1.msra.mxu0 0.0
      %6293 = vmatprep.subr.mxu0 0.0
      %6294 = vmatpush1.msra.mxu0 0.0
      %6295 = vmatprep.subr.mxu0 0.0
      %6296 = vmatpush1.msra.mxu0 0.0
      %6297 = vmatprep.subr.mxu0 0.0
      %6298 = vmatpush1.msra.mxu0 0.0
      %6299 = vmatprep.subr.mxu0 0.0
      %6300 = vmatpush1.msra.mxu0 0.0
      %6301 = vmatprep.subr.mxu0 0.0
      %6302 = vmatpush1.msra.mxu0 0.0
      %6303 = vmatprep.subr.mxu0 0.0
      %6304 = vmatpush1.msra.mxu0 0.0
      %6305 = vmatprep.subr.mxu0 0.0
      %6306 = vmatpush1.msra.mxu0 0.0
      %6307 = vmatprep.subr.mxu0 0.0
      %6308 = vmatpush1.msra.mxu0 0.0
      %6309 = vmatprep.subr.mxu0 0.0
      %6310 = vmatpush1.msra.mxu0 0.0
      %6311 = vmatprep.subr.mxu0 0.0
      %6312 = vmatpush1.msra.mxu0 0.0
      %6313 = vmatprep.subr.mxu0 0.0
      %6314 = vmatpush1.msra.mxu0 0.0
      %6315 = vmatprep.subr.mxu0 0.0
      %6316 = vmatpush1.msra.mxu0 0.0
      %6317 = vmatprep.subr.mxu0 0.0
      %6318 = vmatpush1.msra.mxu0 0.0
      %6319 = vmatprep.subr.mxu0 0.0
      %6320 = vmatpush1.msra.mxu0 0.0
      %6321 = vmatprep.subr.mxu0 0.0
      %6322 = vmatpush1.msra.mxu0 0.0
      %6323 = vmatprep.subr.mxu0 0.0
      %6324 = vmatpush1.msra.mxu0 0.0
      %6325 = vmatprep.subr.mxu0 0.0
      %6326 = vmatpush1.msra.mxu0 0.0
      %6327 = vmatprep.subr.mxu0 0.0
      %6328 = vmatpush1.msra.mxu0 0.0
      %6329 = vmatprep.subr.mxu0 0.0
      %6330 = vmatpush1.msra.mxu0 0.0
      %6331 = vmatprep.subr.mxu0 0.0
      %6332 = vmatpush1.msra.mxu0 0.0
      %6333 = vmatprep.subr.mxu0 0.0
      %6334 = vmatpush1.msra.mxu0 0.0
      %6335 = vmatprep.subr.mxu0 0.0
      %6336 = vmatpush1.msra.mxu0 0.0
      %6337 = vmatprep.mubr.f32.mxu0 0.0
      %6338 = vmatmul.mubr.f32.gmra.mrb[0].mxu0 %v6271
      %v6339 = vpop.f32.mrb[0].mxu0
      %v6340 = vadd.f32 0.0, %v6339
      %v6341 = vpop.f32.mrb[0].mxu0
      %6342 = vdwg.mxu0
      %v6344 = vsel %vm634, %v5319, 0
      %6346 = vmatprep.subr.mxu0 0.0
      %6347 = vmatpush1.msra.mxu0 %v5387
      %6348 = vmatprep.subr.mxu0 0.0
      %6349 = vmatpush1.msra.mxu0 %v5388
      %6350 = vmatprep.subr.mxu0 0.0
      %6351 = vmatpush1.msra.mxu0 %v5389
      %6352 = vmatprep.subr.mxu0 0.0
      %6353 = vmatpush1.msra.mxu0 %v5390
      %6354 = vmatprep.subr.mxu0 0.0
      %6355 = vmatpush1.msra.mxu0 0.0
      %6356 = vmatprep.subr.mxu0 0.0
      %6357 = vmatpush1.msra.mxu0 0.0
      %6358 = vmatprep.subr.mxu0 0.0
      %6359 = vmatpush1.msra.mxu0 0.0
      %6360 = vmatprep.subr.mxu0 0.0
      %6361 = vmatpush1.msra.mxu0 0.0
      %6362 = vmatprep.subr.mxu0 0.0
      %6363 = vmatpush1.msra.mxu0 0.0
      %6364 = vmatprep.subr.mxu0 0.0
      %6365 = vmatpush1.msra.mxu0 0.0
      %6366 = vmatprep.subr.mxu0 0.0
      %6367 = vmatpush1.msra.mxu0 0.0
      %6368 = vmatprep.subr.mxu0 0.0
      %6369 = vmatpush1.msra.mxu0 0.0
      %6370 = vmatprep.subr.mxu0 0.0
      %6371 = vmatpush1.msra.mxu0 0.0
      %6372 = vmatprep.subr.mxu0 0.0
      %6373 = vmatpush1.msra.mxu0 0.0
      %6374 = vmatprep.subr.mxu0 0.0
      %6375 = vmatpush1.msra.mxu0 0.0
      %6376 = vmatprep.subr.mxu0 0.0
      %6377 = vmatpush1.msra.mxu0 0.0
      %6378 = vmatprep.subr.mxu0 0.0
      %6379 = vmatpush1.msra.mxu0 0.0
      %6380 = vmatprep.subr.mxu0 0.0
      %6381 = vmatpush1.msra.mxu0 0.0
      %6382 = vmatprep.subr.mxu0 0.0
      %6383 = vmatpush1.msra.mxu0 0.0
      %6384 = vmatprep.subr.mxu0 0.0
      %6385 = vmatpush1.msra.mxu0 0.0
      %6386 = vmatprep.subr.mxu0 0.0
      %6387 = vmatpush1.msra.mxu0 0.0
      %6388 = vmatprep.subr.mxu0 0.0
      %6389 = vmatpush1.msra.mxu0 0.0
      %6390 = vmatprep.subr.mxu0 0.0
      %6391 = vmatpush1.msra.mxu0 0.0
      %6392 = vmatprep.subr.mxu0 0.0
      %6393 = vmatpush1.msra.mxu0 0.0
      %6394 = vmatprep.subr.mxu0 0.0
      %6395 = vmatpush1.msra.mxu0 0.0
      %6396 = vmatprep.subr.mxu0 0.0
      %6397 = vmatpush1.msra.mxu0 0.0
      %6398 = vmatprep.subr.mxu0 0.0
      %6399 = vmatpush1.msra.mxu0 0.0
      %6400 = vmatprep.subr.mxu0 0.0
      %6401 = vmatpush1.msra.mxu0 0.0
      %6402 = vmatprep.subr.mxu0 0.0
      %6403 = vmatpush1.msra.mxu0 0.0
      %6404 = vmatprep.subr.mxu0 0.0
      %6405 = vmatpush1.msra.mxu0 0.0
      %6406 = vmatprep.subr.mxu0 0.0
      %6407 = vmatpush1.msra.mxu0 0.0
      %6408 = vmatprep.subr.mxu0 0.0
      %6409 = vmatpush1.msra.mxu0 0.0
      %6410 = vmatprep.mubr.f32.mxu0 0.0
      %6411 = vmatmul.mubr.f32.gmra.mrb[0].mxu0 %v6344
      %v6412 = vpop.f32.mrb[0].mxu0
      %v6413 = vadd.f32 0.0, %v6412
      %v6414 = vpop.f32.mrb[0].mxu0
      %6415 = vdwg.mxu0
      %v6417 = vsel %vm634, %v5320, 0
      %6419 = vmatprep.subr.mxu0 0.0
      %6420 = vmatpush1.msra.mxu0 %v5391
      %6421 = vmatprep.subr.mxu0 0.0
      %6422 = vmatpush1.msra.mxu0 %v5392
      %6423 = vmatprep.subr.mxu0 0.0
      %6424 = vmatpush1.msra.mxu0 %v5393
      %6425 = vmatprep.subr.mxu0 0.0
      %6426 = vmatpush1.msra.mxu0 %v5394
      %6427 = vmatprep.subr.mxu0 0.0
      %6428 = vmatpush1.msra.mxu0 0.0
      %6429 = vmatprep.subr.mxu0 0.0
      %6430 = vmatpush1.msra.mxu0 0.0
      %6431 = vmatprep.subr.mxu0 0.0
      %6432 = vmatpush1.msra.mxu0 0.0
      %6433 = vmatprep.subr.mxu0 0.0
      %6434 = vmatpush1.msra.mxu0 0.0
      %6435 = vmatprep.subr.mxu0 0.0
      %6436 = vmatpush1.msra.mxu0 0.0
      %6437 = vmatprep.subr.mxu0 0.0
      %6438 = vmatpush1.msra.mxu0 0.0
      %6439 = vmatprep.subr.mxu0 0.0
      %6440 = vmatpush1.msra.mxu0 0.0
      %6441 = vmatprep.subr.mxu0 0.0
      %6442 = vmatpush1.msra.mxu0 0.0
      %6443 = vmatprep.subr.mxu0 0.0
      %6444 = vmatpush1.msra.mxu0 0.0
      %6445 = vmatprep.subr.mxu0 0.0
      %6446 = vmatpush1.msra.mxu0 0.0
      %6447 = vmatprep.subr.mxu0 0.0
      %6448 = vmatpush1.msra.mxu0 0.0
      %6449 = vmatprep.subr.mxu0 0.0
      %6450 = vmatpush1.msra.mxu0 0.0
      %6451 = vmatprep.subr.mxu0 0.0
      %6452 = vmatpush1.msra.mxu0 0.0
      %6453 = vmatprep.subr.mxu0 0.0
      %6454 = vmatpush1.msra.mxu0 0.0
      %6455 = vmatprep.subr.mxu0 0.0
      %6456 = vmatpush1.msra.mxu0 0.0
      %6457 = vmatprep.subr.mxu0 0.0
      %6458 = vmatpush1.msra.mxu0 0.0
      %6459 = vmatprep.subr.mxu0 0.0
      %6460 = vmatpush1.msra.mxu0 0.0
      %6461 = vmatprep.subr.mxu0 0.0
      %6462 = vmatpush1.msra.mxu0 0.0
      %6463 = vmatprep.subr.mxu0 0.0
      %6464 = vmatpush1.msra.mxu0 0.0
      %6465 = vmatprep.subr.mxu0 0.0
      %6466 = vmatpush1.msra.mxu0 0.0
      %6467 = vmatprep.subr.mxu0 0.0
      %6468 = vmatpush1.msra.mxu0 0.0
      %6469 = vmatprep.subr.mxu0 0.0
      %6470 = vmatpush1.msra.mxu0 0.0
      %6471 = vmatprep.subr.mxu0 0.0
      %6472 = vmatpush1.msra.mxu0 0.0
      %6473 = vmatprep.subr.mxu0 0.0
      %6474 = vmatpush1.msra.mxu0 0.0
      %6475 = vmatprep.subr.mxu0 0.0
      %6476 = vmatpush1.msra.mxu0 0.0
      %6477 = vmatprep.subr.mxu0 0.0
      %6478 = vmatpush1.msra.mxu0 0.0
      %6479 = vmatprep.subr.mxu0 0.0
      %6480 = vmatpush1.msra.mxu0 0.0
      %6481 = vmatprep.subr.mxu0 0.0
      %6482 = vmatpush1.msra.mxu0 0.0
      %6483 = vmatprep.mubr.f32.mxu0 0.0
      %6484 = vmatmul.mubr.f32.gmra.mrb[0].mxu0 %v6417
      %v6485 = vpop.f32.mrb[0].mxu0
      %v6486 = vadd.f32 0.0, %v6485
      %v6487 = vpop.f32.mrb[0].mxu0
      %6488 = vdwg.mxu0
      %v6490 = vsel %vm634, %v5321, 0
      %6492 = vmatprep.subr.mxu0 0.0
      %6493 = vmatpush1.msra.mxu0 %v5395
      %6494 = vmatprep.subr.mxu0 0.0
      %6495 = vmatpush1.msra.mxu0 %v5396
      %6496 = vmatprep.subr.mxu0 0.0
      %6497 = vmatpush1.msra.mxu0 %v5397
      %6498 = vmatprep.subr.mxu0 0.0
      %6499 = vmatpush1.msra.mxu0 %v5398
      %6500 = vmatprep.subr.mxu0 0.0
      %6501 = vmatpush1.msra.mxu0 0.0
      %6502 = vmatprep.subr.mxu0 0.0
      %6503 = vmatpush1.msra.mxu0 0.0
      %6504 = vmatprep.subr.mxu0 0.0
      %6505 = vmatpush1.msra.mxu0 0.0
      %6506 = vmatprep.subr.mxu0 0.0
      %6507 = vmatpush1.msra.mxu0 0.0
      %6508 = vmatprep.subr.mxu0 0.0
      %6509 = vmatpush1.msra.mxu0 0.0
      %6510 = vmatprep.subr.mxu0 0.0
      %6511 = vmatpush1.msra.mxu0 0.0
      %6512 = vmatprep.subr.mxu0 0.0
      %6513 = vmatpush1.msra.mxu0 0.0
      %6514 = vmatprep.subr.mxu0 0.0
      %6515 = vmatpush1.msra.mxu0 0.0
      %6516 = vmatprep.subr.mxu0 0.0
      %6517 = vmatpush1.msra.mxu0 0.0
      %6518 = vmatprep.subr.mxu0 0.0
      %6519 = vmatpush1.msra.mxu0 0.0
      %6520 = vmatprep.subr.mxu0 0.0
      %6521 = vmatpush1.msra.mxu0 0.0
      %6522 = vmatprep.subr.mxu0 0.0
      %6523 = vmatpush1.msra.mxu0 0.0
      %6524 = vmatprep.subr.mxu0 0.0
      %6525 = vmatpush1.msra.mxu0 0.0
      %6526 = vmatprep.subr.mxu0 0.0
      %6527 = vmatpush1.msra.mxu0 0.0
      %6528 = vmatprep.subr.mxu0 0.0
      %6529 = vmatpush1.msra.mxu0 0.0
      %6530 = vmatprep.subr.mxu0 0.0
      %6531 = vmatpush1.msra.mxu0 0.0
      %6532 = vmatprep.subr.mxu0 0.0
      %6533 = vmatpush1.msra.mxu0 0.0
      %6534 = vmatprep.subr.mxu0 0.0
      %6535 = vmatpush1.msra.mxu0 0.0
      %6536 = vmatprep.subr.mxu0 0.0
      %6537 = vmatpush1.msra.mxu0 0.0
      %6538 = vmatprep.subr.mxu0 0.0
      %6539 = vmatpush1.msra.mxu0 0.0
      %6540 = vmatprep.subr.mxu0 0.0
      %6541 = vmatpush1.msra.mxu0 0.0
      %6542 = vmatprep.subr.mxu0 0.0
      %6543 = vmatpush1.msra.mxu0 0.0
      %6544 = vmatprep.subr.mxu0 0.0
      %6545 = vmatpush1.msra.mxu0 0.0
      %6546 = vmatprep.subr.mxu0 0.0
      %6547 = vmatpush1.msra.mxu0 0.0
      %6548 = vmatprep.subr.mxu0 0.0
      %6549 = vmatpush1.msra.mxu0 0.0
      %6550 = vmatprep.subr.mxu0 0.0
      %6551 = vmatpush1.msra.mxu0 0.0
      %6552 = vmatprep.subr.mxu0 0.0
      %6553 = vmatpush1.msra.mxu0 0.0
      %6554 = vmatprep.subr.mxu0 0.0
      %6555 = vmatpush1.msra.mxu0 0.0
      %6556 = vmatprep.mubr.f32.mxu0 0.0
      %6557 = vmatmul.mubr.f32.gmra.mrb[0].mxu0 %v6490
      %v6558 = vpop.f32.mrb[0].mxu0
      %v6559 = vadd.f32 0.0, %v6558
      %v6560 = vpop.f32.mrb[0].mxu0
      %6561 = vdwg.mxu0
      %v6563 = vsel %vm634, %v5322, 0
      %6565 = vmatprep.subr.mxu0 0.0
      %6566 = vmatpush1.msra.mxu0 %v5399
      %6567 = vmatprep.subr.mxu0 0.0
      %6568 = vmatpush1.msra.mxu0 %v5400
      %6569 = vmatprep.subr.mxu0 0.0
      %6570 = vmatpush1.msra.mxu0 %v5401
      %6571 = vmatprep.subr.mxu0 0.0
      %6572 = vmatpush1.msra.mxu0 %v5402
      %6573 = vmatprep.subr.mxu0 0.0
      %6574 = vmatpush1.msra.mxu0 0.0
      %6575 = vmatprep.subr.mxu0 0.0
      %6576 = vmatpush1.msra.mxu0 0.0
      %6577 = vmatprep.subr.mxu0 0.0
      %6578 = vmatpush1.msra.mxu0 0.0
      %6579 = vmatprep.subr.mxu0 0.0
      %6580 = vmatpush1.msra.mxu0 0.0
      %6581 = vmatprep.subr.mxu0 0.0
      %6582 = vmatpush1.msra.mxu0 0.0
      %6583 = vmatprep.subr.mxu0 0.0
      %6584 = vmatpush1.msra.mxu0 0.0
      %6585 = vmatprep.subr.mxu0 0.0
      %6586 = vmatpush1.msra.mxu0 0.0
      %6587 = vmatprep.subr.mxu0 0.0
      %6588 = vmatpush1.msra.mxu0 0.0
      %6589 = vmatprep.subr.mxu0 0.0
      %6590 = vmatpush1.msra.mxu0 0.0
      %6591 = vmatprep.subr.mxu0 0.0
      %6592 = vmatpush1.msra.mxu0 0.0
      %6593 = vmatprep.subr.mxu0 0.0
      %6594 = vmatpush1.msra.mxu0 0.0
      %6595 = vmatprep.subr.mxu0 0.0
      %6596 = vmatpush1.msra.mxu0 0.0
      %6597 = vmatprep.subr.mxu0 0.0
      %6598 = vmatpush1.msra.mxu0 0.0
      %6599 = vmatprep.subr.mxu0 0.0
      %6600 = vmatpush1.msra.mxu0 0.0
      %6601 = vmatprep.subr.mxu0 0.0
      %6602 = vmatpush1.msra.mxu0 0.0
      %6603 = vmatprep.subr.mxu0 0.0
      %6604 = vmatpush1.msra.mxu0 0.0
      %6605 = vmatprep.subr.mxu0 0.0
      %6606 = vmatpush1.msra.mxu0 0.0
      %6607 = vmatprep.subr.mxu0 0.0
      %6608 = vmatpush1.msra.mxu0 0.0
      %6609 = vmatprep.subr.mxu0 0.0
      %6610 = vmatpush1.msra.mxu0 0.0
      %6611 = vmatprep.subr.mxu0 0.0
      %6612 = vmatpush1.msra.mxu0 0.0
      %6613 = vmatprep.subr.mxu0 0.0
      %6614 = vmatpush1.msra.mxu0 0.0
      %6615 = vmatprep.subr.mxu0 0.0
      %6616 = vmatpush1.msra.mxu0 0.0
      %6617 = vmatprep.subr.mxu0 0.0
      %6618 = vmatpush1.msra.mxu0 0.0
      %6619 = vmatprep.subr.mxu0 0.0
      %6620 = vmatpush1.msra.mxu0 0.0
      %6621 = vmatprep.subr.mxu0 0.0
      %6622 = vmatpush1.msra.mxu0 0.0
      %6623 = vmatprep.subr.mxu0 0.0
      %6624 = vmatpush1.msra.mxu0 0.0
      %6625 = vmatprep.subr.mxu0 0.0
      %6626 = vmatpush1.msra.mxu0 0.0
      %6627 = vmatprep.subr.mxu0 0.0
      %6628 = vmatpush1.msra.mxu0 0.0
      %6629 = vmatprep.mubr.f32.mxu0 0.0
      %6630 = vmatmul.mubr.f32.gmra.mrb[0].mxu0 %v6563
      %v6631 = vpop.f32.mrb[0].mxu0
      %v6632 = vadd.f32 0.0, %v6631
      %v6633 = vpop.f32.mrb[0].mxu0
      %6634 = vdwg.mxu0
      %v6636 = vsel %vm634, %v5323, 0
      %6638 = vmatprep.subr.mxu0 0.0
      %6639 = vmatpush1.msra.mxu0 %v5403
      %6640 = vmatprep.subr.mxu0 0.0
      %6641 = vmatpush1.msra.mxu0 %v5404
      %6642 = vmatprep.subr.mxu0 0.0
      %6643 = vmatpush1.msra.mxu0 %v5405
      %6644 = vmatprep.subr.mxu0 0.0
      %6645 = vmatpush1.msra.mxu0 %v5406
      %6646 = vmatprep.subr.mxu0 0.0
      %6647 = vmatpush1.msra.mxu0 0.0
      %6648 = vmatprep.subr.mxu0 0.0
      %6649 = vmatpush1.msra.mxu0 0.0
      %6650 = vmatprep.subr.mxu0 0.0
      %6651 = vmatpush1.msra.mxu0 0.0
      %6652 = vmatprep.subr.mxu0 0.0
      %6653 = vmatpush1.msra.mxu0 0.0
      %6654 = vmatprep.subr.mxu0 0.0
      %6655 = vmatpush1.msra.mxu0 0.0
      %6656 = vmatprep.subr.mxu0 0.0
      %6657 = vmatpush1.msra.mxu0 0.0
      %6658 = vmatprep.subr.mxu0 0.0
      %6659 = vmatpush1.msra.mxu0 0.0
      %6660 = vmatprep.subr.mxu0 0.0
      %6661 = vmatpush1.msra.mxu0 0.0
      %6662 = vmatprep.subr.mxu0 0.0
      %6663 = vmatpush1.msra.mxu0 0.0
      %6664 = vmatprep.subr.mxu0 0.0
      %6665 = vmatpush1.msra.mxu0 0.0
      %6666 = vmatprep.subr.mxu0 0.0
      %6667 = vmatpush1.msra.mxu0 0.0
      %6668 = vmatprep.subr.mxu0 0.0
      %6669 = vmatpush1.msra.mxu0 0.0
      %6670 = vmatprep.subr.mxu0 0.0
      %6671 = vmatpush1.msra.mxu0 0.0
      %6672 = vmatprep.subr.mxu0 0.0
      %6673 = vmatpush1.msra.mxu0 0.0
      %6674 = vmatprep.subr.mxu0 0.0
      %6675 = vmatpush1.msra.mxu0 0.0
      %6676 = vmatprep.subr.mxu0 0.0
      %6677 = vmatpush1.msra.mxu0 0.0
      %6678 = vmatprep.subr.mxu0 0.0
      %6679 = vmatpush1.msra.mxu0 0.0
      %6680 = vmatprep.subr.mxu0 0.0
      %6681 = vmatpush1.msra.mxu0 0.0
      %6682 = vmatprep.subr.mxu0 0.0
      %6683 = vmatpush1.msra.mxu0 0.0
      %6684 = vmatprep.subr.mxu0 0.0
      %6685 = vmatpush1.msra.mxu0 0.0
      %6686 = vmatprep.subr.mxu0 0.0
      %6687 = vmatpush1.msra.mxu0 0.0
      %6688 = vmatprep.subr.mxu0 0.0
      %6689 = vmatpush1.msra.mxu0 0.0
      %6690 = vmatprep.subr.mxu0 0.0
      %6691 = vmatpush1.msra.mxu0 0.0
      %6692 = vmatprep.subr.mxu0 0.0
      %6693 = vmatpush1.msra.mxu0 0.0
      %6694 = vmatprep.subr.mxu0 0.0
      %6695 = vmatpush1.msra.mxu0 0.0
      %6696 = vmatprep.subr.mxu0 0.0
      %6697 = vmatpush1.msra.mxu0 0.0
      %6698 = vmatprep.subr.mxu0 0.0
      %6699 = vmatpush1.msra.mxu0 0.0
      %6700 = vmatprep.subr.mxu0 0.0
      %6701 = vmatpush1.msra.mxu0 0.0
      %6702 = vmatprep.mubr.f32.mxu0 0.0
      %6703 = vmatmul.mubr.f32.gmra.mrb[0].mxu0 %v6636
      %v6704 = vpop.f32.mrb[0].mxu0
      %v6705 = vadd.f32 0.0, %v6704
      %v6706 = vpop.f32.mrb[0].mxu0
      %6707 = vdwg.mxu0
      %v6709 = vsel %vm634, %v5324, 0
      %6711 = vmatprep.subr.mxu0 0.0
      %6712 = vmatpush1.msra.mxu0 %v5407
      %6713 = vmatprep.subr.mxu0 0.0
      %6714 = vmatpush1.msra.mxu0 %v5408
      %6715 = vmatprep.subr.mxu0 0.0
      %6716 = vmatpush1.msra.mxu0 %v5409
      %6717 = vmatprep.subr.mxu0 0.0
      %6718 = vmatpush1.msra.mxu0 %v5410
      %6719 = vmatprep.subr.mxu0 0.0
      %6720 = vmatpush1.msra.mxu0 0.0
      %6721 = vmatprep.subr.mxu0 0.0
      %6722 = vmatpush1.msra.mxu0 0.0
      %6723 = vmatprep.subr.mxu0 0.0
      %6724 = vmatpush1.msra.mxu0 0.0
      %6725 = vmatprep.subr.mxu0 0.0
      %6726 = vmatpush1.msra.mxu0 0.0
      %6727 = vmatprep.subr.mxu0 0.0
      %6728 = vmatpush1.msra.mxu0 0.0
      %6729 = vmatprep.subr.mxu0 0.0
      %6730 = vmatpush1.msra.mxu0 0.0
      %6731 = vmatprep.subr.mxu0 0.0
      %6732 = vmatpush1.msra.mxu0 0.0
      %6733 = vmatprep.subr.mxu0 0.0
      %6734 = vmatpush1.msra.mxu0 0.0
      %6735 = vmatprep.subr.mxu0 0.0
      %6736 = vmatpush1.msra.mxu0 0.0
      %6737 = vmatprep.subr.mxu0 0.0
      %6738 = vmatpush1.msra.mxu0 0.0
      %6739 = vmatprep.subr.mxu0 0.0
      %6740 = vmatpush1.msra.mxu0 0.0
      %6741 = vmatprep.subr.mxu0 0.0
      %6742 = vmatpush1.msra.mxu0 0.0
      %6743 = vmatprep.subr.mxu0 0.0
      %6744 = vmatpush1.msra.mxu0 0.0
      %6745 = vmatprep.subr.mxu0 0.0
      %6746 = vmatpush1.msra.mxu0 0.0
      %6747 = vmatprep.subr.mxu0 0.0
      %6748 = vmatpush1.msra.mxu0 0.0
      %6749 = vmatprep.subr.mxu0 0.0
      %6750 = vmatpush1.msra.mxu0 0.0
      %6751 = vmatprep.subr.mxu0 0.0
      %6752 = vmatpush1.msra.mxu0 0.0
      %6753 = vmatprep.subr.mxu0 0.0
      %6754 = vmatpush1.msra.mxu0 0.0
      %6755 = vmatprep.subr.mxu0 0.0
      %6756 = vmatpush1.msra.mxu0 0.0
      %6757 = vmatprep.subr.mxu0 0.0
      %6758 = vmatpush1.msra.mxu0 0.0
      %6759 = vmatprep.subr.mxu0 0.0
      %6760 = vmatpush1.msra.mxu0 0.0
      %6761 = vmatprep.subr.mxu0 0.0
      %6762 = vmatpush1.msra.mxu0 0.0
      %6763 = vmatprep.subr.mxu0 0.0
      %6764 = vmatpush1.msra.mxu0 0.0
      %6765 = vmatprep.subr.mxu0 0.0
      %6766 = vmatpush1.msra.mxu0 0.0
      %6767 = vmatprep.subr.mxu0 0.0
      %6768 = vmatpush1.msra.mxu0 0.0
      %6769 = vmatprep.subr.mxu0 0.0
      %6770 = vmatpush1.msra.mxu0 0.0
      %6771 = vmatprep.subr.mxu0 0.0
      %6772 = vmatpush1.msra.mxu0 0.0
      %6773 = vmatprep.subr.mxu0 0.0
      %6774 = vmatpush1.msra.mxu0 0.0
      %6775 = vmatprep.mubr.f32.mxu0 0.0
      %6776 = vmatmul.mubr.f32.gmra.mrb[0].mxu0 %v6709
      %v6777 = vpop.f32.mrb[0].mxu0
      %v6778 = vadd.f32 0.0, %v6777
      %v6779 = vpop.f32.mrb[0].mxu0
      %6780 = vdwg.mxu0
      %v6782 = vsel %vm634, %v5325, 0
      %6784 = vmatprep.subr.mxu0 0.0
      %6785 = vmatpush1.msra.mxu0 %v5411
      %6786 = vmatprep.subr.mxu0 0.0
      %6787 = vmatpush1.msra.mxu0 %v5412
      %6788 = vmatprep.subr.mxu0 0.0
      %6789 = vmatpush1.msra.mxu0 %v5413
      %6790 = vmatprep.subr.mxu0 0.0
      %6791 = vmatpush1.msra.mxu0 %v5414
      %6792 = vmatprep.subr.mxu0 0.0
      %6793 = vmatpush1.msra.mxu0 0.0
      %6794 = vmatprep.subr.mxu0 0.0
      %6795 = vmatpush1.msra.mxu0 0.0
      %6796 = vmatprep.subr.mxu0 0.0
      %6797 = vmatpush1.msra.mxu0 0.0
      %6798 = vmatprep.subr.mxu0 0.0
      %6799 = vmatpush1.msra.mxu0 0.0
      %6800 = vmatprep.subr.mxu0 0.0
      %6801 = vmatpush1.msra.mxu0 0.0
      %6802 = vmatprep.subr.mxu0 0.0
      %6803 = vmatpush1.msra.mxu0 0.0
      %6804 = vmatprep.subr.mxu0 0.0
      %6805 = vmatpush1.msra.mxu0 0.0
      %6806 = vmatprep.subr.mxu0 0.0
      %6807 = vmatpush1.msra.mxu0 0.0
      %6808 = vmatprep.subr.mxu0 0.0
      %6809 = vmatpush1.msra.mxu0 0.0
      %6810 = vmatprep.subr.mxu0 0.0
      %6811 = vmatpush1.msra.mxu0 0.0
      %6812 = vmatprep.subr.mxu0 0.0
      %6813 = vmatpush1.msra.mxu0 0.0
      %6814 = vmatprep.subr.mxu0 0.0
      %6815 = vmatpush1.msra.mxu0 0.0
      %6816 = vmatprep.subr.mxu0 0.0
      %6817 = vmatpush1.msra.mxu0 0.0
      %6818 = vmatprep.subr.mxu0 0.0
      %6819 = vmatpush1.msra.mxu0 0.0
      %6820 = vmatprep.subr.mxu0 0.0
      %6821 = vmatpush1.msra.mxu0 0.0
      %6822 = vmatprep.subr.mxu0 0.0
      %6823 = vmatpush1.msra.mxu0 0.0
      %6824 = vmatprep.subr.mxu0 0.0
      %6825 = vmatpush1.msra.mxu0 0.0
      %6826 = vmatprep.subr.mxu0 0.0
      %6827 = vmatpush1.msra.mxu0 0.0
      %6828 = vmatprep.subr.mxu0 0.0
      %6829 = vmatpush1.msra.mxu0 0.0
      %6830 = vmatprep.subr.mxu0 0.0
      %6831 = vmatpush1.msra.mxu0 0.0
      %6832 = vmatprep.subr.mxu0 0.0
      %6833 = vmatpush1.msra.mxu0 0.0
      %6834 = vmatprep.subr.mxu0 0.0
      %6835 = vmatpush1.msra.mxu0 0.0
      %6836 = vmatprep.subr.mxu0 0.0
      %6837 = vmatpush1.msra.mxu0 0.0
      %6838 = vmatprep.subr.mxu0 0.0
      %6839 = vmatpush1.msra.mxu0 0.0
      %6840 = vmatprep.subr.mxu0 0.0
      %6841 = vmatpush1.msra.mxu0 0.0
      %6842 = vmatprep.subr.mxu0 0.0
      %6843 = vmatpush1.msra.mxu0 0.0
      %6844 = vmatprep.subr.mxu0 0.0
      %6845 = vmatpush1.msra.mxu0 0.0
      %6846 = vmatprep.subr.mxu0 0.0
      %6847 = vmatpush1.msra.mxu0 0.0
      %6848 = vmatprep.mubr.f32.mxu0 0.0
      %6849 = vmatmul.mubr.f32.gmra.mrb[0].mxu0 %v6782
      %v6850 = vpop.f32.mrb[0].mxu0
      %v6851 = vadd.f32 0.0, %v6850
      %v6852 = vpop.f32.mrb[0].mxu0
      %6853 = vdwg.mxu0
      %v6855 = vsel %vm634, %v5326, 0
      %6857 = vmatprep.subr.mxu0 0.0
      %6858 = vmatpush1.msra.mxu0 %v5415
      %6859 = vmatprep.subr.mxu0 0.0
      %6860 = vmatpush1.msra.mxu0 %v5416
      %6861 = vmatprep.subr.mxu0 0.0
      %6862 = vmatpush1.msra.mxu0 %v5417
      %6863 = vmatprep.subr.mxu0 0.0
      %6864 = vmatpush1.msra.mxu0 %v5418
      %6865 = vmatprep.subr.mxu0 0.0
      %6866 = vmatpush1.msra.mxu0 0.0
      %6867 = vmatprep.subr.mxu0 0.0
      %6868 = vmatpush1.msra.mxu0 0.0
      %6869 = vmatprep.subr.mxu0 0.0
      %6870 = vmatpush1.msra.mxu0 0.0
      %6871 = vmatprep.subr.mxu0 0.0
      %6872 = vmatpush1.msra.mxu0 0.0
      %6873 = vmatprep.subr.mxu0 0.0
      %6874 = vmatpush1.msra.mxu0 0.0
      %6875 = vmatprep.subr.mxu0 0.0
      %6876 = vmatpush1.msra.mxu0 0.0
      %6877 = vmatprep.subr.mxu0 0.0
      %6878 = vmatpush1.msra.mxu0 0.0
      %6879 = vmatprep.subr.mxu0 0.0
      %6880 = vmatpush1.msra.mxu0 0.0
      %6881 = vmatprep.subr.mxu0 0.0
      %6882 = vmatpush1.msra.mxu0 0.0
      %6883 = vmatprep.subr.mxu0 0.0
      %6884 = vmatpush1.msra.mxu0 0.0
      %6885 = vmatprep.subr.mxu0 0.0
      %6886 = vmatpush1.msra.mxu0 0.0
      %6887 = vmatprep.subr.mxu0 0.0
      %6888 = vmatpush1.msra.mxu0 0.0
      %6889 = vmatprep.subr.mxu0 0.0
      %6890 = vmatpush1.msra.mxu0 0.0
      %6891 = vmatprep.subr.mxu0 0.0
      %6892 = vmatpush1.msra.mxu0 0.0
      %6893 = vmatprep.subr.mxu0 0.0
      %6894 = vmatpush1.msra.mxu0 0.0
      %6895 = vmatprep.subr.mxu0 0.0
      %6896 = vmatpush1.msra.mxu0 0.0
      %6897 = vmatprep.subr.mxu0 0.0
      %6898 = vmatpush1.msra.mxu0 0.0
      %6899 = vmatprep.subr.mxu0 0.0
      %6900 = vmatpush1.msra.mxu0 0.0
      %6901 = vmatprep.subr.mxu0 0.0
      %6902 = vmatpush1.msra.mxu0 0.0
      %6903 = vmatprep.subr.mxu0 0.0
      %6904 = vmatpush1.msra.mxu0 0.0
      %6905 = vmatprep.subr.mxu0 0.0
      %6906 = vmatpush1.msra.mxu0 0.0
      %6907 = vmatprep.subr.mxu0 0.0
      %6908 = vmatpush1.msra.mxu0 0.0
      %6909 = vmatprep.subr.mxu0 0.0
      %6910 = vmatpush1.msra.mxu0 0.0
      %6911 = vmatprep.subr.mxu0 0.0
      %6912 = vmatpush1.msra.mxu0 0.0
      %6913 = vmatprep.subr.mxu0 0.0
      %6914 = vmatpush1.msra.mxu0 0.0
      %6915 = vmatprep.subr.mxu0 0.0
      %6916 = vmatpush1.msra.mxu0 0.0
      %6917 = vmatprep.subr.mxu0 0.0
      %6918 = vmatpush1.msra.mxu0 0.0
      %6919 = vmatprep.subr.mxu0 0.0
      %6920 = vmatpush1.msra.mxu0 0.0
      %6921 = vmatprep.mubr.f32.mxu0 0.0
      %6922 = vmatmul.mubr.f32.gmra.mrb[0].mxu0 %v6855
      %v6923 = vpop.f32.mrb[0].mxu0
      %v6924 = vadd.f32 0.0, %v6923
      %v6925 = vpop.f32.mrb[0].mxu0
      %6926 = vdwg.mxu0
      %v6928 = vsel %vm634, %v5327, 0
      %6930 = vmatprep.subr.mxu0 0.0
      %6931 = vmatpush1.msra.mxu0 %v5419
      %6932 = vmatprep.subr.mxu0 0.0
      %6933 = vmatpush1.msra.mxu0 %v5420
      %6934 = vmatprep.subr.mxu0 0.0
      %6935 = vmatpush1.msra.mxu0 %v5421
      %6936 = vmatprep.subr.mxu0 0.0
      %6937 = vmatpush1.msra.mxu0 %v5422
      %6938 = vmatprep.subr.mxu0 0.0
      %6939 = vmatpush1.msra.mxu0 0.0
      %6940 = vmatprep.subr.mxu0 0.0
      %6941 = vmatpush1.msra.mxu0 0.0
      %6942 = vmatprep.subr.mxu0 0.0
      %6943 = vmatpush1.msra.mxu0 0.0
      %6944 = vmatprep.subr.mxu0 0.0
      %6945 = vmatpush1.msra.mxu0 0.0
      %6946 = vmatprep.subr.mxu0 0.0
      %6947 = vmatpush1.msra.mxu0 0.0
      %6948 = vmatprep.subr.mxu0 0.0
      %6949 = vmatpush1.msra.mxu0 0.0
      %6950 = vmatprep.subr.mxu0 0.0
      %6951 = vmatpush1.msra.mxu0 0.0
      %6952 = vmatprep.subr.mxu0 0.0
      %6953 = vmatpush1.msra.mxu0 0.0
      %6954 = vmatprep.subr.mxu0 0.0
      %6955 = vmatpush1.msra.mxu0 0.0
      %6956 = vmatprep.subr.mxu0 0.0
      %6957 = vmatpush1.msra.mxu0 0.0
      %6958 = vmatprep.subr.mxu0 0.0
      %6959 = vmatpush1.msra.mxu0 0.0
      %6960 = vmatprep.subr.mxu0 0.0
      %6961 = vmatpush1.msra.mxu0 0.0
      %6962 = vmatprep.subr.mxu0 0.0
      %6963 = vmatpush1.msra.mxu0 0.0
      %6964 = vmatprep.subr.mxu0 0.0
      %6965 = vmatpush1.msra.mxu0 0.0
      %6966 = vmatprep.subr.mxu0 0.0
      %6967 = vmatpush1.msra.mxu0 0.0
      %6968 = vmatprep.subr.mxu0 0.0
      %6969 = vmatpush1.msra.mxu0 0.0
      %6970 = vmatprep.subr.mxu0 0.0
      %6971 = vmatpush1.msra.mxu0 0.0
      %6972 = vmatprep.subr.mxu0 0.0
      %6973 = vmatpush1.msra.mxu0 0.0
      %6974 = vmatprep.subr.mxu0 0.0
      %6975 = vmatpush1.msra.mxu0 0.0
      %6976 = vmatprep.subr.mxu0 0.0
      %6977 = vmatpush1.msra.mxu0 0.0
      %6978 = vmatprep.subr.mxu0 0.0
      %6979 = vmatpush1.msra.mxu0 0.0
      %6980 = vmatprep.subr.mxu0 0.0
      %6981 = vmatpush1.msra.mxu0 0.0
      %6982 = vmatprep.subr.mxu0 0.0
      %6983 = vmatpush1.msra.mxu0 0.0
      %6984 = vmatprep.subr.mxu0 0.0
      %6985 = vmatpush1.msra.mxu0 0.0
      %6986 = vmatprep.subr.mxu0 0.0
      %6987 = vmatpush1.msra.mxu0 0.0
      %6988 = vmatprep.subr.mxu0 0.0
      %6989 = vmatpush1.msra.mxu0 0.0
      %6990 = vmatprep.subr.mxu0 0.0
      %6991 = vmatpush1.msra.mxu0 0.0
      %6992 = vmatprep.subr.mxu0 0.0
      %6993 = vmatpush1.msra.mxu0 0.0
      %6994 = vmatprep.mubr.f32.mxu0 0.0
      %6995 = vmatmul.mubr.f32.gmra.mrb[0].mxu0 %v6928
      %v6996 = vpop.f32.mrb[0].mxu0
      %v6997 = vadd.f32 0.0, %v6996
      %v6998 = vpop.f32.mrb[0].mxu0
      %6999 = vdwg.mxu0
      %v7001 = vsel %vm634, %v5328, 0
      %7003 = vmatprep.subr.mxu0 0.0
      %7004 = vmatpush1.msra.mxu0 %v5423
      %7005 = vmatprep.subr.mxu0 0.0
      %7006 = vmatpush1.msra.mxu0 %v5424
      %7007 = vmatprep.subr.mxu0 0.0
      %7008 = vmatpush1.msra.mxu0 %v5425
      %7009 = vmatprep.subr.mxu0 0.0
      %7010 = vmatpush1.msra.mxu0 %v5426
      %7011 = vmatprep.subr.mxu0 0.0
      %7012 = vmatpush1.msra.mxu0 0.0
      %7013 = vmatprep.subr.mxu0 0.0
      %7014 = vmatpush1.msra.mxu0 0.0
      %7015 = vmatprep.subr.mxu0 0.0
      %7016 = vmatpush1.msra.mxu0 0.0
      %7017 = vmatprep.subr.mxu0 0.0
      %7018 = vmatpush1.msra.mxu0 0.0
      %7019 = vmatprep.subr.mxu0 0.0
      %7020 = vmatpush1.msra.mxu0 0.0
      %7021 = vmatprep.subr.mxu0 0.0
      %7022 = vmatpush1.msra.mxu0 0.0
      %7023 = vmatprep.subr.mxu0 0.0
      %7024 = vmatpush1.msra.mxu0 0.0
      %7025 = vmatprep.subr.mxu0 0.0
      %7026 = vmatpush1.msra.mxu0 0.0
      %7027 = vmatprep.subr.mxu0 0.0
      %7028 = vmatpush1.msra.mxu0 0.0
      %7029 = vmatprep.subr.mxu0 0.0
      %7030 = vmatpush1.msra.mxu0 0.0
      %7031 = vmatprep.subr.mxu0 0.0
      %7032 = vmatpush1.msra.mxu0 0.0
      %7033 = vmatprep.subr.mxu0 0.0
      %7034 = vmatpush1.msra.mxu0 0.0
      %7035 = vmatprep.subr.mxu0 0.0
      %7036 = vmatpush1.msra.mxu0 0.0
      %7037 = vmatprep.subr.mxu0 0.0
      %7038 = vmatpush1.msra.mxu0 0.0
      %7039 = vmatprep.subr.mxu0 0.0
      %7040 = vmatpush1.msra.mxu0 0.0
      %7041 = vmatprep.subr.mxu0 0.0
      %7042 = vmatpush1.msra.mxu0 0.0
      %7043 = vmatprep.subr.mxu0 0.0
      %7044 = vmatpush1.msra.mxu0 0.0
      %7045 = vmatprep.subr.mxu0 0.0
      %7046 = vmatpush1.msra.mxu0 0.0
      %7047 = vmatprep.subr.mxu0 0.0
      %7048 = vmatpush1.msra.mxu0 0.0
      %7049 = vmatprep.subr.mxu0 0.0
      %7050 = vmatpush1.msra.mxu0 0.0
      %7051 = vmatprep.subr.mxu0 0.0
      %7052 = vmatpush1.msra.mxu0 0.0
      %7053 = vmatprep.subr.mxu0 0.0
      %7054 = vmatpush1.msra.mxu0 0.0
      %7055 = vmatprep.subr.mxu0 0.0
      %7056 = vmatpush1.msra.mxu0 0.0
      %7057 = vmatprep.subr.mxu0 0.0
      %7058 = vmatpush1.msra.mxu0 0.0
      %7059 = vmatprep.subr.mxu0 0.0
      %7060 = vmatpush1.msra.mxu0 0.0
      %7061 = vmatprep.subr.mxu0 0.0
      %7062 = vmatpush1.msra.mxu0 0.0
      %7063 = vmatprep.subr.mxu0 0.0
      %7064 = vmatpush1.msra.mxu0 0.0
      %7065 = vmatprep.subr.mxu0 0.0
      %7066 = vmatpush1.msra.mxu0 0.0
      %7067 = vmatprep.mubr.f32.mxu0 0.0
      %7068 = vmatmul.mubr.f32.gmra.mrb[0].mxu0 %v7001
      %v7069 = vpop.f32.mrb[0].mxu0
      %v7070 = vadd.f32 0.0, %v7069
      %v7071 = vpop.f32.mrb[0].mxu0
      %7072 = vdwg.mxu0
      %v7074 = vsel %vm634, %v5329, 0
      %7076 = vmatprep.subr.mxu0 0.0
      %7077 = vmatpush1.msra.mxu0 %v5427
      %7078 = vmatprep.subr.mxu0 0.0
      %7079 = vmatpush1.msra.mxu0 %v5428
      %7080 = vmatprep.subr.mxu0 0.0
      %7081 = vmatpush1.msra.mxu0 %v5429
      %7082 = vmatprep.subr.mxu0 0.0
      %7083 = vmatpush1.msra.mxu0 %v5430
      %7084 = vmatprep.subr.mxu0 0.0
      %7085 = vmatpush1.msra.mxu0 0.0
      %7086 = vmatprep.subr.mxu0 0.0
      %7087 = vmatpush1.msra.mxu0 0.0
      %7088 = vmatprep.subr.mxu0 0.0
      %7089 = vmatpush1.msra.mxu0 0.0
      %7090 = vmatprep.subr.mxu0 0.0
      %7091 = vmatpush1.msra.mxu0 0.0
      %7092 = vmatprep.subr.mxu0 0.0
      %7093 = vmatpush1.msra.mxu0 0.0
      %7094 = vmatprep.subr.mxu0 0.0
      %7095 = vmatpush1.msra.mxu0 0.0
      %7096 = vmatprep.subr.mxu0 0.0
      %7097 = vmatpush1.msra.mxu0 0.0
      %7098 = vmatprep.subr.mxu0 0.0
      %7099 = vmatpush1.msra.mxu0 0.0
      %7100 = vmatprep.subr.mxu0 0.0
      %7101 = vmatpush1.msra.mxu0 0.0
      %7102 = vmatprep.subr.mxu0 0.0
      %7103 = vmatpush1.msra.mxu0 0.0
      %7104 = vmatprep.subr.mxu0 0.0
      %7105 = vmatpush1.msra.mxu0 0.0
      %7106 = vmatprep.subr.mxu0 0.0
      %7107 = vmatpush1.msra.mxu0 0.0
      %7108 = vmatprep.subr.mxu0 0.0
      %7109 = vmatpush1.msra.mxu0 0.0
      %7110 = vmatprep.subr.mxu0 0.0
      %7111 = vmatpush1.msra.mxu0 0.0
      %7112 = vmatprep.subr.mxu0 0.0
      %7113 = vmatpush1.msra.mxu0 0.0
      %7114 = vmatprep.subr.mxu0 0.0
      %7115 = vmatpush1.msra.mxu0 0.0
      %7116 = vmatprep.subr.mxu0 0.0
      %7117 = vmatpush1.msra.mxu0 0.0
      %7118 = vmatprep.subr.mxu0 0.0
      %7119 = vmatpush1.msra.mxu0 0.0
      %7120 = vmatprep.subr.mxu0 0.0
      %7121 = vmatpush1.msra.mxu0 0.0
      %7122 = vmatprep.subr.mxu0 0.0
      %7123 = vmatpush1.msra.mxu0 0.0
      %7124 = vmatprep.subr.mxu0 0.0
      %7125 = vmatpush1.msra.mxu0 0.0
      %7126 = vmatprep.subr.mxu0 0.0
      %7127 = vmatpush1.msra.mxu0 0.0
      %7128 = vmatprep.subr.mxu0 0.0
      %7129 = vmatpush1.msra.mxu0 0.0
      %7130 = vmatprep.subr.mxu0 0.0
      %7131 = vmatpush1.msra.mxu0 0.0
      %7132 = vmatprep.subr.mxu0 0.0
      %7133 = vmatpush1.msra.mxu0 0.0
      %7134 = vmatprep.subr.mxu0 0.0
      %7135 = vmatpush1.msra.mxu0 0.0
      %7136 = vmatprep.subr.mxu0 0.0
      %7137 = vmatpush1.msra.mxu0 0.0
      %7138 = vmatprep.subr.mxu0 0.0
      %7139 = vmatpush1.msra.mxu0 0.0
      %7140 = vmatprep.mubr.f32.mxu0 0.0
      %7141 = vmatmul.mubr.f32.gmra.mrb[0].mxu0 %v7074
      %v7142 = vpop.f32.mrb[0].mxu0
      %v7143 = vadd.f32 0.0, %v7142
      %v7144 = vpop.f32.mrb[0].mxu0
      %7145 = vdwg.mxu0
      %v7147 = vsel %vm634, %v5330, 0
      %7149 = vmatprep.subr.mxu0 0.0
      %7150 = vmatpush1.msra.mxu0 %v5431
      %7151 = vmatprep.subr.mxu0 0.0
      %7152 = vmatpush1.msra.mxu0 %v5432
      %7153 = vmatprep.subr.mxu0 0.0
      %7154 = vmatpush1.msra.mxu0 %v5433
      %7155 = vmatprep.subr.mxu0 0.0
      %7156 = vmatpush1.msra.mxu0 %v5434
      %7157 = vmatprep.subr.mxu0 0.0
      %7158 = vmatpush1.msra.mxu0 0.0
      %7159 = vmatprep.subr.mxu0 0.0
      %7160 = vmatpush1.msra.mxu0 0.0
      %7161 = vmatprep.subr.mxu0 0.0
      %7162 = vmatpush1.msra.mxu0 0.0
      %7163 = vmatprep.subr.mxu0 0.0
      %7164 = vmatpush1.msra.mxu0 0.0
      %7165 = vmatprep.subr.mxu0 0.0
      %7166 = vmatpush1.msra.mxu0 0.0
      %7167 = vmatprep.subr.mxu0 0.0
      %7168 = vmatpush1.msra.mxu0 0.0
      %7169 = vmatprep.subr.mxu0 0.0
      %7170 = vmatpush1.msra.mxu0 0.0
      %7171 = vmatprep.subr.mxu0 0.0
      %7172 = vmatpush1.msra.mxu0 0.0
      %7173 = vmatprep.subr.mxu0 0.0
      %7174 = vmatpush1.msra.mxu0 0.0
      %7175 = vmatprep.subr.mxu0 0.0
      %7176 = vmatpush1.msra.mxu0 0.0
      %7177 = vmatprep.subr.mxu0 0.0
      %7178 = vmatpush1.msra.mxu0 0.0
      %7179 = vmatprep.subr.mxu0 0.0
      %7180 = vmatpush1.msra.mxu0 0.0
      %7181 = vmatprep.subr.mxu0 0.0
      %7182 = vmatpush1.msra.mxu0 0.0
      %7183 = vmatprep.subr.mxu0 0.0
      %7184 = vmatpush1.msra.mxu0 0.0
      %7185 = vmatprep.subr.mxu0 0.0
      %7186 = vmatpush1.msra.mxu0 0.0
      %7187 = vmatprep.subr.mxu0 0.0
      %7188 = vmatpush1.msra.mxu0 0.0
      %7189 = vmatprep.subr.mxu0 0.0
      %7190 = vmatpush1.msra.mxu0 0.0
      %7191 = vmatprep.subr.mxu0 0.0
      %7192 = vmatpush1.msra.mxu0 0.0
      %7193 = vmatprep.subr.mxu0 0.0
      %7194 = vmatpush1.msra.mxu0 0.0
      %7195 = vmatprep.subr.mxu0 0.0
      %7196 = vmatpush1.msra.mxu0 0.0
      %7197 = vmatprep.subr.mxu0 0.0
      %7198 = vmatpush1.msra.mxu0 0.0
      %7199 = vmatprep.subr.mxu0 0.0
      %7200 = vmatpush1.msra.mxu0 0.0
      %7201 = vmatprep.subr.mxu0 0.0
      %7202 = vmatpush1.msra.mxu0 0.0
      %7203 = vmatprep.subr.mxu0 0.0
      %7204 = vmatpush1.msra.mxu0 0.0
      %7205 = vmatprep.subr.mxu0 0.0
      %7206 = vmatpush1.msra.mxu0 0.0
      %7207 = vmatprep.subr.mxu0 0.0
      %7208 = vmatpush1.msra.mxu0 0.0
      %7209 = vmatprep.subr.mxu0 0.0
      %7210 = vmatpush1.msra.mxu0 0.0
      %7211 = vmatprep.subr.mxu0 0.0
      %7212 = vmatpush1.msra.mxu0 0.0
      %7213 = vmatprep.mubr.f32.mxu0 0.0
      %7214 = vmatmul.mubr.f32.gmra.mrb[0].mxu0 %v7147
      %v7215 = vpop.f32.mrb[0].mxu0
      %v7216 = vadd.f32 0.0, %v7215
      %v7217 = vpop.f32.mrb[0].mxu0
      %7218 = vdwg.mxu0
      %v7220 = vsel %vm634, %v5331, 0
      %7222 = vmatprep.subr.mxu0 0.0
      %7223 = vmatpush1.msra.mxu0 %v5435
      %7224 = vmatprep.subr.mxu0 0.0
      %7225 = vmatpush1.msra.mxu0 %v5436
      %7226 = vmatprep.subr.mxu0 0.0
      %7227 = vmatpush1.msra.mxu0 %v5437
      %7228 = vmatprep.subr.mxu0 0.0
      %7229 = vmatpush1.msra.mxu0 %v5438
      %7230 = vmatprep.subr.mxu0 0.0
      %7231 = vmatpush1.msra.mxu0 0.0
      %7232 = vmatprep.subr.mxu0 0.0
      %7233 = vmatpush1.msra.mxu0 0.0
      %7234 = vmatprep.subr.mxu0 0.0
      %7235 = vmatpush1.msra.mxu0 0.0
      %7236 = vmatprep.subr.mxu0 0.0
      %7237 = vmatpush1.msra.mxu0 0.0
      %7238 = vmatprep.subr.mxu0 0.0
      %7239 = vmatpush1.msra.mxu0 0.0
      %7240 = vmatprep.subr.mxu0 0.0
      %7241 = vmatpush1.msra.mxu0 0.0
      %7242 = vmatprep.subr.mxu0 0.0
      %7243 = vmatpush1.msra.mxu0 0.0
      %7244 = vmatprep.subr.mxu0 0.0
      %7245 = vmatpush1.msra.mxu0 0.0
      %7246 = vmatprep.subr.mxu0 0.0
      %7247 = vmatpush1.msra.mxu0 0.0
      %7248 = vmatprep.subr.mxu0 0.0
      %7249 = vmatpush1.msra.mxu0 0.0
      %7250 = vmatprep.subr.mxu0 0.0
      %7251 = vmatpush1.msra.mxu0 0.0
      %7252 = vmatprep.subr.mxu0 0.0
      %7253 = vmatpush1.msra.mxu0 0.0
      %7254 = vmatprep.subr.mxu0 0.0
      %7255 = vmatpush1.msra.mxu0 0.0
      %7256 = vmatprep.subr.mxu0 0.0
      %7257 = vmatpush1.msra.mxu0 0.0
      %7258 = vmatprep.subr.mxu0 0.0
      %7259 = vmatpush1.msra.mxu0 0.0
      %7260 = vmatprep.subr.mxu0 0.0
      %7261 = vmatpush1.msra.mxu0 0.0
      %7262 = vmatprep.subr.mxu0 0.0
      %7263 = vmatpush1.msra.mxu0 0.0
      %7264 = vmatprep.subr.mxu0 0.0
      %7265 = vmatpush1.msra.mxu0 0.0
      %7266 = vmatprep.subr.mxu0 0.0
      %7267 = vmatpush1.msra.mxu0 0.0
      %7268 = vmatprep.subr.mxu0 0.0
      %7269 = vmatpush1.msra.mxu0 0.0
      %7270 = vmatprep.subr.mxu0 0.0
      %7271 = vmatpush1.msra.mxu0 0.0
      %7272 = vmatprep.subr.mxu0 0.0
      %7273 = vmatpush1.msra.mxu0 0.0
      %7274 = vmatprep.subr.mxu0 0.0
      %7275 = vmatpush1.msra.mxu0 0.0
      %7276 = vmatprep.subr.mxu0 0.0
      %7277 = vmatpush1.msra.mxu0 0.0
      %7278 = vmatprep.subr.mxu0 0.0
      %7279 = vmatpush1.msra.mxu0 0.0
      %7280 = vmatprep.subr.mxu0 0.0
      %7281 = vmatpush1.msra.mxu0 0.0
      %7282 = vmatprep.subr.mxu0 0.0
      %7283 = vmatpush1.msra.mxu0 0.0
      %7284 = vmatprep.subr.mxu0 0.0
      %7285 = vmatpush1.msra.mxu0 0.0
      %7286 = vmatprep.mubr.f32.mxu0 0.0
      %7287 = vmatmul.mubr.f32.gmra.mrb[0].mxu0 %v7220
      %v7288 = vpop.f32.mrb[0].mxu0
      %v7289 = vadd.f32 0.0, %v7288
      %v7290 = vpop.f32.mrb[0].mxu0
      %7291 = vdwg.mxu0
      %v7293 = vsel %vm634, %v5332, 0
      %7295 = vmatprep.subr.mxu0 0.0
      %7296 = vmatpush1.msra.mxu0 %v5439
      %7297 = vmatprep.subr.mxu0 0.0
      %7298 = vmatpush1.msra.mxu0 %v5440
      %7299 = vmatprep.subr.mxu0 0.0
      %7300 = vmatpush1.msra.mxu0 %v5441
      %7301 = vmatprep.subr.mxu0 0.0
      %7302 = vmatpush1.msra.mxu0 %v5442
      %7303 = vmatprep.subr.mxu0 0.0
      %7304 = vmatpush1.msra.mxu0 0.0
      %7305 = vmatprep.subr.mxu0 0.0
      %7306 = vmatpush1.msra.mxu0 0.0
      %7307 = vmatprep.subr.mxu0 0.0
      %7308 = vmatpush1.msra.mxu0 0.0
      %7309 = vmatprep.subr.mxu0 0.0
      %7310 = vmatpush1.msra.mxu0 0.0
      %7311 = vmatprep.subr.mxu0 0.0
      %7312 = vmatpush1.msra.mxu0 0.0
      %7313 = vmatprep.subr.mxu0 0.0
      %7314 = vmatpush1.msra.mxu0 0.0
      %7315 = vmatprep.subr.mxu0 0.0
      %7316 = vmatpush1.msra.mxu0 0.0
      %7317 = vmatprep.subr.mxu0 0.0
      %7318 = vmatpush1.msra.mxu0 0.0
      %7319 = vmatprep.subr.mxu0 0.0
      %7320 = vmatpush1.msra.mxu0 0.0
      %7321 = vmatprep.subr.mxu0 0.0
      %7322 = vmatpush1.msra.mxu0 0.0
      %7323 = vmatprep.subr.mxu0 0.0
      %7324 = vmatpush1.msra.mxu0 0.0
      %7325 = vmatprep.subr.mxu0 0.0
      %7326 = vmatpush1.msra.mxu0 0.0
      %7327 = vmatprep.subr.mxu0 0.0
      %7328 = vmatpush1.msra.mxu0 0.0
      %7329 = vmatprep.subr.mxu0 0.0
      %7330 = vmatpush1.msra.mxu0 0.0
      %7331 = vmatprep.subr.mxu0 0.0
      %7332 = vmatpush1.msra.mxu0 0.0
      %7333 = vmatprep.subr.mxu0 0.0
      %7334 = vmatpush1.msra.mxu0 0.0
      %7335 = vmatprep.subr.mxu0 0.0
      %7336 = vmatpush1.msra.mxu0 0.0
      %7337 = vmatprep.subr.mxu0 0.0
      %7338 = vmatpush1.msra.mxu0 0.0
      %7339 = vmatprep.subr.mxu0 0.0
      %7340 = vmatpush1.msra.mxu0 0.0
      %7341 = vmatprep.subr.mxu0 0.0
      %7342 = vmatpush1.msra.mxu0 0.0
      %7343 = vmatprep.subr.mxu0 0.0
      %7344 = vmatpush1.msra.mxu0 0.0
      %7345 = vmatprep.subr.mxu0 0.0
      %7346 = vmatpush1.msra.mxu0 0.0
      %7347 = vmatprep.subr.mxu0 0.0
      %7348 = vmatpush1.msra.mxu0 0.0
      %7349 = vmatprep.subr.mxu0 0.0
      %7350 = vmatpush1.msra.mxu0 0.0
      %7351 = vmatprep.subr.mxu0 0.0
      %7352 = vmatpush1.msra.mxu0 0.0
      %7353 = vmatprep.subr.mxu0 0.0
      %7354 = vmatpush1.msra.mxu0 0.0
      %7355 = vmatprep.subr.mxu0 0.0
      %7356 = vmatpush1.msra.mxu0 0.0
      %7357 = vmatprep.subr.mxu0 0.0
      %7358 = vmatpush1.msra.mxu0 0.0
      %7359 = vmatprep.mubr.f32.mxu0 0.0
      %7360 = vmatmul.mubr.f32.gmra.mrb[0].mxu0 %v7293
      %v7361 = vpop.f32.mrb[0].mxu0
      %v7362 = vadd.f32 0.0, %v7361
      %v7363 = vpop.f32.mrb[0].mxu0
      %7364 = vdwg.mxu0
      %v7366 = vsel %vm634, %v5333, 0
      %7368 = vmatprep.subr.mxu0 0.0
      %7369 = vmatpush1.msra.mxu0 %v5443
      %7370 = vmatprep.subr.mxu0 0.0
      %7371 = vmatpush1.msra.mxu0 %v5444
      %7372 = vmatprep.subr.mxu0 0.0
      %7373 = vmatpush1.msra.mxu0 %v5445
      %7374 = vmatprep.subr.mxu0 0.0
      %7375 = vmatpush1.msra.mxu0 %v5446
      %7376 = vmatprep.subr.mxu0 0.0
      %7377 = vmatpush1.msra.mxu0 0.0
      %7378 = vmatprep.subr.mxu0 0.0
      %7379 = vmatpush1.msra.mxu0 0.0
      %7380 = vmatprep.subr.mxu0 0.0
      %7381 = vmatpush1.msra.mxu0 0.0
      %7382 = vmatprep.subr.mxu0 0.0
      %7383 = vmatpush1.msra.mxu0 0.0
      %7384 = vmatprep.subr.mxu0 0.0
      %7385 = vmatpush1.msra.mxu0 0.0
      %7386 = vmatprep.subr.mxu0 0.0
      %7387 = vmatpush1.msra.mxu0 0.0
      %7388 = vmatprep.subr.mxu0 0.0
      %7389 = vmatpush1.msra.mxu0 0.0
      %7390 = vmatprep.subr.mxu0 0.0
      %7391 = vmatpush1.msra.mxu0 0.0
      %7392 = vmatprep.subr.mxu0 0.0
      %7393 = vmatpush1.msra.mxu0 0.0
      %7394 = vmatprep.subr.mxu0 0.0
      %7395 = vmatpush1.msra.mxu0 0.0
      %7396 = vmatprep.subr.mxu0 0.0
      %7397 = vmatpush1.msra.mxu0 0.0
      %7398 = vmatprep.subr.mxu0 0.0
      %7399 = vmatpush1.msra.mxu0 0.0
      %7400 = vmatprep.subr.mxu0 0.0
      %7401 = vmatpush1.msra.mxu0 0.0
      %7402 = vmatprep.subr.mxu0 0.0
      %7403 = vmatpush1.msra.mxu0 0.0
      %7404 = vmatprep.subr.mxu0 0.0
      %7405 = vmatpush1.msra.mxu0 0.0
      %7406 = vmatprep.subr.mxu0 0.0
      %7407 = vmatpush1.msra.mxu0 0.0
      %7408 = vmatprep.subr.mxu0 0.0
      %7409 = vmatpush1.msra.mxu0 0.0
      %7410 = vmatprep.subr.mxu0 0.0
      %7411 = vmatpush1.msra.mxu0 0.0
      %7412 = vmatprep.subr.mxu0 0.0
      %7413 = vmatpush1.msra.mxu0 0.0
      %7414 = vmatprep.subr.mxu0 0.0
      %7415 = vmatpush1.msra.mxu0 0.0
      %7416 = vmatprep.subr.mxu0 0.0
      %7417 = vmatpush1.msra.mxu0 0.0
      %7418 = vmatprep.subr.mxu0 0.0
      %7419 = vmatpush1.msra.mxu0 0.0
      %7420 = vmatprep.subr.mxu0 0.0
      %7421 = vmatpush1.msra.mxu0 0.0
      %7422 = vmatprep.subr.mxu0 0.0
      %7423 = vmatpush1.msra.mxu0 0.0
      %7424 = vmatprep.subr.mxu0 0.0
      %7425 = vmatpush1.msra.mxu0 0.0
      %7426 = vmatprep.subr.mxu0 0.0
      %7427 = vmatpush1.msra.mxu0 0.0
      %7428 = vmatprep.subr.mxu0 0.0
      %7429 = vmatpush1.msra.mxu0 0.0
      %7430 = vmatprep.subr.mxu0 0.0
      %7431 = vmatpush1.msra.mxu0 0.0
      %7432 = vmatprep.mubr.f32.mxu0 0.0
      %7433 = vmatmul.mubr.f32.gmra.mrb[0].mxu0 %v7366
      %v7434 = vpop.f32.mrb[0].mxu0
      %v7435 = vadd.f32 0.0, %v7434
      %v7436 = vpop.f32.mrb[0].mxu0
      %7437 = vdwg.mxu0
      %v7439 = vsel %vm634, %v5334, 0
      %7441 = vmatprep.subr.mxu0 0.0
      %7442 = vmatpush1.msra.mxu0 %v5447
      %7443 = vmatprep.subr.mxu0 0.0
      %7444 = vmatpush1.msra.mxu0 %v5448
      %7445 = vmatprep.subr.mxu0 0.0
      %7446 = vmatpush1.msra.mxu0 %v5449
      %7447 = vmatprep.subr.mxu0 0.0
      %7448 = vmatpush1.msra.mxu0 %v5450
      %7449 = vmatprep.subr.mxu0 0.0
      %7450 = vmatpush1.msra.mxu0 0.0
      %7451 = vmatprep.subr.mxu0 0.0
      %7452 = vmatpush1.msra.mxu0 0.0
      %7453 = vmatprep.subr.mxu0 0.0
      %7454 = vmatpush1.msra.mxu0 0.0
      %7455 = vmatprep.subr.mxu0 0.0
      %7456 = vmatpush1.msra.mxu0 0.0
      %7457 = vmatprep.subr.mxu0 0.0
      %7458 = vmatpush1.msra.mxu0 0.0
      %7459 = vmatprep.subr.mxu0 0.0
      %7460 = vmatpush1.msra.mxu0 0.0
      %7461 = vmatprep.subr.mxu0 0.0
      %7462 = vmatpush1.msra.mxu0 0.0
      %7463 = vmatprep.subr.mxu0 0.0
      %7464 = vmatpush1.msra.mxu0 0.0
      %7465 = vmatprep.subr.mxu0 0.0
      %7466 = vmatpush1.msra.mxu0 0.0
      %7467 = vmatprep.subr.mxu0 0.0
      %7468 = vmatpush1.msra.mxu0 0.0
      %7469 = vmatprep.subr.mxu0 0.0
      %7470 = vmatpush1.msra.mxu0 0.0
      %7471 = vmatprep.subr.mxu0 0.0
      %7472 = vmatpush1.msra.mxu0 0.0
      %7473 = vmatprep.subr.mxu0 0.0
      %7474 = vmatpush1.msra.mxu0 0.0
      %7475 = vmatprep.subr.mxu0 0.0
      %7476 = vmatpush1.msra.mxu0 0.0
      %7477 = vmatprep.subr.mxu0 0.0
      %7478 = vmatpush1.msra.mxu0 0.0
      %7479 = vmatprep.subr.mxu0 0.0
      %7480 = vmatpush1.msra.mxu0 0.0
      %7481 = vmatprep.subr.mxu0 0.0
      %7482 = vmatpush1.msra.mxu0 0.0
      %7483 = vmatprep.subr.mxu0 0.0
      %7484 = vmatpush1.msra.mxu0 0.0
      %7485 = vmatprep.subr.mxu0 0.0
      %7486 = vmatpush1.msra.mxu0 0.0
      %7487 = vmatprep.subr.mxu0 0.0
      %7488 = vmatpush1.msra.mxu0 0.0
      %7489 = vmatprep.subr.mxu0 0.0
      %7490 = vmatpush1.msra.mxu0 0.0
      %7491 = vmatprep.subr.mxu0 0.0
      %7492 = vmatpush1.msra.mxu0 0.0
      %7493 = vmatprep.subr.mxu0 0.0
      %7494 = vmatpush1.msra.mxu0 0.0
      %7495 = vmatprep.subr.mxu0 0.0
      %7496 = vmatpush1.msra.mxu0 0.0
      %7497 = vmatprep.subr.mxu0 0.0
      %7498 = vmatpush1.msra.mxu0 0.0
      %7499 = vmatprep.subr.mxu0 0.0
      %7500 = vmatpush1.msra.mxu0 0.0
      %7501 = vmatprep.subr.mxu0 0.0
      %7502 = vmatpush1.msra.mxu0 0.0
      %7503 = vmatprep.subr.mxu0 0.0
      %7504 = vmatpush1.msra.mxu0 0.0
      %7505 = vmatprep.mubr.f32.mxu0 0.0
      %7506 = vmatmul.mubr.f32.gmra.mrb[0].mxu0 %v7439
      %v7507 = vpop.f32.mrb[0].mxu0
      %v7508 = vadd.f32 0.0, %v7507
      %v7509 = vpop.f32.mrb[0].mxu0
      %7510 = vdwg.mxu0
      %v7512 = vsel %vm634, %v5335, 0
      %7514 = vmatprep.subr.mxu0 0.0
      %7515 = vmatpush1.msra.mxu0 %v5451
      %7516 = vmatprep.subr.mxu0 0.0
      %7517 = vmatpush1.msra.mxu0 %v5452
      %7518 = vmatprep.subr.mxu0 0.0
      %7519 = vmatpush1.msra.mxu0 %v5453
      %7520 = vmatprep.subr.mxu0 0.0
      %7521 = vmatpush1.msra.mxu0 %v5454
      %7522 = vmatprep.subr.mxu0 0.0
      %7523 = vmatpush1.msra.mxu0 0.0
      %7524 = vmatprep.subr.mxu0 0.0
      %7525 = vmatpush1.msra.mxu0 0.0
      %7526 = vmatprep.subr.mxu0 0.0
      %7527 = vmatpush1.msra.mxu0 0.0
      %7528 = vmatprep.subr.mxu0 0.0
      %7529 = vmatpush1.msra.mxu0 0.0
      %7530 = vmatprep.subr.mxu0 0.0
      %7531 = vmatpush1.msra.mxu0 0.0
      %7532 = vmatprep.subr.mxu0 0.0
      %7533 = vmatpush1.msra.mxu0 0.0
      %7534 = vmatprep.subr.mxu0 0.0
      %7535 = vmatpush1.msra.mxu0 0.0
      %7536 = vmatprep.subr.mxu0 0.0
      %7537 = vmatpush1.msra.mxu0 0.0
      %7538 = vmatprep.subr.mxu0 0.0
      %7539 = vmatpush1.msra.mxu0 0.0
      %7540 = vmatprep.subr.mxu0 0.0
      %7541 = vmatpush1.msra.mxu0 0.0
      %7542 = vmatprep.subr.mxu0 0.0
      %7543 = vmatpush1.msra.mxu0 0.0
      %7544 = vmatprep.subr.mxu0 0.0
      %7545 = vmatpush1.msra.mxu0 0.0
      %7546 = vmatprep.subr.mxu0 0.0
      %7547 = vmatpush1.msra.mxu0 0.0
      %7548 = vmatprep.subr.mxu0 0.0
      %7549 = vmatpush1.msra.mxu0 0.0
      %7550 = vmatprep.subr.mxu0 0.0
      %7551 = vmatpush1.msra.mxu0 0.0
      %7552 = vmatprep.subr.mxu0 0.0
      %7553 = vmatpush1.msra.mxu0 0.0
      %7554 = vmatprep.subr.mxu0 0.0
      %7555 = vmatpush1.msra.mxu0 0.0
      %7556 = vmatprep.subr.mxu0 0.0
      %7557 = vmatpush1.msra.mxu0 0.0
      %7558 = vmatprep.subr.mxu0 0.0
      %7559 = vmatpush1.msra.mxu0 0.0
      %7560 = vmatprep.subr.mxu0 0.0
      %7561 = vmatpush1.msra.mxu0 0.0
      %7562 = vmatprep.subr.mxu0 0.0
      %7563 = vmatpush1.msra.mxu0 0.0
      %7564 = vmatprep.subr.mxu0 0.0
      %7565 = vmatpush1.msra.mxu0 0.0
      %7566 = vmatprep.subr.mxu0 0.0
      %7567 = vmatpush1.msra.mxu0 0.0
      %7568 = vmatprep.subr.mxu0 0.0
      %7569 = vmatpush1.msra.mxu0 0.0
      %7570 = vmatprep.subr.mxu0 0.0
      %7571 = vmatpush1.msra.mxu0 0.0
      %7572 = vmatprep.subr.mxu0 0.0
      %7573 = vmatpush1.msra.mxu0 0.0
      %7574 = vmatprep.subr.mxu0 0.0
      %7575 = vmatpush1.msra.mxu0 0.0
      %7576 = vmatprep.subr.mxu0 0.0
      %7577 = vmatpush1.msra.mxu0 0.0
      %7578 = vmatprep.mubr.f32.mxu0 0.0
      %7579 = vmatmul.mubr.f32.gmra.mrb[0].mxu0 %v7512
      %v7580 = vpop.f32.mrb[0].mxu0
      %v7581 = vadd.f32 0.0, %v7580
      %v7582 = vpop.f32.mrb[0].mxu0
      %7583 = vdwg.mxu0
      %v7585 = vsel %vm634, %v5336, 0
      %7587 = vmatprep.subr.mxu0 0.0
      %7588 = vmatpush1.msra.mxu0 %v5455
      %7589 = vmatprep.subr.mxu0 0.0
      %7590 = vmatpush1.msra.mxu0 %v5456
      %7591 = vmatprep.subr.mxu0 0.0
      %7592 = vmatpush1.msra.mxu0 %v5457
      %7593 = vmatprep.subr.mxu0 0.0
      %7594 = vmatpush1.msra.mxu0 %v5458
      %7595 = vmatprep.subr.mxu0 0.0
      %7596 = vmatpush1.msra.mxu0 0.0
      %7597 = vmatprep.subr.mxu0 0.0
      %7598 = vmatpush1.msra.mxu0 0.0
      %7599 = vmatprep.subr.mxu0 0.0
      %7600 = vmatpush1.msra.mxu0 0.0
      %7601 = vmatprep.subr.mxu0 0.0
      %7602 = vmatpush1.msra.mxu0 0.0
      %7603 = vmatprep.subr.mxu0 0.0
      %7604 = vmatpush1.msra.mxu0 0.0
      %7605 = vmatprep.subr.mxu0 0.0
      %7606 = vmatpush1.msra.mxu0 0.0
      %7607 = vmatprep.subr.mxu0 0.0
      %7608 = vmatpush1.msra.mxu0 0.0
      %7609 = vmatprep.subr.mxu0 0.0
      %7610 = vmatpush1.msra.mxu0 0.0
      %7611 = vmatprep.subr.mxu0 0.0
      %7612 = vmatpush1.msra.mxu0 0.0
      %7613 = vmatprep.subr.mxu0 0.0
      %7614 = vmatpush1.msra.mxu0 0.0
      %7615 = vmatprep.subr.mxu0 0.0
      %7616 = vmatpush1.msra.mxu0 0.0
      %7617 = vmatprep.subr.mxu0 0.0
      %7618 = vmatpush1.msra.mxu0 0.0
      %7619 = vmatprep.subr.mxu0 0.0
      %7620 = vmatpush1.msra.mxu0 0.0
      %7621 = vmatprep.subr.mxu0 0.0
      %7622 = vmatpush1.msra.mxu0 0.0
      %7623 = vmatprep.subr.mxu0 0.0
      %7624 = vmatpush1.msra.mxu0 0.0
      %7625 = vmatprep.subr.mxu0 0.0
      %7626 = vmatpush1.msra.mxu0 0.0
      %7627 = vmatprep.subr.mxu0 0.0
      %7628 = vmatpush1.msra.mxu0 0.0
      %7629 = vmatprep.subr.mxu0 0.0
      %7630 = vmatpush1.msra.mxu0 0.0
      %7631 = vmatprep.subr.mxu0 0.0
      %7632 = vmatpush1.msra.mxu0 0.0
      %7633 = vmatprep.subr.mxu0 0.0
      %7634 = vmatpush1.msra.mxu0 0.0
      %7635 = vmatprep.subr.mxu0 0.0
      %7636 = vmatpush1.msra.mxu0 0.0
      %7637 = vmatprep.subr.mxu0 0.0
      %7638 = vmatpush1.msra.mxu0 0.0
      %7639 = vmatprep.subr.mxu0 0.0
      %7640 = vmatpush1.msra.mxu0 0.0
      %7641 = vmatprep.subr.mxu0 0.0
      %7642 = vmatpush1.msra.mxu0 0.0
      %7643 = vmatprep.subr.mxu0 0.0
      %7644 = vmatpush1.msra.mxu0 0.0
      %7645 = vmatprep.subr.mxu0 0.0
      %7646 = vmatpush1.msra.mxu0 0.0
      %7647 = vmatprep.subr.mxu0 0.0
      %7648 = vmatpush1.msra.mxu0 0.0
      %7649 = vmatprep.subr.mxu0 0.0
      %7650 = vmatpush1.msra.mxu0 0.0
      %7651 = vmatprep.mubr.f32.mxu0 0.0
      %7652 = vmatmul.mubr.f32.gmra.mrb[0].mxu0 %v7585
      %v7653 = vpop.f32.mrb[0].mxu0
      %v7654 = vadd.f32 0.0, %v7653
      %v7655 = vpop.f32.mrb[0].mxu0
      %7656 = vdwg.mxu0
      %v7658 = vsel %vm634, %v5337, 0
      %7660 = vmatprep.subr.mxu0 0.0
      %7661 = vmatpush1.msra.mxu0 %v5459
      %7662 = vmatprep.subr.mxu0 0.0
      %7663 = vmatpush1.msra.mxu0 %v5460
      %7664 = vmatprep.subr.mxu0 0.0
      %7665 = vmatpush1.msra.mxu0 %v5461
      %7666 = vmatprep.subr.mxu0 0.0
      %7667 = vmatpush1.msra.mxu0 %v5462
      %7668 = vmatprep.subr.mxu0 0.0
      %7669 = vmatpush1.msra.mxu0 0.0
      %7670 = vmatprep.subr.mxu0 0.0
      %7671 = vmatpush1.msra.mxu0 0.0
      %7672 = vmatprep.subr.mxu0 0.0
      %7673 = vmatpush1.msra.mxu0 0.0
      %7674 = vmatprep.subr.mxu0 0.0
      %7675 = vmatpush1.msra.mxu0 0.0
      %7676 = vmatprep.subr.mxu0 0.0
      %7677 = vmatpush1.msra.mxu0 0.0
      %7678 = vmatprep.subr.mxu0 0.0
      %7679 = vmatpush1.msra.mxu0 0.0
      %7680 = vmatprep.subr.mxu0 0.0
      %7681 = vmatpush1.msra.mxu0 0.0
      %7682 = vmatprep.subr.mxu0 0.0
      %7683 = vmatpush1.msra.mxu0 0.0
      %7684 = vmatprep.subr.mxu0 0.0
      %7685 = vmatpush1.msra.mxu0 0.0
      %7686 = vmatprep.subr.mxu0 0.0
      %7687 = vmatpush1.msra.mxu0 0.0
      %7688 = vmatprep.subr.mxu0 0.0
      %7689 = vmatpush1.msra.mxu0 0.0
      %7690 = vmatprep.subr.mxu0 0.0
      %7691 = vmatpush1.msra.mxu0 0.0
      %7692 = vmatprep.subr.mxu0 0.0
      %7693 = vmatpush1.msra.mxu0 0.0
      %7694 = vmatprep.subr.mxu0 0.0
      %7695 = vmatpush1.msra.mxu0 0.0
      %7696 = vmatprep.subr.mxu0 0.0
      %7697 = vmatpush1.msra.mxu0 0.0
      %7698 = vmatprep.subr.mxu0 0.0
      %7699 = vmatpush1.msra.mxu0 0.0
      %7700 = vmatprep.subr.mxu0 0.0
      %7701 = vmatpush1.msra.mxu0 0.0
      %7702 = vmatprep.subr.mxu0 0.0
      %7703 = vmatpush1.msra.mxu0 0.0
      %7704 = vmatprep.subr.mxu0 0.0
      %7705 = vmatpush1.msra.mxu0 0.0
      %7706 = vmatprep.subr.mxu0 0.0
      %7707 = vmatpush1.msra.mxu0 0.0
      %7708 = vmatprep.subr.mxu0 0.0
      %7709 = vmatpush1.msra.mxu0 0.0
      %7710 = vmatprep.subr.mxu0 0.0
      %7711 = vmatpush1.msra.mxu0 0.0
      %7712 = vmatprep.subr.mxu0 0.0
      %7713 = vmatpush1.msra.mxu0 0.0
      %7714 = vmatprep.subr.mxu0 0.0
      %7715 = vmatpush1.msra.mxu0 0.0
      %7716 = vmatprep.subr.mxu0 0.0
      %7717 = vmatpush1.msra.mxu0 0.0
      %7718 = vmatprep.subr.mxu0 0.0
      %7719 = vmatpush1.msra.mxu0 0.0
      %7720 = vmatprep.subr.mxu0 0.0
      %7721 = vmatpush1.msra.mxu0 0.0
      %7722 = vmatprep.subr.mxu0 0.0
      %7723 = vmatpush1.msra.mxu0 0.0
      %7724 = vmatprep.mubr.f32.mxu0 0.0
      %7725 = vmatmul.mubr.f32.gmra.mrb[0].mxu0 %v7658
      %v7726 = vpop.f32.mrb[0].mxu0
      %v7727 = vadd.f32 0.0, %v7726
      %v7728 = vpop.f32.mrb[0].mxu0
      %7729 = vdwg.mxu0
      %v7731 = vsel %vm634, %v5338, 0
      %7733 = vmatprep.subr.mxu0 0.0
      %7734 = vmatpush1.msra.mxu0 %v5463
      %7735 = vmatprep.subr.mxu0 0.0
      %7736 = vmatpush1.msra.mxu0 %v5464
      %7737 = vmatprep.subr.mxu0 0.0
      %7738 = vmatpush1.msra.mxu0 %v5465
      %7739 = vmatprep.subr.mxu0 0.0
      %7740 = vmatpush1.msra.mxu0 %v5466
      %7741 = vmatprep.subr.mxu0 0.0
      %7742 = vmatpush1.msra.mxu0 0.0
      %7743 = vmatprep.subr.mxu0 0.0
      %7744 = vmatpush1.msra.mxu0 0.0
      %7745 = vmatprep.subr.mxu0 0.0
      %7746 = vmatpush1.msra.mxu0 0.0
      %7747 = vmatprep.subr.mxu0 0.0
      %7748 = vmatpush1.msra.mxu0 0.0
      %7749 = vmatprep.subr.mxu0 0.0
      %7750 = vmatpush1.msra.mxu0 0.0
      %7751 = vmatprep.subr.mxu0 0.0
      %7752 = vmatpush1.msra.mxu0 0.0
      %7753 = vmatprep.subr.mxu0 0.0
      %7754 = vmatpush1.msra.mxu0 0.0
      %7755 = vmatprep.subr.mxu0 0.0
      %7756 = vmatpush1.msra.mxu0 0.0
      %7757 = vmatprep.subr.mxu0 0.0
      %7758 = vmatpush1.msra.mxu0 0.0
      %7759 = vmatprep.subr.mxu0 0.0
      %7760 = vmatpush1.msra.mxu0 0.0
      %7761 = vmatprep.subr.mxu0 0.0
      %7762 = vmatpush1.msra.mxu0 0.0
      %7763 = vmatprep.subr.mxu0 0.0
      %7764 = vmatpush1.msra.mxu0 0.0
      %7765 = vmatprep.subr.mxu0 0.0
      %7766 = vmatpush1.msra.mxu0 0.0
      %7767 = vmatprep.subr.mxu0 0.0
      %7768 = vmatpush1.msra.mxu0 0.0
      %7769 = vmatprep.subr.mxu0 0.0
      %7770 = vmatpush1.msra.mxu0 0.0
      %7771 = vmatprep.subr.mxu0 0.0
      %7772 = vmatpush1.msra.mxu0 0.0
      %7773 = vmatprep.subr.mxu0 0.0
      %7774 = vmatpush1.msra.mxu0 0.0
      %7775 = vmatprep.subr.mxu0 0.0
      %7776 = vmatpush1.msra.mxu0 0.0
      %7777 = vmatprep.subr.mxu0 0.0
      %7778 = vmatpush1.msra.mxu0 0.0
      %7779 = vmatprep.subr.mxu0 0.0
      %7780 = vmatpush1.msra.mxu0 0.0
      %7781 = vmatprep.subr.mxu0 0.0
      %7782 = vmatpush1.msra.mxu0 0.0
      %7783 = vmatprep.subr.mxu0 0.0
      %7784 = vmatpush1.msra.mxu0 0.0
      %7785 = vmatprep.subr.mxu0 0.0
      %7786 = vmatpush1.msra.mxu0 0.0
      %7787 = vmatprep.subr.mxu0 0.0
      %7788 = vmatpush1.msra.mxu0 0.0
      %7789 = vmatprep.subr.mxu0 0.0
      %7790 = vmatpush1.msra.mxu0 0.0
      %7791 = vmatprep.subr.mxu0 0.0
      %7792 = vmatpush1.msra.mxu0 0.0
      %7793 = vmatprep.subr.mxu0 0.0
      %7794 = vmatpush1.msra.mxu0 0.0
      %7795 = vmatprep.subr.mxu0 0.0
      %7796 = vmatpush1.msra.mxu0 0.0
      %7797 = vmatprep.mubr.f32.mxu0 0.0
      %7798 = vmatmul.mubr.f32.gmra.mrb[0].mxu0 %v7731
      %v7799 = vpop.f32.mrb[0].mxu0
      %v7800 = vadd.f32 0.0, %v7799
      %v7801 = vpop.f32.mrb[0].mxu0
      %7802 = vdwg.mxu0
      %v7803 = vsub.f32 %v705, %v3041
      %v7804 = vsub.f32 %v778, %v3114
      %v7805 = vsub.f32 %v851, %v3187
      %v7806 = vsub.f32 %v924, %v3260
      %v7807 = vsub.f32 %v997, %v3333
      %v7808 = vsub.f32 %v1070, %v3406
      %v7809 = vsub.f32 %v1143, %v3479
      %v7810 = vsub.f32 %v1216, %v3552
      %v7811 = vsub.f32 %v1289, %v3625
      %v7812 = vsub.f32 %v1362, %v3698
      %v7813 = vsub.f32 %v1435, %v3771
      %v7814 = vsub.f32 %v1508, %v3844
      %v7815 = vsub.f32 %v1581, %v3917
      %v7816 = vsub.f32 %v1654, %v3990
      %v7817 = vsub.f32 %v1727, %v4063
      %v7818 = vsub.f32 %v1800, %v4136
      %v7819 = vsub.f32 %v1873, %v4209
      %v7820 = vsub.f32 %v1946, %v4282
      %v7821 = vsub.f32 %v2019, %v4355
      %v7822 = vsub.f32 %v2092, %v4428
      %v7823 = vsub.f32 %v2165, %v4501
      %v7824 = vsub.f32 %v2238, %v4574
      %v7825 = vsub.f32 %v2311, %v4647
      %v7826 = vsub.f32 %v2384, %v4720
      %v7827 = vsub.f32 %v2457, %v4793
      %v7828 = vsub.f32 %v2530, %v4866
      %v7829 = vsub.f32 %v2603, %v4939
      %v7830 = vsub.f32 %v2676, %v5012
      %v7831 = vsub.f32 %v2749, %v5085
      %v7832 = vsub.f32 %v2822, %v5158
      %v7833 = vsub.f32 %v2895, %v5231
      %v7834 = vsub.f32 %v2968, %v5304
      %vm7835 = vcmask 254976
      %7836 = vst.msk [vmem:[%s306] sm:$0x3] %vm7835, %v7803
      %7837 = vst.msk [vmem:[%s306 + $0x2] sm:$0x3] %vm7835, %v7804
      %7838 = vst.msk [vmem:[%s306 + $0x4] sm:$0x3] %vm7835, %v7805
      %7839 = vst.msk [vmem:[%s306 + $0x6] sm:$0x3] %vm7835, %v7806
      %7840 = vst.msk [vmem:[%s306 + $0x8] sm:$0x3] %vm7835, %v7807
      %7841 = vst.msk [vmem:[%s306 + $0xa] sm:$0x3] %vm7835, %v7808
      %7842 = vst.msk [vmem:[%s306 + $0xc] sm:$0x3] %vm7835, %v7809
      %7843 = vst.msk [vmem:[%s306 + $0xe] sm:$0x3] %vm7835, %v7810
      %7844 = vst.msk [vmem:[%s306 + $0x10] sm:$0x3] %vm7835, %v7811
      %7845 = vst.msk [vmem:[%s306 + $0x12] sm:$0x3] %vm7835, %v7812
      %7846 = vst.msk [vmem:[%s306 + $0x14] sm:$0x3] %vm7835, %v7813
      %7847 = vst.msk [vmem:[%s306 + $0x16] sm:$0x3] %vm7835, %v7814
      %7848 = vst.msk [vmem:[%s306 + $0x18] sm:$0x3] %vm7835, %v7815
      %7849 = vst.msk [vmem:[%s306 + $0x1a] sm:$0x3] %vm7835, %v7816
      %7850 = vst.msk [vmem:[%s306 + $0x1c] sm:$0x3] %vm7835, %v7817
      %7851 = vst.msk [vmem:[%s306 + $0x1e] sm:$0x3] %vm7835, %v7818
      %7852 = vst.msk [vmem:[%s306 + $0x20] sm:$0x3] %vm7835, %v7819
      %7853 = vst.msk [vmem:[%s306 + $0x22] sm:$0x3] %vm7835, %v7820
      %7854 = vst.msk [vmem:[%s306 + $0x24] sm:$0x3] %vm7835, %v7821
      %7855 = vst.msk [vmem:[%s306 + $0x26] sm:$0x3] %vm7835, %v7822
      %7856 = vst.msk [vmem:[%s306 + $0x28] sm:$0x3] %vm7835, %v7823
      %7857 = vst.msk [vmem:[%s306 + $0x2a] sm:$0x3] %vm7835, %v7824
      %7858 = vst.msk [vmem:[%s306 + $0x2c] sm:$0x3] %vm7835, %v7825
      %7859 = vst.msk [vmem:[%s306 + $0x2e] sm:$0x3] %vm7835, %v7826
      %7860 = vst.msk [vmem:[%s306 + $0x30] sm:$0x3] %vm7835, %v7827
      %7861 = vst.msk [vmem:[%s306 + $0x32] sm:$0x3] %vm7835, %v7828
      %7862 = vst.msk [vmem:[%s306 + $0x34] sm:$0x3] %vm7835, %v7829
      %7863 = vst.msk [vmem:[%s306 + $0x36] sm:$0x3] %vm7835, %v7830
      %7864 = vst.msk [vmem:[%s306 + $0x38] sm:$0x3] %vm7835, %v7831
      %7865 = vst.msk [vmem:[%s306 + $0x3a] sm:$0x3] %vm7835, %v7832
      %7866 = vst.msk [vmem:[%s306 + $0x3c] sm:$0x3] %vm7835, %v7833
      %7867 = vst.msk [vmem:[%s306 + $0x3e] sm:$0x3] %vm7835, %v7834
      %v7868 = vsub.f32 %v5537, %v705
      %v7869 = vsub.f32 %v5610, %v778
      %v7870 = vsub.f32 %v5683, %v851
      %v7871 = vsub.f32 %v5756, %v924
      %v7872 = vsub.f32 %v5829, %v997
      %v7873 = vsub.f32 %v5902, %v1070
      %v7874 = vsub.f32 %v5975, %v1143
      %v7875 = vsub.f32 %v6048, %v1216
      %v7876 = vsub.f32 %v6121, %v1289
      %v7877 = vsub.f32 %v6194, %v1362
      %v7878 = vsub.f32 %v6267, %v1435
      %v7879 = vsub.f32 %v6340, %v1508
      %v7880 = vsub.f32 %v6413, %v1581
      %v7881 = vsub.f32 %v6486, %v1654
      %v7882 = vsub.f32 %v6559, %v1727
      %v7883 = vsub.f32 %v6632, %v1800
      %v7884 = vsub.f32 %v6705, %v1873
      %v7885 = vsub.f32 %v6778, %v1946
      %v7886 = vsub.f32 %v6851, %v2019
      %v7887 = vsub.f32 %v6924, %v2092
      %v7888 = vsub.f32 %v6997, %v2165
      %v7889 = vsub.f32 %v7070, %v2238
      %v7890 = vsub.f32 %v7143, %v2311
      %v7891 = vsub.f32 %v7216, %v2384
      %v7892 = vsub.f32 %v7289, %v2457
      %v7893 = vsub.f32 %v7362, %v2530
      %v7894 = vsub.f32 %v7435, %v2603
      %v7895 = vsub.f32 %v7508, %v2676
      %v7896 = vsub.f32 %v7581, %v2749
      %v7897 = vsub.f32 %v7654, %v2822
      %v7898 = vsub.f32 %v7727, %v2895
      %v7899 = vsub.f32 %v7800, %v2968
      %v7900 = vsub.f32 %v7868, %v3041
      %v7901 = vsub.f32 %v7869, %v3114
      %v7902 = vsub.f32 %v7870, %v3187
      %v7903 = vsub.f32 %v7871, %v3260
      %v7904 = vsub.f32 %v7872, %v3333
      %v7905 = vsub.f32 %v7873, %v3406
      %v7906 = vsub.f32 %v7874, %v3479
      %v7907 = vsub.f32 %v7875, %v3552
      %v7908 = vsub.f32 %v7876, %v3625
      %v7909 = vsub.f32 %v7877, %v3698
      %v7910 = vsub.f32 %v7878, %v3771
      %v7911 = vsub.f32 %v7879, %v3844
      %v7912 = vsub.f32 %v7880, %v3917
      %v7913 = vsub.f32 %v7881, %v3990
      %v7914 = vsub.f32 %v7882, %v4063
      %v7915 = vsub.f32 %v7883, %v4136
      %v7916 = vsub.f32 %v7884, %v4209
      %v7917 = vsub.f32 %v7885, %v4282
      %v7918 = vsub.f32 %v7886, %v4355
      %v7919 = vsub.f32 %v7887, %v4428
      %v7920 = vsub.f32 %v7888, %v4501
      %v7921 = vsub.f32 %v7889, %v4574
      %v7922 = vsub.f32 %v7890, %v4647
      %v7923 = vsub.f32 %v7891, %v4720
      %v7924 = vsub.f32 %v7892, %v4793
      %v7925 = vsub.f32 %v7893, %v4866
      %v7926 = vsub.f32 %v7894, %v4939
      %v7927 = vsub.f32 %v7895, %v5012
      %v7928 = vsub.f32 %v7896, %v5085
      %v7929 = vsub.f32 %v7897, %v5158
      %v7930 = vsub.f32 %v7898, %v5231
      %v7931 = vsub.f32 %v7899, %v5304
      %7932 = vst.msk [vmem:[%s312] sm:$0x3] %vm7835, %v7900
      %7933 = vst.msk [vmem:[%s312 + $0x2] sm:$0x3] %vm7835, %v7901
      %7934 = vst.msk [vmem:[%s312 + $0x4] sm:$0x3] %vm7835, %v7902
      %7935 = vst.msk [vmem:[%s312 + $0x6] sm:$0x3] %vm7835, %v7903
      %7936 = vst.msk [vmem:[%s312 + $0x8] sm:$0x3] %vm7835, %v7904
      %7937 = vst.msk [vmem:[%s312 + $0xa] sm:$0x3] %vm7835, %v7905
      %7938 = vst.msk [vmem:[%s312 + $0xc] sm:$0x3] %vm7835, %v7906
      %7939 = vst.msk [vmem:[%s312 + $0xe] sm:$0x3] %vm7835, %v7907
      %7940 = vst.msk [vmem:[%s312 + $0x10] sm:$0x3] %vm7835, %v7908
      %7941 = vst.msk [vmem:[%s312 + $0x12] sm:$0x3] %vm7835, %v7909
      %7942 = vst.msk [vmem:[%s312 + $0x14] sm:$0x3] %vm7835, %v7910
      %7943 = vst.msk [vmem:[%s312 + $0x16] sm:$0x3] %vm7835, %v7911
      %7944 = vst.msk [vmem:[%s312 + $0x18] sm:$0x3] %vm7835, %v7912
      %7945 = vst.msk [vmem:[%s312 + $0x1a] sm:$0x3] %vm7835, %v7913
      %7946 = vst.msk [vmem:[%s312 + $0x1c] sm:$0x3] %vm7835, %v7914
      %7947 = vst.msk [vmem:[%s312 + $0x1e] sm:$0x3] %vm7835, %v7915
      %7948 = vst.msk [vmem:[%s312 + $0x20] sm:$0x3] %vm7835, %v7916
      %7949 = vst.msk [vmem:[%s312 + $0x22] sm:$0x3] %vm7835, %v7917
      %7950 = vst.msk [vmem:[%s312 + $0x24] sm:$0x3] %vm7835, %v7918
      %7951 = vst.msk [vmem:[%s312 + $0x26] sm:$0x3] %vm7835, %v7919
      %7952 = vst.msk [vmem:[%s312 + $0x28] sm:$0x3] %vm7835, %v7920
      %7953 = vst.msk [vmem:[%s312 + $0x2a] sm:$0x3] %vm7835, %v7921
      %7954 = vst.msk [vmem:[%s312 + $0x2c] sm:$0x3] %vm7835, %v7922
      %7955 = vst.msk [vmem:[%s312 + $0x2e] sm:$0x3] %vm7835, %v7923
      %7956 = vst.msk [vmem:[%s312 + $0x30] sm:$0x3] %vm7835, %v7924
      %7957 = vst.msk [vmem:[%s312 + $0x32] sm:$0x3] %vm7835, %v7925
      %7958 = vst.msk [vmem:[%s312 + $0x34] sm:$0x3] %vm7835, %v7926
      %7959 = vst.msk [vmem:[%s312 + $0x36] sm:$0x3] %vm7835, %v7927
      %7960 = vst.msk [vmem:[%s312 + $0x38] sm:$0x3] %vm7835, %v7928
      %7961 = vst.msk [vmem:[%s312 + $0x3a] sm:$0x3] %vm7835, %v7929
      %7962 = vst.msk [vmem:[%s312 + $0x3c] sm:$0x3] %vm7835, %v7930
      %7963 = vst.msk [vmem:[%s312 + $0x3e] sm:$0x3] %vm7835, %v7931
      %s7964 = smul.u32 32, %s17
      %p7965 = scmp.lt.s32.totalorder %s7964, 63
      %s7966 = scalar_select %p7965, %s7964, 63
      %s7967 = smul.addr %s7966, 2
      %s7968 = scalar_lea.vmem %s4, %s7967
      %s7969 = smul.u32 32, %s17
      %p7970 = scmp.lt.s32.totalorder %s7969, 63
      %s7971 = scalar_select %p7970, %s7969, 63
      %s7972 = smul.addr %s7971, 2
      %s7973 = scalar_lea.vmem %s5, %s7972
      // Predicated region
      $region37: #{fno_block_forward.2} parent=35 // pred_check
        %p7974 = pneg %p139
      $region38: #{fno_block_forward.2} parent=35 // pred_check_branch
        %7976 = sbr.rel (%p7974) target = $region40
      $region39: #{fno_block_forward.2} parent=35 // pred_region
        %s7977 = smul.u32 32, %s17
      $region40: #{fno_block_forward.2} parent=35 // pred_fallthru
        _
      // Predicated region
      $region41: #{fno_block_forward.2} parent=35 // pred_check
        %p7978 = pneg %p165
      $region42: #{fno_block_forward.2} parent=35 // pred_check_branch
        %7980 = sbr.rel (%p7978) target = $region44
      $region43: #{fno_block_forward.2} parent=35 // pred_region
        %s7981 = smul.u32 32, %s17
      $region44: #{fno_block_forward.2} parent=35 // pred_fallthru
        _
    $region36: #{fno_block_forward.2} parent=5 // pred_fallthru
      _
    %p7982 = scmp.le.s32.totalorder 2, %s12
    // Predicated region
    $region45: #{fno_block_forward.2} parent=5 // pred_check
      %p7983 = pneg %p7982
    $region46: #{fno_block_forward.2} parent=5 // pred_check_branch
      %7985 = sbr.rel (%p7983) target = $region48
    $region47: #{fno_block_forward.2} parent=5 // pred_region
      %s7986 = ssub.s32 %s12, 2
      // Predicated region
      $region49: #{fno_block_forward.2} parent=47 // pred_check
        %p7987 = pneg %p145
      $region50: #{fno_block_forward.2} parent=47 // pred_check_branch
        %7989 = sbr.rel (%p7987) target = $region52
      $region51: #{fno_block_forward.2} parent=47 // pred_region
        %s7990 = smul.u32 32, %s18
        %p7991 = scmp.lt.s32.totalorder %s7990, 63
        %s7992 = scalar_select %p7991, %s7990, 63
        %s7993 = smul.addr %s7992, 2
        %s7994 = scalar_lea.vmem %s4, %s7993
      $region52: #{fno_block_forward.2} parent=47 // pred_fallthru
        _
      // Predicated region
      $region53: #{fno_block_forward.2} parent=47 // pred_check
        %p7995 = pneg %p171
      $region54: #{fno_block_forward.2} parent=47 // pred_check_branch
        %7997 = sbr.rel (%p7995) target = $region56
      $region55: #{fno_block_forward.2} parent=47 // pred_region
        %s7998 = smul.u32 32, %s18
        %p7999 = scmp.lt.s32.totalorder %s7998, 63
        %s8000 = scalar_select %p7999, %s7998, 63
        %s8001 = smul.addr %s8000, 2
        %s8002 = scalar_lea.vmem %s5, %s8001
      $region56: #{fno_block_forward.2} parent=47 // pred_fallthru
        _
    $region48: #{fno_block_forward.2} parent=5 // pred_fallthru
      _
  $region6: #{fno_block_forward.2} parent=0 // loop_footer
    %s16 = sadd.s32 1, %s12
  $region7: #{fno_block_forward.2} parent=0 // loop_footer_branch
    %11 = sbr.rel target = $region3
  $region8: #{fno_block_forward.2} parent=0 // loop_exit
    _

</llo_original>
